<compile_context>
chip_gen: v7x
topology: tpu7x:2x2x1
jax: 0.10.0
libtpu: 0.0.40
codegen_flags: <defaults>
</compile_context>

<pallas_src>
import functools
import math

import jax
import jax.numpy as jnp
from jax import lax
from jax.experimental import pallas as pl
from jax.experimental.pallas import tpu as pltpu

EPS = 1e-5  # nn.LayerNorm default eps


# --------------------------------------------------------------------------
# Hardware-aware budgets / tiling helpers
# --------------------------------------------------------------------------
@functools.lru_cache(maxsize=None)
def _vmem_budget_bytes():
    """Scoped-VMEM budget: min(64 MiB, physical/2). 64 MiB on v6e/v5e (above
    their 32/16 MiB defaults), 32 MiB on v7x (64 MiB physical)."""
    try:
        cap = pltpu.get_tpu_info().vmem_capacity_bytes
    except Exception:
        cap = 128 * 1024 * 1024
    return int(min(64 * 1024 * 1024, cap // 2))


def _choose_row_tile(rows, cap=1024):
    """Largest divisor of `rows` that is a multiple of 8 (or rows itself) and
    <= cap, preferring >= 2 grid steps when the tile stays >= 256 rows."""
    candidates = [t for t in range(1, min(cap, rows) + 1)
                  if rows % t == 0 and (t % 8 == 0 or t == rows)]
    if not candidates:
        return rows
    for t in sorted(candidates, reverse=True):
        if rows // t >= 2 and t >= 256:
            return t
    return max(candidates)


def _choose_window_tile(n_windows, tokens_per_window, row_cap=512, min_rows=256):
    """Windows per attention grid step: keep Wb*N <= row_cap, prefer Wb*N >=
    min_rows with >= 2 grid steps (v7x megacore), else the largest feasible."""
    best = 1
    for wb in range(n_windows, 0, -1):
        if n_windows % wb or wb * tokens_per_window > row_cap:
            continue
        if best == 1:
            best = wb
        if n_windows // wb >= 2 and wb * tokens_per_window >= min_rows:
            return wb
    return best


def _mlp_row_cap(C, Hd, dtype_bytes, budget):
    """Generation-aware MLP row-tile cap: double-buffered weights + in/out
    activation streams + f32 hidden intermediate must fit the VMEM budget."""
    weight_bytes = 2 * (C * Hd + Hd * C + Hd + C) * dtype_bytes  # double-buffered
    per_row = (2 * 2 * C * dtype_bytes      # x in + out, double-buffered
               + Hd * 4                      # f32 hidden intermediate
               + 6 * C * 4)                  # f32 temporaries (x, xn, y, ...)
    avail = budget - weight_bytes
    if avail <= per_row * 64:
        return 64
    cap = int(avail // per_row)
    cap = max(64, min(cap, 2048))
    return (cap // 8) * 8


# --------------------------------------------------------------------------
# Kernel 1: standalone LayerNorm (only used on the padding path)
# --------------------------------------------------------------------------
def layernorm_kernel(x_ref, g_ref, b_ref, o_ref):
    x = x_ref[...].astype(jnp.float32)
    mu = jnp.mean(x, axis=-1, keepdims=True)
    xc = x - mu
    var = jnp.mean(xc * xc, axis=-1, keepdims=True)
    y = xc * lax.rsqrt(var + EPS)
    o_ref[...] = (y * g_ref[...] + b_ref[...]).astype(o_ref.dtype)


def layernorm(x2d, gamma, beta):
    R, C = x2d.shape
    tile_rows = _choose_row_tile(R)
    assert R % tile_rows == 0
    return pl.pallas_call(
        layernorm_kernel,
        out_shape=jax.ShapeDtypeStruct((R, C), x2d.dtype),
        grid_spec=pltpu.PrefetchScalarGridSpec(
            num_scalar_prefetch=0,
            grid=(R // tile_rows,),
            in_specs=[
                pl.BlockSpec((tile_rows, C), lambda i: (i, 0)),
                pl.BlockSpec((1, C), lambda i: (0, 0)),
                pl.BlockSpec((1, C), lambda i: (0, 0)),
            ],
            out_specs=pl.BlockSpec((tile_rows, C), lambda i: (i, 0)),
        ),
        compiler_params=pltpu.CompilerParams(
            dimension_semantics=("parallel",),
            vmem_limit_bytes=_vmem_budget_bytes()),
    )(x2d, gamma.reshape(1, C), beta.reshape(1, C))


# --------------------------------------------------------------------------
# Kernel 2: windowed multi-head attention, Wb windows per grid step
#   optional fused norm1 + pos-emb + QKV + softmax + output proj + residual
# --------------------------------------------------------------------------
def window_attn_kernel(x_ref, pos_ref, g1_ref, b1_ref, wqkv_ref, bqkv_ref,
                       wproj_ref, bproj_ref, o_ref, *, num_heads, scale,
                       apply_ln, add_residual):
    Wb, N, C = x_ref.shape
    hd = C // num_heads
    dt = x_ref.dtype

    x_in = x_ref[...].astype(jnp.float32)                   # (Wb, N, C)
    if apply_ln:                                             # fused norm1
        mu = jnp.mean(x_in, axis=-1, keepdims=True)
        xc = x_in - mu
        var = jnp.mean(xc * xc, axis=-1, keepdims=True)
        xn = xc * lax.rsqrt(var + EPS) * g1_ref[...] + b1_ref[...]
    else:
        xn = x_in
    xn = xn + pos_ref[...].astype(jnp.float32)               # broadcast over Wb

    # QKV projection: native-dtype operands, f32 accumulation on the MXU.
    x2 = xn.astype(dt).reshape(Wb * N, C)
    qkv = jnp.dot(x2, wqkv_ref[...], preferred_element_type=jnp.float32)
    qkv = qkv + bqkv_ref[...]

    q = (qkv[:, 0:C] * scale).astype(dt)     # scale hoisted: one full-width mul
    k = qkv[:, C:2 * C].astype(dt)
    v = qkv[:, 2 * C:3 * C].astype(dt)

    wproj = wproj_ref[...]                   # (C, C), native dtype
    acc = jnp.zeros((Wb * N, C), jnp.float32)
    for h in range(num_heads):
        sl = slice(h * hd, (h + 1) * hd)
        qh = q[:, sl].reshape(Wb, N, hd)
        kh = k[:, sl].reshape(Wb, N, hd)
        vh = v[:, sl].reshape(Wb, N, hd)
        s = jnp.einsum('wqd,wkd->wqk', qh, kh,
                       preferred_element_type=jnp.float32)   # batched over windows
        s = s - jnp.max(s, axis=-1, keepdims=True)
        p = jnp.exp(s)
        p = p * pl.reciprocal(jnp.sum(p, axis=-1, keepdims=True), approx=True)
        ch = jnp.einsum('wqk,wkd->wqd', p.astype(dt), vh,
                        preferred_element_type=jnp.float32)
        # Project this head's context through its Wproj row slice and
        # accumulate: no lane-wise concatenate of head contexts.
        acc = acc + jnp.dot(ch.reshape(Wb * N, hd).astype(dt), wproj[sl, :],
                            preferred_element_type=jnp.float32)

    out = acc + bproj_ref[...]
    if add_residual:                          # fused first residual (shortcut)
        out = out + x_in.reshape(Wb * N, C)
    o_ref[...] = out.reshape(Wb, N, C).astype(o_ref.dtype)


def window_attention(x_windows, params, num_heads, apply_ln, add_residual):
    nW, N, C = x_windows.shape
    hd = C // num_heads
    scale = hd ** -0.5
    Wb = _choose_window_tile(nW, N)
    assert nW % Wb == 0
    kernel = functools.partial(window_attn_kernel, num_heads=num_heads,
                               scale=scale, apply_ln=apply_ln,
                               add_residual=add_residual)
    return pl.pallas_call(
        kernel,
        out_shape=jax.ShapeDtypeStruct((nW, N, C), x_windows.dtype),
        grid_spec=pltpu.PrefetchScalarGridSpec(
            num_scalar_prefetch=0,
            grid=(nW // Wb,),
            in_specs=[
                pl.BlockSpec((Wb, N, C), lambda w: (w, 0, 0)),
                pl.BlockSpec((N, C), lambda w: (0, 0)),
                pl.BlockSpec((1, C), lambda w: (0, 0)),
                pl.BlockSpec((1, C), lambda w: (0, 0)),
                pl.BlockSpec((C, 3 * C), lambda w: (0, 0)),
                pl.BlockSpec((1, 3 * C), lambda w: (0, 0)),
                pl.BlockSpec((C, C), lambda w: (0, 0)),
                pl.BlockSpec((1, C), lambda w: (0, 0)),
            ],
            out_specs=pl.BlockSpec((Wb, N, C), lambda w: (w, 0, 0)),
        ),
        compiler_params=pltpu.CompilerParams(
            dimension_semantics=("parallel",),
            vmem_limit_bytes=_vmem_budget_bytes()),
    )(
        x_windows,
        params["pos"].reshape(N, C),
        params["gamma1"].reshape(1, C), params["beta1"].reshape(1, C),
        params["Wqkv"], params["bqkv"].reshape(1, 3 * C),
        params["Wproj"], params["bproj"].reshape(1, C),
    )


# --------------------------------------------------------------------------
# Kernel 3: fused norm2 + MLP(GELU exact) + residual  (input already includes
#           the first residual: x1 = shortcut + attn_out)
# --------------------------------------------------------------------------
def _erf(x):
    # Abramowitz & Stegun 7.1.26 rational approximation (max abs err ~1.5e-7).
    # Kept instead of lax.erf for guaranteed Mosaic lowering; exp rides the EUP.
    a1, a2, a3, a4, a5 = 0.254829592, -0.284496736, 1.421413741, -1.453152027, 1.061405429
    p = 0.3275911
    s = jnp.sign(x)
    ax = jnp.abs(x)
    t = 1.0 / (1.0 + p * ax)
    y = 1.0 - (((((a5 * t + a4) * t) + a3) * t + a2) * t + a1) * t * jnp.exp(-ax * ax)
    return s * y


def mlp_block_kernel(x_ref, g2_ref, b2_ref, w1_ref, b1_ref, w2_ref, b2lin_ref, o_ref):
    dt = x_ref.dtype
    x = x_ref[...].astype(jnp.float32)          # x1 = shortcut + attn (pre-fused)
    # norm2 (f32 statistics)
    mu = jnp.mean(x, axis=-1, keepdims=True)
    xc = x - mu
    var = jnp.mean(xc * xc, axis=-1, keepdims=True)
    xn = xc * lax.rsqrt(var + EPS) * g2_ref[...] + b2_ref[...]
    # MLP: fc1 -> GELU(exact) -> fc2, native-dtype operands, f32 accumulation.
    h = jnp.dot(xn.astype(dt), w1_ref[...],
                preferred_element_type=jnp.float32) + b1_ref[...]
    h = 0.5 * h * (1.0 + _erf(h * (1.0 / math.sqrt(2.0))))
    y = jnp.dot(h.astype(dt), w2_ref[...],
                preferred_element_type=jnp.float32) + b2lin_ref[...]
    o_ref[...] = (x + y).astype(o_ref.dtype)


def mlp_residual(x1_2d, params):
    R, C = x1_2d.shape
    Hd = params["W1"].shape[1]
    budget = _vmem_budget_bytes()
    cap = _mlp_row_cap(C, Hd, x1_2d.dtype.itemsize, budget)
    tile_rows = _choose_row_tile(R, cap=cap)
    assert R % tile_rows == 0
    return pl.pallas_call(
        mlp_block_kernel,
        out_shape=jax.ShapeDtypeStruct((R, C), x1_2d.dtype),
        grid_spec=pltpu.PrefetchScalarGridSpec(
            num_scalar_prefetch=0,
            grid=(R // tile_rows,),
            in_specs=[
                pl.BlockSpec((tile_rows, C), lambda i: (i, 0)),
                pl.BlockSpec((1, C), lambda i: (0, 0)),
                pl.BlockSpec((1, C), lambda i: (0, 0)),
                pl.BlockSpec((C, Hd), lambda i: (0, 0)),
                pl.BlockSpec((1, Hd), lambda i: (0, 0)),
                pl.BlockSpec((Hd, C), lambda i: (0, 0)),
                pl.BlockSpec((1, C), lambda i: (0, 0)),
            ],
            out_specs=pl.BlockSpec((tile_rows, C), lambda i: (i, 0)),
        ),
        compiler_params=pltpu.CompilerParams(
            dimension_semantics=("parallel",),
            vmem_limit_bytes=budget),
    )(
        x1_2d,
        params["gamma2"].reshape(1, C), params["beta2"].reshape(1, C),
        params["W1"], params["b1"].reshape(1, Hd),
        params["W2"], params["b2"].reshape(1, C),
    )


# --------------------------------------------------------------------------
# Window partition / reverse (pure data movement — plain JAX glue)
# --------------------------------------------------------------------------
def window_partition(x, ws):
    B, S, H, W, C = x.shape
    x = x.reshape(B, S // ws, ws, H // ws, ws, W // ws, ws, C)
    x = jnp.transpose(x, (0, 1, 3, 5, 2, 4, 6, 7))
    return x.reshape(-1, ws, ws, ws, C)


def window_reverse(windows, ws, S, H, W):
    B = windows.shape[0] // (S * H * W // ws // ws // ws)
    x = windows.reshape(B, S // ws, H // ws, W // ws, ws, ws, ws, -1)
    x = jnp.transpose(x, (0, 1, 4, 2, 5, 3, 6, 7))
    return x.reshape(B, S, H, W, -1)


# --------------------------------------------------------------------------
# Full SwinTransformerBlock forward (shift_size=0, drop/drop_path = 0)
# --------------------------------------------------------------------------
def swin_block_forward(x, params, input_resolution, window_size, num_heads):
    B, L, C = x.shape
    S, H, W = input_resolution
    assert L == S * H * W, "input feature has wrong size"
    ws = window_size

    pad_r = (ws - W % ws) % ws
    pad_b = (ws - H % ws) % ws
    pad_g = (ws - S % ws) % ws
    needs_pad = (pad_r > 0 or pad_b > 0 or pad_g > 0)

    if needs_pad:
        # Must LayerNorm BEFORE zero-padding so padded tokens are exactly 0
        # (they then get the pos embedding and participate unmasked in the
        # softmax, matching the PyTorch order norm1 -> pad -> attention).
        xn = layernorm(x.reshape(B * L, C), params["gamma1"], params["beta1"])
        xn = xn.reshape(B, S, H, W, C)
        xn = jnp.pad(xn, ((0, 0), (0, pad_g), (0, pad_b), (0, pad_r), (0, 0)))
        _, Sp, Hp, Wp, _ = xn.shape
        x_windows = window_partition(xn, ws).reshape(-1, ws * ws * ws, C)
        attn_windows = window_attention(x_windows, params, num_heads,
                                        apply_ln=False, add_residual=False)
        attn_windows = attn_windows.reshape(-1, ws, ws, ws, C)
        shifted_x = window_reverse(attn_windows, ws, Sp, Hp, Wp)
        shifted_x = shifted_x[:, :S, :H, :W, :]
        x1 = x + shifted_x.reshape(B, L, C)          # residual in JAX (rare path)
    else:
        # Fuse norm1 AND the first residual into the attention kernel; since
        # window_reverse is a pure permutation, shortcut + attn commutes.
        xn = x.reshape(B, S, H, W, C)
        x_windows = window_partition(xn, ws).reshape(-1, ws * ws * ws, C)
        attn_windows = window_attention(x_windows, params, num_heads,
                                        apply_ln=True, add_residual=True)
        attn_windows = attn_windows.reshape(-1, ws, ws, ws, C)
        x1 = window_reverse(attn_windows, ws, S, H, W).reshape(B, L, C)

    # x = x1 + mlp(norm2(x1))
    out = mlp_residual(x1.reshape(B * L, C), params)
    return out.reshape(B, L, C)


# --------------------------------------------------------------------------
# Pure-JAX reference (for correctness verification)
# --------------------------------------------------------------------------
def _ln_ref(x, g, b):
    mu = jnp.mean(x, -1, keepdims=True)
    var = jnp.mean((x - mu) ** 2, -1, keepdims=True)
    return (x - mu) / jnp.sqrt(var + EPS) * g + b


def ref_forward(x, p, input_resolution, ws, num_heads):
    hp = jax.lax.Precision.HIGHEST
    B, L, C = x.shape
    S, H, W = input_resolution
    shortcut = x
    xn = _ln_ref(x, p["gamma1"], p["beta1"]).reshape(B, S, H, W, C)
    xw = window_partition(xn, ws).reshape(-1, ws ** 3, C)

    hd = C // num_heads
    scale = hd ** -0.5
    xa = xw + p["pos"]
    qkv = jnp.dot(xa, p["Wqkv"], precision=hp) + p["bqkv"]
    B_, N, _ = xw.shape
    qkv = qkv.reshape(B_, N, 3, num_heads, hd).transpose(2, 0, 3, 1, 4)
    q, k, v = qkv[0] * scale, qkv[1], qkv[2]
    attn = jnp.einsum("bhnd,bhmd->bhnm", q, k, precision=hp)
    attn = jax.nn.softmax(attn, axis=-1)
    ctx = jnp.einsum("bhnm,bhmd->bhnd", attn, v, precision=hp)
    ctx = ctx.transpose(0, 2, 1, 3).reshape(B_, N, C)
    aw = jnp.dot(ctx, p["Wproj"], precision=hp) + p["bproj"]

    attn_out = window_reverse(aw.reshape(-1, ws, ws, ws, C), ws, S, H, W).reshape(B, L, C)
    x1 = shortcut + attn_out
    xn2 = _ln_ref(x1, p["gamma2"], p["beta2"])
    h = jnp.dot(xn2, p["W1"], precision=hp) + p["b1"]
    h = jax.nn.gelu(h, approximate=False)
    y = jnp.dot(h, p["W2"], precision=hp) + p["b2"]
    return x1 + y


# --------------------------------------------------------------------------
if __name__ == "__main__":
    # Small config: dim=32, heads=4, window_size=4, input_resolution=(4, 8, 8)
    B, C = 2, 32
    num_heads = 4
    ws = 4
    input_resolution = (4, 8, 8)
    S, H, W = input_resolution
    L = S * H * W
    N = ws ** 3
    mlp_hidden = int(C * 4.0)

    key = jax.random.PRNGKey(0)
    ks = jax.random.split(key, 12)
    params = {
        "gamma1": 1.0 + 0.02 * jax.random.normal(ks[0], (C,), jnp.float32),
        "beta1":  0.02 * jax.random.normal(ks[1], (C,), jnp.float32),
        "pos":    0.02 * jax.random.normal(ks[2], (1, N, C), jnp.float32),
        "Wqkv":   0.05 * jax.random.normal(ks[3], (C, 3 * C), jnp.float32),
        "bqkv":   0.02 * jax.random.normal(ks[4], (3 * C,), jnp.float32),
        "Wproj":  0.05 * jax.random.normal(ks[5], (C, C), jnp.float32),
        "bproj":  0.02 * jax.random.normal(ks[6], (C,), jnp.float32),
        "gamma2": 1.0 + 0.02 * jax.random.normal(ks[7], (C,), jnp.float32),
        "beta2":  0.02 * jax.random.normal(ks[8], (C,), jnp.float32),
        "W1":     0.05 * jax.random.normal(ks[9], (C, mlp_hidden), jnp.float32),
        "b1":     0.02 * jax.random.normal(ks[10], (mlp_hidden,), jnp.float32),
        "W2":     0.05 * jax.random.normal(ks[11], (mlp_hidden, C), jnp.float32),
        "b2":     jnp.zeros((C,), jnp.float32),
    }

    x = jax.random.normal(jax.random.PRNGKey(42), (B, L, C), jnp.float32)

    out = swin_block_forward(x, params, input_resolution, ws, num_heads)
    out = jax.block_until_ready(out)

    ref = ref_forward(x, params, input_resolution, ws, num_heads)
    assert out.shape == (B, L, C)
    assert jnp.allclose(out, ref, atol=2e-2, rtol=2e-2), (
        float(jnp.max(jnp.abs(out - ref))))

    print("KERNEL_OK")
</pallas_src>

<mosaic_0001>
module attributes {stable_mosaic.version = 11 : i64} {
  func.func @window_attn_kernel(%arg0: i32, %arg1: memref<4x64x32xf32, #tpu.memory_space<vmem>>, %arg2: memref<64x32xf32, #tpu.memory_space<vmem>>, %arg3: memref<1x32xf32, #tpu.memory_space<vmem>>, %arg4: memref<1x32xf32, #tpu.memory_space<vmem>>, %arg5: memref<32x96xf32, #tpu.memory_space<vmem>>, %arg6: memref<1x96xf32, #tpu.memory_space<vmem>>, %arg7: memref<32x32xf32, #tpu.memory_space<vmem>>, %arg8: memref<1x32xf32, #tpu.memory_space<vmem>>, %arg9: memref<4x64x32xf32, #tpu.memory_space<vmem>>) attributes {dimension_semantics = [#tpu.dimension_semantics<parallel>], iteration_bounds = array<i64: 2>, scalar_prefetch = 0 : i64, scratch_operands = 0 : i64, tpu.core_type = #tpu.core_type<tc>, window_params = [{transform_indices = @transform_0, window_bounds = array<i64: 4, 64, 32>}, {pipeline_mode = #tpu.pipeline_mode<synchronous>, transform_indices = @transform_1, window_bounds = array<i64: 64, 32>}, {pipeline_mode = #tpu.pipeline_mode<synchronous>, transform_indices = @transform_2, window_bounds = array<i64: 1, 32>}, {pipeline_mode = #tpu.pipeline_mode<synchronous>, transform_indices = @transform_3, window_bounds = array<i64: 1, 32>}, {pipeline_mode = #tpu.pipeline_mode<synchronous>, transform_indices = @transform_4, window_bounds = array<i64: 32, 96>}, {pipeline_mode = #tpu.pipeline_mode<synchronous>, transform_indices = @transform_5, window_bounds = array<i64: 1, 96>}, {pipeline_mode = #tpu.pipeline_mode<synchronous>, transform_indices = @transform_6, window_bounds = array<i64: 32, 32>}, {pipeline_mode = #tpu.pipeline_mode<synchronous>, transform_indices = @transform_7, window_bounds = array<i64: 1, 32>}, {transform_indices = @transform_8, window_bounds = array<i64: 4, 64, 32>}]} {
    %c0 = arith.constant 0 : index
    %c0_0 = arith.constant 0 : index
    %c0_1 = arith.constant 0 : index
    %0 = vector.load %arg1[%c0, %c0_0, %c0_1] : memref<4x64x32xf32, #tpu.memory_space<vmem>>, vector<4x64x32xf32>
    %cst = arith.constant dense<0.000000e+00> : vector<4x64xf32>
    %1 = vector.multi_reduction <add>, %0, %cst [2] : vector<4x64x32xf32> to vector<4x64xf32>
    %2 = vector.shape_cast %1 : vector<4x64xf32> to vector<4x64x1xf32>
    %cst_2 = arith.constant 3.200000e+01 : f32
    %3 = vector.broadcast %cst_2 : f32 to vector<4x64x1xf32>
    %4 = arith.divf %2, %3 : vector<4x64x1xf32>
    %5 = vector.broadcast %4 : vector<4x64x1xf32> to vector<4x64x32xf32>
    %6 = arith.subf %0, %5 : vector<4x64x32xf32>
    %7 = arith.mulf %6, %6 : vector<4x64x32xf32>
    %cst_3 = arith.constant dense<0.000000e+00> : vector<4x64xf32>
    %8 = vector.multi_reduction <add>, %7, %cst_3 [2] : vector<4x64x32xf32> to vector<4x64xf32>
    %9 = vector.shape_cast %8 : vector<4x64xf32> to vector<4x64x1xf32>
    %cst_4 = arith.constant 3.200000e+01 : f32
    %10 = vector.broadcast %cst_4 : f32 to vector<4x64x1xf32>
    %11 = arith.divf %9, %10 : vector<4x64x1xf32>
    %cst_5 = arith.constant 9.99999974E-6 : f32
    %12 = vector.broadcast %cst_5 : f32 to vector<4x64x1xf32>
    %13 = arith.addf %11, %12 : vector<4x64x1xf32>
    %14 = math.rsqrt %13 : vector<4x64x1xf32>
    %15 = vector.broadcast %14 : vector<4x64x1xf32> to vector<4x64x32xf32>
    %16 = arith.mulf %6, %15 : vector<4x64x32xf32>
    %c0_6 = arith.constant 0 : index
    %c0_7 = arith.constant 0 : index
    %17 = vector.load %arg3[%c0_6, %c0_7] : memref<1x32xf32, #tpu.memory_space<vmem>>, vector<1x32xf32>
    %18 = vector.shape_cast %17 : vector<1x32xf32> to vector<1x1x32xf32>
    %19 = vector.broadcast %18 : vector<1x1x32xf32> to vector<4x64x32xf32>
    %20 = arith.mulf %16, %19 : vector<4x64x32xf32>
    %c0_8 = arith.constant 0 : index
    %c0_9 = arith.constant 0 : index
    %21 = vector.load %arg4[%c0_8, %c0_9] : memref<1x32xf32, #tpu.memory_space<vmem>>, vector<1x32xf32>
    %22 = vector.shape_cast %21 : vector<1x32xf32> to vector<1x1x32xf32>
    %23 = vector.broadcast %22 : vector<1x1x32xf32> to vector<4x64x32xf32>
    %24 = arith.addf %20, %23 : vector<4x64x32xf32>
    %c0_10 = arith.constant 0 : index
    %c0_11 = arith.constant 0 : index
    %25 = vector.load %arg2[%c0_10, %c0_11] : memref<64x32xf32, #tpu.memory_space<vmem>>, vector<64x32xf32>
    %26 = vector.shape_cast %25 : vector<64x32xf32> to vector<1x64x32xf32>
    %27 = vector.broadcast %26 : vector<1x64x32xf32> to vector<4x64x32xf32>
    %28 = arith.addf %24, %27 : vector<4x64x32xf32>
    %29 = vector.shape_cast %28 : vector<4x64x32xf32> to vector<256x32xf32>
    %c0_12 = arith.constant 0 : index
    %c0_13 = arith.constant 0 : index
    %30 = vector.load %arg5[%c0_12, %c0_13] : memref<32x96xf32, #tpu.memory_space<vmem>>, vector<32x96xf32>
    %cst_14 = arith.constant dense<0.000000e+00> : vector<256x96xf32>
    %31 = tpu.matmul %29, %30, %cst_14 {dimension_numbers = #tpu.dot_dimension_numbers<[1], [0], [0], [1], [0, 0, 1, 1], [], []>} : vector<256x32xf32>, vector<32x96xf32>, vector<256x96xf32> -> vector<256x96xf32>
    %c0_15 = arith.constant 0 : index
    %c0_16 = arith.constant 0 : index
    %32 = vector.load %arg6[%c0_15, %c0_16] : memref<1x96xf32, #tpu.memory_space<vmem>>, vector<1x96xf32>
    %33 = vector.broadcast %32 : vector<1x96xf32> to vector<256x96xf32>
    %34 = arith.addf %31, %33 : vector<256x96xf32>
    %35 = vector.extract_strided_slice %34 {offsets = [0, 0], sizes = [256, 32], strides = [1, 1]} : vector<256x96xf32> to vector<256x32xf32>
    %cst_17 = arith.constant 0.353553385 : f32
    %36 = vector.broadcast %cst_17 : f32 to vector<256x32xf32>
    %37 = arith.mulf %35, %36 : vector<256x32xf32>
    %38 = vector.extract_strided_slice %34 {offsets = [0, 32], sizes = [256, 32], strides = [1, 1]} : vector<256x96xf32> to vector<256x32xf32>
    %39 = vector.extract_strided_slice %34 {offsets = [0, 64], sizes = [256, 32], strides = [1, 1]} : vector<256x96xf32> to vector<256x32xf32>
    %c0_18 = arith.constant 0 : index
    %c0_19 = arith.constant 0 : index
    %40 = vector.load %arg7[%c0_18, %c0_19] : memref<32x32xf32, #tpu.memory_space<vmem>>, vector<32x32xf32>
    %cst_20 = arith.constant 0.000000e+00 : f32
    %41 = vector.broadcast %cst_20 : f32 to vector<256x32xf32>
    %42 = vector.extract_strided_slice %37 {offsets = [0, 0], sizes = [256, 8], strides = [1, 1]} : vector<256x32xf32> to vector<256x8xf32>
    %43 = vector.shape_cast %42 : vector<256x8xf32> to vector<4x64x8xf32>
    %44 = vector.extract_strided_slice %38 {offsets = [0, 0], sizes = [256, 8], strides = [1, 1]} : vector<256x32xf32> to vector<256x8xf32>
    %45 = vector.shape_cast %44 : vector<256x8xf32> to vector<4x64x8xf32>
    %46 = vector.extract_strided_slice %39 {offsets = [0, 0], sizes = [256, 8], strides = [1, 1]} : vector<256x32xf32> to vector<256x8xf32>
    %47 = vector.shape_cast %46 : vector<256x8xf32> to vector<4x64x8xf32>
    "tpu.trace_start"() <{level = 10 : i32, message = "wqd,wkd->wqk"}> : () -> ()
    %cst_21 = arith.constant dense<0.000000e+00> : vector<4x64x64xf32>
    %48 = tpu.matmul %43, %45, %cst_21 {dimension_numbers = #tpu.dot_dimension_numbers<[2], [2], [1], [1], [0, 0, 0, 1, 1, 1], [0], [0]>} : vector<4x64x8xf32>, vector<4x64x8xf32>, vector<4x64x64xf32> -> vector<4x64x64xf32>
    "tpu.trace_stop"() : () -> ()
    %cst_22 = arith.constant dense<0xFF800000> : vector<4x64xf32>
    %49 = vector.multi_reduction <maximumf>, %48, %cst_22 [2] : vector<4x64x64xf32> to vector<4x64xf32>
    %50 = vector.shape_cast %49 : vector<4x64xf32> to vector<4x64x1xf32>
    %51 = vector.broadcast %50 : vector<4x64x1xf32> to vector<4x64x64xf32>
    %52 = arith.subf %48, %51 : vector<4x64x64xf32>
    %53 = math.exp %52 : vector<4x64x64xf32>
    %cst_23 = arith.constant dense<0.000000e+00> : vector<4x64xf32>
    %54 = vector.multi_reduction <add>, %53, %cst_23 [2] : vector<4x64x64xf32> to vector<4x64xf32>
    %55 = vector.shape_cast %54 : vector<4x64xf32> to vector<4x64x1xf32>
    %56 = tpu.reciprocal %55 {approx = true} : vector<4x64x1xf32> -> vector<4x64x1xf32>
    %57 = vector.broadcast %56 : vector<4x64x1xf32> to vector<4x64x64xf32>
    %58 = arith.mulf %53, %57 : vector<4x64x64xf32>
    "tpu.trace_start"() <{level = 10 : i32, message = "wqk,wkd->wqd"}> : () -> ()
    %cst_24 = arith.constant dense<0.000000e+00> : vector<4x64x8xf32>
    %59 = tpu.matmul %58, %47, %cst_24 {dimension_numbers = #tpu.dot_dimension_numbers<[2], [1], [1], [2], [0, 0, 0, 1, 1, 2], [0], [0]>} : vector<4x64x64xf32>, vector<4x64x8xf32>, vector<4x64x8xf32> -> vector<4x64x8xf32>
    "tpu.trace_stop"() : () -> ()
    %60 = vector.shape_cast %59 : vector<4x64x8xf32> to vector<256x8xf32>
    %61 = vector.extract_strided_slice %40 {offsets = [0, 0], sizes = [8, 32], strides = [1, 1]} : vector<32x32xf32> to vector<8x32xf32>
    %cst_25 = arith.constant dense<0.000000e+00> : vector<256x32xf32>
    %62 = tpu.matmul %60, %61, %cst_25 {dimension_numbers = #tpu.dot_dimension_numbers<[1], [0], [0], [1], [0, 0, 1, 1], [], []>} : vector<256x8xf32>, vector<8x32xf32>, vector<256x32xf32> -> vector<256x32xf32>
    %63 = arith.addf %41, %62 : vector<256x32xf32>
    %64 = vector.extract_strided_slice %37 {offsets = [0, 8], sizes = [256, 8], strides = [1, 1]} : vector<256x32xf32> to vector<256x8xf32>
    %65 = vector.shape_cast %64 : vector<256x8xf32> to vector<4x64x8xf32>
    %66 = vector.extract_strided_slice %38 {offsets = [0, 8], sizes = [256, 8], strides = [1, 1]} : vector<256x32xf32> to vector<256x8xf32>
    %67 = vector.shape_cast %66 : vector<256x8xf32> to vector<4x64x8xf32>
    %68 = vector.extract_strided_slice %39 {offsets = [0, 8], sizes = [256, 8], strides = [1, 1]} : vector<256x32xf32> to vector<256x8xf32>
    %69 = vector.shape_cast %68 : vector<256x8xf32> to vector<4x64x8xf32>
    "tpu.trace_start"() <{level = 10 : i32, message = "wqd,wkd->wqk"}> : () -> ()
    %cst_26 = arith.constant dense<0.000000e+00> : vector<4x64x64xf32>
    %70 = tpu.matmul %65, %67, %cst_26 {dimension_numbers = #tpu.dot_dimension_numbers<[2], [2], [1], [1], [0, 0, 0, 1, 1, 1], [0], [0]>} : vector<4x64x8xf32>, vector<4x64x8xf32>, vector<4x64x64xf32> -> vector<4x64x64xf32>
    "tpu.trace_stop"() : () -> ()
    %cst_27 = arith.constant dense<0xFF800000> : vector<4x64xf32>
    %71 = vector.multi_reduction <maximumf>, %70, %cst_27 [2] : vector<4x64x64xf32> to vector<4x64xf32>
    %72 = vector.shape_cast %71 : vector<4x64xf32> to vector<4x64x1xf32>
    %73 = vector.broadcast %72 : vector<4x64x1xf32> to vector<4x64x64xf32>
    %74 = arith.subf %70, %73 : vector<4x64x64xf32>
    %75 = math.exp %74 : vector<4x64x64xf32>
    %cst_28 = arith.constant dense<0.000000e+00> : vector<4x64xf32>
    %76 = vector.multi_reduction <add>, %75, %cst_28 [2] : vector<4x64x64xf32> to vector<4x64xf32>
    %77 = vector.shape_cast %76 : vector<4x64xf32> to vector<4x64x1xf32>
    %78 = tpu.reciprocal %77 {approx = true} : vector<4x64x1xf32> -> vector<4x64x1xf32>
    %79 = vector.broadcast %78 : vector<4x64x1xf32> to vector<4x64x64xf32>
    %80 = arith.mulf %75, %79 : vector<4x64x64xf32>
    "tpu.trace_start"() <{level = 10 : i32, message = "wqk,wkd->wqd"}> : () -> ()
    %cst_29 = arith.constant dense<0.000000e+00> : vector<4x64x8xf32>
    %81 = tpu.matmul %80, %69, %cst_29 {dimension_numbers = #tpu.dot_dimension_numbers<[2], [1], [1], [2], [0, 0, 0, 1, 1, 2], [0], [0]>} : vector<4x64x64xf32>, vector<4x64x8xf32>, vector<4x64x8xf32> -> vector<4x64x8xf32>
    "tpu.trace_stop"() : () -> ()
    %82 = vector.shape_cast %81 : vector<4x64x8xf32> to vector<256x8xf32>
    %83 = vector.extract_strided_slice %40 {offsets = [8, 0], sizes = [8, 32], strides = [1, 1]} : vector<32x32xf32> to vector<8x32xf32>
    %cst_30 = arith.constant dense<0.000000e+00> : vector<256x32xf32>
    %84 = tpu.matmul %82, %83, %cst_30 {dimension_numbers = #tpu.dot_dimension_numbers<[1], [0], [0], [1], [0, 0, 1, 1], [], []>} : vector<256x8xf32>, vector<8x32xf32>, vector<256x32xf32> -> vector<256x32xf32>
    %85 = arith.addf %63, %84 : vector<256x32xf32>
    %86 = vector.extract_strided_slice %37 {offsets = [0, 16], sizes = [256, 8], strides = [1, 1]} : vector<256x32xf32> to vector<256x8xf32>
    %87 = vector.shape_cast %86 : vector<256x8xf32> to vector<4x64x8xf32>
    %88 = vector.extract_strided_slice %38 {offsets = [0, 16], sizes = [256, 8], strides = [1, 1]} : vector<256x32xf32> to vector<256x8xf32>
    %89 = vector.shape_cast %88 : vector<256x8xf32> to vector<4x64x8xf32>
    %90 = vector.extract_strided_slice %39 {offsets = [0, 16], sizes = [256, 8], strides = [1, 1]} : vector<256x32xf32> to vector<256x8xf32>
    %91 = vector.shape_cast %90 : vector<256x8xf32> to vector<4x64x8xf32>
    "tpu.trace_start"() <{level = 10 : i32, message = "wqd,wkd->wqk"}> : () -> ()
    %cst_31 = arith.constant dense<0.000000e+00> : vector<4x64x64xf32>
    %92 = tpu.matmul %87, %89, %cst_31 {dimension_numbers = #tpu.dot_dimension_numbers<[2], [2], [1], [1], [0, 0, 0, 1, 1, 1], [0], [0]>} : vector<4x64x8xf32>, vector<4x64x8xf32>, vector<4x64x64xf32> -> vector<4x64x64xf32>
    "tpu.trace_stop"() : () -> ()
    %cst_32 = arith.constant dense<0xFF800000> : vector<4x64xf32>
    %93 = vector.multi_reduction <maximumf>, %92, %cst_32 [2] : vector<4x64x64xf32> to vector<4x64xf32>
    %94 = vector.shape_cast %93 : vector<4x64xf32> to vector<4x64x1xf32>
    %95 = vector.broadcast %94 : vector<4x64x1xf32> to vector<4x64x64xf32>
    %96 = arith.subf %92, %95 : vector<4x64x64xf32>
    %97 = math.exp %96 : vector<4x64x64xf32>
    %cst_33 = arith.constant dense<0.000000e+00> : vector<4x64xf32>
    %98 = vector.multi_reduction <add>, %97, %cst_33 [2] : vector<4x64x64xf32> to vector<4x64xf32>
    %99 = vector.shape_cast %98 : vector<4x64xf32> to vector<4x64x1xf32>
    %100 = tpu.reciprocal %99 {approx = true} : vector<4x64x1xf32> -> vector<4x64x1xf32>
    %101 = vector.broadcast %100 : vector<4x64x1xf32> to vector<4x64x64xf32>
    %102 = arith.mulf %97, %101 : vector<4x64x64xf32>
    "tpu.trace_start"() <{level = 10 : i32, message = "wqk,wkd->wqd"}> : () -> ()
    %cst_34 = arith.constant dense<0.000000e+00> : vector<4x64x8xf32>
    %103 = tpu.matmul %102, %91, %cst_34 {dimension_numbers = #tpu.dot_dimension_numbers<[2], [1], [1], [2], [0, 0, 0, 1, 1, 2], [0], [0]>} : vector<4x64x64xf32>, vector<4x64x8xf32>, vector<4x64x8xf32> -> vector<4x64x8xf32>
    "tpu.trace_stop"() : () -> ()
    %104 = vector.shape_cast %103 : vector<4x64x8xf32> to vector<256x8xf32>
    %105 = vector.extract_strided_slice %40 {offsets = [16, 0], sizes = [8, 32], strides = [1, 1]} : vector<32x32xf32> to vector<8x32xf32>
    %cst_35 = arith.constant dense<0.000000e+00> : vector<256x32xf32>
    %106 = tpu.matmul %104, %105, %cst_35 {dimension_numbers = #tpu.dot_dimension_numbers<[1], [0], [0], [1], [0, 0, 1, 1], [], []>} : vector<256x8xf32>, vector<8x32xf32>, vector<256x32xf32> -> vector<256x32xf32>
    %107 = arith.addf %85, %106 : vector<256x32xf32>
    %108 = vector.extract_strided_slice %37 {offsets = [0, 24], sizes = [256, 8], strides = [1, 1]} : vector<256x32xf32> to vector<256x8xf32>
    %109 = vector.shape_cast %108 : vector<256x8xf32> to vector<4x64x8xf32>
    %110 = vector.extract_strided_slice %38 {offsets = [0, 24], sizes = [256, 8], strides = [1, 1]} : vector<256x32xf32> to vector<256x8xf32>
    %111 = vector.shape_cast %110 : vector<256x8xf32> to vector<4x64x8xf32>
    %112 = vector.extract_strided_slice %39 {offsets = [0, 24], sizes = [256, 8], strides = [1, 1]} : vector<256x32xf32> to vector<256x8xf32>
    %113 = vector.shape_cast %112 : vector<256x8xf32> to vector<4x64x8xf32>
    "tpu.trace_start"() <{level = 10 : i32, message = "wqd,wkd->wqk"}> : () -> ()
    %cst_36 = arith.constant dense<0.000000e+00> : vector<4x64x64xf32>
    %114 = tpu.matmul %109, %111, %cst_36 {dimension_numbers = #tpu.dot_dimension_numbers<[2], [2], [1], [1], [0, 0, 0, 1, 1, 1], [0], [0]>} : vector<4x64x8xf32>, vector<4x64x8xf32>, vector<4x64x64xf32> -> vector<4x64x64xf32>
    "tpu.trace_stop"() : () -> ()
    %cst_37 = arith.constant dense<0xFF800000> : vector<4x64xf32>
    %115 = vector.multi_reduction <maximumf>, %114, %cst_37 [2] : vector<4x64x64xf32> to vector<4x64xf32>
    %116 = vector.shape_cast %115 : vector<4x64xf32> to vector<4x64x1xf32>
    %117 = vector.broadcast %116 : vector<4x64x1xf32> to vector<4x64x64xf32>
    %118 = arith.subf %114, %117 : vector<4x64x64xf32>
    %119 = math.exp %118 : vector<4x64x64xf32>
    %cst_38 = arith.constant dense<0.000000e+00> : vector<4x64xf32>
    %120 = vector.multi_reduction <add>, %119, %cst_38 [2] : vector<4x64x64xf32> to vector<4x64xf32>
    %121 = vector.shape_cast %120 : vector<4x64xf32> to vector<4x64x1xf32>
    %122 = tpu.reciprocal %121 {approx = true} : vector<4x64x1xf32> -> vector<4x64x1xf32>
    %123 = vector.broadcast %122 : vector<4x64x1xf32> to vector<4x64x64xf32>
    %124 = arith.mulf %119, %123 : vector<4x64x64xf32>
    "tpu.trace_start"() <{level = 10 : i32, message = "wqk,wkd->wqd"}> : () -> ()
    %cst_39 = arith.constant dense<0.000000e+00> : vector<4x64x8xf32>
    %125 = tpu.matmul %124, %113, %cst_39 {dimension_numbers = #tpu.dot_dimension_numbers<[2], [1], [1], [2], [0, 0, 0, 1, 1, 2], [0], [0]>} : vector<4x64x64xf32>, vector<4x64x8xf32>, vector<4x64x8xf32> -> vector<4x64x8xf32>
    "tpu.trace_stop"() : () -> ()
    %126 = vector.shape_cast %125 : vector<4x64x8xf32> to vector<256x8xf32>
    %127 = vector.extract_strided_slice %40 {offsets = [24, 0], sizes = [8, 32], strides = [1, 1]} : vector<32x32xf32> to vector<8x32xf32>
    %cst_40 = arith.constant dense<0.000000e+00> : vector<256x32xf32>
    %128 = tpu.matmul %126, %127, %cst_40 {dimension_numbers = #tpu.dot_dimension_numbers<[1], [0], [0], [1], [0, 0, 1, 1], [], []>} : vector<256x8xf32>, vector<8x32xf32>, vector<256x32xf32> -> vector<256x32xf32>
    %129 = arith.addf %107, %128 : vector<256x32xf32>
    %c0_41 = arith.constant 0 : index
    %c0_42 = arith.constant 0 : index
    %130 = vector.load %arg8[%c0_41, %c0_42] : memref<1x32xf32, #tpu.memory_space<vmem>>, vector<1x32xf32>
    %131 = vector.broadcast %130 : vector<1x32xf32> to vector<256x32xf32>
    %132 = arith.addf %129, %131 : vector<256x32xf32>
    %133 = vector.shape_cast %0 : vector<4x64x32xf32> to vector<256x32xf32>
    %134 = arith.addf %132, %133 : vector<256x32xf32>
    %135 = vector.shape_cast %134 : vector<256x32xf32> to vector<4x64x32xf32>
    %c0_43 = arith.constant 0 : index
    %c0_44 = arith.constant 0 : index
    %c0_45 = arith.constant 0 : index
    %136 = vector.load %arg9[%c0_43, %c0_44, %c0_45] : memref<4x64x32xf32, #tpu.memory_space<vmem>>, vector<4x64x32xf32>
    tpu.vector_store %arg9[%c0_43, %c0_44, %c0_45], %135 {strides = array<i32>} : memref<4x64x32xf32, #tpu.memory_space<vmem>>, vector<4x64x32xf32>,
    return
  }
  func.func @transform_0(%arg0: i32) -> (i32, i32, i32) {
    %c0_i32 = arith.constant 0 : i32
    %c0_i32_0 = arith.constant 0 : i32
    %c0_i32_1 = arith.constant 0 : i32
    return %arg0, %c0_i32, %c0_i32_0 : i32, i32, i32
  }
  func.func @transform_1(%arg0: i32) -> (i32, i32) {
    %c0_i32 = arith.constant 0 : i32
    %c0_i32_0 = arith.constant 0 : i32
    %c0_i32_1 = arith.constant 0 : i32
    return %c0_i32, %c0_i32_0 : i32, i32
  }
  func.func @transform_2(%arg0: i32) -> (i32, i32) {
    %c0_i32 = arith.constant 0 : i32
    %c0_i32_0 = arith.constant 0 : i32
    %c0_i32_1 = arith.constant 0 : i32
    return %c0_i32, %c0_i32_0 : i32, i32
  }
  func.func @transform_3(%arg0: i32) -> (i32, i32) {
    %c0_i32 = arith.constant 0 : i32
    %c0_i32_0 = arith.constant 0 : i32
    %c0_i32_1 = arith.constant 0 : i32
    return %c0_i32, %c0_i32_0 : i32, i32
  }
  func.func @transform_4(%arg0: i32) -> (i32, i32) {
    %c0_i32 = arith.constant 0 : i32
    %c0_i32_0 = arith.constant 0 : i32
    %c0_i32_1 = arith.constant 0 : i32
    return %c0_i32, %c0_i32_0 : i32, i32
  }
  func.func @transform_5(%arg0: i32) -> (i32, i32) {
    %c0_i32 = arith.constant 0 : i32
    %c0_i32_0 = arith.constant 0 : i32
    %c0_i32_1 = arith.constant 0 : i32
    return %c0_i32, %c0_i32_0 : i32, i32
  }
  func.func @transform_6(%arg0: i32) -> (i32, i32) {
    %c0_i32 = arith.constant 0 : i32
    %c0_i32_0 = arith.constant 0 : i32
    %c0_i32_1 = arith.constant 0 : i32
    return %c0_i32, %c0_i32_0 : i32, i32
  }
  func.func @transform_7(%arg0: i32) -> (i32, i32) {
    %c0_i32 = arith.constant 0 : i32
    %c0_i32_0 = arith.constant 0 : i32
    %c0_i32_1 = arith.constant 0 : i32
    return %c0_i32, %c0_i32_0 : i32, i32
  }
  func.func @transform_8(%arg0: i32) -> (i32, i32, i32) {
    %c0_i32 = arith.constant 0 : i32
    %c0_i32_0 = arith.constant 0 : i32
    %c0_i32_1 = arith.constant 0 : i32
    return %arg0, %c0_i32, %c0_i32_0 : i32, i32, i32
  }
}

</mosaic_0001>

<llo_original>
// kernel: tpu_custom_call.1
$region0: #{tpu_custom_call.1}
  #allocation0 [shape = 'u32[]', space=smem, size = 0x4, offset = 0x4, fixed_abs, tag = 'smem constant byte address 0x4 - core index']
  #allocation1 [shape = 'u32[144,128]{1,0:T(1,128)}', space=vmem, size = 0x12000, scoped, tag = 'internal scratch']
  %s0 = inlined_call_operand.hbm [shape: f32[8,64,32], index: 0, kind: input, shape index: {}]
  %s1 = inlined_call_operand.hbm [shape: f32[64,32], index: 1, kind: input, shape index: {}]
  %s2 = inlined_call_operand.hbm [shape: f32[1,32], index: 2, kind: input, shape index: {}]
  %s3 = inlined_call_operand.hbm [shape: f32[1,32], index: 3, kind: input, shape index: {}]
  %s4 = inlined_call_operand.hbm [shape: f32[32,96], index: 4, kind: input, shape index: {}]
  %s5 = inlined_call_operand.hbm [shape: f32[1,96], index: 5, kind: input, shape index: {}]
  %s6 = inlined_call_operand.hbm [shape: f32[32,32], index: 6, kind: input, shape index: {}]
  %s7 = inlined_call_operand.hbm [shape: f32[1,32], index: 7, kind: input, shape index: {}]
  %s8 = inlined_call_operand.hbm [shape: f32[8,64,32], index: 8, kind: output, shape index: {}]
  %s9 = sld [smem:[#allocation0]]
  $region97: #{tpu_custom_call.1} parent=0
    _
  %s11 = ssub.s32 1, %s9
  %s12 = scalar_select 0, %s11, %s9
  $region1: #{tpu_custom_call.1} parent=0
    #allocation2 [shape = 'u8[262144]{0}', space=vmem, size = 0x40000, scoped, tag = 'input window, operand 0']
    #allocation3 [shape = 's32[2]{0}', space=sflag, size = 0x8, scoped, tag = 'scoped memory for tpu_custom_call.1']
    #allocation4 [shape = 's32[2]{0}', space=sflag, size = 0x8, scoped, tag = 'scoped memory for tpu_custom_call.1']
    #allocation5 [shape = 'u8[32768]{0}', space=vmem, size = 0x8000, scoped, tag = 'input window, operand 1, single buffered']
    #allocation6 [shape = 's32[1]{0}', space=sflag, size = 0x4, scoped, tag = 'scoped memory for tpu_custom_call.1']
    #allocation7 [shape = 'u8[512]{0}', space=vmem, size = 0x400, scoped, tag = 'input window, operand 2, single buffered']
    #allocation8 [shape = 'u8[512]{0}', space=vmem, size = 0x400, scoped, tag = 'input window, operand 3, single buffered']
    #allocation9 [shape = 's32[1]{0}', space=sflag, size = 0x4, scoped, tag = 'scoped memory for tpu_custom_call.1']
    #allocation10 [shape = 'u8[16384]{0}', space=vmem, size = 0x4000, scoped, tag = 'input window, operand 4, single buffered']
    #allocation11 [shape = 'u8[512]{0}', space=vmem, size = 0x400, scoped, tag = 'input window, operand 5, single buffered']
    #allocation12 [shape = 's32[1]{0}', space=sflag, size = 0x4, scoped, tag = 'scoped memory for tpu_custom_call.1']
    #allocation13 [shape = 'u8[16384]{0}', space=vmem, size = 0x4000, scoped, tag = 'input window, operand 6, single buffered']
    #allocation14 [shape = 'u8[512]{0}', space=vmem, size = 0x400, scoped, tag = 'input window, operand 7, single buffered']
    #allocation15 [shape = 's32[1]{0}', space=sflag, size = 0x4, scoped, tag = 'scoped memory for tpu_custom_call.1']
    #allocation16 [shape = 'u8[262144]{0}', space=vmem, size = 0x40000, scoped, tag = 'output window, operand 0']
    %13 = vsyncpa [#allocation3], 0
    %s14 = scalar_lea.sflag [#allocation3], 1
    %15 = vsyncpa %s14, 0
    %16 = vsyncpa [#allocation6], 0
    %17 = vsyncpa [#allocation9], 0
    %18 = vsyncpa [#allocation12], 0
    %19 = vsyncpa [#allocation15], 0
    %20 = vsyncpa [#allocation4], 0
    %s21 = scalar_lea.sflag [#allocation4], 1
    %22 = vsyncpa %s21, 0
    loop: start=0, step=1, limit=4
    $region2: #{tpu_custom_call.1} parent=1 // loop_pre_header
      _
    $region3: #{tpu_custom_call.1} parent=1 // loop_header
      %s24 = sphi 0, %s28
      %p25 = scmp.ge.s32.totalorder %s24, 4
      %s34 = sphi 0, %s36
      %s37 = sphi 0, %s34
      %s38 = sphi 0, %s37
      %s54 = sphi 0, %s38
      %s58 = sphi 0, %s58
      %s60 = sphi 0, %s58
      %s61 = sphi 0, %s60
      %s75 = sphi 0, %s61
      %s79 = sphi 0, %s79
      %s81 = sphi 0, %s79
      %s82 = sphi 0, %s81
      %s96 = sphi 0, %s82
      %s100 = sphi 0, %s100
      %s102 = sphi 0, %s100
      %s103 = sphi 0, %s102
      %s117 = sphi 0, %s103
      %s121 = sphi 0, %s121
      %s123 = sphi 0, %s121
      %s124 = sphi 0, %s123
      %s138 = sphi 0, %s124
      %s142 = sphi 0, %s142
      %s144 = sphi 0, %s142
      %s145 = sphi 0, %s144
      %s159 = sphi 0, %s145
      %s163 = sphi 0, %s163
      %s165 = sphi 0, %s163
      %s166 = sphi 0, %s165
      %s180 = sphi 0, %s166
      %s184 = sphi 0, %s184
      %s186 = sphi 0, %s184
      %s187 = sphi 0, %s186
      %s201 = sphi 0, %s187
      %s207 = sphi 0, %s209
      %s210 = sphi 0, %s207
      %s211 = sphi 0, %s210
      %s227 = sphi 0, %s211
    $region4: #{tpu_custom_call.1} parent=1 // loop_header_branch
      %27 = sbr.rel (%p25) target = $region8
    $region5: #{tpu_custom_call.1} parent=1 // loop_body
      %s29 = ssub.s32 %s24, 1
      %s30 = ssub.s32 %s24, 2
      %s31 = sadd.s32 %s24, 1
      %s32 = ssub.s32 %s24, %s31
      %p33 = scmp.eq.s32.totalorder %s32, 0
      %s35 = sadd.s32 %s34, 1
      %s36 = scalar_select %p33, %s34, %s35
      %p39 = pneg %p33
      %p40 = scmp.eq.s32.totalorder %s24, 1
      %p41 = por %p39, %p40
      %p42 = scmp.ne.s32.totalorder %s34, %s37
      %p43 = scmp.eq.s32.totalorder %s24, 0
      %p44 = por %p42, %p43
      %p45 = scmp.ne.s32.totalorder %s34, %s37
      %p46 = scmp.eq.s32.totalorder %s29, 1
      %p47 = por %p45, %p46
      %p48 = scmp.ne.s32.totalorder %s37, %s38
      %p49 = scmp.eq.s32.totalorder %s29, 0
      %p50 = por %p48, %p49
      %p51 = scmp.ne.s32.totalorder %s37, %s38
      %p52 = scmp.eq.s32.totalorder %s30, 1
      %p53 = por %p51, %p52
      %p55 = scmp.ne.s32.totalorder %s38, %s54
      %p56 = scmp.eq.s32.totalorder %s30, 0
      %p57 = por %p55, %p56
      %s59 = sadd.s32 %s58, 1
      %p62 = scmp.eq.s32.totalorder %s24, 1
      %p63 = scmp.ne.s32.totalorder %s58, %s60
      %p64 = scmp.eq.s32.totalorder %s24, 0
      %p65 = por %p63, %p64
      %p66 = scmp.ne.s32.totalorder %s58, %s60
      %p67 = scmp.eq.s32.totalorder %s29, 1
      %p68 = por %p66, %p67
      %p69 = scmp.ne.s32.totalorder %s60, %s61
      %p70 = scmp.eq.s32.totalorder %s29, 0
      %p71 = por %p69, %p70
      %p72 = scmp.ne.s32.totalorder %s60, %s61
      %p73 = scmp.eq.s32.totalorder %s30, 1
      %p74 = por %p72, %p73
      %p76 = scmp.ne.s32.totalorder %s61, %s75
      %p77 = scmp.eq.s32.totalorder %s30, 0
      %p78 = por %p76, %p77
      %s80 = sadd.s32 %s79, 1
      %p83 = scmp.eq.s32.totalorder %s24, 1
      %p84 = scmp.ne.s32.totalorder %s79, %s81
      %p85 = scmp.eq.s32.totalorder %s24, 0
      %p86 = por %p84, %p85
      %p87 = scmp.ne.s32.totalorder %s79, %s81
      %p88 = scmp.eq.s32.totalorder %s29, 1
      %p89 = por %p87, %p88
      %p90 = scmp.ne.s32.totalorder %s81, %s82
      %p91 = scmp.eq.s32.totalorder %s29, 0
      %p92 = por %p90, %p91
      %p93 = scmp.ne.s32.totalorder %s81, %s82
      %p94 = scmp.eq.s32.totalorder %s30, 1
      %p95 = por %p93, %p94
      %p97 = scmp.ne.s32.totalorder %s82, %s96
      %p98 = scmp.eq.s32.totalorder %s30, 0
      %p99 = por %p97, %p98
      %s101 = sadd.s32 %s100, 1
      %p104 = scmp.eq.s32.totalorder %s24, 1
      %p105 = scmp.ne.s32.totalorder %s100, %s102
      %p106 = scmp.eq.s32.totalorder %s24, 0
      %p107 = por %p105, %p106
      %p108 = scmp.ne.s32.totalorder %s100, %s102
      %p109 = scmp.eq.s32.totalorder %s29, 1
      %p110 = por %p108, %p109
      %p111 = scmp.ne.s32.totalorder %s102, %s103
      %p112 = scmp.eq.s32.totalorder %s29, 0
      %p113 = por %p111, %p112
      %p114 = scmp.ne.s32.totalorder %s102, %s103
      %p115 = scmp.eq.s32.totalorder %s30, 1
      %p116 = por %p114, %p115
      %p118 = scmp.ne.s32.totalorder %s103, %s117
      %p119 = scmp.eq.s32.totalorder %s30, 0
      %p120 = por %p118, %p119
      %s122 = sadd.s32 %s121, 1
      %p125 = scmp.eq.s32.totalorder %s24, 1
      %p126 = scmp.ne.s32.totalorder %s121, %s123
      %p127 = scmp.eq.s32.totalorder %s24, 0
      %p128 = por %p126, %p127
      %p129 = scmp.ne.s32.totalorder %s121, %s123
      %p130 = scmp.eq.s32.totalorder %s29, 1
      %p131 = por %p129, %p130
      %p132 = scmp.ne.s32.totalorder %s123, %s124
      %p133 = scmp.eq.s32.totalorder %s29, 0
      %p134 = por %p132, %p133
      %p135 = scmp.ne.s32.totalorder %s123, %s124
      %p136 = scmp.eq.s32.totalorder %s30, 1
      %p137 = por %p135, %p136
      %p139 = scmp.ne.s32.totalorder %s124, %s138
      %p140 = scmp.eq.s32.totalorder %s30, 0
      %p141 = por %p139, %p140
      %s143 = sadd.s32 %s142, 1
      %p146 = scmp.eq.s32.totalorder %s24, 1
      %p147 = scmp.ne.s32.totalorder %s142, %s144
      %p148 = scmp.eq.s32.totalorder %s24, 0
      %p149 = por %p147, %p148
      %p150 = scmp.ne.s32.totalorder %s142, %s144
      %p151 = scmp.eq.s32.totalorder %s29, 1
      %p152 = por %p150, %p151
      %p153 = scmp.ne.s32.totalorder %s144, %s145
      %p154 = scmp.eq.s32.totalorder %s29, 0
      %p155 = por %p153, %p154
      %p156 = scmp.ne.s32.totalorder %s144, %s145
      %p157 = scmp.eq.s32.totalorder %s30, 1
      %p158 = por %p156, %p157
      %p160 = scmp.ne.s32.totalorder %s145, %s159
      %p161 = scmp.eq.s32.totalorder %s30, 0
      %p162 = por %p160, %p161
      %s164 = sadd.s32 %s163, 1
      %p167 = scmp.eq.s32.totalorder %s24, 1
      %p168 = scmp.ne.s32.totalorder %s163, %s165
      %p169 = scmp.eq.s32.totalorder %s24, 0
      %p170 = por %p168, %p169
      %p171 = scmp.ne.s32.totalorder %s163, %s165
      %p172 = scmp.eq.s32.totalorder %s29, 1
      %p173 = por %p171, %p172
      %p174 = scmp.ne.s32.totalorder %s165, %s166
      %p175 = scmp.eq.s32.totalorder %s29, 0
      %p176 = por %p174, %p175
      %p177 = scmp.ne.s32.totalorder %s165, %s166
      %p178 = scmp.eq.s32.totalorder %s30, 1
      %p179 = por %p177, %p178
      %p181 = scmp.ne.s32.totalorder %s166, %s180
      %p182 = scmp.eq.s32.totalorder %s30, 0
      %p183 = por %p181, %p182
      %s185 = sadd.s32 %s184, 1
      %p188 = scmp.eq.s32.totalorder %s24, 1
      %p189 = scmp.ne.s32.totalorder %s184, %s186
      %p190 = scmp.eq.s32.totalorder %s24, 0
      %p191 = por %p189, %p190
      %p192 = scmp.ne.s32.totalorder %s184, %s186
      %p193 = scmp.eq.s32.totalorder %s29, 1
      %p194 = por %p192, %p193
      %p195 = scmp.ne.s32.totalorder %s186, %s187
      %p196 = scmp.eq.s32.totalorder %s29, 0
      %p197 = por %p195, %p196
      %p198 = scmp.ne.s32.totalorder %s186, %s187
      %p199 = scmp.eq.s32.totalorder %s30, 1
      %p200 = por %p198, %p199
      %p202 = scmp.ne.s32.totalorder %s187, %s201
      %p203 = scmp.eq.s32.totalorder %s30, 0
      %p204 = por %p202, %p203
      %s205 = ssub.s32 %s24, %s31
      %p206 = scmp.eq.s32.totalorder %s205, 0
      %s208 = sadd.s32 %s207, 1
      %s209 = scalar_select %p206, %s207, %s208
      %p212 = pneg %p206
      %p213 = scmp.eq.s32.totalorder %s24, 1
      %p214 = por %p212, %p213
      %p215 = scmp.ne.s32.totalorder %s207, %s210
      %p216 = scmp.eq.s32.totalorder %s24, 0
      %p217 = por %p215, %p216
      %p218 = scmp.ne.s32.totalorder %s207, %s210
      %p219 = scmp.eq.s32.totalorder %s29, 1
      %p220 = por %p218, %p219
      %p221 = scmp.ne.s32.totalorder %s210, %s211
      %p222 = scmp.eq.s32.totalorder %s29, 0
      %p223 = por %p221, %p222
      %p224 = scmp.ne.s32.totalorder %s210, %s211
      %p225 = scmp.eq.s32.totalorder %s30, 1
      %p226 = por %p224, %p225
      %p228 = scmp.ne.s32.totalorder %s211, %s227
      %p229 = scmp.eq.s32.totalorder %s30, 0
      %p230 = por %p228, %p229
      %p231 = scmp.le.s32.totalorder 1, %s24
      %p232 = scmp.lt.s32.totalorder %s24, 3
      %p233 = pnand %p231, %p232
      %p234 = pneg %p233
      // Predicated region
      $region9: #{tpu_custom_call.1} parent=5 // pred_check
        _
      $region10: #{tpu_custom_call.1} parent=5 // pred_check_branch
        %236 = sbr.rel (%p233) target = $region12
      $region11: #{tpu_custom_call.1} parent=5 // pred_region
        %s237 = ssub.s32 %s24, 1
        // Predicated region
        $region13: #{tpu_custom_call.1} parent=11 // pred_check
          %p238 = pneg %p71
        $region14: #{tpu_custom_call.1} parent=11 // pred_check_branch
          %240 = sbr.rel (%p238) target = $region16
        $region15: #{tpu_custom_call.1} parent=11 // pred_region
          %s242 = ssub.s32 1024, 1024
          %243 = vsyncadd [#allocation6], %s242
          %s244 = sshll.u32 [#allocation5], 4
          %s245 = int_to_ptr.vmem [resolvable:$true] %s244
          %250 = dma.hbm_to_vmem [thread:$0]  %s1, 1024, %s245, [#allocation6], 128, 128, 8
        $region16: #{tpu_custom_call.1} parent=11 // pred_fallthru
          _
        // Predicated region
        $region17: #{tpu_custom_call.1} parent=11 // pred_check
          %p251 = pneg %p92
        $region18: #{tpu_custom_call.1} parent=11 // pred_check_branch
          %253 = sbr.rel (%p251) target = $region20
        $region19: #{tpu_custom_call.1} parent=11 // pred_region
          %s255 = ssub.s32 16, 16
          %256 = vsyncadd [#allocation6], %s255
          %s258 = sshll.u32 [#allocation7], 4
          %s259 = int_to_ptr.vmem [resolvable:$true] %s258
          %261 = dma.hbm_to_vmem [thread:$0]  %s2, 16, %s259, [#allocation6]
        $region20: #{tpu_custom_call.1} parent=11 // pred_fallthru
          _
        // Predicated region
        $region21: #{tpu_custom_call.1} parent=11 // pred_check
          %p262 = pneg %p113
        $region22: #{tpu_custom_call.1} parent=11 // pred_check_branch
          %264 = sbr.rel (%p262) target = $region24
        $region23: #{tpu_custom_call.1} parent=11 // pred_region
          %s266 = ssub.s32 16, 16
          %267 = vsyncadd [#allocation9], %s266
          %s269 = sshll.u32 [#allocation8], 4
          %s270 = int_to_ptr.vmem [resolvable:$true] %s269
          %272 = dma.hbm_to_vmem [thread:$0]  %s3, 16, %s270, [#allocation9]
        $region24: #{tpu_custom_call.1} parent=11 // pred_fallthru
          _
        // Predicated region
        $region25: #{tpu_custom_call.1} parent=11 // pred_check
          %p273 = pneg %p134
        $region26: #{tpu_custom_call.1} parent=11 // pred_check_branch
          %275 = sbr.rel (%p273) target = $region28
        $region27: #{tpu_custom_call.1} parent=11 // pred_region
          %s277 = ssub.s32 512, 512
          %278 = vsyncadd [#allocation9], %s277
          %s279 = sshll.u32 [#allocation10], 4
          %s280 = int_to_ptr.vmem [resolvable:$true] %s279
          %285 = dma.hbm_to_vmem [thread:$0]  %s4, 512, %s280, [#allocation9], 128, 128, 8
        $region28: #{tpu_custom_call.1} parent=11 // pred_fallthru
          _
        // Predicated region
        $region29: #{tpu_custom_call.1} parent=11 // pred_check
          %p286 = pneg %p155
        $region30: #{tpu_custom_call.1} parent=11 // pred_check_branch
          %288 = sbr.rel (%p286) target = $region32
        $region31: #{tpu_custom_call.1} parent=11 // pred_region
          %s290 = ssub.s32 16, 16
          %291 = vsyncadd [#allocation12], %s290
          %s293 = sshll.u32 [#allocation11], 4
          %s294 = int_to_ptr.vmem [resolvable:$true] %s293
          %296 = dma.hbm_to_vmem [thread:$0]  %s5, 16, %s294, [#allocation12]
        $region32: #{tpu_custom_call.1} parent=11 // pred_fallthru
          _
        // Predicated region
        $region33: #{tpu_custom_call.1} parent=11 // pred_check
          %p297 = pneg %p176
        $region34: #{tpu_custom_call.1} parent=11 // pred_check_branch
          %299 = sbr.rel (%p297) target = $region36
        $region35: #{tpu_custom_call.1} parent=11 // pred_region
          %s301 = ssub.s32 512, 512
          %302 = vsyncadd [#allocation12], %s301
          %s303 = sshll.u32 [#allocation13], 4
          %s304 = int_to_ptr.vmem [resolvable:$true] %s303
          %309 = dma.hbm_to_vmem [thread:$0]  %s6, 512, %s304, [#allocation12], 128, 128, 8
        $region36: #{tpu_custom_call.1} parent=11 // pred_fallthru
          _
        // Predicated region
        $region37: #{tpu_custom_call.1} parent=11 // pred_check
          %p310 = pneg %p197
        $region38: #{tpu_custom_call.1} parent=11 // pred_check_branch
          %312 = sbr.rel (%p310) target = $region40
        $region39: #{tpu_custom_call.1} parent=11 // pred_region
          %s314 = ssub.s32 16, 16
          %315 = vsyncadd [#allocation15], %s314
          %s317 = sshll.u32 [#allocation14], 4
          %s318 = int_to_ptr.vmem [resolvable:$true] %s317
          %320 = dma.hbm_to_vmem [thread:$0]  %s7, 16, %s318, [#allocation15]
        $region40: #{tpu_custom_call.1} parent=11 // pred_fallthru
          _
      $region12: #{tpu_custom_call.1} parent=5 // pred_fallthru
        _
      %p321 = scmp.lt.s32.totalorder %s24, 2
      // Predicated region
      $region41: #{tpu_custom_call.1} parent=5 // pred_check
        %p322 = pneg %p321
      $region42: #{tpu_custom_call.1} parent=5 // pred_check_branch
        %324 = sbr.rel (%p322) target = $region44
      $region43: #{tpu_custom_call.1} parent=5 // pred_region
        // Predicated region
        $region45: #{tpu_custom_call.1} parent=43 // pred_check
          %p325 = pneg %p44
        $region46: #{tpu_custom_call.1} parent=43 // pred_check_branch
          %327 = sbr.rel (%p325) target = $region48
        $region47: #{tpu_custom_call.1} parent=43 // pred_region
          %s328 = sand.u32 %s34, 1
          %s329 = scalar_lea.sflag [#allocation3], %s328
          %s330 = sand.u32 %s34, 1
          %s331 = smul.addr %s330, 256
          %s332 = scalar_lea.vmem [#allocation2], %s331
          %s333 = smul.u32 4, %s24
          %s335 = ssub.s32 4096, 4096
          %336 = vsyncadd %s329, %s335
          %s337 = smul.addr %s333, 8
          %s338 = smul.addr %s337, 128
          %s339 = scalar_lea.hbm %s0, %s338
          %s340 = sshll.u32 %s332, 4
          %s341 = int_to_ptr.vmem [resolvable:$true] %s340
          %346 = dma.hbm_to_vmem [thread:$0]  %s339, 4096, %s341, %s329, 128, 128, 8
        $region48: #{tpu_custom_call.1} parent=43 // pred_fallthru
          _
      $region44: #{tpu_custom_call.1} parent=5 // pred_fallthru
        _
      %p347 = scmp.le.s32.totalorder 1, %s24
      %p348 = scmp.lt.s32.totalorder %s24, 3
      %p349 = pnand %p347, %p348
      %p350 = pneg %p349
      // Predicated region
      $region49: #{tpu_custom_call.1} parent=5 // pred_check
        _
      $region50: #{tpu_custom_call.1} parent=5 // pred_check_branch
        %352 = sbr.rel (%p349) target = $region52
      $region51: #{tpu_custom_call.1} parent=5 // pred_region
        %s353 = ssub.s32 %s24, 1
        %s354 = sand.u32 %s37, 1
        %s355 = scalar_lea.sflag [#allocation3], %s354
        %s356 = sand.u32 %s37, 1
        %s357 = smul.addr %s356, 256
        %s358 = scalar_lea.vmem [#allocation2], %s357
        // Predicated region
        $region53: #{tpu_custom_call.1} parent=51 // pred_check
          %p359 = pneg %p50
        $region54: #{tpu_custom_call.1} parent=51 // pred_check_branch
          %361 = sbr.rel (%p359) target = $region56
        $region55: #{tpu_custom_call.1} parent=51 // pred_region
          %362 = dma.done %s355, 4096
        $region56: #{tpu_custom_call.1} parent=51 // pred_fallthru
          _
        // Predicated region
        $region57: #{tpu_custom_call.1} parent=51 // pred_check
          %p363 = pneg %p71
        $region58: #{tpu_custom_call.1} parent=51 // pred_check_branch
          %365 = sbr.rel (%p363) target = $region60
        $region59: #{tpu_custom_call.1} parent=51 // pred_region
          %366 = dma.done [#allocation6], 1024
        $region60: #{tpu_custom_call.1} parent=51 // pred_fallthru
          _
        // Predicated region
        $region61: #{tpu_custom_call.1} parent=51 // pred_check
          %p367 = pneg %p92
        $region62: #{tpu_custom_call.1} parent=51 // pred_check_branch
          %369 = sbr.rel (%p367) target = $region64
        $region63: #{tpu_custom_call.1} parent=51 // pred_region
          %370 = dma.done [#allocation6], 16
        $region64: #{tpu_custom_call.1} parent=51 // pred_fallthru
          _
        // Predicated region
        $region65: #{tpu_custom_call.1} parent=51 // pred_check
          %p371 = pneg %p113
        $region66: #{tpu_custom_call.1} parent=51 // pred_check_branch
          %373 = sbr.rel (%p371) target = $region68
        $region67: #{tpu_custom_call.1} parent=51 // pred_region
          %374 = dma.done [#allocation9], 16
        $region68: #{tpu_custom_call.1} parent=51 // pred_fallthru
          _
        // Predicated region
        $region69: #{tpu_custom_call.1} parent=51 // pred_check
          %p375 = pneg %p134
        $region70: #{tpu_custom_call.1} parent=51 // pred_check_branch
          %377 = sbr.rel (%p375) target = $region72
        $region71: #{tpu_custom_call.1} parent=51 // pred_region
          %378 = dma.done [#allocation9], 512
        $region72: #{tpu_custom_call.1} parent=51 // pred_fallthru
          _
        // Predicated region
        $region73: #{tpu_custom_call.1} parent=51 // pred_check
          %p379 = pneg %p155
        $region74: #{tpu_custom_call.1} parent=51 // pred_check_branch
          %381 = sbr.rel (%p379) target = $region76
        $region75: #{tpu_custom_call.1} parent=51 // pred_region
          %382 = dma.done [#allocation12], 16
        $region76: #{tpu_custom_call.1} parent=51 // pred_fallthru
          _
        // Predicated region
        $region77: #{tpu_custom_call.1} parent=51 // pred_check
          %p383 = pneg %p176
        $region78: #{tpu_custom_call.1} parent=51 // pred_check_branch
          %385 = sbr.rel (%p383) target = $region80
        $region79: #{tpu_custom_call.1} parent=51 // pred_region
          %386 = dma.done [#allocation12], 512
        $region80: #{tpu_custom_call.1} parent=51 // pred_fallthru
          _
        // Predicated region
        $region81: #{tpu_custom_call.1} parent=51 // pred_check
          %p387 = pneg %p197
        $region82: #{tpu_custom_call.1} parent=51 // pred_check_branch
          %389 = sbr.rel (%p387) target = $region84
        $region83: #{tpu_custom_call.1} parent=51 // pred_region
          %390 = dma.done [#allocation15], 16
        $region84: #{tpu_custom_call.1} parent=51 // pred_fallthru
          _
        %s391 = sand.u32 %s37, 1
        %s392 = scalar_lea.sflag [#allocation3], %s391
        %s393 = sand.u32 %s37, 1
        %s394 = smul.addr %s393, 256
        %s395 = scalar_lea.vmem [#allocation2], %s394
        %p396 = pneg %p50
        %p397 = pneg %p47
        %p398 = pneg %p71
        %p399 = pneg %p68
        %p400 = pneg %p92
        %p401 = pneg %p89
        %p402 = pneg %p113
        %p403 = pneg %p110
        %p404 = pneg %p134
        %p405 = pneg %p131
        %p406 = pneg %p155
        %p407 = pneg %p152
        %p408 = pneg %p176
        %p409 = pneg %p173
        %p410 = pneg %p197
        %p411 = pneg %p194
        %p412 = pneg %p223
        %p413 = pneg %p220
        %s414 = sand.u32 %s210, 1
        %s415 = scalar_lea.sflag [#allocation4], %s414
        %s416 = sand.u32 %s210, 1
        %s417 = smul.addr %s416, 256
        %s418 = scalar_lea.vmem [#allocation16], %s417
        %s419 = smul.u32 4, %s29
        %s420 = smul.u32 4, %s29
        %v421 = vld [vmem:[%s358] sm:$0xff]
        %v422 = vld [vmem:[%s358 + $0x8] sm:$0xff]
        %v423 = vld [vmem:[%s358 + $0x10] sm:$0xff]
        %v424 = vld [vmem:[%s358 + $0x18] sm:$0xff]
        %v425 = vld [vmem:[%s358 + $0x20] sm:$0xff]
        %v426 = vld [vmem:[%s358 + $0x28] sm:$0xff]
        %v427 = vld [vmem:[%s358 + $0x30] sm:$0xff]
        %v428 = vld [vmem:[%s358 + $0x38] sm:$0xff]
        %v429 = vld [vmem:[%s358 + $0x40] sm:$0xff]
        %v430 = vld [vmem:[%s358 + $0x48] sm:$0xff]
        %v431 = vld [vmem:[%s358 + $0x50] sm:$0xff]
        %v432 = vld [vmem:[%s358 + $0x58] sm:$0xff]
        %v433 = vld [vmem:[%s358 + $0x60] sm:$0xff]
        %v434 = vld [vmem:[%s358 + $0x68] sm:$0xff]
        %v435 = vld [vmem:[%s358 + $0x70] sm:$0xff]
        %v436 = vld [vmem:[%s358 + $0x78] sm:$0xff]
        %v437 = vld [vmem:[%s358 + $0x80] sm:$0xff]
        %v438 = vld [vmem:[%s358 + $0x88] sm:$0xff]
        %v439 = vld [vmem:[%s358 + $0x90] sm:$0xff]
        %v440 = vld [vmem:[%s358 + $0x98] sm:$0xff]
        %v441 = vld [vmem:[%s358 + $0xa0] sm:$0xff]
        %v442 = vld [vmem:[%s358 + $0xa8] sm:$0xff]
        %v443 = vld [vmem:[%s358 + $0xb0] sm:$0xff]
        %v444 = vld [vmem:[%s358 + $0xb8] sm:$0xff]
        %v445 = vld [vmem:[%s358 + $0xc0] sm:$0xff]
        %v446 = vld [vmem:[%s358 + $0xc8] sm:$0xff]
        %v447 = vld [vmem:[%s358 + $0xd0] sm:$0xff]
        %v448 = vld [vmem:[%s358 + $0xd8] sm:$0xff]
        %v449 = vld [vmem:[%s358 + $0xe0] sm:$0xff]
        %v450 = vld [vmem:[%s358 + $0xe8] sm:$0xff]
        %v451 = vld [vmem:[%s358 + $0xf0] sm:$0xff]
        %v452 = vld [vmem:[%s358 + $0xf8] sm:$0xff]
        %vm453 = vcmask 261120
        %v454 = vsel %vm453, %v421, 0.0
        %455 = vadd.xlane.f32.xlu0 %v454
        %v456 = vpop.xlane.xlu0 %455
        %v457 = vsel %vm453, %v422, 0.0
        %458 = vadd.xlane.f32.xlu0 %v457
        %v459 = vpop.xlane.xlu0 %458
        %v460 = vsel %vm453, %v423, 0.0
        %461 = vadd.xlane.f32.xlu0 %v460
        %v462 = vpop.xlane.xlu0 %461
        %v463 = vsel %vm453, %v424, 0.0
        %464 = vadd.xlane.f32.xlu0 %v463
        %v465 = vpop.xlane.xlu0 %464
        %v466 = vsel %vm453, %v425, 0.0
        %467 = vadd.xlane.f32.xlu0 %v466
        %v468 = vpop.xlane.xlu0 %467
        %v469 = vsel %vm453, %v426, 0.0
        %470 = vadd.xlane.f32.xlu0 %v469
        %v471 = vpop.xlane.xlu0 %470
        %v472 = vsel %vm453, %v427, 0.0
        %473 = vadd.xlane.f32.xlu0 %v472
        %v474 = vpop.xlane.xlu0 %473
        %v475 = vsel %vm453, %v428, 0.0
        %476 = vadd.xlane.f32.xlu0 %v475
        %v477 = vpop.xlane.xlu0 %476
        %v478 = vsel %vm453, %v429, 0.0
        %479 = vadd.xlane.f32.xlu0 %v478
        %v480 = vpop.xlane.xlu0 %479
        %v481 = vsel %vm453, %v430, 0.0
        %482 = vadd.xlane.f32.xlu0 %v481
        %v483 = vpop.xlane.xlu0 %482
        %v484 = vsel %vm453, %v431, 0.0
        %485 = vadd.xlane.f32.xlu0 %v484
        %v486 = vpop.xlane.xlu0 %485
        %v487 = vsel %vm453, %v432, 0.0
        %488 = vadd.xlane.f32.xlu0 %v487
        %v489 = vpop.xlane.xlu0 %488
        %v490 = vsel %vm453, %v433, 0.0
        %491 = vadd.xlane.f32.xlu0 %v490
        %v492 = vpop.xlane.xlu0 %491
        %v493 = vsel %vm453, %v434, 0.0
        %494 = vadd.xlane.f32.xlu0 %v493
        %v495 = vpop.xlane.xlu0 %494
        %v496 = vsel %vm453, %v435, 0.0
        %497 = vadd.xlane.f32.xlu0 %v496
        %v498 = vpop.xlane.xlu0 %497
        %v499 = vsel %vm453, %v436, 0.0
        %500 = vadd.xlane.f32.xlu0 %v499
        %v501 = vpop.xlane.xlu0 %500
        %v502 = vsel %vm453, %v437, 0.0
        %503 = vadd.xlane.f32.xlu0 %v502
        %v504 = vpop.xlane.xlu0 %503
        %v505 = vsel %vm453, %v438, 0.0
        %506 = vadd.xlane.f32.xlu0 %v505
        %v507 = vpop.xlane.xlu0 %506
        %v508 = vsel %vm453, %v439, 0.0
        %509 = vadd.xlane.f32.xlu0 %v508
        %v510 = vpop.xlane.xlu0 %509
        %v511 = vsel %vm453, %v440, 0.0
        %512 = vadd.xlane.f32.xlu0 %v511
        %v513 = vpop.xlane.xlu0 %512
        %v514 = vsel %vm453, %v441, 0.0
        %515 = vadd.xlane.f32.xlu0 %v514
        %v516 = vpop.xlane.xlu0 %515
        %v517 = vsel %vm453, %v442, 0.0
        %518 = vadd.xlane.f32.xlu0 %v517
        %v519 = vpop.xlane.xlu0 %518
        %v520 = vsel %vm453, %v443, 0.0
        %521 = vadd.xlane.f32.xlu0 %v520
        %v522 = vpop.xlane.xlu0 %521
        %v523 = vsel %vm453, %v444, 0.0
        %524 = vadd.xlane.f32.xlu0 %v523
        %v525 = vpop.xlane.xlu0 %524
        %v526 = vsel %vm453, %v445, 0.0
        %527 = vadd.xlane.f32.xlu0 %v526
        %v528 = vpop.xlane.xlu0 %527
        %v529 = vsel %vm453, %v446, 0.0
        %530 = vadd.xlane.f32.xlu0 %v529
        %v531 = vpop.xlane.xlu0 %530
        %v532 = vsel %vm453, %v447, 0.0
        %533 = vadd.xlane.f32.xlu0 %v532
        %v534 = vpop.xlane.xlu0 %533
        %v535 = vsel %vm453, %v448, 0.0
        %536 = vadd.xlane.f32.xlu0 %v535
        %v537 = vpop.xlane.xlu0 %536
        %v538 = vsel %vm453, %v449, 0.0
        %539 = vadd.xlane.f32.xlu0 %v538
        %v540 = vpop.xlane.xlu0 %539
        %v541 = vsel %vm453, %v450, 0.0
        %542 = vadd.xlane.f32.xlu0 %v541
        %v543 = vpop.xlane.xlu0 %542
        %v544 = vsel %vm453, %v451, 0.0
        %545 = vadd.xlane.f32.xlu0 %v544
        %v546 = vpop.xlane.xlu0 %545
        %v547 = vsel %vm453, %v452, 0.0
        %548 = vadd.xlane.f32.xlu0 %v547
        %v549 = vpop.xlane.xlu0 %548
        %v550 = vrcp.pop 32.0
        %v551 = vmul.f32 %v456, %v550
        %v552 = vmul.f32 %v459, %v550
        %v553 = vmul.f32 %v462, %v550
        %v554 = vmul.f32 %v465, %v550
        %v555 = vmul.f32 %v468, %v550
        %v556 = vmul.f32 %v471, %v550
        %v557 = vmul.f32 %v474, %v550
        %v558 = vmul.f32 %v477, %v550
        %v559 = vmul.f32 %v480, %v550
        %v560 = vmul.f32 %v483, %v550
        %v561 = vmul.f32 %v486, %v550
        %v562 = vmul.f32 %v489, %v550
        %v563 = vmul.f32 %v492, %v550
        %v564 = vmul.f32 %v495, %v550
        %v565 = vmul.f32 %v498, %v550
        %v566 = vmul.f32 %v501, %v550
        %v567 = vmul.f32 %v504, %v550
        %v568 = vmul.f32 %v507, %v550
        %v569 = vmul.f32 %v510, %v550
        %v570 = vmul.f32 %v513, %v550
        %v571 = vmul.f32 %v516, %v550
        %v572 = vmul.f32 %v519, %v550
        %v573 = vmul.f32 %v522, %v550
        %v574 = vmul.f32 %v525, %v550
        %v575 = vmul.f32 %v528, %v550
        %v576 = vmul.f32 %v531, %v550
        %v577 = vmul.f32 %v534, %v550
        %v578 = vmul.f32 %v537, %v550
        %v579 = vmul.f32 %v540, %v550
        %v580 = vmul.f32 %v543, %v550
        %v581 = vmul.f32 %v546, %v550
        %v582 = vmul.f32 %v549, %v550
        %v583 = vsub.f32 %v421, %v551
        %v584 = vsub.f32 %v422, %v552
        %v585 = vsub.f32 %v423, %v553
        %v586 = vsub.f32 %v424, %v554
        %v587 = vsub.f32 %v425, %v555
        %v588 = vsub.f32 %v426, %v556
        %v589 = vsub.f32 %v427, %v557
        %v590 = vsub.f32 %v428, %v558
        %v591 = vsub.f32 %v429, %v559
        %v592 = vsub.f32 %v430, %v560
        %v593 = vsub.f32 %v431, %v561
        %v594 = vsub.f32 %v432, %v562
        %v595 = vsub.f32 %v433, %v563
        %v596 = vsub.f32 %v434, %v564
        %v597 = vsub.f32 %v435, %v565
        %v598 = vsub.f32 %v436, %v566
        %v599 = vsub.f32 %v437, %v567
        %v600 = vsub.f32 %v438, %v568
        %v601 = vsub.f32 %v439, %v569
        %v602 = vsub.f32 %v440, %v570
        %v603 = vsub.f32 %v441, %v571
        %v604 = vsub.f32 %v442, %v572
        %v605 = vsub.f32 %v443, %v573
        %v606 = vsub.f32 %v444, %v574
        %v607 = vsub.f32 %v445, %v575
        %v608 = vsub.f32 %v446, %v576
        %v609 = vsub.f32 %v447, %v577
        %v610 = vsub.f32 %v448, %v578
        %v611 = vsub.f32 %v449, %v579
        %v612 = vsub.f32 %v450, %v580
        %v613 = vsub.f32 %v451, %v581
        %v614 = vsub.f32 %v452, %v582
        %v615 = vmul.f32 %v583, %v583
        %v616 = vmul.f32 %v584, %v584
        %v617 = vmul.f32 %v585, %v585
        %v618 = vmul.f32 %v586, %v586
        %v619 = vmul.f32 %v587, %v587
        %v620 = vmul.f32 %v588, %v588
        %v621 = vmul.f32 %v589, %v589
        %v622 = vmul.f32 %v590, %v590
        %v623 = vmul.f32 %v591, %v591
        %v624 = vmul.f32 %v592, %v592
        %v625 = vmul.f32 %v593, %v593
        %v626 = vmul.f32 %v594, %v594
        %v627 = vmul.f32 %v595, %v595
        %v628 = vmul.f32 %v596, %v596
        %v629 = vmul.f32 %v597, %v597
        %v630 = vmul.f32 %v598, %v598
        %v631 = vmul.f32 %v599, %v599
        %v632 = vmul.f32 %v600, %v600
        %v633 = vmul.f32 %v601, %v601
        %v634 = vmul.f32 %v602, %v602
        %v635 = vmul.f32 %v603, %v603
        %v636 = vmul.f32 %v604, %v604
        %v637 = vmul.f32 %v605, %v605
        %v638 = vmul.f32 %v606, %v606
        %v639 = vmul.f32 %v607, %v607
        %v640 = vmul.f32 %v608, %v608
        %v641 = vmul.f32 %v609, %v609
        %v642 = vmul.f32 %v610, %v610
        %v643 = vmul.f32 %v611, %v611
        %v644 = vmul.f32 %v612, %v612
        %v645 = vmul.f32 %v613, %v613
        %v646 = vmul.f32 %v614, %v614
        %v647 = vsel %vm453, %v615, 0.0
        %648 = vadd.xlane.f32.xlu0 %v647
        %v649 = vpop.xlane.xlu0 %648
        %v650 = vsel %vm453, %v616, 0.0
        %651 = vadd.xlane.f32.xlu0 %v650
        %v652 = vpop.xlane.xlu0 %651
        %v653 = vsel %vm453, %v617, 0.0
        %654 = vadd.xlane.f32.xlu0 %v653
        %v655 = vpop.xlane.xlu0 %654
        %v656 = vsel %vm453, %v618, 0.0
        %657 = vadd.xlane.f32.xlu0 %v656
        %v658 = vpop.xlane.xlu0 %657
        %v659 = vsel %vm453, %v619, 0.0
        %660 = vadd.xlane.f32.xlu0 %v659
        %v661 = vpop.xlane.xlu0 %660
        %v662 = vsel %vm453, %v620, 0.0
        %663 = vadd.xlane.f32.xlu0 %v662
        %v664 = vpop.xlane.xlu0 %663
        %v665 = vsel %vm453, %v621, 0.0
        %666 = vadd.xlane.f32.xlu0 %v665
        %v667 = vpop.xlane.xlu0 %666
        %v668 = vsel %vm453, %v622, 0.0
        %669 = vadd.xlane.f32.xlu0 %v668
        %v670 = vpop.xlane.xlu0 %669
        %v671 = vsel %vm453, %v623, 0.0
        %672 = vadd.xlane.f32.xlu0 %v671
        %v673 = vpop.xlane.xlu0 %672
        %v674 = vsel %vm453, %v624, 0.0
        %675 = vadd.xlane.f32.xlu0 %v674
        %v676 = vpop.xlane.xlu0 %675
        %v677 = vsel %vm453, %v625, 0.0
        %678 = vadd.xlane.f32.xlu0 %v677
        %v679 = vpop.xlane.xlu0 %678
        %v680 = vsel %vm453, %v626, 0.0
        %681 = vadd.xlane.f32.xlu0 %v680
        %v682 = vpop.xlane.xlu0 %681
        %v683 = vsel %vm453, %v627, 0.0
        %684 = vadd.xlane.f32.xlu0 %v683
        %v685 = vpop.xlane.xlu0 %684
        %v686 = vsel %vm453, %v628, 0.0
        %687 = vadd.xlane.f32.xlu0 %v686
        %v688 = vpop.xlane.xlu0 %687
        %v689 = vsel %vm453, %v629, 0.0
        %690 = vadd.xlane.f32.xlu0 %v689
        %v691 = vpop.xlane.xlu0 %690
        %v692 = vsel %vm453, %v630, 0.0
        %693 = vadd.xlane.f32.xlu0 %v692
        %v694 = vpop.xlane.xlu0 %693
        %v695 = vsel %vm453, %v631, 0.0
        %696 = vadd.xlane.f32.xlu0 %v695
        %v697 = vpop.xlane.xlu0 %696
        %v698 = vsel %vm453, %v632, 0.0
        %699 = vadd.xlane.f32.xlu0 %v698
        %v700 = vpop.xlane.xlu0 %699
        %v701 = vsel %vm453, %v633, 0.0
        %702 = vadd.xlane.f32.xlu0 %v701
        %v703 = vpop.xlane.xlu0 %702
        %v704 = vsel %vm453, %v634, 0.0
        %705 = vadd.xlane.f32.xlu0 %v704
        %v706 = vpop.xlane.xlu0 %705
        %v707 = vsel %vm453, %v635, 0.0
        %708 = vadd.xlane.f32.xlu0 %v707
        %v709 = vpop.xlane.xlu0 %708
        %v710 = vsel %vm453, %v636, 0.0
        %711 = vadd.xlane.f32.xlu0 %v710
        %v712 = vpop.xlane.xlu0 %711
        %v713 = vsel %vm453, %v637, 0.0
        %714 = vadd.xlane.f32.xlu0 %v713
        %v715 = vpop.xlane.xlu0 %714
        %v716 = vsel %vm453, %v638, 0.0
        %717 = vadd.xlane.f32.xlu0 %v716
        %v718 = vpop.xlane.xlu0 %717
        %v719 = vsel %vm453, %v639, 0.0
        %720 = vadd.xlane.f32.xlu0 %v719
        %v721 = vpop.xlane.xlu0 %720
        %v722 = vsel %vm453, %v640, 0.0
        %723 = vadd.xlane.f32.xlu0 %v722
        %v724 = vpop.xlane.xlu0 %723
        %v725 = vsel %vm453, %v641, 0.0
        %726 = vadd.xlane.f32.xlu0 %v725
        %v727 = vpop.xlane.xlu0 %726
        %v728 = vsel %vm453, %v642, 0.0
        %729 = vadd.xlane.f32.xlu0 %v728
        %v730 = vpop.xlane.xlu0 %729
        %v731 = vsel %vm453, %v643, 0.0
        %732 = vadd.xlane.f32.xlu0 %v731
        %v733 = vpop.xlane.xlu0 %732
        %v734 = vsel %vm453, %v644, 0.0
        %735 = vadd.xlane.f32.xlu0 %v734
        %v736 = vpop.xlane.xlu0 %735
        %v737 = vsel %vm453, %v645, 0.0
        %738 = vadd.xlane.f32.xlu0 %v737
        %v739 = vpop.xlane.xlu0 %738
        %v740 = vsel %vm453, %v646, 0.0
        %741 = vadd.xlane.f32.xlu0 %v740
        %v742 = vpop.xlane.xlu0 %741
        %v743 = vmul.f32 %v649, %v550
        %v744 = vmul.f32 %v652, %v550
        %v745 = vmul.f32 %v655, %v550
        %v746 = vmul.f32 %v658, %v550
        %v747 = vmul.f32 %v661, %v550
        %v748 = vmul.f32 %v664, %v550
        %v749 = vmul.f32 %v667, %v550
        %v750 = vmul.f32 %v670, %v550
        %v751 = vmul.f32 %v673, %v550
        %v752 = vmul.f32 %v676, %v550
        %v753 = vmul.f32 %v679, %v550
        %v754 = vmul.f32 %v682, %v550
        %v755 = vmul.f32 %v685, %v550
        %v756 = vmul.f32 %v688, %v550
        %v757 = vmul.f32 %v691, %v550
        %v758 = vmul.f32 %v694, %v550
        %v759 = vmul.f32 %v697, %v550
        %v760 = vmul.f32 %v700, %v550
        %v761 = vmul.f32 %v703, %v550
        %v762 = vmul.f32 %v706, %v550
        %v763 = vmul.f32 %v709, %v550
        %v764 = vmul.f32 %v712, %v550
        %v765 = vmul.f32 %v715, %v550
        %v766 = vmul.f32 %v718, %v550
        %v767 = vmul.f32 %v721, %v550
        %v768 = vmul.f32 %v724, %v550
        %v769 = vmul.f32 %v727, %v550
        %v770 = vmul.f32 %v730, %v550
        %v771 = vmul.f32 %v733, %v550
        %v772 = vmul.f32 %v736, %v550
        %v773 = vmul.f32 %v739, %v550
        %v774 = vmul.f32 %v742, %v550
        %v775 = vadd.f32 %v743, 1e-05
        %v776 = vadd.f32 %v744, 1e-05
        %v777 = vadd.f32 %v745, 1e-05
        %v778 = vadd.f32 %v746, 1e-05
        %v779 = vadd.f32 %v747, 1e-05
        %v780 = vadd.f32 %v748, 1e-05
        %v781 = vadd.f32 %v749, 1e-05
        %v782 = vadd.f32 %v750, 1e-05
        %v783 = vadd.f32 %v751, 1e-05
        %v784 = vadd.f32 %v752, 1e-05
        %v785 = vadd.f32 %v753, 1e-05
        %v786 = vadd.f32 %v754, 1e-05
        %v787 = vadd.f32 %v755, 1e-05
        %v788 = vadd.f32 %v756, 1e-05
        %v789 = vadd.f32 %v757, 1e-05
        %v790 = vadd.f32 %v758, 1e-05
        %v791 = vadd.f32 %v759, 1e-05
        %v792 = vadd.f32 %v760, 1e-05
        %v793 = vadd.f32 %v761, 1e-05
        %v794 = vadd.f32 %v762, 1e-05
        %v795 = vadd.f32 %v763, 1e-05
        %v796 = vadd.f32 %v764, 1e-05
        %v797 = vadd.f32 %v765, 1e-05
        %v798 = vadd.f32 %v766, 1e-05
        %v799 = vadd.f32 %v767, 1e-05
        %v800 = vadd.f32 %v768, 1e-05
        %v801 = vadd.f32 %v769, 1e-05
        %v802 = vadd.f32 %v770, 1e-05
        %v803 = vadd.f32 %v771, 1e-05
        %v804 = vadd.f32 %v772, 1e-05
        %v805 = vadd.f32 %v773, 1e-05
        %v806 = vadd.f32 %v774, 1e-05
        %v807 = vrsqrt.pop %v775
        %v808 = vrsqrt.pop %v776
        %v809 = vrsqrt.pop %v777
        %v810 = vrsqrt.pop %v778
        %v811 = vrsqrt.pop %v779
        %v812 = vrsqrt.pop %v780
        %v813 = vrsqrt.pop %v781
        %v814 = vrsqrt.pop %v782
        %v815 = vrsqrt.pop %v783
        %v816 = vrsqrt.pop %v784
        %v817 = vrsqrt.pop %v785
        %v818 = vrsqrt.pop %v786
        %v819 = vrsqrt.pop %v787
        %v820 = vrsqrt.pop %v788
        %v821 = vrsqrt.pop %v789
        %v822 = vrsqrt.pop %v790
        %v823 = vrsqrt.pop %v791
        %v824 = vrsqrt.pop %v792
        %v825 = vrsqrt.pop %v793
        %v826 = vrsqrt.pop %v794
        %v827 = vrsqrt.pop %v795
        %v828 = vrsqrt.pop %v796
        %v829 = vrsqrt.pop %v797
        %v830 = vrsqrt.pop %v798
        %v831 = vrsqrt.pop %v799
        %v832 = vrsqrt.pop %v800
        %v833 = vrsqrt.pop %v801
        %v834 = vrsqrt.pop %v802
        %v835 = vrsqrt.pop %v803
        %v836 = vrsqrt.pop %v804
        %v837 = vrsqrt.pop %v805
        %v838 = vrsqrt.pop %v806
        %v839 = vmul.f32 %v583, %v807
        %v840 = vmul.f32 %v584, %v808
        %v841 = vmul.f32 %v585, %v809
        %v842 = vmul.f32 %v586, %v810
        %v843 = vmul.f32 %v587, %v811
        %v844 = vmul.f32 %v588, %v812
        %v845 = vmul.f32 %v589, %v813
        %v846 = vmul.f32 %v590, %v814
        %v847 = vmul.f32 %v591, %v815
        %v848 = vmul.f32 %v592, %v816
        %v849 = vmul.f32 %v593, %v817
        %v850 = vmul.f32 %v594, %v818
        %v851 = vmul.f32 %v595, %v819
        %v852 = vmul.f32 %v596, %v820
        %v853 = vmul.f32 %v597, %v821
        %v854 = vmul.f32 %v598, %v822
        %v855 = vmul.f32 %v599, %v823
        %v856 = vmul.f32 %v600, %v824
        %v857 = vmul.f32 %v601, %v825
        %v858 = vmul.f32 %v602, %v826
        %v859 = vmul.f32 %v603, %v827
        %v860 = vmul.f32 %v604, %v828
        %v861 = vmul.f32 %v605, %v829
        %v862 = vmul.f32 %v606, %v830
        %v863 = vmul.f32 %v607, %v831
        %v864 = vmul.f32 %v608, %v832
        %v865 = vmul.f32 %v609, %v833
        %v866 = vmul.f32 %v610, %v834
        %v867 = vmul.f32 %v611, %v835
        %v868 = vmul.f32 %v612, %v836
        %v869 = vmul.f32 %v613, %v837
        %v870 = vmul.f32 %v614, %v838
        %v871 = vld [vmem:[#allocation7] sm:$0x1]
        %v873 = vlaneseq
        %v874 = vshrl.u32 %v873, 7
        %v875 = vsub.s32 0, %v874
        %v876 = vrot.slane %v871, %v875
        %v878 = vmul.f32 %v839, %v876
        %v879 = vmul.f32 %v840, %v876
        %v880 = vmul.f32 %v841, %v876
        %v881 = vmul.f32 %v842, %v876
        %v882 = vmul.f32 %v843, %v876
        %v883 = vmul.f32 %v844, %v876
        %v884 = vmul.f32 %v845, %v876
        %v885 = vmul.f32 %v846, %v876
        %v886 = vmul.f32 %v847, %v876
        %v887 = vmul.f32 %v848, %v876
        %v888 = vmul.f32 %v849, %v876
        %v889 = vmul.f32 %v850, %v876
        %v890 = vmul.f32 %v851, %v876
        %v891 = vmul.f32 %v852, %v876
        %v892 = vmul.f32 %v853, %v876
        %v893 = vmul.f32 %v854, %v876
        %v894 = vmul.f32 %v855, %v876
        %v895 = vmul.f32 %v856, %v876
        %v896 = vmul.f32 %v857, %v876
        %v897 = vmul.f32 %v858, %v876
        %v898 = vmul.f32 %v859, %v876
        %v899 = vmul.f32 %v860, %v876
        %v900 = vmul.f32 %v861, %v876
        %v901 = vmul.f32 %v862, %v876
        %v902 = vmul.f32 %v863, %v876
        %v903 = vmul.f32 %v864, %v876
        %v904 = vmul.f32 %v865, %v876
        %v905 = vmul.f32 %v866, %v876
        %v906 = vmul.f32 %v867, %v876
        %v907 = vmul.f32 %v868, %v876
        %v908 = vmul.f32 %v869, %v876
        %v909 = vmul.f32 %v870, %v876
        %v910 = vld [vmem:[#allocation8] sm:$0x1]
        %v912 = vlaneseq
        %v913 = vshrl.u32 %v912, 7
        %v914 = vsub.s32 0, %v913
        %v915 = vrot.slane %v910, %v914
        %v917 = vadd.f32 %v878, %v915
        %v918 = vadd.f32 %v879, %v915
        %v919 = vadd.f32 %v880, %v915
        %v920 = vadd.f32 %v881, %v915
        %v921 = vadd.f32 %v882, %v915
        %v922 = vadd.f32 %v883, %v915
        %v923 = vadd.f32 %v884, %v915
        %v924 = vadd.f32 %v885, %v915
        %v925 = vadd.f32 %v886, %v915
        %v926 = vadd.f32 %v887, %v915
        %v927 = vadd.f32 %v888, %v915
        %v928 = vadd.f32 %v889, %v915
        %v929 = vadd.f32 %v890, %v915
        %v930 = vadd.f32 %v891, %v915
        %v931 = vadd.f32 %v892, %v915
        %v932 = vadd.f32 %v893, %v915
        %v933 = vadd.f32 %v894, %v915
        %v934 = vadd.f32 %v895, %v915
        %v935 = vadd.f32 %v896, %v915
        %v936 = vadd.f32 %v897, %v915
        %v937 = vadd.f32 %v898, %v915
        %v938 = vadd.f32 %v899, %v915
        %v939 = vadd.f32 %v900, %v915
        %v940 = vadd.f32 %v901, %v915
        %v941 = vadd.f32 %v902, %v915
        %v942 = vadd.f32 %v903, %v915
        %v943 = vadd.f32 %v904, %v915
        %v944 = vadd.f32 %v905, %v915
        %v945 = vadd.f32 %v906, %v915
        %v946 = vadd.f32 %v907, %v915
        %v947 = vadd.f32 %v908, %v915
        %v948 = vadd.f32 %v909, %v915
        %v949 = vld [vmem:[#allocation5] sm:$0xff]
        %v950 = vld [vmem:[#allocation5 + $0x8] sm:$0xff]
        %v951 = vld [vmem:[#allocation5 + $0x10] sm:$0xff]
        %v952 = vld [vmem:[#allocation5 + $0x18] sm:$0xff]
        %v953 = vld [vmem:[#allocation5 + $0x20] sm:$0xff]
        %v954 = vld [vmem:[#allocation5 + $0x28] sm:$0xff]
        %v955 = vld [vmem:[#allocation5 + $0x30] sm:$0xff]
        %v956 = vld [vmem:[#allocation5 + $0x38] sm:$0xff]
        %v957 = vadd.f32 %v917, %v949
        %v958 = vadd.f32 %v918, %v950
        %v959 = vadd.f32 %v919, %v951
        %v960 = vadd.f32 %v920, %v952
        %v961 = vadd.f32 %v921, %v953
        %v962 = vadd.f32 %v922, %v954
        %v963 = vadd.f32 %v923, %v955
        %v964 = vadd.f32 %v924, %v956
        %v965 = vadd.f32 %v925, %v949
        %v966 = vadd.f32 %v926, %v950
        %v967 = vadd.f32 %v927, %v951
        %v968 = vadd.f32 %v928, %v952
        %v969 = vadd.f32 %v929, %v953
        %v970 = vadd.f32 %v930, %v954
        %v971 = vadd.f32 %v931, %v955
        %v972 = vadd.f32 %v932, %v956
        %v973 = vadd.f32 %v933, %v949
        %v974 = vadd.f32 %v934, %v950
        %v975 = vadd.f32 %v935, %v951
        %v976 = vadd.f32 %v936, %v952
        %v977 = vadd.f32 %v937, %v953
        %v978 = vadd.f32 %v938, %v954
        %v979 = vadd.f32 %v939, %v955
        %v980 = vadd.f32 %v940, %v956
        %v981 = vadd.f32 %v941, %v949
        %v982 = vadd.f32 %v942, %v950
        %v983 = vadd.f32 %v943, %v951
        %v984 = vadd.f32 %v944, %v952
        %v985 = vadd.f32 %v945, %v953
        %v986 = vadd.f32 %v946, %v954
        %v987 = vadd.f32 %v947, %v955
        %v988 = vadd.f32 %v948, %v956
        %v989 = vld [vmem:[#allocation10] sm:$0xff]
        %v990 = vld [vmem:[#allocation10 + $0x8] sm:$0xff]
        %v991 = vld [vmem:[#allocation10 + $0x10] sm:$0xff]
        %v992 = vld [vmem:[#allocation10 + $0x18] sm:$0xff]
        %v993 = vld [vmem:[#allocation11] sm:$0x1]
        %v995 = vlaneseq
        %v996 = vshrl.u32 %v995, 7
        %v997 = vsub.s32 0, %v996
        %v998 = vrot.slane %v993, %v997
        %v1001 = vsel %vm453, %v957, 0
        %v1004 = vsel %vm453, %v958, 0
        %v1007 = vsel %vm453, %v959, 0
        %v1010 = vsel %vm453, %v960, 0
        %v1013 = vsel %vm453, %v961, 0
        %v1016 = vsel %vm453, %v962, 0
        %v1019 = vsel %vm453, %v963, 0
        %v1022 = vsel %vm453, %v964, 0
        %v1025 = vsel %vm453, %v965, 0
        %v1028 = vsel %vm453, %v966, 0
        %v1031 = vsel %vm453, %v967, 0
        %v1034 = vsel %vm453, %v968, 0
        %v1037 = vsel %vm453, %v969, 0
        %v1040 = vsel %vm453, %v970, 0
        %v1043 = vsel %vm453, %v971, 0
        %v1046 = vsel %vm453, %v972, 0
        %v1049 = vsel %vm453, %v973, 0
        %v1052 = vsel %vm453, %v974, 0
        %v1055 = vsel %vm453, %v975, 0
        %v1058 = vsel %vm453, %v976, 0
        %v1061 = vsel %vm453, %v977, 0
        %v1064 = vsel %vm453, %v978, 0
        %v1067 = vsel %vm453, %v979, 0
        %v1070 = vsel %vm453, %v980, 0
        %v1073 = vsel %vm453, %v981, 0
        %v1076 = vsel %vm453, %v982, 0
        %v1079 = vsel %vm453, %v983, 0
        %v1082 = vsel %vm453, %v984, 0
        %v1085 = vsel %vm453, %v985, 0
        %v1088 = vsel %vm453, %v986, 0
        %v1091 = vsel %vm453, %v987, 0
        %v1094 = vsel %vm453, %v988, 0
        %1096 = vmatprep.subr.mxu0 0.0
        %1097 = vmatpush1.msra.mxu0 %v989
        %1098 = vmatprep.subr.mxu0 0.0
        %1099 = vmatpush1.msra.mxu0 %v990
        %1100 = vmatprep.subr.mxu0 0.0
        %1101 = vmatpush1.msra.mxu0 %v991
        %1102 = vmatprep.subr.mxu0 0.0
        %1103 = vmatpush1.msra.mxu0 %v992
        %1104 = vmatprep.subr.mxu0 0.0
        %1105 = vmatpush1.msra.mxu0 0.0
        %1106 = vmatprep.subr.mxu0 0.0
        %1107 = vmatpush1.msra.mxu0 0.0
        %1108 = vmatprep.subr.mxu0 0.0
        %1109 = vmatpush1.msra.mxu0 0.0
        %1110 = vmatprep.subr.mxu0 0.0
        %1111 = vmatpush1.msra.mxu0 0.0
        %1112 = vmatprep.subr.mxu0 0.0
        %1113 = vmatpush1.msra.mxu0 0.0
        %1114 = vmatprep.subr.mxu0 0.0
        %1115 = vmatpush1.msra.mxu0 0.0
        %1116 = vmatprep.subr.mxu0 0.0
        %1117 = vmatpush1.msra.mxu0 0.0
        %1118 = vmatprep.subr.mxu0 0.0
        %1119 = vmatpush1.msra.mxu0 0.0
        %1120 = vmatprep.subr.mxu0 0.0
        %1121 = vmatpush1.msra.mxu0 0.0
        %1122 = vmatprep.subr.mxu0 0.0
        %1123 = vmatpush1.msra.mxu0 0.0
        %1124 = vmatprep.subr.mxu0 0.0
        %1125 = vmatpush1.msra.mxu0 0.0
        %1126 = vmatprep.subr.mxu0 0.0
        %1127 = vmatpush1.msra.mxu0 0.0
        %1128 = vmatprep.subr.mxu0 0.0
        %1129 = vmatpush1.msra.mxu0 0.0
        %1130 = vmatprep.subr.mxu0 0.0
        %1131 = vmatpush1.msra.mxu0 0.0
        %1132 = vmatprep.subr.mxu0 0.0
        %1133 = vmatpush1.msra.mxu0 0.0
        %1134 = vmatprep.subr.mxu0 0.0
        %1135 = vmatpush1.msra.mxu0 0.0
        %1136 = vmatprep.subr.mxu0 0.0
        %1137 = vmatpush1.msra.mxu0 0.0
        %1138 = vmatprep.subr.mxu0 0.0
        %1139 = vmatpush1.msra.mxu0 0.0
        %1140 = vmatprep.subr.mxu0 0.0
        %1141 = vmatpush1.msra.mxu0 0.0
        %1142 = vmatprep.subr.mxu0 0.0
        %1143 = vmatpush1.msra.mxu0 0.0
        %1144 = vmatprep.subr.mxu0 0.0
        %1145 = vmatpush1.msra.mxu0 0.0
        %1146 = vmatprep.subr.mxu0 0.0
        %1147 = vmatpush1.msra.mxu0 0.0
        %1148 = vmatprep.subr.mxu0 0.0
        %1149 = vmatpush1.msra.mxu0 0.0
        %1150 = vmatprep.subr.mxu0 0.0
        %1151 = vmatpush1.msra.mxu0 0.0
        %1152 = vmatprep.subr.mxu0 0.0
        %1153 = vmatpush1.msra.mxu0 0.0
        %1154 = vmatprep.subr.mxu0 0.0
        %1155 = vmatpush1.msra.mxu0 0.0
        %1156 = vmatprep.subr.mxu0 0.0
        %1157 = vmatpush1.msra.mxu0 0.0
        %1158 = vmatprep.subr.mxu0 0.0
        %1159 = vmatpush1.msra.mxu0 0.0
        %1160 = vmatprep.mubr.f32.mxu0 0.0
        %1161 = vmatmul.mubr.f32.gmra.mrb[0].mxu0 %v1001
        %v1162 = vpop.f32.mrb[0].mxu0
        %v1163 = vadd.f32 %v998, %v1162
        %v1164 = vpop.f32.mrb[0].mxu0
        %1165 = vmatprep.mubr.f32.mxu0 0.0
        %1166 = vmatmul.mubr.f32.gmra.mrb[0].mxu0 %v1004
        %v1167 = vpop.f32.mrb[0].mxu0
        %v1168 = vadd.f32 %v998, %v1167
        %v1169 = vpop.f32.mrb[0].mxu0
        %1170 = vmatprep.mubr.f32.mxu0 0.0
        %1171 = vmatmul.mubr.f32.gmra.mrb[0].mxu0 %v1007
        %v1172 = vpop.f32.mrb[0].mxu0
        %v1173 = vadd.f32 %v998, %v1172
        %v1174 = vpop.f32.mrb[0].mxu0
        %1175 = vmatprep.mubr.f32.mxu0 0.0
        %1176 = vmatmul.mubr.f32.gmra.mrb[0].mxu0 %v1010
        %v1177 = vpop.f32.mrb[0].mxu0
        %v1178 = vadd.f32 %v998, %v1177
        %v1179 = vpop.f32.mrb[0].mxu0
        %1180 = vmatprep.mubr.f32.mxu0 0.0
        %1181 = vmatmul.mubr.f32.gmra.mrb[0].mxu0 %v1013
        %v1182 = vpop.f32.mrb[0].mxu0
        %v1183 = vadd.f32 %v998, %v1182
        %v1184 = vpop.f32.mrb[0].mxu0
        %1185 = vmatprep.mubr.f32.mxu0 0.0
        %1186 = vmatmul.mubr.f32.gmra.mrb[0].mxu0 %v1016
        %v1187 = vpop.f32.mrb[0].mxu0
        %v1188 = vadd.f32 %v998, %v1187
        %v1189 = vpop.f32.mrb[0].mxu0
        %1190 = vmatprep.mubr.f32.mxu0 0.0
        %1191 = vmatmul.mubr.f32.gmra.mrb[0].mxu0 %v1019
        %v1192 = vpop.f32.mrb[0].mxu0
        %v1193 = vadd.f32 %v998, %v1192
        %v1194 = vpop.f32.mrb[0].mxu0
        %1195 = vmatprep.mubr.f32.mxu0 0.0
        %1196 = vmatmul.mubr.f32.gmra.mrb[0].mxu0 %v1022
        %v1197 = vpop.f32.mrb[0].mxu0
        %v1198 = vadd.f32 %v998, %v1197
        %v1199 = vpop.f32.mrb[0].mxu0
        %1200 = vmatprep.mubr.f32.mxu0 0.0
        %1201 = vmatmul.mubr.f32.gmra.mrb[0].mxu0 %v1025
        %v1202 = vpop.f32.mrb[0].mxu0
        %v1203 = vadd.f32 %v998, %v1202
        %v1204 = vpop.f32.mrb[0].mxu0
        %1205 = vmatprep.mubr.f32.mxu0 0.0
        %1206 = vmatmul.mubr.f32.gmra.mrb[0].mxu0 %v1028
        %v1207 = vpop.f32.mrb[0].mxu0
        %v1208 = vadd.f32 %v998, %v1207
        %v1209 = vpop.f32.mrb[0].mxu0
        %1210 = vmatprep.mubr.f32.mxu0 0.0
        %1211 = vmatmul.mubr.f32.gmra.mrb[0].mxu0 %v1031
        %v1212 = vpop.f32.mrb[0].mxu0
        %v1213 = vadd.f32 %v998, %v1212
        %v1214 = vpop.f32.mrb[0].mxu0
        %1215 = vmatprep.mubr.f32.mxu0 0.0
        %1216 = vmatmul.mubr.f32.gmra.mrb[0].mxu0 %v1034
        %v1217 = vpop.f32.mrb[0].mxu0
        %v1218 = vadd.f32 %v998, %v1217
        %v1219 = vpop.f32.mrb[0].mxu0
        %1220 = vmatprep.mubr.f32.mxu0 0.0
        %1221 = vmatmul.mubr.f32.gmra.mrb[0].mxu0 %v1037
        %v1222 = vpop.f32.mrb[0].mxu0
        %v1223 = vadd.f32 %v998, %v1222
        %v1224 = vpop.f32.mrb[0].mxu0
        %1225 = vmatprep.mubr.f32.mxu0 0.0
        %1226 = vmatmul.mubr.f32.gmra.mrb[0].mxu0 %v1040
        %v1227 = vpop.f32.mrb[0].mxu0
        %v1228 = vadd.f32 %v998, %v1227
        %v1229 = vpop.f32.mrb[0].mxu0
        %1230 = vmatprep.mubr.f32.mxu0 0.0
        %1231 = vmatmul.mubr.f32.gmra.mrb[0].mxu0 %v1043
        %v1232 = vpop.f32.mrb[0].mxu0
        %v1233 = vadd.f32 %v998, %v1232
        %v1234 = vpop.f32.mrb[0].mxu0
        %1235 = vmatprep.mubr.f32.mxu0 0.0
        %1236 = vmatmul.mubr.f32.gmra.mrb[0].mxu0 %v1046
        %v1237 = vpop.f32.mrb[0].mxu0
        %v1238 = vadd.f32 %v998, %v1237
        %v1239 = vpop.f32.mrb[0].mxu0
        %1240 = vmatprep.mubr.f32.mxu0 0.0
        %1241 = vmatmul.mubr.f32.gmra.mrb[0].mxu0 %v1049
        %v1242 = vpop.f32.mrb[0].mxu0
        %v1243 = vadd.f32 %v998, %v1242
        %v1244 = vpop.f32.mrb[0].mxu0
        %1245 = vmatprep.mubr.f32.mxu0 0.0
        %1246 = vmatmul.mubr.f32.gmra.mrb[0].mxu0 %v1052
        %v1247 = vpop.f32.mrb[0].mxu0
        %v1248 = vadd.f32 %v998, %v1247
        %v1249 = vpop.f32.mrb[0].mxu0
        %1250 = vmatprep.mubr.f32.mxu0 0.0
        %1251 = vmatmul.mubr.f32.gmra.mrb[0].mxu0 %v1055
        %v1252 = vpop.f32.mrb[0].mxu0
        %v1253 = vadd.f32 %v998, %v1252
        %v1254 = vpop.f32.mrb[0].mxu0
        %1255 = vmatprep.mubr.f32.mxu0 0.0
        %1256 = vmatmul.mubr.f32.gmra.mrb[0].mxu0 %v1058
        %v1257 = vpop.f32.mrb[0].mxu0
        %v1258 = vadd.f32 %v998, %v1257
        %v1259 = vpop.f32.mrb[0].mxu0
        %1260 = vmatprep.mubr.f32.mxu0 0.0
        %1261 = vmatmul.mubr.f32.gmra.mrb[0].mxu0 %v1061
        %v1262 = vpop.f32.mrb[0].mxu0
        %v1263 = vadd.f32 %v998, %v1262
        %v1264 = vpop.f32.mrb[0].mxu0
        %1265 = vmatprep.mubr.f32.mxu0 0.0
        %1266 = vmatmul.mubr.f32.gmra.mrb[0].mxu0 %v1064
        %v1267 = vpop.f32.mrb[0].mxu0
        %v1268 = vadd.f32 %v998, %v1267
        %v1269 = vpop.f32.mrb[0].mxu0
        %1270 = vmatprep.mubr.f32.mxu0 0.0
        %1271 = vmatmul.mubr.f32.gmra.mrb[0].mxu0 %v1067
        %v1272 = vpop.f32.mrb[0].mxu0
        %v1273 = vadd.f32 %v998, %v1272
        %v1274 = vpop.f32.mrb[0].mxu0
        %1275 = vmatprep.mubr.f32.mxu0 0.0
        %1276 = vmatmul.mubr.f32.gmra.mrb[0].mxu0 %v1070
        %v1277 = vpop.f32.mrb[0].mxu0
        %v1278 = vadd.f32 %v998, %v1277
        %v1279 = vpop.f32.mrb[0].mxu0
        %1280 = vmatprep.mubr.f32.mxu0 0.0
        %1281 = vmatmul.mubr.f32.gmra.mrb[0].mxu0 %v1073
        %v1282 = vpop.f32.mrb[0].mxu0
        %v1283 = vadd.f32 %v998, %v1282
        %v1284 = vpop.f32.mrb[0].mxu0
        %1285 = vmatprep.mubr.f32.mxu0 0.0
        %1286 = vmatmul.mubr.f32.gmra.mrb[0].mxu0 %v1076
        %v1287 = vpop.f32.mrb[0].mxu0
        %v1288 = vadd.f32 %v998, %v1287
        %v1289 = vpop.f32.mrb[0].mxu0
        %1290 = vmatprep.mubr.f32.mxu0 0.0
        %1291 = vmatmul.mubr.f32.gmra.mrb[0].mxu0 %v1079
        %v1292 = vpop.f32.mrb[0].mxu0
        %v1293 = vadd.f32 %v998, %v1292
        %v1294 = vpop.f32.mrb[0].mxu0
        %1295 = vmatprep.mubr.f32.mxu0 0.0
        %1296 = vmatmul.mubr.f32.gmra.mrb[0].mxu0 %v1082
        %v1297 = vpop.f32.mrb[0].mxu0
        %v1298 = vadd.f32 %v998, %v1297
        %v1299 = vpop.f32.mrb[0].mxu0
        %1300 = vmatprep.mubr.f32.mxu0 0.0
        %1301 = vmatmul.mubr.f32.gmra.mrb[0].mxu0 %v1085
        %v1302 = vpop.f32.mrb[0].mxu0
        %v1303 = vadd.f32 %v998, %v1302
        %v1304 = vpop.f32.mrb[0].mxu0
        %1305 = vmatprep.mubr.f32.mxu0 0.0
        %1306 = vmatmul.mubr.f32.gmra.mrb[0].mxu0 %v1088
        %v1307 = vpop.f32.mrb[0].mxu0
        %v1308 = vadd.f32 %v998, %v1307
        %v1309 = vpop.f32.mrb[0].mxu0
        %1310 = vmatprep.mubr.f32.mxu0 0.0
        %1311 = vmatmul.mubr.f32.gmra.mrb[0].mxu0 %v1091
        %v1312 = vpop.f32.mrb[0].mxu0
        %v1313 = vadd.f32 %v998, %v1312
        %v1314 = vpop.f32.mrb[0].mxu0
        %1315 = vmatprep.mubr.f32.mxu0 0.0
        %1316 = vmatmul.mubr.f32.gmra.mrb[0].mxu0 %v1094
        %v1317 = vpop.f32.mrb[0].mxu0
        %v1318 = vadd.f32 %v998, %v1317
        %v1319 = vpop.f32.mrb[0].mxu0
        %1320 = vdwg.mxu0
        %v1321 = vmul.f32 %v1163, 0.35355338
        %v1322 = vmul.f32 %v1168, 0.35355338
        %v1323 = vmul.f32 %v1173, 0.35355338
        %v1324 = vmul.f32 %v1178, 0.35355338
        %v1325 = vmul.f32 %v1183, 0.35355338
        %v1326 = vmul.f32 %v1188, 0.35355338
        %v1327 = vmul.f32 %v1193, 0.35355338
        %v1328 = vmul.f32 %v1198, 0.35355338
        %v1329 = vmul.f32 %v1203, 0.35355338
        %v1330 = vmul.f32 %v1208, 0.35355338
        %v1331 = vmul.f32 %v1213, 0.35355338
        %v1332 = vmul.f32 %v1218, 0.35355338
        %v1333 = vmul.f32 %v1223, 0.35355338
        %v1334 = vmul.f32 %v1228, 0.35355338
        %v1335 = vmul.f32 %v1233, 0.35355338
        %v1336 = vmul.f32 %v1238, 0.35355338
        %v1337 = vmul.f32 %v1243, 0.35355338
        %v1338 = vmul.f32 %v1248, 0.35355338
        %v1339 = vmul.f32 %v1253, 0.35355338
        %v1340 = vmul.f32 %v1258, 0.35355338
        %v1341 = vmul.f32 %v1263, 0.35355338
        %v1342 = vmul.f32 %v1268, 0.35355338
        %v1343 = vmul.f32 %v1273, 0.35355338
        %v1344 = vmul.f32 %v1278, 0.35355338
        %v1345 = vmul.f32 %v1283, 0.35355338
        %v1346 = vmul.f32 %v1288, 0.35355338
        %v1347 = vmul.f32 %v1293, 0.35355338
        %v1348 = vmul.f32 %v1298, 0.35355338
        %v1349 = vmul.f32 %v1303, 0.35355338
        %v1350 = vmul.f32 %v1308, 0.35355338
        %v1351 = vmul.f32 %v1313, 0.35355338
        %v1352 = vmul.f32 %v1318, 0.35355338
        %v1353 = vld [vmem:[#allocation13] sm:$0xff]
        %v1354 = vld [vmem:[#allocation13 + $0x8] sm:$0xff]
        %v1355 = vld [vmem:[#allocation13 + $0x10] sm:$0xff]
        %v1356 = vld [vmem:[#allocation13 + $0x18] sm:$0xff]
        %1365 = vrot.lane.b32.xlu0 %v1163, 96
        %v1366 = vpop.permute.xlu0 %1365
        %1367 = vrot.lane.b32.xlu0 %v1168, 96
        %v1368 = vpop.permute.xlu0 %1367
        %1369 = vrot.lane.b32.xlu0 %v1173, 96
        %v1370 = vpop.permute.xlu0 %1369
        %1371 = vrot.lane.b32.xlu0 %v1178, 96
        %v1372 = vpop.permute.xlu0 %1371
        %1373 = vrot.lane.b32.xlu0 %v1183, 96
        %v1374 = vpop.permute.xlu0 %1373
        %1375 = vrot.lane.b32.xlu0 %v1188, 96
        %v1376 = vpop.permute.xlu0 %1375
        %1377 = vrot.lane.b32.xlu0 %v1193, 96
        %v1378 = vpop.permute.xlu0 %1377
        %1379 = vrot.lane.b32.xlu0 %v1198, 96
        %v1380 = vpop.permute.xlu0 %1379
        %vm1381 = vcmask 64512
        %v1383 = vsel %vm1381, %v1321, 0
        %v1386 = vsel %vm1381, %v1322, 0
        %v1389 = vsel %vm1381, %v1323, 0
        %v1392 = vsel %vm1381, %v1324, 0
        %v1395 = vsel %vm1381, %v1325, 0
        %v1398 = vsel %vm1381, %v1326, 0
        %v1401 = vsel %vm1381, %v1327, 0
        %v1404 = vsel %vm1381, %v1328, 0
        %v1406 = vsel %vm1381, %v1366, 0
        %v1408 = vsel %vm1381, %v1368, 0
        %v1410 = vsel %vm1381, %v1370, 0
        %v1412 = vsel %vm1381, %v1372, 0
        %v1414 = vsel %vm1381, %v1374, 0
        %v1416 = vsel %vm1381, %v1376, 0
        %v1418 = vsel %vm1381, %v1378, 0
        %v1420 = vsel %vm1381, %v1380, 0
        %1422 = vmatprep.subr.mxu0 0.0
        %1423 = vmatpush1.xpose.msra.mxu0 %v1406
        %1424 = vmatprep.subr.mxu0 0.0
        %1425 = vmatpush1.xpose.msra.mxu0 %v1408
        %1426 = vmatprep.subr.mxu0 0.0
        %1427 = vmatpush1.xpose.msra.mxu0 %v1410
        %1428 = vmatprep.subr.mxu0 0.0
        %1429 = vmatpush1.xpose.msra.mxu0 %v1412
        %1430 = vmatprep.subr.mxu0 0.0
        %1431 = vmatpush1.xpose.msra.mxu0 %v1414
        %1432 = vmatprep.subr.mxu0 0.0
        %1433 = vmatpush1.xpose.msra.mxu0 %v1416
        %1434 = vmatprep.subr.mxu0 0.0
        %1435 = vmatpush1.xpose.msra.mxu0 %v1418
        %1436 = vmatprep.subr.mxu0 0.0
        %1437 = vmatpush1.xpose.msra.mxu0 %v1420
        %1438 = vmatprep.subr.mxu0 0.0
        %1439 = vmatpush1.xpose.msra.mxu0 0.0
        %1440 = vmatprep.subr.mxu0 0.0
        %1441 = vmatpush1.xpose.msra.mxu0 0.0
        %1442 = vmatprep.subr.mxu0 0.0
        %1443 = vmatpush1.xpose.msra.mxu0 0.0
        %1444 = vmatprep.subr.mxu0 0.0
        %1445 = vmatpush1.xpose.msra.mxu0 0.0
        %1446 = vmatprep.subr.mxu0 0.0
        %1447 = vmatpush1.xpose.msra.mxu0 0.0
        %1448 = vmatprep.subr.mxu0 0.0
        %1449 = vmatpush1.xpose.msra.mxu0 0.0
        %1450 = vmatprep.subr.mxu0 0.0
        %1451 = vmatpush1.xpose.msra.mxu0 0.0
        %1452 = vmatprep.subr.mxu0 0.0
        %1453 = vmatpush1.xpose.msra.mxu0 0.0
        %1454 = vmatprep.subr.mxu0 0.0
        %1455 = vmatpush1.xpose.msra.mxu0 0.0
        %1456 = vmatprep.subr.mxu0 0.0
        %1457 = vmatpush1.xpose.msra.mxu0 0.0
        %1458 = vmatprep.subr.mxu0 0.0
        %1459 = vmatpush1.xpose.msra.mxu0 0.0
        %1460 = vmatprep.subr.mxu0 0.0
        %1461 = vmatpush1.xpose.msra.mxu0 0.0
        %1462 = vmatprep.subr.mxu0 0.0
        %1463 = vmatpush1.xpose.msra.mxu0 0.0
        %1464 = vmatprep.subr.mxu0 0.0
        %1465 = vmatpush1.xpose.msra.mxu0 0.0
        %1466 = vmatprep.subr.mxu0 0.0
        %1467 = vmatpush1.xpose.msra.mxu0 0.0
        %1468 = vmatprep.subr.mxu0 0.0
        %1469 = vmatpush1.xpose.msra.mxu0 0.0
        %1470 = vmatprep.subr.mxu0 0.0
        %1471 = vmatpush1.xpose.msra.mxu0 0.0
        %1472 = vmatprep.subr.mxu0 0.0
        %1473 = vmatpush1.xpose.msra.mxu0 0.0
        %1474 = vmatprep.subr.mxu0 0.0
        %1475 = vmatpush1.xpose.msra.mxu0 0.0
        %1476 = vmatprep.subr.mxu0 0.0
        %1477 = vmatpush1.xpose.msra.mxu0 0.0
        %1478 = vmatprep.subr.mxu0 0.0
        %1479 = vmatpush1.xpose.msra.mxu0 0.0
        %1480 = vmatprep.subr.mxu0 0.0
        %1481 = vmatpush1.xpose.msra.mxu0 0.0
        %1482 = vmatprep.subr.mxu0 0.0
        %1483 = vmatpush1.xpose.msra.mxu0 0.0
        %1484 = vmatprep.subr.mxu0 0.0
        %1485 = vmatpush1.xpose.msra.mxu0 0.0
        %1486 = vmatprep.mubr.f32.mxu0 0.0
        %1487 = vmatmul.mubr.f32.gmra.mrb[0].mxu0 %v1383
        %v1488 = vpop.f32.mrb[0].mxu0
        %v1489 = vadd.f32 0.0, %v1488
        %v1490 = vpop.f32.mrb[0].mxu0
        %1491 = vmatprep.mubr.f32.mxu0 0.0
        %1492 = vmatmul.mubr.f32.gmra.mrb[0].mxu0 %v1386
        %v1493 = vpop.f32.mrb[0].mxu0
        %v1494 = vadd.f32 0.0, %v1493
        %v1495 = vpop.f32.mrb[0].mxu0
        %1496 = vmatprep.mubr.f32.mxu0 0.0
        %1497 = vmatmul.mubr.f32.gmra.mrb[0].mxu0 %v1389
        %v1498 = vpop.f32.mrb[0].mxu0
        %v1499 = vadd.f32 0.0, %v1498
        %v1500 = vpop.f32.mrb[0].mxu0
        %1501 = vmatprep.mubr.f32.mxu0 0.0
        %1502 = vmatmul.mubr.f32.gmra.mrb[0].mxu0 %v1392
        %v1503 = vpop.f32.mrb[0].mxu0
        %v1504 = vadd.f32 0.0, %v1503
        %v1505 = vpop.f32.mrb[0].mxu0
        %1506 = vmatprep.mubr.f32.mxu0 0.0
        %1507 = vmatmul.mubr.f32.gmra.mrb[0].mxu0 %v1395
        %v1508 = vpop.f32.mrb[0].mxu0
        %v1509 = vadd.f32 0.0, %v1508
        %v1510 = vpop.f32.mrb[0].mxu0
        %1511 = vmatprep.mubr.f32.mxu0 0.0
        %1512 = vmatmul.mubr.f32.gmra.mrb[0].mxu0 %v1398
        %v1513 = vpop.f32.mrb[0].mxu0
        %v1514 = vadd.f32 0.0, %v1513
        %v1515 = vpop.f32.mrb[0].mxu0
        %1516 = vmatprep.mubr.f32.mxu0 0.0
        %1517 = vmatmul.mubr.f32.gmra.mrb[0].mxu0 %v1401
        %v1518 = vpop.f32.mrb[0].mxu0
        %v1519 = vadd.f32 0.0, %v1518
        %v1520 = vpop.f32.mrb[0].mxu0
        %1521 = vmatprep.mubr.f32.mxu0 0.0
        %1522 = vmatmul.mubr.f32.gmra.mrb[0].mxu0 %v1404
        %v1523 = vpop.f32.mrb[0].mxu0
        %v1524 = vadd.f32 0.0, %v1523
        %v1525 = vpop.f32.mrb[0].mxu0
        %1526 = vdwg.mxu0
        %1535 = vrot.lane.b32.xlu0 %v1203, 96
        %v1536 = vpop.permute.xlu0 %1535
        %1537 = vrot.lane.b32.xlu0 %v1208, 96
        %v1538 = vpop.permute.xlu0 %1537
        %1539 = vrot.lane.b32.xlu0 %v1213, 96
        %v1540 = vpop.permute.xlu0 %1539
        %1541 = vrot.lane.b32.xlu0 %v1218, 96
        %v1542 = vpop.permute.xlu0 %1541
        %1543 = vrot.lane.b32.xlu0 %v1223, 96
        %v1544 = vpop.permute.xlu0 %1543
        %1545 = vrot.lane.b32.xlu0 %v1228, 96
        %v1546 = vpop.permute.xlu0 %1545
        %1547 = vrot.lane.b32.xlu0 %v1233, 96
        %v1548 = vpop.permute.xlu0 %1547
        %1549 = vrot.lane.b32.xlu0 %v1238, 96
        %v1550 = vpop.permute.xlu0 %1549
        %v1552 = vsel %vm1381, %v1329, 0
        %v1555 = vsel %vm1381, %v1330, 0
        %v1558 = vsel %vm1381, %v1331, 0
        %v1561 = vsel %vm1381, %v1332, 0
        %v1564 = vsel %vm1381, %v1333, 0
        %v1567 = vsel %vm1381, %v1334, 0
        %v1570 = vsel %vm1381, %v1335, 0
        %v1573 = vsel %vm1381, %v1336, 0
        %v1575 = vsel %vm1381, %v1536, 0
        %v1577 = vsel %vm1381, %v1538, 0
        %v1579 = vsel %vm1381, %v1540, 0
        %v1581 = vsel %vm1381, %v1542, 0
        %v1583 = vsel %vm1381, %v1544, 0
        %v1585 = vsel %vm1381, %v1546, 0
        %v1587 = vsel %vm1381, %v1548, 0
        %v1589 = vsel %vm1381, %v1550, 0
        %1591 = vmatprep.subr.mxu0 0.0
        %1592 = vmatpush1.xpose.msra.mxu0 %v1575
        %1593 = vmatprep.subr.mxu0 0.0
        %1594 = vmatpush1.xpose.msra.mxu0 %v1577
        %1595 = vmatprep.subr.mxu0 0.0
        %1596 = vmatpush1.xpose.msra.mxu0 %v1579
        %1597 = vmatprep.subr.mxu0 0.0
        %1598 = vmatpush1.xpose.msra.mxu0 %v1581
        %1599 = vmatprep.subr.mxu0 0.0
        %1600 = vmatpush1.xpose.msra.mxu0 %v1583
        %1601 = vmatprep.subr.mxu0 0.0
        %1602 = vmatpush1.xpose.msra.mxu0 %v1585
        %1603 = vmatprep.subr.mxu0 0.0
        %1604 = vmatpush1.xpose.msra.mxu0 %v1587
        %1605 = vmatprep.subr.mxu0 0.0
        %1606 = vmatpush1.xpose.msra.mxu0 %v1589
        %1607 = vmatprep.subr.mxu0 0.0
        %1608 = vmatpush1.xpose.msra.mxu0 0.0
        %1609 = vmatprep.subr.mxu0 0.0
        %1610 = vmatpush1.xpose.msra.mxu0 0.0
        %1611 = vmatprep.subr.mxu0 0.0
        %1612 = vmatpush1.xpose.msra.mxu0 0.0
        %1613 = vmatprep.subr.mxu0 0.0
        %1614 = vmatpush1.xpose.msra.mxu0 0.0
        %1615 = vmatprep.subr.mxu0 0.0
        %1616 = vmatpush1.xpose.msra.mxu0 0.0
        %1617 = vmatprep.subr.mxu0 0.0
        %1618 = vmatpush1.xpose.msra.mxu0 0.0
        %1619 = vmatprep.subr.mxu0 0.0
        %1620 = vmatpush1.xpose.msra.mxu0 0.0
        %1621 = vmatprep.subr.mxu0 0.0
        %1622 = vmatpush1.xpose.msra.mxu0 0.0
        %1623 = vmatprep.subr.mxu0 0.0
        %1624 = vmatpush1.xpose.msra.mxu0 0.0
        %1625 = vmatprep.subr.mxu0 0.0
        %1626 = vmatpush1.xpose.msra.mxu0 0.0
        %1627 = vmatprep.subr.mxu0 0.0
        %1628 = vmatpush1.xpose.msra.mxu0 0.0
        %1629 = vmatprep.subr.mxu0 0.0
        %1630 = vmatpush1.xpose.msra.mxu0 0.0
        %1631 = vmatprep.subr.mxu0 0.0
        %1632 = vmatpush1.xpose.msra.mxu0 0.0
        %1633 = vmatprep.subr.mxu0 0.0
        %1634 = vmatpush1.xpose.msra.mxu0 0.0
        %1635 = vmatprep.subr.mxu0 0.0
        %1636 = vmatpush1.xpose.msra.mxu0 0.0
        %1637 = vmatprep.subr.mxu0 0.0
        %1638 = vmatpush1.xpose.msra.mxu0 0.0
        %1639 = vmatprep.subr.mxu0 0.0
        %1640 = vmatpush1.xpose.msra.mxu0 0.0
        %1641 = vmatprep.subr.mxu0 0.0
        %1642 = vmatpush1.xpose.msra.mxu0 0.0
        %1643 = vmatprep.subr.mxu0 0.0
        %1644 = vmatpush1.xpose.msra.mxu0 0.0
        %1645 = vmatprep.subr.mxu0 0.0
        %1646 = vmatpush1.xpose.msra.mxu0 0.0
        %1647 = vmatprep.subr.mxu0 0.0
        %1648 = vmatpush1.xpose.msra.mxu0 0.0
        %1649 = vmatprep.subr.mxu0 0.0
        %1650 = vmatpush1.xpose.msra.mxu0 0.0
        %1651 = vmatprep.subr.mxu0 0.0
        %1652 = vmatpush1.xpose.msra.mxu0 0.0
        %1653 = vmatprep.subr.mxu0 0.0
        %1654 = vmatpush1.xpose.msra.mxu0 0.0
        %1655 = vmatprep.mubr.f32.mxu0 0.0
        %1656 = vmatmul.mubr.f32.gmra.mrb[0].mxu0 %v1552
        %v1657 = vpop.f32.mrb[0].mxu0
        %v1658 = vadd.f32 0.0, %v1657
        %v1659 = vpop.f32.mrb[0].mxu0
        %1660 = vmatprep.mubr.f32.mxu0 0.0
        %1661 = vmatmul.mubr.f32.gmra.mrb[0].mxu0 %v1555
        %v1662 = vpop.f32.mrb[0].mxu0
        %v1663 = vadd.f32 0.0, %v1662
        %v1664 = vpop.f32.mrb[0].mxu0
        %1665 = vmatprep.mubr.f32.mxu0 0.0
        %1666 = vmatmul.mubr.f32.gmra.mrb[0].mxu0 %v1558
        %v1667 = vpop.f32.mrb[0].mxu0
        %v1668 = vadd.f32 0.0, %v1667
        %v1669 = vpop.f32.mrb[0].mxu0
        %1670 = vmatprep.mubr.f32.mxu0 0.0
        %1671 = vmatmul.mubr.f32.gmra.mrb[0].mxu0 %v1561
        %v1672 = vpop.f32.mrb[0].mxu0
        %v1673 = vadd.f32 0.0, %v1672
        %v1674 = vpop.f32.mrb[0].mxu0
        %1675 = vmatprep.mubr.f32.mxu0 0.0
        %1676 = vmatmul.mubr.f32.gmra.mrb[0].mxu0 %v1564
        %v1677 = vpop.f32.mrb[0].mxu0
        %v1678 = vadd.f32 0.0, %v1677
        %v1679 = vpop.f32.mrb[0].mxu0
        %1680 = vmatprep.mubr.f32.mxu0 0.0
        %1681 = vmatmul.mubr.f32.gmra.mrb[0].mxu0 %v1567
        %v1682 = vpop.f32.mrb[0].mxu0
        %v1683 = vadd.f32 0.0, %v1682
        %v1684 = vpop.f32.mrb[0].mxu0
        %1685 = vmatprep.mubr.f32.mxu0 0.0
        %1686 = vmatmul.mubr.f32.gmra.mrb[0].mxu0 %v1570
        %v1687 = vpop.f32.mrb[0].mxu0
        %v1688 = vadd.f32 0.0, %v1687
        %v1689 = vpop.f32.mrb[0].mxu0
        %1690 = vmatprep.mubr.f32.mxu0 0.0
        %1691 = vmatmul.mubr.f32.gmra.mrb[0].mxu0 %v1573
        %v1692 = vpop.f32.mrb[0].mxu0
        %v1693 = vadd.f32 0.0, %v1692
        %v1694 = vpop.f32.mrb[0].mxu0
        %1695 = vdwg.mxu0
        %1704 = vrot.lane.b32.xlu0 %v1243, 96
        %v1705 = vpop.permute.xlu0 %1704
        %1706 = vrot.lane.b32.xlu0 %v1248, 96
        %v1707 = vpop.permute.xlu0 %1706
        %1708 = vrot.lane.b32.xlu0 %v1253, 96
        %v1709 = vpop.permute.xlu0 %1708
        %1710 = vrot.lane.b32.xlu0 %v1258, 96
        %v1711 = vpop.permute.xlu0 %1710
        %1712 = vrot.lane.b32.xlu0 %v1263, 96
        %v1713 = vpop.permute.xlu0 %1712
        %1714 = vrot.lane.b32.xlu0 %v1268, 96
        %v1715 = vpop.permute.xlu0 %1714
        %1716 = vrot.lane.b32.xlu0 %v1273, 96
        %v1717 = vpop.permute.xlu0 %1716
        %1718 = vrot.lane.b32.xlu0 %v1278, 96
        %v1719 = vpop.permute.xlu0 %1718
        %v1721 = vsel %vm1381, %v1337, 0
        %v1724 = vsel %vm1381, %v1338, 0
        %v1727 = vsel %vm1381, %v1339, 0
        %v1730 = vsel %vm1381, %v1340, 0
        %v1733 = vsel %vm1381, %v1341, 0
        %v1736 = vsel %vm1381, %v1342, 0
        %v1739 = vsel %vm1381, %v1343, 0
        %v1742 = vsel %vm1381, %v1344, 0
        %v1744 = vsel %vm1381, %v1705, 0
        %v1746 = vsel %vm1381, %v1707, 0
        %v1748 = vsel %vm1381, %v1709, 0
        %v1750 = vsel %vm1381, %v1711, 0
        %v1752 = vsel %vm1381, %v1713, 0
        %v1754 = vsel %vm1381, %v1715, 0
        %v1756 = vsel %vm1381, %v1717, 0
        %v1758 = vsel %vm1381, %v1719, 0
        %1760 = vmatprep.subr.mxu0 0.0
        %1761 = vmatpush1.xpose.msra.mxu0 %v1744
        %1762 = vmatprep.subr.mxu0 0.0
        %1763 = vmatpush1.xpose.msra.mxu0 %v1746
        %1764 = vmatprep.subr.mxu0 0.0
        %1765 = vmatpush1.xpose.msra.mxu0 %v1748
        %1766 = vmatprep.subr.mxu0 0.0
        %1767 = vmatpush1.xpose.msra.mxu0 %v1750
        %1768 = vmatprep.subr.mxu0 0.0
        %1769 = vmatpush1.xpose.msra.mxu0 %v1752
        %1770 = vmatprep.subr.mxu0 0.0
        %1771 = vmatpush1.xpose.msra.mxu0 %v1754
        %1772 = vmatprep.subr.mxu0 0.0
        %1773 = vmatpush1.xpose.msra.mxu0 %v1756
        %1774 = vmatprep.subr.mxu0 0.0
        %1775 = vmatpush1.xpose.msra.mxu0 %v1758
        %1776 = vmatprep.subr.mxu0 0.0
        %1777 = vmatpush1.xpose.msra.mxu0 0.0
        %1778 = vmatprep.subr.mxu0 0.0
        %1779 = vmatpush1.xpose.msra.mxu0 0.0
        %1780 = vmatprep.subr.mxu0 0.0
        %1781 = vmatpush1.xpose.msra.mxu0 0.0
        %1782 = vmatprep.subr.mxu0 0.0
        %1783 = vmatpush1.xpose.msra.mxu0 0.0
        %1784 = vmatprep.subr.mxu0 0.0
        %1785 = vmatpush1.xpose.msra.mxu0 0.0
        %1786 = vmatprep.subr.mxu0 0.0
        %1787 = vmatpush1.xpose.msra.mxu0 0.0
        %1788 = vmatprep.subr.mxu0 0.0
        %1789 = vmatpush1.xpose.msra.mxu0 0.0
        %1790 = vmatprep.subr.mxu0 0.0
        %1791 = vmatpush1.xpose.msra.mxu0 0.0
        %1792 = vmatprep.subr.mxu0 0.0
        %1793 = vmatpush1.xpose.msra.mxu0 0.0
        %1794 = vmatprep.subr.mxu0 0.0
        %1795 = vmatpush1.xpose.msra.mxu0 0.0
        %1796 = vmatprep.subr.mxu0 0.0
        %1797 = vmatpush1.xpose.msra.mxu0 0.0
        %1798 = vmatprep.subr.mxu0 0.0
        %1799 = vmatpush1.xpose.msra.mxu0 0.0
        %1800 = vmatprep.subr.mxu0 0.0
        %1801 = vmatpush1.xpose.msra.mxu0 0.0
        %1802 = vmatprep.subr.mxu0 0.0
        %1803 = vmatpush1.xpose.msra.mxu0 0.0
        %1804 = vmatprep.subr.mxu0 0.0
        %1805 = vmatpush1.xpose.msra.mxu0 0.0
        %1806 = vmatprep.subr.mxu0 0.0
        %1807 = vmatpush1.xpose.msra.mxu0 0.0
        %1808 = vmatprep.subr.mxu0 0.0
        %1809 = vmatpush1.xpose.msra.mxu0 0.0
        %1810 = vmatprep.subr.mxu0 0.0
        %1811 = vmatpush1.xpose.msra.mxu0 0.0
        %1812 = vmatprep.subr.mxu0 0.0
        %1813 = vmatpush1.xpose.msra.mxu0 0.0
        %1814 = vmatprep.subr.mxu0 0.0
        %1815 = vmatpush1.xpose.msra.mxu0 0.0
        %1816 = vmatprep.subr.mxu0 0.0
        %1817 = vmatpush1.xpose.msra.mxu0 0.0
        %1818 = vmatprep.subr.mxu0 0.0
        %1819 = vmatpush1.xpose.msra.mxu0 0.0
        %1820 = vmatprep.subr.mxu0 0.0
        %1821 = vmatpush1.xpose.msra.mxu0 0.0
        %1822 = vmatprep.subr.mxu0 0.0
        %1823 = vmatpush1.xpose.msra.mxu0 0.0
        %1824 = vmatprep.mubr.f32.mxu0 0.0
        %1825 = vmatmul.mubr.f32.gmra.mrb[0].mxu0 %v1721
        %v1826 = vpop.f32.mrb[0].mxu0
        %v1827 = vadd.f32 0.0, %v1826
        %v1828 = vpop.f32.mrb[0].mxu0
        %1829 = vmatprep.mubr.f32.mxu0 0.0
        %1830 = vmatmul.mubr.f32.gmra.mrb[0].mxu0 %v1724
        %v1831 = vpop.f32.mrb[0].mxu0
        %v1832 = vadd.f32 0.0, %v1831
        %v1833 = vpop.f32.mrb[0].mxu0
        %1834 = vmatprep.mubr.f32.mxu0 0.0
        %1835 = vmatmul.mubr.f32.gmra.mrb[0].mxu0 %v1727
        %v1836 = vpop.f32.mrb[0].mxu0
        %v1837 = vadd.f32 0.0, %v1836
        %v1838 = vpop.f32.mrb[0].mxu0
        %1839 = vmatprep.mubr.f32.mxu0 0.0
        %1840 = vmatmul.mubr.f32.gmra.mrb[0].mxu0 %v1730
        %v1841 = vpop.f32.mrb[0].mxu0
        %v1842 = vadd.f32 0.0, %v1841
        %v1843 = vpop.f32.mrb[0].mxu0
        %1844 = vmatprep.mubr.f32.mxu0 0.0
        %1845 = vmatmul.mubr.f32.gmra.mrb[0].mxu0 %v1733
        %v1846 = vpop.f32.mrb[0].mxu0
        %v1847 = vadd.f32 0.0, %v1846
        %v1848 = vpop.f32.mrb[0].mxu0
        %1849 = vmatprep.mubr.f32.mxu0 0.0
        %1850 = vmatmul.mubr.f32.gmra.mrb[0].mxu0 %v1736
        %v1851 = vpop.f32.mrb[0].mxu0
        %v1852 = vadd.f32 0.0, %v1851
        %v1853 = vpop.f32.mrb[0].mxu0
        %1854 = vmatprep.mubr.f32.mxu0 0.0
        %1855 = vmatmul.mubr.f32.gmra.mrb[0].mxu0 %v1739
        %v1856 = vpop.f32.mrb[0].mxu0
        %v1857 = vadd.f32 0.0, %v1856
        %v1858 = vpop.f32.mrb[0].mxu0
        %1859 = vmatprep.mubr.f32.mxu0 0.0
        %1860 = vmatmul.mubr.f32.gmra.mrb[0].mxu0 %v1742
        %v1861 = vpop.f32.mrb[0].mxu0
        %v1862 = vadd.f32 0.0, %v1861
        %v1863 = vpop.f32.mrb[0].mxu0
        %1864 = vdwg.mxu0
        %1873 = vrot.lane.b32.xlu0 %v1283, 96
        %v1874 = vpop.permute.xlu0 %1873
        %1875 = vrot.lane.b32.xlu0 %v1288, 96
        %v1876 = vpop.permute.xlu0 %1875
        %1877 = vrot.lane.b32.xlu0 %v1293, 96
        %v1878 = vpop.permute.xlu0 %1877
        %1879 = vrot.lane.b32.xlu0 %v1298, 96
        %v1880 = vpop.permute.xlu0 %1879
        %1881 = vrot.lane.b32.xlu0 %v1303, 96
        %v1882 = vpop.permute.xlu0 %1881
        %1883 = vrot.lane.b32.xlu0 %v1308, 96
        %v1884 = vpop.permute.xlu0 %1883
        %1885 = vrot.lane.b32.xlu0 %v1313, 96
        %v1886 = vpop.permute.xlu0 %1885
        %1887 = vrot.lane.b32.xlu0 %v1318, 96
        %v1888 = vpop.permute.xlu0 %1887
        %v1890 = vsel %vm1381, %v1345, 0
        %v1893 = vsel %vm1381, %v1346, 0
        %v1896 = vsel %vm1381, %v1347, 0
        %v1899 = vsel %vm1381, %v1348, 0
        %v1902 = vsel %vm1381, %v1349, 0
        %v1905 = vsel %vm1381, %v1350, 0
        %v1908 = vsel %vm1381, %v1351, 0
        %v1911 = vsel %vm1381, %v1352, 0
        %v1913 = vsel %vm1381, %v1874, 0
        %v1915 = vsel %vm1381, %v1876, 0
        %v1917 = vsel %vm1381, %v1878, 0
        %v1919 = vsel %vm1381, %v1880, 0
        %v1921 = vsel %vm1381, %v1882, 0
        %v1923 = vsel %vm1381, %v1884, 0
        %v1925 = vsel %vm1381, %v1886, 0
        %v1927 = vsel %vm1381, %v1888, 0
        %1929 = vmatprep.subr.mxu0 0.0
        %1930 = vmatpush1.xpose.msra.mxu0 %v1913
        %1931 = vmatprep.subr.mxu0 0.0
        %1932 = vmatpush1.xpose.msra.mxu0 %v1915
        %1933 = vmatprep.subr.mxu0 0.0
        %1934 = vmatpush1.xpose.msra.mxu0 %v1917
        %1935 = vmatprep.subr.mxu0 0.0
        %1936 = vmatpush1.xpose.msra.mxu0 %v1919
        %1937 = vmatprep.subr.mxu0 0.0
        %1938 = vmatpush1.xpose.msra.mxu0 %v1921
        %1939 = vmatprep.subr.mxu0 0.0
        %1940 = vmatpush1.xpose.msra.mxu0 %v1923
        %1941 = vmatprep.subr.mxu0 0.0
        %1942 = vmatpush1.xpose.msra.mxu0 %v1925
        %1943 = vmatprep.subr.mxu0 0.0
        %1944 = vmatpush1.xpose.msra.mxu0 %v1927
        %1945 = vmatprep.subr.mxu0 0.0
        %1946 = vmatpush1.xpose.msra.mxu0 0.0
        %1947 = vmatprep.subr.mxu0 0.0
        %1948 = vmatpush1.xpose.msra.mxu0 0.0
        %1949 = vmatprep.subr.mxu0 0.0
        %1950 = vmatpush1.xpose.msra.mxu0 0.0
        %1951 = vmatprep.subr.mxu0 0.0
        %1952 = vmatpush1.xpose.msra.mxu0 0.0
        %1953 = vmatprep.subr.mxu0 0.0
        %1954 = vmatpush1.xpose.msra.mxu0 0.0
        %1955 = vmatprep.subr.mxu0 0.0
        %1956 = vmatpush1.xpose.msra.mxu0 0.0
        %1957 = vmatprep.subr.mxu0 0.0
        %1958 = vmatpush1.xpose.msra.mxu0 0.0
        %1959 = vmatprep.subr.mxu0 0.0
        %1960 = vmatpush1.xpose.msra.mxu0 0.0
        %1961 = vmatprep.subr.mxu0 0.0
        %1962 = vmatpush1.xpose.msra.mxu0 0.0
        %1963 = vmatprep.subr.mxu0 0.0
        %1964 = vmatpush1.xpose.msra.mxu0 0.0
        %1965 = vmatprep.subr.mxu0 0.0
        %1966 = vmatpush1.xpose.msra.mxu0 0.0
        %1967 = vmatprep.subr.mxu0 0.0
        %1968 = vmatpush1.xpose.msra.mxu0 0.0
        %1969 = vmatprep.subr.mxu0 0.0
        %1970 = vmatpush1.xpose.msra.mxu0 0.0
        %1971 = vmatprep.subr.mxu0 0.0
        %1972 = vmatpush1.xpose.msra.mxu0 0.0
        %1973 = vmatprep.subr.mxu0 0.0
        %1974 = vmatpush1.xpose.msra.mxu0 0.0
        %1975 = vmatprep.subr.mxu0 0.0
        %1976 = vmatpush1.xpose.msra.mxu0 0.0
        %1977 = vmatprep.subr.mxu0 0.0
        %1978 = vmatpush1.xpose.msra.mxu0 0.0
        %1979 = vmatprep.subr.mxu0 0.0
        %1980 = vmatpush1.xpose.msra.mxu0 0.0
        %1981 = vmatprep.subr.mxu0 0.0
        %1982 = vmatpush1.xpose.msra.mxu0 0.0
        %1983 = vmatprep.subr.mxu0 0.0
        %1984 = vmatpush1.xpose.msra.mxu0 0.0
        %1985 = vmatprep.subr.mxu0 0.0
        %1986 = vmatpush1.xpose.msra.mxu0 0.0
        %1987 = vmatprep.subr.mxu0 0.0
        %1988 = vmatpush1.xpose.msra.mxu0 0.0
        %1989 = vmatprep.subr.mxu0 0.0
        %1990 = vmatpush1.xpose.msra.mxu0 0.0
        %1991 = vmatprep.subr.mxu0 0.0
        %1992 = vmatpush1.xpose.msra.mxu0 0.0
        %1993 = vmatprep.mubr.f32.mxu0 0.0
        %1994 = vmatmul.mubr.f32.gmra.mrb[0].mxu0 %v1890
        %v1995 = vpop.f32.mrb[0].mxu0
        %v1996 = vadd.f32 0.0, %v1995
        %v1997 = vpop.f32.mrb[0].mxu0
        %1998 = vmatprep.mubr.f32.mxu0 0.0
        %1999 = vmatmul.mubr.f32.gmra.mrb[0].mxu0 %v1893
        %v2000 = vpop.f32.mrb[0].mxu0
        %v2001 = vadd.f32 0.0, %v2000
        %v2002 = vpop.f32.mrb[0].mxu0
        %2003 = vmatprep.mubr.f32.mxu0 0.0
        %2004 = vmatmul.mubr.f32.gmra.mrb[0].mxu0 %v1896
        %v2005 = vpop.f32.mrb[0].mxu0
        %v2006 = vadd.f32 0.0, %v2005
        %v2007 = vpop.f32.mrb[0].mxu0
        %2008 = vmatprep.mubr.f32.mxu0 0.0
        %2009 = vmatmul.mubr.f32.gmra.mrb[0].mxu0 %v1899
        %v2010 = vpop.f32.mrb[0].mxu0
        %v2011 = vadd.f32 0.0, %v2010
        %v2012 = vpop.f32.mrb[0].mxu0
        %2013 = vmatprep.mubr.f32.mxu0 0.0
        %2014 = vmatmul.mubr.f32.gmra.mrb[0].mxu0 %v1902
        %v2015 = vpop.f32.mrb[0].mxu0
        %v2016 = vadd.f32 0.0, %v2015
        %v2017 = vpop.f32.mrb[0].mxu0
        %2018 = vmatprep.mubr.f32.mxu0 0.0
        %2019 = vmatmul.mubr.f32.gmra.mrb[0].mxu0 %v1905
        %v2020 = vpop.f32.mrb[0].mxu0
        %v2021 = vadd.f32 0.0, %v2020
        %v2022 = vpop.f32.mrb[0].mxu0
        %2023 = vmatprep.mubr.f32.mxu0 0.0
        %2024 = vmatmul.mubr.f32.gmra.mrb[0].mxu0 %v1908
        %v2025 = vpop.f32.mrb[0].mxu0
        %v2026 = vadd.f32 0.0, %v2025
        %v2027 = vpop.f32.mrb[0].mxu0
        %2028 = vmatprep.mubr.f32.mxu0 0.0
        %2029 = vmatmul.mubr.f32.gmra.mrb[0].mxu0 %v1911
        %v2030 = vpop.f32.mrb[0].mxu0
        %v2031 = vadd.f32 0.0, %v2030
        %v2032 = vpop.f32.mrb[0].mxu0
        %2033 = vdwg.mxu0
        %vm2034 = vcmask 523264
        %v2035 = vsel %vm2034, %v1489, -inf
        %2036 = vmax.xlane.f32.xlu0 %v2035
        %v2037 = vpop.xlane.xlu0 %2036
        %v2038 = vsel %vm2034, %v1494, -inf
        %2039 = vmax.xlane.f32.xlu0 %v2038
        %v2040 = vpop.xlane.xlu0 %2039
        %v2041 = vsel %vm2034, %v1499, -inf
        %2042 = vmax.xlane.f32.xlu0 %v2041
        %v2043 = vpop.xlane.xlu0 %2042
        %v2044 = vsel %vm2034, %v1504, -inf
        %2045 = vmax.xlane.f32.xlu0 %v2044
        %v2046 = vpop.xlane.xlu0 %2045
        %v2047 = vsel %vm2034, %v1509, -inf
        %2048 = vmax.xlane.f32.xlu0 %v2047
        %v2049 = vpop.xlane.xlu0 %2048
        %v2050 = vsel %vm2034, %v1514, -inf
        %2051 = vmax.xlane.f32.xlu0 %v2050
        %v2052 = vpop.xlane.xlu0 %2051
        %v2053 = vsel %vm2034, %v1519, -inf
        %2054 = vmax.xlane.f32.xlu0 %v2053
        %v2055 = vpop.xlane.xlu0 %2054
        %v2056 = vsel %vm2034, %v1524, -inf
        %2057 = vmax.xlane.f32.xlu0 %v2056
        %v2058 = vpop.xlane.xlu0 %2057
        %v2059 = vsel %vm2034, %v1658, -inf
        %2060 = vmax.xlane.f32.xlu0 %v2059
        %v2061 = vpop.xlane.xlu0 %2060
        %v2062 = vsel %vm2034, %v1663, -inf
        %2063 = vmax.xlane.f32.xlu0 %v2062
        %v2064 = vpop.xlane.xlu0 %2063
        %v2065 = vsel %vm2034, %v1668, -inf
        %2066 = vmax.xlane.f32.xlu0 %v2065
        %v2067 = vpop.xlane.xlu0 %2066
        %v2068 = vsel %vm2034, %v1673, -inf
        %2069 = vmax.xlane.f32.xlu0 %v2068
        %v2070 = vpop.xlane.xlu0 %2069
        %v2071 = vsel %vm2034, %v1678, -inf
        %2072 = vmax.xlane.f32.xlu0 %v2071
        %v2073 = vpop.xlane.xlu0 %2072
        %v2074 = vsel %vm2034, %v1683, -inf
        %2075 = vmax.xlane.f32.xlu0 %v2074
        %v2076 = vpop.xlane.xlu0 %2075
        %v2077 = vsel %vm2034, %v1688, -inf
        %2078 = vmax.xlane.f32.xlu0 %v2077
        %v2079 = vpop.xlane.xlu0 %2078
        %v2080 = vsel %vm2034, %v1693, -inf
        %2081 = vmax.xlane.f32.xlu0 %v2080
        %v2082 = vpop.xlane.xlu0 %2081
        %v2083 = vsel %vm2034, %v1827, -inf
        %2084 = vmax.xlane.f32.xlu0 %v2083
        %v2085 = vpop.xlane.xlu0 %2084
        %v2086 = vsel %vm2034, %v1832, -inf
        %2087 = vmax.xlane.f32.xlu0 %v2086
        %v2088 = vpop.xlane.xlu0 %2087
        %v2089 = vsel %vm2034, %v1837, -inf
        %2090 = vmax.xlane.f32.xlu0 %v2089
        %v2091 = vpop.xlane.xlu0 %2090
        %v2092 = vsel %vm2034, %v1842, -inf
        %2093 = vmax.xlane.f32.xlu0 %v2092
        %v2094 = vpop.xlane.xlu0 %2093
        %v2095 = vsel %vm2034, %v1847, -inf
        %2096 = vmax.xlane.f32.xlu0 %v2095
        %v2097 = vpop.xlane.xlu0 %2096
        %v2098 = vsel %vm2034, %v1852, -inf
        %2099 = vmax.xlane.f32.xlu0 %v2098
        %v2100 = vpop.xlane.xlu0 %2099
        %v2101 = vsel %vm2034, %v1857, -inf
        %2102 = vmax.xlane.f32.xlu0 %v2101
        %v2103 = vpop.xlane.xlu0 %2102
        %v2104 = vsel %vm2034, %v1862, -inf
        %2105 = vmax.xlane.f32.xlu0 %v2104
        %v2106 = vpop.xlane.xlu0 %2105
        %v2107 = vsel %vm2034, %v1996, -inf
        %2108 = vmax.xlane.f32.xlu0 %v2107
        %v2109 = vpop.xlane.xlu0 %2108
        %v2110 = vsel %vm2034, %v2001, -inf
        %2111 = vmax.xlane.f32.xlu0 %v2110
        %v2112 = vpop.xlane.xlu0 %2111
        %v2113 = vsel %vm2034, %v2006, -inf
        %2114 = vmax.xlane.f32.xlu0 %v2113
        %v2115 = vpop.xlane.xlu0 %2114
        %v2116 = vsel %vm2034, %v2011, -inf
        %2117 = vmax.xlane.f32.xlu0 %v2116
        %v2118 = vpop.xlane.xlu0 %2117
        %v2119 = vsel %vm2034, %v2016, -inf
        %2120 = vmax.xlane.f32.xlu0 %v2119
        %v2121 = vpop.xlane.xlu0 %2120
        %v2122 = vsel %vm2034, %v2021, -inf
        %2123 = vmax.xlane.f32.xlu0 %v2122
        %v2124 = vpop.xlane.xlu0 %2123
        %v2125 = vsel %vm2034, %v2026, -inf
        %2126 = vmax.xlane.f32.xlu0 %v2125
        %v2127 = vpop.xlane.xlu0 %2126
        %v2128 = vsel %vm2034, %v2031, -inf
        %2129 = vmax.xlane.f32.xlu0 %v2128
        %v2130 = vpop.xlane.xlu0 %2129
        %v2131 = vsub.f32 %v1489, %v2037
        %v2132 = vsub.f32 %v1494, %v2040
        %v2133 = vsub.f32 %v1499, %v2043
        %v2134 = vsub.f32 %v1504, %v2046
        %v2135 = vsub.f32 %v1509, %v2049
        %v2136 = vsub.f32 %v1514, %v2052
        %v2137 = vsub.f32 %v1519, %v2055
        %v2138 = vsub.f32 %v1524, %v2058
        %v2139 = vsub.f32 %v1658, %v2061
        %v2140 = vsub.f32 %v1663, %v2064
        %v2141 = vsub.f32 %v1668, %v2067
        %v2142 = vsub.f32 %v1673, %v2070
        %v2143 = vsub.f32 %v1678, %v2073
        %v2144 = vsub.f32 %v1683, %v2076
        %v2145 = vsub.f32 %v1688, %v2079
        %v2146 = vsub.f32 %v1693, %v2082
        %v2147 = vsub.f32 %v1827, %v2085
        %v2148 = vsub.f32 %v1832, %v2088
        %v2149 = vsub.f32 %v1837, %v2091
        %v2150 = vsub.f32 %v1842, %v2094
        %v2151 = vsub.f32 %v1847, %v2097
        %v2152 = vsub.f32 %v1852, %v2100
        %v2153 = vsub.f32 %v1857, %v2103
        %v2154 = vsub.f32 %v1862, %v2106
        %v2155 = vsub.f32 %v1996, %v2109
        %v2156 = vsub.f32 %v2001, %v2112
        %v2157 = vsub.f32 %v2006, %v2115
        %v2158 = vsub.f32 %v2011, %v2118
        %v2159 = vsub.f32 %v2016, %v2121
        %v2160 = vsub.f32 %v2021, %v2124
        %v2161 = vsub.f32 %v2026, %v2127
        %v2162 = vsub.f32 %v2031, %v2130
        %v2163 = vmul.f32 %v2131, 1.442695
        %v2164 = vpow.pop %v2163
        %v2165 = vmul.f32 %v2132, 1.442695
        %v2166 = vpow.pop %v2165
        %v2167 = vmul.f32 %v2133, 1.442695
        %v2168 = vpow.pop %v2167
        %v2169 = vmul.f32 %v2134, 1.442695
        %v2170 = vpow.pop %v2169
        %v2171 = vmul.f32 %v2135, 1.442695
        %v2172 = vpow.pop %v2171
        %v2173 = vmul.f32 %v2136, 1.442695
        %v2174 = vpow.pop %v2173
        %v2175 = vmul.f32 %v2137, 1.442695
        %v2176 = vpow.pop %v2175
        %v2177 = vmul.f32 %v2138, 1.442695
        %v2178 = vpow.pop %v2177
        %v2179 = vmul.f32 %v2139, 1.442695
        %v2180 = vpow.pop %v2179
        %v2181 = vmul.f32 %v2140, 1.442695
        %v2182 = vpow.pop %v2181
        %v2183 = vmul.f32 %v2141, 1.442695
        %v2184 = vpow.pop %v2183
        %v2185 = vmul.f32 %v2142, 1.442695
        %v2186 = vpow.pop %v2185
        %v2187 = vmul.f32 %v2143, 1.442695
        %v2188 = vpow.pop %v2187
        %v2189 = vmul.f32 %v2144, 1.442695
        %v2190 = vpow.pop %v2189
        %v2191 = vmul.f32 %v2145, 1.442695
        %v2192 = vpow.pop %v2191
        %v2193 = vmul.f32 %v2146, 1.442695
        %v2194 = vpow.pop %v2193
        %v2195 = vmul.f32 %v2147, 1.442695
        %v2196 = vpow.pop %v2195
        %v2197 = vmul.f32 %v2148, 1.442695
        %v2198 = vpow.pop %v2197
        %v2199 = vmul.f32 %v2149, 1.442695
        %v2200 = vpow.pop %v2199
        %v2201 = vmul.f32 %v2150, 1.442695
        %v2202 = vpow.pop %v2201
        %v2203 = vmul.f32 %v2151, 1.442695
        %v2204 = vpow.pop %v2203
        %v2205 = vmul.f32 %v2152, 1.442695
        %v2206 = vpow.pop %v2205
        %v2207 = vmul.f32 %v2153, 1.442695
        %v2208 = vpow.pop %v2207
        %v2209 = vmul.f32 %v2154, 1.442695
        %v2210 = vpow.pop %v2209
        %v2211 = vmul.f32 %v2155, 1.442695
        %v2212 = vpow.pop %v2211
        %v2213 = vmul.f32 %v2156, 1.442695
        %v2214 = vpow.pop %v2213
        %v2215 = vmul.f32 %v2157, 1.442695
        %v2216 = vpow.pop %v2215
        %v2217 = vmul.f32 %v2158, 1.442695
        %v2218 = vpow.pop %v2217
        %v2219 = vmul.f32 %v2159, 1.442695
        %v2220 = vpow.pop %v2219
        %v2221 = vmul.f32 %v2160, 1.442695
        %v2222 = vpow.pop %v2221
        %v2223 = vmul.f32 %v2161, 1.442695
        %v2224 = vpow.pop %v2223
        %v2225 = vmul.f32 %v2162, 1.442695
        %v2226 = vpow.pop %v2225
        %v2227 = vsel %vm2034, %v2164, 0.0
        %2228 = vadd.xlane.f32.xlu0 %v2227
        %v2229 = vpop.xlane.xlu0 %2228
        %v2230 = vsel %vm2034, %v2166, 0.0
        %2231 = vadd.xlane.f32.xlu0 %v2230
        %v2232 = vpop.xlane.xlu0 %2231
        %v2233 = vsel %vm2034, %v2168, 0.0
        %2234 = vadd.xlane.f32.xlu0 %v2233
        %v2235 = vpop.xlane.xlu0 %2234
        %v2236 = vsel %vm2034, %v2170, 0.0
        %2237 = vadd.xlane.f32.xlu0 %v2236
        %v2238 = vpop.xlane.xlu0 %2237
        %v2239 = vsel %vm2034, %v2172, 0.0
        %2240 = vadd.xlane.f32.xlu0 %v2239
        %v2241 = vpop.xlane.xlu0 %2240
        %v2242 = vsel %vm2034, %v2174, 0.0
        %2243 = vadd.xlane.f32.xlu0 %v2242
        %v2244 = vpop.xlane.xlu0 %2243
        %v2245 = vsel %vm2034, %v2176, 0.0
        %2246 = vadd.xlane.f32.xlu0 %v2245
        %v2247 = vpop.xlane.xlu0 %2246
        %v2248 = vsel %vm2034, %v2178, 0.0
        %2249 = vadd.xlane.f32.xlu0 %v2248
        %v2250 = vpop.xlane.xlu0 %2249
        %v2251 = vsel %vm2034, %v2180, 0.0
        %2252 = vadd.xlane.f32.xlu0 %v2251
        %v2253 = vpop.xlane.xlu0 %2252
        %v2254 = vsel %vm2034, %v2182, 0.0
        %2255 = vadd.xlane.f32.xlu0 %v2254
        %v2256 = vpop.xlane.xlu0 %2255
        %v2257 = vsel %vm2034, %v2184, 0.0
        %2258 = vadd.xlane.f32.xlu0 %v2257
        %v2259 = vpop.xlane.xlu0 %2258
        %v2260 = vsel %vm2034, %v2186, 0.0
        %2261 = vadd.xlane.f32.xlu0 %v2260
        %v2262 = vpop.xlane.xlu0 %2261
        %v2263 = vsel %vm2034, %v2188, 0.0
        %2264 = vadd.xlane.f32.xlu0 %v2263
        %v2265 = vpop.xlane.xlu0 %2264
        %v2266 = vsel %vm2034, %v2190, 0.0
        %2267 = vadd.xlane.f32.xlu0 %v2266
        %v2268 = vpop.xlane.xlu0 %2267
        %v2269 = vsel %vm2034, %v2192, 0.0
        %2270 = vadd.xlane.f32.xlu0 %v2269
        %v2271 = vpop.xlane.xlu0 %2270
        %v2272 = vsel %vm2034, %v2194, 0.0
        %2273 = vadd.xlane.f32.xlu0 %v2272
        %v2274 = vpop.xlane.xlu0 %2273
        %v2275 = vsel %vm2034, %v2196, 0.0
        %2276 = vadd.xlane.f32.xlu0 %v2275
        %v2277 = vpop.xlane.xlu0 %2276
        %v2278 = vsel %vm2034, %v2198, 0.0
        %2279 = vadd.xlane.f32.xlu0 %v2278
        %v2280 = vpop.xlane.xlu0 %2279
        %v2281 = vsel %vm2034, %v2200, 0.0
        %2282 = vadd.xlane.f32.xlu0 %v2281
        %v2283 = vpop.xlane.xlu0 %2282
        %v2284 = vsel %vm2034, %v2202, 0.0
        %2285 = vadd.xlane.f32.xlu0 %v2284
        %v2286 = vpop.xlane.xlu0 %2285
        %v2287 = vsel %vm2034, %v2204, 0.0
        %2288 = vadd.xlane.f32.xlu0 %v2287
        %v2289 = vpop.xlane.xlu0 %2288
        %v2290 = vsel %vm2034, %v2206, 0.0
        %2291 = vadd.xlane.f32.xlu0 %v2290
        %v2292 = vpop.xlane.xlu0 %2291
        %v2293 = vsel %vm2034, %v2208, 0.0
        %2294 = vadd.xlane.f32.xlu0 %v2293
        %v2295 = vpop.xlane.xlu0 %2294
        %v2296 = vsel %vm2034, %v2210, 0.0
        %2297 = vadd.xlane.f32.xlu0 %v2296
        %v2298 = vpop.xlane.xlu0 %2297
        %v2299 = vsel %vm2034, %v2212, 0.0
        %2300 = vadd.xlane.f32.xlu0 %v2299
        %v2301 = vpop.xlane.xlu0 %2300
        %v2302 = vsel %vm2034, %v2214, 0.0
        %2303 = vadd.xlane.f32.xlu0 %v2302
        %v2304 = vpop.xlane.xlu0 %2303
        %v2305 = vsel %vm2034, %v2216, 0.0
        %2306 = vadd.xlane.f32.xlu0 %v2305
        %v2307 = vpop.xlane.xlu0 %2306
        %v2308 = vsel %vm2034, %v2218, 0.0
        %2309 = vadd.xlane.f32.xlu0 %v2308
        %v2310 = vpop.xlane.xlu0 %2309
        %v2311 = vsel %vm2034, %v2220, 0.0
        %2312 = vadd.xlane.f32.xlu0 %v2311
        %v2313 = vpop.xlane.xlu0 %2312
        %v2314 = vsel %vm2034, %v2222, 0.0
        %2315 = vadd.xlane.f32.xlu0 %v2314
        %v2316 = vpop.xlane.xlu0 %2315
        %v2317 = vsel %vm2034, %v2224, 0.0
        %2318 = vadd.xlane.f32.xlu0 %v2317
        %v2319 = vpop.xlane.xlu0 %2318
        %v2320 = vsel %vm2034, %v2226, 0.0
        %2321 = vadd.xlane.f32.xlu0 %v2320
        %v2322 = vpop.xlane.xlu0 %2321
        %v2323 = vrcp.pop %v2229
        %v2324 = vrcp.pop %v2232
        %v2325 = vrcp.pop %v2235
        %v2326 = vrcp.pop %v2238
        %v2327 = vrcp.pop %v2241
        %v2328 = vrcp.pop %v2244
        %v2329 = vrcp.pop %v2247
        %v2330 = vrcp.pop %v2250
        %v2331 = vrcp.pop %v2253
        %v2332 = vrcp.pop %v2256
        %v2333 = vrcp.pop %v2259
        %v2334 = vrcp.pop %v2262
        %v2335 = vrcp.pop %v2265
        %v2336 = vrcp.pop %v2268
        %v2337 = vrcp.pop %v2271
        %v2338 = vrcp.pop %v2274
        %v2339 = vrcp.pop %v2277
        %v2340 = vrcp.pop %v2280
        %v2341 = vrcp.pop %v2283
        %v2342 = vrcp.pop %v2286
        %v2343 = vrcp.pop %v2289
        %v2344 = vrcp.pop %v2292
        %v2345 = vrcp.pop %v2295
        %v2346 = vrcp.pop %v2298
        %v2347 = vrcp.pop %v2301
        %v2348 = vrcp.pop %v2304
        %v2349 = vrcp.pop %v2307
        %v2350 = vrcp.pop %v2310
        %v2351 = vrcp.pop %v2313
        %v2352 = vrcp.pop %v2316
        %v2353 = vrcp.pop %v2319
        %v2354 = vrcp.pop %v2322
        %v2355 = vmul.f32 %v2164, %v2323
        %v2356 = vmul.f32 %v2166, %v2324
        %v2357 = vmul.f32 %v2168, %v2325
        %v2358 = vmul.f32 %v2170, %v2326
        %v2359 = vmul.f32 %v2172, %v2327
        %v2360 = vmul.f32 %v2174, %v2328
        %v2361 = vmul.f32 %v2176, %v2329
        %v2362 = vmul.f32 %v2178, %v2330
        %v2363 = vmul.f32 %v2180, %v2331
        %v2364 = vmul.f32 %v2182, %v2332
        %v2365 = vmul.f32 %v2184, %v2333
        %v2366 = vmul.f32 %v2186, %v2334
        %v2367 = vmul.f32 %v2188, %v2335
        %v2368 = vmul.f32 %v2190, %v2336
        %v2369 = vmul.f32 %v2192, %v2337
        %v2370 = vmul.f32 %v2194, %v2338
        %v2371 = vmul.f32 %v2196, %v2339
        %v2372 = vmul.f32 %v2198, %v2340
        %v2373 = vmul.f32 %v2200, %v2341
        %v2374 = vmul.f32 %v2202, %v2342
        %v2375 = vmul.f32 %v2204, %v2343
        %v2376 = vmul.f32 %v2206, %v2344
        %v2377 = vmul.f32 %v2208, %v2345
        %v2378 = vmul.f32 %v2210, %v2346
        %v2379 = vmul.f32 %v2212, %v2347
        %v2380 = vmul.f32 %v2214, %v2348
        %v2381 = vmul.f32 %v2216, %v2349
        %v2382 = vmul.f32 %v2218, %v2350
        %v2383 = vmul.f32 %v2220, %v2351
        %v2384 = vmul.f32 %v2222, %v2352
        %v2385 = vmul.f32 %v2224, %v2353
        %v2386 = vmul.f32 %v2226, %v2354
        %2387 = vrot.lane.b32.xlu0 %v1163, 64
        %v2388 = vpop.permute.xlu0 %2387
        %2389 = vrot.lane.b32.xlu0 %v1168, 64
        %v2390 = vpop.permute.xlu0 %2389
        %2391 = vrot.lane.b32.xlu0 %v1173, 64
        %v2392 = vpop.permute.xlu0 %2391
        %2393 = vrot.lane.b32.xlu0 %v1178, 64
        %v2394 = vpop.permute.xlu0 %2393
        %2395 = vrot.lane.b32.xlu0 %v1183, 64
        %v2396 = vpop.permute.xlu0 %2395
        %2397 = vrot.lane.b32.xlu0 %v1188, 64
        %v2398 = vpop.permute.xlu0 %2397
        %2399 = vrot.lane.b32.xlu0 %v1193, 64
        %v2400 = vpop.permute.xlu0 %2399
        %2401 = vrot.lane.b32.xlu0 %v1198, 64
        %v2402 = vpop.permute.xlu0 %2401
        %v2412 = vsel %vm2034, %v2355, 0
        %v2415 = vsel %vm2034, %v2356, 0
        %v2418 = vsel %vm2034, %v2357, 0
        %v2421 = vsel %vm2034, %v2358, 0
        %v2424 = vsel %vm2034, %v2359, 0
        %v2427 = vsel %vm2034, %v2360, 0
        %v2430 = vsel %vm2034, %v2361, 0
        %v2433 = vsel %vm2034, %v2362, 0
        %2435 = vmatprep.subr.mxu0 0.0
        %2436 = vmatpush1.msra.mxu0 %v2388
        %2437 = vmatprep.subr.mxu0 0.0
        %2438 = vmatpush1.msra.mxu0 %v2390
        %2439 = vmatprep.subr.mxu0 0.0
        %2440 = vmatpush1.msra.mxu0 %v2392
        %2441 = vmatprep.subr.mxu0 0.0
        %2442 = vmatpush1.msra.mxu0 %v2394
        %2443 = vmatprep.subr.mxu0 0.0
        %2444 = vmatpush1.msra.mxu0 %v2396
        %2445 = vmatprep.subr.mxu0 0.0
        %2446 = vmatpush1.msra.mxu0 %v2398
        %2447 = vmatprep.subr.mxu0 0.0
        %2448 = vmatpush1.msra.mxu0 %v2400
        %2449 = vmatprep.subr.mxu0 0.0
        %2450 = vmatpush1.msra.mxu0 %v2402
        %2451 = vmatprep.subr.mxu0 0.0
        %2452 = vmatpush1.msra.mxu0 0.0
        %2453 = vmatprep.subr.mxu0 0.0
        %2454 = vmatpush1.msra.mxu0 0.0
        %2455 = vmatprep.subr.mxu0 0.0
        %2456 = vmatpush1.msra.mxu0 0.0
        %2457 = vmatprep.subr.mxu0 0.0
        %2458 = vmatpush1.msra.mxu0 0.0
        %2459 = vmatprep.subr.mxu0 0.0
        %2460 = vmatpush1.msra.mxu0 0.0
        %2461 = vmatprep.subr.mxu0 0.0
        %2462 = vmatpush1.msra.mxu0 0.0
        %2463 = vmatprep.subr.mxu0 0.0
        %2464 = vmatpush1.msra.mxu0 0.0
        %2465 = vmatprep.subr.mxu0 0.0
        %2466 = vmatpush1.msra.mxu0 0.0
        %2467 = vmatprep.subr.mxu0 0.0
        %2468 = vmatpush1.msra.mxu0 0.0
        %2469 = vmatprep.subr.mxu0 0.0
        %2470 = vmatpush1.msra.mxu0 0.0
        %2471 = vmatprep.subr.mxu0 0.0
        %2472 = vmatpush1.msra.mxu0 0.0
        %2473 = vmatprep.subr.mxu0 0.0
        %2474 = vmatpush1.msra.mxu0 0.0
        %2475 = vmatprep.subr.mxu0 0.0
        %2476 = vmatpush1.msra.mxu0 0.0
        %2477 = vmatprep.subr.mxu0 0.0
        %2478 = vmatpush1.msra.mxu0 0.0
        %2479 = vmatprep.subr.mxu0 0.0
        %2480 = vmatpush1.msra.mxu0 0.0
        %2481 = vmatprep.subr.mxu0 0.0
        %2482 = vmatpush1.msra.mxu0 0.0
        %2483 = vmatprep.subr.mxu0 0.0
        %2484 = vmatpush1.msra.mxu0 0.0
        %2485 = vmatprep.subr.mxu0 0.0
        %2486 = vmatpush1.msra.mxu0 0.0
        %2487 = vmatprep.subr.mxu0 0.0
        %2488 = vmatpush1.msra.mxu0 0.0
        %2489 = vmatprep.subr.mxu0 0.0
        %2490 = vmatpush1.msra.mxu0 0.0
        %2491 = vmatprep.subr.mxu0 0.0
        %2492 = vmatpush1.msra.mxu0 0.0
        %2493 = vmatprep.subr.mxu0 0.0
        %2494 = vmatpush1.msra.mxu0 0.0
        %2495 = vmatprep.subr.mxu0 0.0
        %2496 = vmatpush1.msra.mxu0 0.0
        %2497 = vmatprep.subr.mxu0 0.0
        %2498 = vmatpush1.msra.mxu0 0.0
        %2499 = vmatprep.mubr.f32.mxu0 0.0
        %2500 = vmatmul.mubr.f32.gmra.mrb[0].mxu0 %v2412
        %v2501 = vpop.f32.mrb[0].mxu0
        %v2502 = vadd.f32 0.0, %v2501
        %v2503 = vpop.f32.mrb[0].mxu0
        %2504 = vmatprep.mubr.f32.mxu0 0.0
        %2505 = vmatmul.mubr.f32.gmra.mrb[0].mxu0 %v2415
        %v2506 = vpop.f32.mrb[0].mxu0
        %v2507 = vadd.f32 0.0, %v2506
        %v2508 = vpop.f32.mrb[0].mxu0
        %2509 = vmatprep.mubr.f32.mxu0 0.0
        %2510 = vmatmul.mubr.f32.gmra.mrb[0].mxu0 %v2418
        %v2511 = vpop.f32.mrb[0].mxu0
        %v2512 = vadd.f32 0.0, %v2511
        %v2513 = vpop.f32.mrb[0].mxu0
        %2514 = vmatprep.mubr.f32.mxu0 0.0
        %2515 = vmatmul.mubr.f32.gmra.mrb[0].mxu0 %v2421
        %v2516 = vpop.f32.mrb[0].mxu0
        %v2517 = vadd.f32 0.0, %v2516
        %v2518 = vpop.f32.mrb[0].mxu0
        %2519 = vmatprep.mubr.f32.mxu0 0.0
        %2520 = vmatmul.mubr.f32.gmra.mrb[0].mxu0 %v2424
        %v2521 = vpop.f32.mrb[0].mxu0
        %v2522 = vadd.f32 0.0, %v2521
        %v2523 = vpop.f32.mrb[0].mxu0
        %2524 = vmatprep.mubr.f32.mxu0 0.0
        %2525 = vmatmul.mubr.f32.gmra.mrb[0].mxu0 %v2427
        %v2526 = vpop.f32.mrb[0].mxu0
        %v2527 = vadd.f32 0.0, %v2526
        %v2528 = vpop.f32.mrb[0].mxu0
        %2529 = vmatprep.mubr.f32.mxu0 0.0
        %2530 = vmatmul.mubr.f32.gmra.mrb[0].mxu0 %v2430
        %v2531 = vpop.f32.mrb[0].mxu0
        %v2532 = vadd.f32 0.0, %v2531
        %v2533 = vpop.f32.mrb[0].mxu0
        %2534 = vmatprep.mubr.f32.mxu0 0.0
        %2535 = vmatmul.mubr.f32.gmra.mrb[0].mxu0 %v2433
        %v2536 = vpop.f32.mrb[0].mxu0
        %v2537 = vadd.f32 0.0, %v2536
        %v2538 = vpop.f32.mrb[0].mxu0
        %2539 = vdwg.mxu0
        %2540 = vrot.lane.b32.xlu0 %v1203, 64
        %v2541 = vpop.permute.xlu0 %2540
        %2542 = vrot.lane.b32.xlu0 %v1208, 64
        %v2543 = vpop.permute.xlu0 %2542
        %2544 = vrot.lane.b32.xlu0 %v1213, 64
        %v2545 = vpop.permute.xlu0 %2544
        %2546 = vrot.lane.b32.xlu0 %v1218, 64
        %v2547 = vpop.permute.xlu0 %2546
        %2548 = vrot.lane.b32.xlu0 %v1223, 64
        %v2549 = vpop.permute.xlu0 %2548
        %2550 = vrot.lane.b32.xlu0 %v1228, 64
        %v2551 = vpop.permute.xlu0 %2550
        %2552 = vrot.lane.b32.xlu0 %v1233, 64
        %v2553 = vpop.permute.xlu0 %2552
        %2554 = vrot.lane.b32.xlu0 %v1238, 64
        %v2555 = vpop.permute.xlu0 %2554
        %v2565 = vsel %vm2034, %v2363, 0
        %v2568 = vsel %vm2034, %v2364, 0
        %v2571 = vsel %vm2034, %v2365, 0
        %v2574 = vsel %vm2034, %v2366, 0
        %v2577 = vsel %vm2034, %v2367, 0
        %v2580 = vsel %vm2034, %v2368, 0
        %v2583 = vsel %vm2034, %v2369, 0
        %v2586 = vsel %vm2034, %v2370, 0
        %2588 = vmatprep.subr.mxu0 0.0
        %2589 = vmatpush1.msra.mxu0 %v2541
        %2590 = vmatprep.subr.mxu0 0.0
        %2591 = vmatpush1.msra.mxu0 %v2543
        %2592 = vmatprep.subr.mxu0 0.0
        %2593 = vmatpush1.msra.mxu0 %v2545
        %2594 = vmatprep.subr.mxu0 0.0
        %2595 = vmatpush1.msra.mxu0 %v2547
        %2596 = vmatprep.subr.mxu0 0.0
        %2597 = vmatpush1.msra.mxu0 %v2549
        %2598 = vmatprep.subr.mxu0 0.0
        %2599 = vmatpush1.msra.mxu0 %v2551
        %2600 = vmatprep.subr.mxu0 0.0
        %2601 = vmatpush1.msra.mxu0 %v2553
        %2602 = vmatprep.subr.mxu0 0.0
        %2603 = vmatpush1.msra.mxu0 %v2555
        %2604 = vmatprep.subr.mxu0 0.0
        %2605 = vmatpush1.msra.mxu0 0.0
        %2606 = vmatprep.subr.mxu0 0.0
        %2607 = vmatpush1.msra.mxu0 0.0
        %2608 = vmatprep.subr.mxu0 0.0
        %2609 = vmatpush1.msra.mxu0 0.0
        %2610 = vmatprep.subr.mxu0 0.0
        %2611 = vmatpush1.msra.mxu0 0.0
        %2612 = vmatprep.subr.mxu0 0.0
        %2613 = vmatpush1.msra.mxu0 0.0
        %2614 = vmatprep.subr.mxu0 0.0
        %2615 = vmatpush1.msra.mxu0 0.0
        %2616 = vmatprep.subr.mxu0 0.0
        %2617 = vmatpush1.msra.mxu0 0.0
        %2618 = vmatprep.subr.mxu0 0.0
        %2619 = vmatpush1.msra.mxu0 0.0
        %2620 = vmatprep.subr.mxu0 0.0
        %2621 = vmatpush1.msra.mxu0 0.0
        %2622 = vmatprep.subr.mxu0 0.0
        %2623 = vmatpush1.msra.mxu0 0.0
        %2624 = vmatprep.subr.mxu0 0.0
        %2625 = vmatpush1.msra.mxu0 0.0
        %2626 = vmatprep.subr.mxu0 0.0
        %2627 = vmatpush1.msra.mxu0 0.0
        %2628 = vmatprep.subr.mxu0 0.0
        %2629 = vmatpush1.msra.mxu0 0.0
        %2630 = vmatprep.subr.mxu0 0.0
        %2631 = vmatpush1.msra.mxu0 0.0
        %2632 = vmatprep.subr.mxu0 0.0
        %2633 = vmatpush1.msra.mxu0 0.0
        %2634 = vmatprep.subr.mxu0 0.0
        %2635 = vmatpush1.msra.mxu0 0.0
        %2636 = vmatprep.subr.mxu0 0.0
        %2637 = vmatpush1.msra.mxu0 0.0
        %2638 = vmatprep.subr.mxu0 0.0
        %2639 = vmatpush1.msra.mxu0 0.0
        %2640 = vmatprep.subr.mxu0 0.0
        %2641 = vmatpush1.msra.mxu0 0.0
        %2642 = vmatprep.subr.mxu0 0.0
        %2643 = vmatpush1.msra.mxu0 0.0
        %2644 = vmatprep.subr.mxu0 0.0
        %2645 = vmatpush1.msra.mxu0 0.0
        %2646 = vmatprep.subr.mxu0 0.0
        %2647 = vmatpush1.msra.mxu0 0.0
        %2648 = vmatprep.subr.mxu0 0.0
        %2649 = vmatpush1.msra.mxu0 0.0
        %2650 = vmatprep.subr.mxu0 0.0
        %2651 = vmatpush1.msra.mxu0 0.0
        %2652 = vmatprep.mubr.f32.mxu0 0.0
        %2653 = vmatmul.mubr.f32.gmra.mrb[0].mxu0 %v2565
        %v2654 = vpop.f32.mrb[0].mxu0
        %v2655 = vadd.f32 0.0, %v2654
        %v2656 = vpop.f32.mrb[0].mxu0
        %2657 = vmatprep.mubr.f32.mxu0 0.0
        %2658 = vmatmul.mubr.f32.gmra.mrb[0].mxu0 %v2568
        %v2659 = vpop.f32.mrb[0].mxu0
        %v2660 = vadd.f32 0.0, %v2659
        %v2661 = vpop.f32.mrb[0].mxu0
        %2662 = vmatprep.mubr.f32.mxu0 0.0
        %2663 = vmatmul.mubr.f32.gmra.mrb[0].mxu0 %v2571
        %v2664 = vpop.f32.mrb[0].mxu0
        %v2665 = vadd.f32 0.0, %v2664
        %v2666 = vpop.f32.mrb[0].mxu0
        %2667 = vmatprep.mubr.f32.mxu0 0.0
        %2668 = vmatmul.mubr.f32.gmra.mrb[0].mxu0 %v2574
        %v2669 = vpop.f32.mrb[0].mxu0
        %v2670 = vadd.f32 0.0, %v2669
        %v2671 = vpop.f32.mrb[0].mxu0
        %2672 = vmatprep.mubr.f32.mxu0 0.0
        %2673 = vmatmul.mubr.f32.gmra.mrb[0].mxu0 %v2577
        %v2674 = vpop.f32.mrb[0].mxu0
        %v2675 = vadd.f32 0.0, %v2674
        %v2676 = vpop.f32.mrb[0].mxu0
        %2677 = vmatprep.mubr.f32.mxu0 0.0
        %2678 = vmatmul.mubr.f32.gmra.mrb[0].mxu0 %v2580
        %v2679 = vpop.f32.mrb[0].mxu0
        %v2680 = vadd.f32 0.0, %v2679
        %v2681 = vpop.f32.mrb[0].mxu0
        %2682 = vmatprep.mubr.f32.mxu0 0.0
        %2683 = vmatmul.mubr.f32.gmra.mrb[0].mxu0 %v2583
        %v2684 = vpop.f32.mrb[0].mxu0
        %v2685 = vadd.f32 0.0, %v2684
        %v2686 = vpop.f32.mrb[0].mxu0
        %2687 = vmatprep.mubr.f32.mxu0 0.0
        %2688 = vmatmul.mubr.f32.gmra.mrb[0].mxu0 %v2586
        %v2689 = vpop.f32.mrb[0].mxu0
        %v2690 = vadd.f32 0.0, %v2689
        %v2691 = vpop.f32.mrb[0].mxu0
        %2692 = vdwg.mxu0
        %2693 = vrot.lane.b32.xlu0 %v1243, 64
        %v2694 = vpop.permute.xlu0 %2693
        %2695 = vrot.lane.b32.xlu0 %v1248, 64
        %v2696 = vpop.permute.xlu0 %2695
        %2697 = vrot.lane.b32.xlu0 %v1253, 64
        %v2698 = vpop.permute.xlu0 %2697
        %2699 = vrot.lane.b32.xlu0 %v1258, 64
        %v2700 = vpop.permute.xlu0 %2699
        %2701 = vrot.lane.b32.xlu0 %v1263, 64
        %v2702 = vpop.permute.xlu0 %2701
        %2703 = vrot.lane.b32.xlu0 %v1268, 64
        %v2704 = vpop.permute.xlu0 %2703
        %2705 = vrot.lane.b32.xlu0 %v1273, 64
        %v2706 = vpop.permute.xlu0 %2705
        %2707 = vrot.lane.b32.xlu0 %v1278, 64
        %v2708 = vpop.permute.xlu0 %2707
        %v2718 = vsel %vm2034, %v2371, 0
        %v2721 = vsel %vm2034, %v2372, 0
        %v2724 = vsel %vm2034, %v2373, 0
        %v2727 = vsel %vm2034, %v2374, 0
        %v2730 = vsel %vm2034, %v2375, 0
        %v2733 = vsel %vm2034, %v2376, 0
        %v2736 = vsel %vm2034, %v2377, 0
        %v2739 = vsel %vm2034, %v2378, 0
        %2741 = vmatprep.subr.mxu0 0.0
        %2742 = vmatpush1.msra.mxu0 %v2694
        %2743 = vmatprep.subr.mxu0 0.0
        %2744 = vmatpush1.msra.mxu0 %v2696
        %2745 = vmatprep.subr.mxu0 0.0
        %2746 = vmatpush1.msra.mxu0 %v2698
        %2747 = vmatprep.subr.mxu0 0.0
        %2748 = vmatpush1.msra.mxu0 %v2700
        %2749 = vmatprep.subr.mxu0 0.0
        %2750 = vmatpush1.msra.mxu0 %v2702
        %2751 = vmatprep.subr.mxu0 0.0
        %2752 = vmatpush1.msra.mxu0 %v2704
        %2753 = vmatprep.subr.mxu0 0.0
        %2754 = vmatpush1.msra.mxu0 %v2706
        %2755 = vmatprep.subr.mxu0 0.0
        %2756 = vmatpush1.msra.mxu0 %v2708
        %2757 = vmatprep.subr.mxu0 0.0
        %2758 = vmatpush1.msra.mxu0 0.0
        %2759 = vmatprep.subr.mxu0 0.0
        %2760 = vmatpush1.msra.mxu0 0.0
        %2761 = vmatprep.subr.mxu0 0.0
        %2762 = vmatpush1.msra.mxu0 0.0
        %2763 = vmatprep.subr.mxu0 0.0
        %2764 = vmatpush1.msra.mxu0 0.0
        %2765 = vmatprep.subr.mxu0 0.0
        %2766 = vmatpush1.msra.mxu0 0.0
        %2767 = vmatprep.subr.mxu0 0.0
        %2768 = vmatpush1.msra.mxu0 0.0
        %2769 = vmatprep.subr.mxu0 0.0
        %2770 = vmatpush1.msra.mxu0 0.0
        %2771 = vmatprep.subr.mxu0 0.0
        %2772 = vmatpush1.msra.mxu0 0.0
        %2773 = vmatprep.subr.mxu0 0.0
        %2774 = vmatpush1.msra.mxu0 0.0
        %2775 = vmatprep.subr.mxu0 0.0
        %2776 = vmatpush1.msra.mxu0 0.0
        %2777 = vmatprep.subr.mxu0 0.0
        %2778 = vmatpush1.msra.mxu0 0.0
        %2779 = vmatprep.subr.mxu0 0.0
        %2780 = vmatpush1.msra.mxu0 0.0
        %2781 = vmatprep.subr.mxu0 0.0
        %2782 = vmatpush1.msra.mxu0 0.0
        %2783 = vmatprep.subr.mxu0 0.0
        %2784 = vmatpush1.msra.mxu0 0.0
        %2785 = vmatprep.subr.mxu0 0.0
        %2786 = vmatpush1.msra.mxu0 0.0
        %2787 = vmatprep.subr.mxu0 0.0
        %2788 = vmatpush1.msra.mxu0 0.0
        %2789 = vmatprep.subr.mxu0 0.0
        %2790 = vmatpush1.msra.mxu0 0.0
        %2791 = vmatprep.subr.mxu0 0.0
        %2792 = vmatpush1.msra.mxu0 0.0
        %2793 = vmatprep.subr.mxu0 0.0
        %2794 = vmatpush1.msra.mxu0 0.0
        %2795 = vmatprep.subr.mxu0 0.0
        %2796 = vmatpush1.msra.mxu0 0.0
        %2797 = vmatprep.subr.mxu0 0.0
        %2798 = vmatpush1.msra.mxu0 0.0
        %2799 = vmatprep.subr.mxu0 0.0
        %2800 = vmatpush1.msra.mxu0 0.0
        %2801 = vmatprep.subr.mxu0 0.0
        %2802 = vmatpush1.msra.mxu0 0.0
        %2803 = vmatprep.subr.mxu0 0.0
        %2804 = vmatpush1.msra.mxu0 0.0
        %2805 = vmatprep.mubr.f32.mxu0 0.0
        %2806 = vmatmul.mubr.f32.gmra.mrb[0].mxu0 %v2718
        %v2807 = vpop.f32.mrb[0].mxu0
        %v2808 = vadd.f32 0.0, %v2807
        %v2809 = vpop.f32.mrb[0].mxu0
        %2810 = vmatprep.mubr.f32.mxu0 0.0
        %2811 = vmatmul.mubr.f32.gmra.mrb[0].mxu0 %v2721
        %v2812 = vpop.f32.mrb[0].mxu0
        %v2813 = vadd.f32 0.0, %v2812
        %v2814 = vpop.f32.mrb[0].mxu0
        %2815 = vmatprep.mubr.f32.mxu0 0.0
        %2816 = vmatmul.mubr.f32.gmra.mrb[0].mxu0 %v2724
        %v2817 = vpop.f32.mrb[0].mxu0
        %v2818 = vadd.f32 0.0, %v2817
        %v2819 = vpop.f32.mrb[0].mxu0
        %2820 = vmatprep.mubr.f32.mxu0 0.0
        %2821 = vmatmul.mubr.f32.gmra.mrb[0].mxu0 %v2727
        %v2822 = vpop.f32.mrb[0].mxu0
        %v2823 = vadd.f32 0.0, %v2822
        %v2824 = vpop.f32.mrb[0].mxu0
        %2825 = vmatprep.mubr.f32.mxu0 0.0
        %2826 = vmatmul.mubr.f32.gmra.mrb[0].mxu0 %v2730
        %v2827 = vpop.f32.mrb[0].mxu0
        %v2828 = vadd.f32 0.0, %v2827
        %v2829 = vpop.f32.mrb[0].mxu0
        %2830 = vmatprep.mubr.f32.mxu0 0.0
        %2831 = vmatmul.mubr.f32.gmra.mrb[0].mxu0 %v2733
        %v2832 = vpop.f32.mrb[0].mxu0
        %v2833 = vadd.f32 0.0, %v2832
        %v2834 = vpop.f32.mrb[0].mxu0
        %2835 = vmatprep.mubr.f32.mxu0 0.0
        %2836 = vmatmul.mubr.f32.gmra.mrb[0].mxu0 %v2736
        %v2837 = vpop.f32.mrb[0].mxu0
        %v2838 = vadd.f32 0.0, %v2837
        %v2839 = vpop.f32.mrb[0].mxu0
        %2840 = vmatprep.mubr.f32.mxu0 0.0
        %2841 = vmatmul.mubr.f32.gmra.mrb[0].mxu0 %v2739
        %v2842 = vpop.f32.mrb[0].mxu0
        %v2843 = vadd.f32 0.0, %v2842
        %v2844 = vpop.f32.mrb[0].mxu0
        %2845 = vdwg.mxu0
        %2846 = vrot.lane.b32.xlu0 %v1283, 64
        %v2847 = vpop.permute.xlu0 %2846
        %2848 = vrot.lane.b32.xlu0 %v1288, 64
        %v2849 = vpop.permute.xlu0 %2848
        %2850 = vrot.lane.b32.xlu0 %v1293, 64
        %v2851 = vpop.permute.xlu0 %2850
        %2852 = vrot.lane.b32.xlu0 %v1298, 64
        %v2853 = vpop.permute.xlu0 %2852
        %2854 = vrot.lane.b32.xlu0 %v1303, 64
        %v2855 = vpop.permute.xlu0 %2854
        %2856 = vrot.lane.b32.xlu0 %v1308, 64
        %v2857 = vpop.permute.xlu0 %2856
        %2858 = vrot.lane.b32.xlu0 %v1313, 64
        %v2859 = vpop.permute.xlu0 %2858
        %2860 = vrot.lane.b32.xlu0 %v1318, 64
        %v2861 = vpop.permute.xlu0 %2860
        %v2871 = vsel %vm2034, %v2379, 0
        %v2874 = vsel %vm2034, %v2380, 0
        %v2877 = vsel %vm2034, %v2381, 0
        %v2880 = vsel %vm2034, %v2382, 0
        %v2883 = vsel %vm2034, %v2383, 0
        %v2886 = vsel %vm2034, %v2384, 0
        %v2889 = vsel %vm2034, %v2385, 0
        %v2892 = vsel %vm2034, %v2386, 0
        %2894 = vmatprep.subr.mxu0 0.0
        %2895 = vmatpush1.msra.mxu0 %v2847
        %2896 = vmatprep.subr.mxu0 0.0
        %2897 = vmatpush1.msra.mxu0 %v2849
        %2898 = vmatprep.subr.mxu0 0.0
        %2899 = vmatpush1.msra.mxu0 %v2851
        %2900 = vmatprep.subr.mxu0 0.0
        %2901 = vmatpush1.msra.mxu0 %v2853
        %2902 = vmatprep.subr.mxu0 0.0
        %2903 = vmatpush1.msra.mxu0 %v2855
        %2904 = vmatprep.subr.mxu0 0.0
        %2905 = vmatpush1.msra.mxu0 %v2857
        %2906 = vmatprep.subr.mxu0 0.0
        %2907 = vmatpush1.msra.mxu0 %v2859
        %2908 = vmatprep.subr.mxu0 0.0
        %2909 = vmatpush1.msra.mxu0 %v2861
        %2910 = vmatprep.subr.mxu0 0.0
        %2911 = vmatpush1.msra.mxu0 0.0
        %2912 = vmatprep.subr.mxu0 0.0
        %2913 = vmatpush1.msra.mxu0 0.0
        %2914 = vmatprep.subr.mxu0 0.0
        %2915 = vmatpush1.msra.mxu0 0.0
        %2916 = vmatprep.subr.mxu0 0.0
        %2917 = vmatpush1.msra.mxu0 0.0
        %2918 = vmatprep.subr.mxu0 0.0
        %2919 = vmatpush1.msra.mxu0 0.0
        %2920 = vmatprep.subr.mxu0 0.0
        %2921 = vmatpush1.msra.mxu0 0.0
        %2922 = vmatprep.subr.mxu0 0.0
        %2923 = vmatpush1.msra.mxu0 0.0
        %2924 = vmatprep.subr.mxu0 0.0
        %2925 = vmatpush1.msra.mxu0 0.0
        %2926 = vmatprep.subr.mxu0 0.0
        %2927 = vmatpush1.msra.mxu0 0.0
        %2928 = vmatprep.subr.mxu0 0.0
        %2929 = vmatpush1.msra.mxu0 0.0
        %2930 = vmatprep.subr.mxu0 0.0
        %2931 = vmatpush1.msra.mxu0 0.0
        %2932 = vmatprep.subr.mxu0 0.0
        %2933 = vmatpush1.msra.mxu0 0.0
        %2934 = vmatprep.subr.mxu0 0.0
        %2935 = vmatpush1.msra.mxu0 0.0
        %2936 = vmatprep.subr.mxu0 0.0
        %2937 = vmatpush1.msra.mxu0 0.0
        %2938 = vmatprep.subr.mxu0 0.0
        %2939 = vmatpush1.msra.mxu0 0.0
        %2940 = vmatprep.subr.mxu0 0.0
        %2941 = vmatpush1.msra.mxu0 0.0
        %2942 = vmatprep.subr.mxu0 0.0
        %2943 = vmatpush1.msra.mxu0 0.0
        %2944 = vmatprep.subr.mxu0 0.0
        %2945 = vmatpush1.msra.mxu0 0.0
        %2946 = vmatprep.subr.mxu0 0.0
        %2947 = vmatpush1.msra.mxu0 0.0
        %2948 = vmatprep.subr.mxu0 0.0
        %2949 = vmatpush1.msra.mxu0 0.0
        %2950 = vmatprep.subr.mxu0 0.0
        %2951 = vmatpush1.msra.mxu0 0.0
        %2952 = vmatprep.subr.mxu0 0.0
        %2953 = vmatpush1.msra.mxu0 0.0
        %2954 = vmatprep.subr.mxu0 0.0
        %2955 = vmatpush1.msra.mxu0 0.0
        %2956 = vmatprep.subr.mxu0 0.0
        %2957 = vmatpush1.msra.mxu0 0.0
        %2958 = vmatprep.mubr.f32.mxu0 0.0
        %2959 = vmatmul.mubr.f32.gmra.mrb[0].mxu0 %v2871
        %v2960 = vpop.f32.mrb[0].mxu0
        %v2961 = vadd.f32 0.0, %v2960
        %v2962 = vpop.f32.mrb[0].mxu0
        %2963 = vmatprep.mubr.f32.mxu0 0.0
        %2964 = vmatmul.mubr.f32.gmra.mrb[0].mxu0 %v2874
        %v2965 = vpop.f32.mrb[0].mxu0
        %v2966 = vadd.f32 0.0, %v2965
        %v2967 = vpop.f32.mrb[0].mxu0
        %2968 = vmatprep.mubr.f32.mxu0 0.0
        %2969 = vmatmul.mubr.f32.gmra.mrb[0].mxu0 %v2877
        %v2970 = vpop.f32.mrb[0].mxu0
        %v2971 = vadd.f32 0.0, %v2970
        %v2972 = vpop.f32.mrb[0].mxu0
        %2973 = vmatprep.mubr.f32.mxu0 0.0
        %2974 = vmatmul.mubr.f32.gmra.mrb[0].mxu0 %v2880
        %v2975 = vpop.f32.mrb[0].mxu0
        %v2976 = vadd.f32 0.0, %v2975
        %v2977 = vpop.f32.mrb[0].mxu0
        %2978 = vmatprep.mubr.f32.mxu0 0.0
        %2979 = vmatmul.mubr.f32.gmra.mrb[0].mxu0 %v2883
        %v2980 = vpop.f32.mrb[0].mxu0
        %v2981 = vadd.f32 0.0, %v2980
        %v2982 = vpop.f32.mrb[0].mxu0
        %2983 = vmatprep.mubr.f32.mxu0 0.0
        %2984 = vmatmul.mubr.f32.gmra.mrb[0].mxu0 %v2886
        %v2985 = vpop.f32.mrb[0].mxu0
        %v2986 = vadd.f32 0.0, %v2985
        %v2987 = vpop.f32.mrb[0].mxu0
        %2988 = vmatprep.mubr.f32.mxu0 0.0
        %2989 = vmatmul.mubr.f32.gmra.mrb[0].mxu0 %v2889
        %v2990 = vpop.f32.mrb[0].mxu0
        %v2991 = vadd.f32 0.0, %v2990
        %v2992 = vpop.f32.mrb[0].mxu0
        %2993 = vmatprep.mubr.f32.mxu0 0.0
        %2994 = vmatmul.mubr.f32.gmra.mrb[0].mxu0 %v2892
        %v2995 = vpop.f32.mrb[0].mxu0
        %v2996 = vadd.f32 0.0, %v2995
        %v2997 = vpop.f32.mrb[0].mxu0
        %2998 = vdwg.mxu0
        %2999 = vrot.lane.b32.xlu0 %v1321, 120
        %v3000 = vpop.permute.xlu0 %2999
        %3001 = vrot.lane.b32.xlu0 %v1322, 120
        %v3002 = vpop.permute.xlu0 %3001
        %3003 = vrot.lane.b32.xlu0 %v1323, 120
        %v3004 = vpop.permute.xlu0 %3003
        %3005 = vrot.lane.b32.xlu0 %v1324, 120
        %v3006 = vpop.permute.xlu0 %3005
        %3007 = vrot.lane.b32.xlu0 %v1325, 120
        %v3008 = vpop.permute.xlu0 %3007
        %3009 = vrot.lane.b32.xlu0 %v1326, 120
        %v3010 = vpop.permute.xlu0 %3009
        %3011 = vrot.lane.b32.xlu0 %v1327, 120
        %v3012 = vpop.permute.xlu0 %3011
        %3013 = vrot.lane.b32.xlu0 %v1328, 120
        %v3014 = vpop.permute.xlu0 %3013
        %3015 = vrot.lane.b32.xlu0 %v1163, 88
        %v3016 = vpop.permute.xlu0 %3015
        %3017 = vrot.lane.b32.xlu0 %v1168, 88
        %v3018 = vpop.permute.xlu0 %3017
        %3019 = vrot.lane.b32.xlu0 %v1173, 88
        %v3020 = vpop.permute.xlu0 %3019
        %3021 = vrot.lane.b32.xlu0 %v1178, 88
        %v3022 = vpop.permute.xlu0 %3021
        %3023 = vrot.lane.b32.xlu0 %v1183, 88
        %v3024 = vpop.permute.xlu0 %3023
        %3025 = vrot.lane.b32.xlu0 %v1188, 88
        %v3026 = vpop.permute.xlu0 %3025
        %3027 = vrot.lane.b32.xlu0 %v1193, 88
        %v3028 = vpop.permute.xlu0 %3027
        %3029 = vrot.lane.b32.xlu0 %v1198, 88
        %v3030 = vpop.permute.xlu0 %3029
        %v3031 = vsel %vm1381, %v3000, 0
        %v3033 = vsel %vm1381, %v3002, 0
        %v3035 = vsel %vm1381, %v3004, 0
        %v3037 = vsel %vm1381, %v3006, 0
        %v3039 = vsel %vm1381, %v3008, 0
        %v3041 = vsel %vm1381, %v3010, 0
        %v3043 = vsel %vm1381, %v3012, 0
        %v3045 = vsel %vm1381, %v3014, 0
        %v3047 = vsel %vm1381, %v3016, 0
        %v3049 = vsel %vm1381, %v3018, 0
        %v3051 = vsel %vm1381, %v3020, 0
        %v3053 = vsel %vm1381, %v3022, 0
        %v3055 = vsel %vm1381, %v3024, 0
        %v3057 = vsel %vm1381, %v3026, 0
        %v3059 = vsel %vm1381, %v3028, 0
        %v3061 = vsel %vm1381, %v3030, 0
        %3063 = vmatprep.subr.mxu0 0.0
        %3064 = vmatpush1.xpose.msra.mxu0 %v3047
        %3065 = vmatprep.subr.mxu0 0.0
        %3066 = vmatpush1.xpose.msra.mxu0 %v3049
        %3067 = vmatprep.subr.mxu0 0.0
        %3068 = vmatpush1.xpose.msra.mxu0 %v3051
        %3069 = vmatprep.subr.mxu0 0.0
        %3070 = vmatpush1.xpose.msra.mxu0 %v3053
        %3071 = vmatprep.subr.mxu0 0.0
        %3072 = vmatpush1.xpose.msra.mxu0 %v3055
        %3073 = vmatprep.subr.mxu0 0.0
        %3074 = vmatpush1.xpose.msra.mxu0 %v3057
        %3075 = vmatprep.subr.mxu0 0.0
        %3076 = vmatpush1.xpose.msra.mxu0 %v3059
        %3077 = vmatprep.subr.mxu0 0.0
        %3078 = vmatpush1.xpose.msra.mxu0 %v3061
        %3079 = vmatprep.subr.mxu0 0.0
        %3080 = vmatpush1.xpose.msra.mxu0 0.0
        %3081 = vmatprep.subr.mxu0 0.0
        %3082 = vmatpush1.xpose.msra.mxu0 0.0
        %3083 = vmatprep.subr.mxu0 0.0
        %3084 = vmatpush1.xpose.msra.mxu0 0.0
        %3085 = vmatprep.subr.mxu0 0.0
        %3086 = vmatpush1.xpose.msra.mxu0 0.0
        %3087 = vmatprep.subr.mxu0 0.0
        %3088 = vmatpush1.xpose.msra.mxu0 0.0
        %3089 = vmatprep.subr.mxu0 0.0
        %3090 = vmatpush1.xpose.msra.mxu0 0.0
        %3091 = vmatprep.subr.mxu0 0.0
        %3092 = vmatpush1.xpose.msra.mxu0 0.0
        %3093 = vmatprep.subr.mxu0 0.0
        %3094 = vmatpush1.xpose.msra.mxu0 0.0
        %3095 = vmatprep.subr.mxu0 0.0
        %3096 = vmatpush1.xpose.msra.mxu0 0.0
        %3097 = vmatprep.subr.mxu0 0.0
        %3098 = vmatpush1.xpose.msra.mxu0 0.0
        %3099 = vmatprep.subr.mxu0 0.0
        %3100 = vmatpush1.xpose.msra.mxu0 0.0
        %3101 = vmatprep.subr.mxu0 0.0
        %3102 = vmatpush1.xpose.msra.mxu0 0.0
        %3103 = vmatprep.subr.mxu0 0.0
        %3104 = vmatpush1.xpose.msra.mxu0 0.0
        %3105 = vmatprep.subr.mxu0 0.0
        %3106 = vmatpush1.xpose.msra.mxu0 0.0
        %3107 = vmatprep.subr.mxu0 0.0
        %3108 = vmatpush1.xpose.msra.mxu0 0.0
        %3109 = vmatprep.subr.mxu0 0.0
        %3110 = vmatpush1.xpose.msra.mxu0 0.0
        %3111 = vmatprep.subr.mxu0 0.0
        %3112 = vmatpush1.xpose.msra.mxu0 0.0
        %3113 = vmatprep.subr.mxu0 0.0
        %3114 = vmatpush1.xpose.msra.mxu0 0.0
        %3115 = vmatprep.subr.mxu0 0.0
        %3116 = vmatpush1.xpose.msra.mxu0 0.0
        %3117 = vmatprep.subr.mxu0 0.0
        %3118 = vmatpush1.xpose.msra.mxu0 0.0
        %3119 = vmatprep.subr.mxu0 0.0
        %3120 = vmatpush1.xpose.msra.mxu0 0.0
        %3121 = vmatprep.subr.mxu0 0.0
        %3122 = vmatpush1.xpose.msra.mxu0 0.0
        %3123 = vmatprep.subr.mxu0 0.0
        %3124 = vmatpush1.xpose.msra.mxu0 0.0
        %3125 = vmatprep.subr.mxu0 0.0
        %3126 = vmatpush1.xpose.msra.mxu0 0.0
        %3127 = vmatprep.mubr.f32.mxu0 0.0
        %3128 = vmatmul.mubr.f32.gmra.mrb[0].mxu0 %v3031
        %v3129 = vpop.f32.mrb[0].mxu0
        %v3130 = vadd.f32 0.0, %v3129
        %v3131 = vpop.f32.mrb[0].mxu0
        %3132 = vmatprep.mubr.f32.mxu0 0.0
        %3133 = vmatmul.mubr.f32.gmra.mrb[0].mxu0 %v3033
        %v3134 = vpop.f32.mrb[0].mxu0
        %v3135 = vadd.f32 0.0, %v3134
        %v3136 = vpop.f32.mrb[0].mxu0
        %3137 = vmatprep.mubr.f32.mxu0 0.0
        %3138 = vmatmul.mubr.f32.gmra.mrb[0].mxu0 %v3035
        %v3139 = vpop.f32.mrb[0].mxu0
        %v3140 = vadd.f32 0.0, %v3139
        %v3141 = vpop.f32.mrb[0].mxu0
        %3142 = vmatprep.mubr.f32.mxu0 0.0
        %3143 = vmatmul.mubr.f32.gmra.mrb[0].mxu0 %v3037
        %v3144 = vpop.f32.mrb[0].mxu0
        %v3145 = vadd.f32 0.0, %v3144
        %v3146 = vpop.f32.mrb[0].mxu0
        %3147 = vmatprep.mubr.f32.mxu0 0.0
        %3148 = vmatmul.mubr.f32.gmra.mrb[0].mxu0 %v3039
        %v3149 = vpop.f32.mrb[0].mxu0
        %v3150 = vadd.f32 0.0, %v3149
        %v3151 = vpop.f32.mrb[0].mxu0
        %3152 = vmatprep.mubr.f32.mxu0 0.0
        %3153 = vmatmul.mubr.f32.gmra.mrb[0].mxu0 %v3041
        %v3154 = vpop.f32.mrb[0].mxu0
        %v3155 = vadd.f32 0.0, %v3154
        %v3156 = vpop.f32.mrb[0].mxu0
        %3157 = vmatprep.mubr.f32.mxu0 0.0
        %3158 = vmatmul.mubr.f32.gmra.mrb[0].mxu0 %v3043
        %v3159 = vpop.f32.mrb[0].mxu0
        %v3160 = vadd.f32 0.0, %v3159
        %v3161 = vpop.f32.mrb[0].mxu0
        %3162 = vmatprep.mubr.f32.mxu0 0.0
        %3163 = vmatmul.mubr.f32.gmra.mrb[0].mxu0 %v3045
        %v3164 = vpop.f32.mrb[0].mxu0
        %v3165 = vadd.f32 0.0, %v3164
        %v3166 = vpop.f32.mrb[0].mxu0
        %3167 = vdwg.mxu0
        %3168 = vrot.lane.b32.xlu0 %v1329, 120
        %v3169 = vpop.permute.xlu0 %3168
        %3170 = vrot.lane.b32.xlu0 %v1330, 120
        %v3171 = vpop.permute.xlu0 %3170
        %3172 = vrot.lane.b32.xlu0 %v1331, 120
        %v3173 = vpop.permute.xlu0 %3172
        %3174 = vrot.lane.b32.xlu0 %v1332, 120
        %v3175 = vpop.permute.xlu0 %3174
        %3176 = vrot.lane.b32.xlu0 %v1333, 120
        %v3177 = vpop.permute.xlu0 %3176
        %3178 = vrot.lane.b32.xlu0 %v1334, 120
        %v3179 = vpop.permute.xlu0 %3178
        %3180 = vrot.lane.b32.xlu0 %v1335, 120
        %v3181 = vpop.permute.xlu0 %3180
        %3182 = vrot.lane.b32.xlu0 %v1336, 120
        %v3183 = vpop.permute.xlu0 %3182
        %3184 = vrot.lane.b32.xlu0 %v1203, 88
        %v3185 = vpop.permute.xlu0 %3184
        %3186 = vrot.lane.b32.xlu0 %v1208, 88
        %v3187 = vpop.permute.xlu0 %3186
        %3188 = vrot.lane.b32.xlu0 %v1213, 88
        %v3189 = vpop.permute.xlu0 %3188
        %3190 = vrot.lane.b32.xlu0 %v1218, 88
        %v3191 = vpop.permute.xlu0 %3190
        %3192 = vrot.lane.b32.xlu0 %v1223, 88
        %v3193 = vpop.permute.xlu0 %3192
        %3194 = vrot.lane.b32.xlu0 %v1228, 88
        %v3195 = vpop.permute.xlu0 %3194
        %3196 = vrot.lane.b32.xlu0 %v1233, 88
        %v3197 = vpop.permute.xlu0 %3196
        %3198 = vrot.lane.b32.xlu0 %v1238, 88
        %v3199 = vpop.permute.xlu0 %3198
        %v3200 = vsel %vm1381, %v3169, 0
        %v3202 = vsel %vm1381, %v3171, 0
        %v3204 = vsel %vm1381, %v3173, 0
        %v3206 = vsel %vm1381, %v3175, 0
        %v3208 = vsel %vm1381, %v3177, 0
        %v3210 = vsel %vm1381, %v3179, 0
        %v3212 = vsel %vm1381, %v3181, 0
        %v3214 = vsel %vm1381, %v3183, 0
        %v3216 = vsel %vm1381, %v3185, 0
        %v3218 = vsel %vm1381, %v3187, 0
        %v3220 = vsel %vm1381, %v3189, 0
        %v3222 = vsel %vm1381, %v3191, 0
        %v3224 = vsel %vm1381, %v3193, 0
        %v3226 = vsel %vm1381, %v3195, 0
        %v3228 = vsel %vm1381, %v3197, 0
        %v3230 = vsel %vm1381, %v3199, 0
        %3232 = vmatprep.subr.mxu0 0.0
        %3233 = vmatpush1.xpose.msra.mxu0 %v3216
        %3234 = vmatprep.subr.mxu0 0.0
        %3235 = vmatpush1.xpose.msra.mxu0 %v3218
        %3236 = vmatprep.subr.mxu0 0.0
        %3237 = vmatpush1.xpose.msra.mxu0 %v3220
        %3238 = vmatprep.subr.mxu0 0.0
        %3239 = vmatpush1.xpose.msra.mxu0 %v3222
        %3240 = vmatprep.subr.mxu0 0.0
        %3241 = vmatpush1.xpose.msra.mxu0 %v3224
        %3242 = vmatprep.subr.mxu0 0.0
        %3243 = vmatpush1.xpose.msra.mxu0 %v3226
        %3244 = vmatprep.subr.mxu0 0.0
        %3245 = vmatpush1.xpose.msra.mxu0 %v3228
        %3246 = vmatprep.subr.mxu0 0.0
        %3247 = vmatpush1.xpose.msra.mxu0 %v3230
        %3248 = vmatprep.subr.mxu0 0.0
        %3249 = vmatpush1.xpose.msra.mxu0 0.0
        %3250 = vmatprep.subr.mxu0 0.0
        %3251 = vmatpush1.xpose.msra.mxu0 0.0
        %3252 = vmatprep.subr.mxu0 0.0
        %3253 = vmatpush1.xpose.msra.mxu0 0.0
        %3254 = vmatprep.subr.mxu0 0.0
        %3255 = vmatpush1.xpose.msra.mxu0 0.0
        %3256 = vmatprep.subr.mxu0 0.0
        %3257 = vmatpush1.xpose.msra.mxu0 0.0
        %3258 = vmatprep.subr.mxu0 0.0
        %3259 = vmatpush1.xpose.msra.mxu0 0.0
        %3260 = vmatprep.subr.mxu0 0.0
        %3261 = vmatpush1.xpose.msra.mxu0 0.0
        %3262 = vmatprep.subr.mxu0 0.0
        %3263 = vmatpush1.xpose.msra.mxu0 0.0
        %3264 = vmatprep.subr.mxu0 0.0
        %3265 = vmatpush1.xpose.msra.mxu0 0.0
        %3266 = vmatprep.subr.mxu0 0.0
        %3267 = vmatpush1.xpose.msra.mxu0 0.0
        %3268 = vmatprep.subr.mxu0 0.0
        %3269 = vmatpush1.xpose.msra.mxu0 0.0
        %3270 = vmatprep.subr.mxu0 0.0
        %3271 = vmatpush1.xpose.msra.mxu0 0.0
        %3272 = vmatprep.subr.mxu0 0.0
        %3273 = vmatpush1.xpose.msra.mxu0 0.0
        %3274 = vmatprep.subr.mxu0 0.0
        %3275 = vmatpush1.xpose.msra.mxu0 0.0
        %3276 = vmatprep.subr.mxu0 0.0
        %3277 = vmatpush1.xpose.msra.mxu0 0.0
        %3278 = vmatprep.subr.mxu0 0.0
        %3279 = vmatpush1.xpose.msra.mxu0 0.0
        %3280 = vmatprep.subr.mxu0 0.0
        %3281 = vmatpush1.xpose.msra.mxu0 0.0
        %3282 = vmatprep.subr.mxu0 0.0
        %3283 = vmatpush1.xpose.msra.mxu0 0.0
        %3284 = vmatprep.subr.mxu0 0.0
        %3285 = vmatpush1.xpose.msra.mxu0 0.0
        %3286 = vmatprep.subr.mxu0 0.0
        %3287 = vmatpush1.xpose.msra.mxu0 0.0
        %3288 = vmatprep.subr.mxu0 0.0
        %3289 = vmatpush1.xpose.msra.mxu0 0.0
        %3290 = vmatprep.subr.mxu0 0.0
        %3291 = vmatpush1.xpose.msra.mxu0 0.0
        %3292 = vmatprep.subr.mxu0 0.0
        %3293 = vmatpush1.xpose.msra.mxu0 0.0
        %3294 = vmatprep.subr.mxu0 0.0
        %3295 = vmatpush1.xpose.msra.mxu0 0.0
        %3296 = vmatprep.mubr.f32.mxu0 0.0
        %3297 = vmatmul.mubr.f32.gmra.mrb[0].mxu0 %v3200
        %v3298 = vpop.f32.mrb[0].mxu0
        %v3299 = vadd.f32 0.0, %v3298
        %v3300 = vpop.f32.mrb[0].mxu0
        %3301 = vmatprep.mubr.f32.mxu0 0.0
        %3302 = vmatmul.mubr.f32.gmra.mrb[0].mxu0 %v3202
        %v3303 = vpop.f32.mrb[0].mxu0
        %v3304 = vadd.f32 0.0, %v3303
        %v3305 = vpop.f32.mrb[0].mxu0
        %3306 = vmatprep.mubr.f32.mxu0 0.0
        %3307 = vmatmul.mubr.f32.gmra.mrb[0].mxu0 %v3204
        %v3308 = vpop.f32.mrb[0].mxu0
        %v3309 = vadd.f32 0.0, %v3308
        %v3310 = vpop.f32.mrb[0].mxu0
        %3311 = vmatprep.mubr.f32.mxu0 0.0
        %3312 = vmatmul.mubr.f32.gmra.mrb[0].mxu0 %v3206
        %v3313 = vpop.f32.mrb[0].mxu0
        %v3314 = vadd.f32 0.0, %v3313
        %v3315 = vpop.f32.mrb[0].mxu0
        %3316 = vmatprep.mubr.f32.mxu0 0.0
        %3317 = vmatmul.mubr.f32.gmra.mrb[0].mxu0 %v3208
        %v3318 = vpop.f32.mrb[0].mxu0
        %v3319 = vadd.f32 0.0, %v3318
        %v3320 = vpop.f32.mrb[0].mxu0
        %3321 = vmatprep.mubr.f32.mxu0 0.0
        %3322 = vmatmul.mubr.f32.gmra.mrb[0].mxu0 %v3210
        %v3323 = vpop.f32.mrb[0].mxu0
        %v3324 = vadd.f32 0.0, %v3323
        %v3325 = vpop.f32.mrb[0].mxu0
        %3326 = vmatprep.mubr.f32.mxu0 0.0
        %3327 = vmatmul.mubr.f32.gmra.mrb[0].mxu0 %v3212
        %v3328 = vpop.f32.mrb[0].mxu0
        %v3329 = vadd.f32 0.0, %v3328
        %v3330 = vpop.f32.mrb[0].mxu0
        %3331 = vmatprep.mubr.f32.mxu0 0.0
        %3332 = vmatmul.mubr.f32.gmra.mrb[0].mxu0 %v3214
        %v3333 = vpop.f32.mrb[0].mxu0
        %v3334 = vadd.f32 0.0, %v3333
        %v3335 = vpop.f32.mrb[0].mxu0
        %3336 = vdwg.mxu0
        %3337 = vrot.lane.b32.xlu0 %v1337, 120
        %v3338 = vpop.permute.xlu0 %3337
        %3339 = vrot.lane.b32.xlu0 %v1338, 120
        %v3340 = vpop.permute.xlu0 %3339
        %3341 = vrot.lane.b32.xlu0 %v1339, 120
        %v3342 = vpop.permute.xlu0 %3341
        %3343 = vrot.lane.b32.xlu0 %v1340, 120
        %v3344 = vpop.permute.xlu0 %3343
        %3345 = vrot.lane.b32.xlu0 %v1341, 120
        %v3346 = vpop.permute.xlu0 %3345
        %3347 = vrot.lane.b32.xlu0 %v1342, 120
        %v3348 = vpop.permute.xlu0 %3347
        %3349 = vrot.lane.b32.xlu0 %v1343, 120
        %v3350 = vpop.permute.xlu0 %3349
        %3351 = vrot.lane.b32.xlu0 %v1344, 120
        %v3352 = vpop.permute.xlu0 %3351
        %3353 = vrot.lane.b32.xlu0 %v1243, 88
        %v3354 = vpop.permute.xlu0 %3353
        %3355 = vrot.lane.b32.xlu0 %v1248, 88
        %v3356 = vpop.permute.xlu0 %3355
        %3357 = vrot.lane.b32.xlu0 %v1253, 88
        %v3358 = vpop.permute.xlu0 %3357
        %3359 = vrot.lane.b32.xlu0 %v1258, 88
        %v3360 = vpop.permute.xlu0 %3359
        %3361 = vrot.lane.b32.xlu0 %v1263, 88
        %v3362 = vpop.permute.xlu0 %3361
        %3363 = vrot.lane.b32.xlu0 %v1268, 88
        %v3364 = vpop.permute.xlu0 %3363
        %3365 = vrot.lane.b32.xlu0 %v1273, 88
        %v3366 = vpop.permute.xlu0 %3365
        %3367 = vrot.lane.b32.xlu0 %v1278, 88
        %v3368 = vpop.permute.xlu0 %3367
        %v3369 = vsel %vm1381, %v3338, 0
        %v3371 = vsel %vm1381, %v3340, 0
        %v3373 = vsel %vm1381, %v3342, 0
        %v3375 = vsel %vm1381, %v3344, 0
        %v3377 = vsel %vm1381, %v3346, 0
        %v3379 = vsel %vm1381, %v3348, 0
        %v3381 = vsel %vm1381, %v3350, 0
        %v3383 = vsel %vm1381, %v3352, 0
        %v3385 = vsel %vm1381, %v3354, 0
        %v3387 = vsel %vm1381, %v3356, 0
        %v3389 = vsel %vm1381, %v3358, 0
        %v3391 = vsel %vm1381, %v3360, 0
        %v3393 = vsel %vm1381, %v3362, 0
        %v3395 = vsel %vm1381, %v3364, 0
        %v3397 = vsel %vm1381, %v3366, 0
        %v3399 = vsel %vm1381, %v3368, 0
        %3401 = vmatprep.subr.mxu0 0.0
        %3402 = vmatpush1.xpose.msra.mxu0 %v3385
        %3403 = vmatprep.subr.mxu0 0.0
        %3404 = vmatpush1.xpose.msra.mxu0 %v3387
        %3405 = vmatprep.subr.mxu0 0.0
        %3406 = vmatpush1.xpose.msra.mxu0 %v3389
        %3407 = vmatprep.subr.mxu0 0.0
        %3408 = vmatpush1.xpose.msra.mxu0 %v3391
        %3409 = vmatprep.subr.mxu0 0.0
        %3410 = vmatpush1.xpose.msra.mxu0 %v3393
        %3411 = vmatprep.subr.mxu0 0.0
        %3412 = vmatpush1.xpose.msra.mxu0 %v3395
        %3413 = vmatprep.subr.mxu0 0.0
        %3414 = vmatpush1.xpose.msra.mxu0 %v3397
        %3415 = vmatprep.subr.mxu0 0.0
        %3416 = vmatpush1.xpose.msra.mxu0 %v3399
        %3417 = vmatprep.subr.mxu0 0.0
        %3418 = vmatpush1.xpose.msra.mxu0 0.0
        %3419 = vmatprep.subr.mxu0 0.0
        %3420 = vmatpush1.xpose.msra.mxu0 0.0
        %3421 = vmatprep.subr.mxu0 0.0
        %3422 = vmatpush1.xpose.msra.mxu0 0.0
        %3423 = vmatprep.subr.mxu0 0.0
        %3424 = vmatpush1.xpose.msra.mxu0 0.0
        %3425 = vmatprep.subr.mxu0 0.0
        %3426 = vmatpush1.xpose.msra.mxu0 0.0
        %3427 = vmatprep.subr.mxu0 0.0
        %3428 = vmatpush1.xpose.msra.mxu0 0.0
        %3429 = vmatprep.subr.mxu0 0.0
        %3430 = vmatpush1.xpose.msra.mxu0 0.0
        %3431 = vmatprep.subr.mxu0 0.0
        %3432 = vmatpush1.xpose.msra.mxu0 0.0
        %3433 = vmatprep.subr.mxu0 0.0
        %3434 = vmatpush1.xpose.msra.mxu0 0.0
        %3435 = vmatprep.subr.mxu0 0.0
        %3436 = vmatpush1.xpose.msra.mxu0 0.0
        %3437 = vmatprep.subr.mxu0 0.0
        %3438 = vmatpush1.xpose.msra.mxu0 0.0
        %3439 = vmatprep.subr.mxu0 0.0
        %3440 = vmatpush1.xpose.msra.mxu0 0.0
        %3441 = vmatprep.subr.mxu0 0.0
        %3442 = vmatpush1.xpose.msra.mxu0 0.0
        %3443 = vmatprep.subr.mxu0 0.0
        %3444 = vmatpush1.xpose.msra.mxu0 0.0
        %3445 = vmatprep.subr.mxu0 0.0
        %3446 = vmatpush1.xpose.msra.mxu0 0.0
        %3447 = vmatprep.subr.mxu0 0.0
        %3448 = vmatpush1.xpose.msra.mxu0 0.0
        %3449 = vmatprep.subr.mxu0 0.0
        %3450 = vmatpush1.xpose.msra.mxu0 0.0
        %3451 = vmatprep.subr.mxu0 0.0
        %3452 = vmatpush1.xpose.msra.mxu0 0.0
        %3453 = vmatprep.subr.mxu0 0.0
        %3454 = vmatpush1.xpose.msra.mxu0 0.0
        %3455 = vmatprep.subr.mxu0 0.0
        %3456 = vmatpush1.xpose.msra.mxu0 0.0
        %3457 = vmatprep.subr.mxu0 0.0
        %3458 = vmatpush1.xpose.msra.mxu0 0.0
        %3459 = vmatprep.subr.mxu0 0.0
        %3460 = vmatpush1.xpose.msra.mxu0 0.0
        %3461 = vmatprep.subr.mxu0 0.0
        %3462 = vmatpush1.xpose.msra.mxu0 0.0
        %3463 = vmatprep.subr.mxu0 0.0
        %3464 = vmatpush1.xpose.msra.mxu0 0.0
        %3465 = vmatprep.mubr.f32.mxu0 0.0
        %3466 = vmatmul.mubr.f32.gmra.mrb[0].mxu0 %v3369
        %v3467 = vpop.f32.mrb[0].mxu0
        %v3468 = vadd.f32 0.0, %v3467
        %v3469 = vpop.f32.mrb[0].mxu0
        %3470 = vmatprep.mubr.f32.mxu0 0.0
        %3471 = vmatmul.mubr.f32.gmra.mrb[0].mxu0 %v3371
        %v3472 = vpop.f32.mrb[0].mxu0
        %v3473 = vadd.f32 0.0, %v3472
        %v3474 = vpop.f32.mrb[0].mxu0
        %3475 = vmatprep.mubr.f32.mxu0 0.0
        %3476 = vmatmul.mubr.f32.gmra.mrb[0].mxu0 %v3373
        %v3477 = vpop.f32.mrb[0].mxu0
        %v3478 = vadd.f32 0.0, %v3477
        %v3479 = vpop.f32.mrb[0].mxu0
        %3480 = vmatprep.mubr.f32.mxu0 0.0
        %3481 = vmatmul.mubr.f32.gmra.mrb[0].mxu0 %v3375
        %v3482 = vpop.f32.mrb[0].mxu0
        %v3483 = vadd.f32 0.0, %v3482
        %v3484 = vpop.f32.mrb[0].mxu0
        %3485 = vmatprep.mubr.f32.mxu0 0.0
        %3486 = vmatmul.mubr.f32.gmra.mrb[0].mxu0 %v3377
        %v3487 = vpop.f32.mrb[0].mxu0
        %v3488 = vadd.f32 0.0, %v3487
        %v3489 = vpop.f32.mrb[0].mxu0
        %3490 = vmatprep.mubr.f32.mxu0 0.0
        %3491 = vmatmul.mubr.f32.gmra.mrb[0].mxu0 %v3379
        %v3492 = vpop.f32.mrb[0].mxu0
        %v3493 = vadd.f32 0.0, %v3492
        %v3494 = vpop.f32.mrb[0].mxu0
        %3495 = vmatprep.mubr.f32.mxu0 0.0
        %3496 = vmatmul.mubr.f32.gmra.mrb[0].mxu0 %v3381
        %v3497 = vpop.f32.mrb[0].mxu0
        %v3498 = vadd.f32 0.0, %v3497
        %v3499 = vpop.f32.mrb[0].mxu0
        %3500 = vmatprep.mubr.f32.mxu0 0.0
        %3501 = vmatmul.mubr.f32.gmra.mrb[0].mxu0 %v3383
        %v3502 = vpop.f32.mrb[0].mxu0
        %v3503 = vadd.f32 0.0, %v3502
        %v3504 = vpop.f32.mrb[0].mxu0
        %3505 = vdwg.mxu0
        %3506 = vrot.lane.b32.xlu0 %v1345, 120
        %v3507 = vpop.permute.xlu0 %3506
        %3508 = vrot.lane.b32.xlu0 %v1346, 120
        %v3509 = vpop.permute.xlu0 %3508
        %3510 = vrot.lane.b32.xlu0 %v1347, 120
        %v3511 = vpop.permute.xlu0 %3510
        %3512 = vrot.lane.b32.xlu0 %v1348, 120
        %v3513 = vpop.permute.xlu0 %3512
        %3514 = vrot.lane.b32.xlu0 %v1349, 120
        %v3515 = vpop.permute.xlu0 %3514
        %3516 = vrot.lane.b32.xlu0 %v1350, 120
        %v3517 = vpop.permute.xlu0 %3516
        %3518 = vrot.lane.b32.xlu0 %v1351, 120
        %v3519 = vpop.permute.xlu0 %3518
        %3520 = vrot.lane.b32.xlu0 %v1352, 120
        %v3521 = vpop.permute.xlu0 %3520
        %3522 = vrot.lane.b32.xlu0 %v1283, 88
        %v3523 = vpop.permute.xlu0 %3522
        %3524 = vrot.lane.b32.xlu0 %v1288, 88
        %v3525 = vpop.permute.xlu0 %3524
        %3526 = vrot.lane.b32.xlu0 %v1293, 88
        %v3527 = vpop.permute.xlu0 %3526
        %3528 = vrot.lane.b32.xlu0 %v1298, 88
        %v3529 = vpop.permute.xlu0 %3528
        %3530 = vrot.lane.b32.xlu0 %v1303, 88
        %v3531 = vpop.permute.xlu0 %3530
        %3532 = vrot.lane.b32.xlu0 %v1308, 88
        %v3533 = vpop.permute.xlu0 %3532
        %3534 = vrot.lane.b32.xlu0 %v1313, 88
        %v3535 = vpop.permute.xlu0 %3534
        %3536 = vrot.lane.b32.xlu0 %v1318, 88
        %v3537 = vpop.permute.xlu0 %3536
        %v3538 = vsel %vm1381, %v3507, 0
        %v3540 = vsel %vm1381, %v3509, 0
        %v3542 = vsel %vm1381, %v3511, 0
        %v3544 = vsel %vm1381, %v3513, 0
        %v3546 = vsel %vm1381, %v3515, 0
        %v3548 = vsel %vm1381, %v3517, 0
        %v3550 = vsel %vm1381, %v3519, 0
        %v3552 = vsel %vm1381, %v3521, 0
        %v3554 = vsel %vm1381, %v3523, 0
        %v3556 = vsel %vm1381, %v3525, 0
        %v3558 = vsel %vm1381, %v3527, 0
        %v3560 = vsel %vm1381, %v3529, 0
        %v3562 = vsel %vm1381, %v3531, 0
        %v3564 = vsel %vm1381, %v3533, 0
        %v3566 = vsel %vm1381, %v3535, 0
        %v3568 = vsel %vm1381, %v3537, 0
        %3570 = vmatprep.subr.mxu0 0.0
        %3571 = vmatpush1.xpose.msra.mxu0 %v3554
        %3572 = vmatprep.subr.mxu0 0.0
        %3573 = vmatpush1.xpose.msra.mxu0 %v3556
        %3574 = vmatprep.subr.mxu0 0.0
        %3575 = vmatpush1.xpose.msra.mxu0 %v3558
        %3576 = vmatprep.subr.mxu0 0.0
        %3577 = vmatpush1.xpose.msra.mxu0 %v3560
        %3578 = vmatprep.subr.mxu0 0.0
        %3579 = vmatpush1.xpose.msra.mxu0 %v3562
        %3580 = vmatprep.subr.mxu0 0.0
        %3581 = vmatpush1.xpose.msra.mxu0 %v3564
        %3582 = vmatprep.subr.mxu0 0.0
        %3583 = vmatpush1.xpose.msra.mxu0 %v3566
        %3584 = vmatprep.subr.mxu0 0.0
        %3585 = vmatpush1.xpose.msra.mxu0 %v3568
        %3586 = vmatprep.subr.mxu0 0.0
        %3587 = vmatpush1.xpose.msra.mxu0 0.0
        %3588 = vmatprep.subr.mxu0 0.0
        %3589 = vmatpush1.xpose.msra.mxu0 0.0
        %3590 = vmatprep.subr.mxu0 0.0
        %3591 = vmatpush1.xpose.msra.mxu0 0.0
        %3592 = vmatprep.subr.mxu0 0.0
        %3593 = vmatpush1.xpose.msra.mxu0 0.0
        %3594 = vmatprep.subr.mxu0 0.0
        %3595 = vmatpush1.xpose.msra.mxu0 0.0
        %3596 = vmatprep.subr.mxu0 0.0
        %3597 = vmatpush1.xpose.msra.mxu0 0.0
        %3598 = vmatprep.subr.mxu0 0.0
        %3599 = vmatpush1.xpose.msra.mxu0 0.0
        %3600 = vmatprep.subr.mxu0 0.0
        %3601 = vmatpush1.xpose.msra.mxu0 0.0
        %3602 = vmatprep.subr.mxu0 0.0
        %3603 = vmatpush1.xpose.msra.mxu0 0.0
        %3604 = vmatprep.subr.mxu0 0.0
        %3605 = vmatpush1.xpose.msra.mxu0 0.0
        %3606 = vmatprep.subr.mxu0 0.0
        %3607 = vmatpush1.xpose.msra.mxu0 0.0
        %3608 = vmatprep.subr.mxu0 0.0
        %3609 = vmatpush1.xpose.msra.mxu0 0.0
        %3610 = vmatprep.subr.mxu0 0.0
        %3611 = vmatpush1.xpose.msra.mxu0 0.0
        %3612 = vmatprep.subr.mxu0 0.0
        %3613 = vmatpush1.xpose.msra.mxu0 0.0
        %3614 = vmatprep.subr.mxu0 0.0
        %3615 = vmatpush1.xpose.msra.mxu0 0.0
        %3616 = vmatprep.subr.mxu0 0.0
        %3617 = vmatpush1.xpose.msra.mxu0 0.0
        %3618 = vmatprep.subr.mxu0 0.0
        %3619 = vmatpush1.xpose.msra.mxu0 0.0
        %3620 = vmatprep.subr.mxu0 0.0
        %3621 = vmatpush1.xpose.msra.mxu0 0.0
        %3622 = vmatprep.subr.mxu0 0.0
        %3623 = vmatpush1.xpose.msra.mxu0 0.0
        %3624 = vmatprep.subr.mxu0 0.0
        %3625 = vmatpush1.xpose.msra.mxu0 0.0
        %3626 = vmatprep.subr.mxu0 0.0
        %3627 = vmatpush1.xpose.msra.mxu0 0.0
        %3628 = vmatprep.subr.mxu0 0.0
        %3629 = vmatpush1.xpose.msra.mxu0 0.0
        %3630 = vmatprep.subr.mxu0 0.0
        %3631 = vmatpush1.xpose.msra.mxu0 0.0
        %3632 = vmatprep.subr.mxu0 0.0
        %3633 = vmatpush1.xpose.msra.mxu0 0.0
        %3634 = vmatprep.mubr.f32.mxu0 0.0
        %3635 = vmatmul.mubr.f32.gmra.mrb[0].mxu0 %v3538
        %v3636 = vpop.f32.mrb[0].mxu0
        %v3637 = vadd.f32 0.0, %v3636
        %v3638 = vpop.f32.mrb[0].mxu0
        %3639 = vmatprep.mubr.f32.mxu0 0.0
        %3640 = vmatmul.mubr.f32.gmra.mrb[0].mxu0 %v3540
        %v3641 = vpop.f32.mrb[0].mxu0
        %v3642 = vadd.f32 0.0, %v3641
        %v3643 = vpop.f32.mrb[0].mxu0
        %3644 = vmatprep.mubr.f32.mxu0 0.0
        %3645 = vmatmul.mubr.f32.gmra.mrb[0].mxu0 %v3542
        %v3646 = vpop.f32.mrb[0].mxu0
        %v3647 = vadd.f32 0.0, %v3646
        %v3648 = vpop.f32.mrb[0].mxu0
        %3649 = vmatprep.mubr.f32.mxu0 0.0
        %3650 = vmatmul.mubr.f32.gmra.mrb[0].mxu0 %v3544
        %v3651 = vpop.f32.mrb[0].mxu0
        %v3652 = vadd.f32 0.0, %v3651
        %v3653 = vpop.f32.mrb[0].mxu0
        %3654 = vmatprep.mubr.f32.mxu0 0.0
        %3655 = vmatmul.mubr.f32.gmra.mrb[0].mxu0 %v3546
        %v3656 = vpop.f32.mrb[0].mxu0
        %v3657 = vadd.f32 0.0, %v3656
        %v3658 = vpop.f32.mrb[0].mxu0
        %3659 = vmatprep.mubr.f32.mxu0 0.0
        %3660 = vmatmul.mubr.f32.gmra.mrb[0].mxu0 %v3548
        %v3661 = vpop.f32.mrb[0].mxu0
        %v3662 = vadd.f32 0.0, %v3661
        %v3663 = vpop.f32.mrb[0].mxu0
        %3664 = vmatprep.mubr.f32.mxu0 0.0
        %3665 = vmatmul.mubr.f32.gmra.mrb[0].mxu0 %v3550
        %v3666 = vpop.f32.mrb[0].mxu0
        %v3667 = vadd.f32 0.0, %v3666
        %v3668 = vpop.f32.mrb[0].mxu0
        %3669 = vmatprep.mubr.f32.mxu0 0.0
        %3670 = vmatmul.mubr.f32.gmra.mrb[0].mxu0 %v3552
        %v3671 = vpop.f32.mrb[0].mxu0
        %v3672 = vadd.f32 0.0, %v3671
        %v3673 = vpop.f32.mrb[0].mxu0
        %3674 = vdwg.mxu0
        %v3675 = vsel %vm2034, %v3130, -inf
        %3676 = vmax.xlane.f32.xlu0 %v3675
        %v3677 = vpop.xlane.xlu0 %3676
        %v3678 = vsel %vm2034, %v3135, -inf
        %3679 = vmax.xlane.f32.xlu0 %v3678
        %v3680 = vpop.xlane.xlu0 %3679
        %v3681 = vsel %vm2034, %v3140, -inf
        %3682 = vmax.xlane.f32.xlu0 %v3681
        %v3683 = vpop.xlane.xlu0 %3682
        %v3684 = vsel %vm2034, %v3145, -inf
        %3685 = vmax.xlane.f32.xlu0 %v3684
        %v3686 = vpop.xlane.xlu0 %3685
        %v3687 = vsel %vm2034, %v3150, -inf
        %3688 = vmax.xlane.f32.xlu0 %v3687
        %v3689 = vpop.xlane.xlu0 %3688
        %v3690 = vsel %vm2034, %v3155, -inf
        %3691 = vmax.xlane.f32.xlu0 %v3690
        %v3692 = vpop.xlane.xlu0 %3691
        %v3693 = vsel %vm2034, %v3160, -inf
        %3694 = vmax.xlane.f32.xlu0 %v3693
        %v3695 = vpop.xlane.xlu0 %3694
        %v3696 = vsel %vm2034, %v3165, -inf
        %3697 = vmax.xlane.f32.xlu0 %v3696
        %v3698 = vpop.xlane.xlu0 %3697
        %v3699 = vsel %vm2034, %v3299, -inf
        %3700 = vmax.xlane.f32.xlu0 %v3699
        %v3701 = vpop.xlane.xlu0 %3700
        %v3702 = vsel %vm2034, %v3304, -inf
        %3703 = vmax.xlane.f32.xlu0 %v3702
        %v3704 = vpop.xlane.xlu0 %3703
        %v3705 = vsel %vm2034, %v3309, -inf
        %3706 = vmax.xlane.f32.xlu0 %v3705
        %v3707 = vpop.xlane.xlu0 %3706
        %v3708 = vsel %vm2034, %v3314, -inf
        %3709 = vmax.xlane.f32.xlu0 %v3708
        %v3710 = vpop.xlane.xlu0 %3709
        %v3711 = vsel %vm2034, %v3319, -inf
        %3712 = vmax.xlane.f32.xlu0 %v3711
        %v3713 = vpop.xlane.xlu0 %3712
        %v3714 = vsel %vm2034, %v3324, -inf
        %3715 = vmax.xlane.f32.xlu0 %v3714
        %v3716 = vpop.xlane.xlu0 %3715
        %v3717 = vsel %vm2034, %v3329, -inf
        %3718 = vmax.xlane.f32.xlu0 %v3717
        %v3719 = vpop.xlane.xlu0 %3718
        %v3720 = vsel %vm2034, %v3334, -inf
        %3721 = vmax.xlane.f32.xlu0 %v3720
        %v3722 = vpop.xlane.xlu0 %3721
        %v3723 = vsel %vm2034, %v3468, -inf
        %3724 = vmax.xlane.f32.xlu0 %v3723
        %v3725 = vpop.xlane.xlu0 %3724
        %v3726 = vsel %vm2034, %v3473, -inf
        %3727 = vmax.xlane.f32.xlu0 %v3726
        %v3728 = vpop.xlane.xlu0 %3727
        %v3729 = vsel %vm2034, %v3478, -inf
        %3730 = vmax.xlane.f32.xlu0 %v3729
        %v3731 = vpop.xlane.xlu0 %3730
        %v3732 = vsel %vm2034, %v3483, -inf
        %3733 = vmax.xlane.f32.xlu0 %v3732
        %v3734 = vpop.xlane.xlu0 %3733
        %v3735 = vsel %vm2034, %v3488, -inf
        %3736 = vmax.xlane.f32.xlu0 %v3735
        %v3737 = vpop.xlane.xlu0 %3736
        %v3738 = vsel %vm2034, %v3493, -inf
        %3739 = vmax.xlane.f32.xlu0 %v3738
        %v3740 = vpop.xlane.xlu0 %3739
        %v3741 = vsel %vm2034, %v3498, -inf
        %3742 = vmax.xlane.f32.xlu0 %v3741
        %v3743 = vpop.xlane.xlu0 %3742
        %v3744 = vsel %vm2034, %v3503, -inf
        %3745 = vmax.xlane.f32.xlu0 %v3744
        %v3746 = vpop.xlane.xlu0 %3745
        %v3747 = vsel %vm2034, %v3637, -inf
        %3748 = vmax.xlane.f32.xlu0 %v3747
        %v3749 = vpop.xlane.xlu0 %3748
        %v3750 = vsel %vm2034, %v3642, -inf
        %3751 = vmax.xlane.f32.xlu0 %v3750
        %v3752 = vpop.xlane.xlu0 %3751
        %v3753 = vsel %vm2034, %v3647, -inf
        %3754 = vmax.xlane.f32.xlu0 %v3753
        %v3755 = vpop.xlane.xlu0 %3754
        %v3756 = vsel %vm2034, %v3652, -inf
        %3757 = vmax.xlane.f32.xlu0 %v3756
        %v3758 = vpop.xlane.xlu0 %3757
        %v3759 = vsel %vm2034, %v3657, -inf
        %3760 = vmax.xlane.f32.xlu0 %v3759
        %v3761 = vpop.xlane.xlu0 %3760
        %v3762 = vsel %vm2034, %v3662, -inf
        %3763 = vmax.xlane.f32.xlu0 %v3762
        %v3764 = vpop.xlane.xlu0 %3763
        %v3765 = vsel %vm2034, %v3667, -inf
        %3766 = vmax.xlane.f32.xlu0 %v3765
        %v3767 = vpop.xlane.xlu0 %3766
        %v3768 = vsel %vm2034, %v3672, -inf
        %3769 = vmax.xlane.f32.xlu0 %v3768
        %v3770 = vpop.xlane.xlu0 %3769
        %v3771 = vsub.f32 %v3130, %v3677
        %v3772 = vsub.f32 %v3135, %v3680
        %v3773 = vsub.f32 %v3140, %v3683
        %v3774 = vsub.f32 %v3145, %v3686
        %v3775 = vsub.f32 %v3150, %v3689
        %v3776 = vsub.f32 %v3155, %v3692
        %v3777 = vsub.f32 %v3160, %v3695
        %v3778 = vsub.f32 %v3165, %v3698
        %v3779 = vsub.f32 %v3299, %v3701
        %v3780 = vsub.f32 %v3304, %v3704
        %v3781 = vsub.f32 %v3309, %v3707
        %v3782 = vsub.f32 %v3314, %v3710
        %v3783 = vsub.f32 %v3319, %v3713
        %v3784 = vsub.f32 %v3324, %v3716
        %v3785 = vsub.f32 %v3329, %v3719
        %v3786 = vsub.f32 %v3334, %v3722
        %v3787 = vsub.f32 %v3468, %v3725
        %v3788 = vsub.f32 %v3473, %v3728
        %v3789 = vsub.f32 %v3478, %v3731
        %v3790 = vsub.f32 %v3483, %v3734
        %v3791 = vsub.f32 %v3488, %v3737
        %v3792 = vsub.f32 %v3493, %v3740
        %v3793 = vsub.f32 %v3498, %v3743
        %v3794 = vsub.f32 %v3503, %v3746
        %v3795 = vsub.f32 %v3637, %v3749
        %v3796 = vsub.f32 %v3642, %v3752
        %v3797 = vsub.f32 %v3647, %v3755
        %v3798 = vsub.f32 %v3652, %v3758
        %v3799 = vsub.f32 %v3657, %v3761
        %v3800 = vsub.f32 %v3662, %v3764
        %v3801 = vsub.f32 %v3667, %v3767
        %v3802 = vsub.f32 %v3672, %v3770
        %v3803 = vmul.f32 %v3771, 1.442695
        %v3804 = vpow.pop %v3803
        %v3805 = vmul.f32 %v3772, 1.442695
        %v3806 = vpow.pop %v3805
        %v3807 = vmul.f32 %v3773, 1.442695
        %v3808 = vpow.pop %v3807
        %v3809 = vmul.f32 %v3774, 1.442695
        %v3810 = vpow.pop %v3809
        %v3811 = vmul.f32 %v3775, 1.442695
        %v3812 = vpow.pop %v3811
        %v3813 = vmul.f32 %v3776, 1.442695
        %v3814 = vpow.pop %v3813
        %v3815 = vmul.f32 %v3777, 1.442695
        %v3816 = vpow.pop %v3815
        %v3817 = vmul.f32 %v3778, 1.442695
        %v3818 = vpow.pop %v3817
        %v3819 = vmul.f32 %v3779, 1.442695
        %v3820 = vpow.pop %v3819
        %v3821 = vmul.f32 %v3780, 1.442695
        %v3822 = vpow.pop %v3821
        %v3823 = vmul.f32 %v3781, 1.442695
        %v3824 = vpow.pop %v3823
        %v3825 = vmul.f32 %v3782, 1.442695
        %v3826 = vpow.pop %v3825
        %v3827 = vmul.f32 %v3783, 1.442695
        %v3828 = vpow.pop %v3827
        %v3829 = vmul.f32 %v3784, 1.442695
        %v3830 = vpow.pop %v3829
        %v3831 = vmul.f32 %v3785, 1.442695
        %v3832 = vpow.pop %v3831
        %v3833 = vmul.f32 %v3786, 1.442695
        %v3834 = vpow.pop %v3833
        %v3835 = vmul.f32 %v3787, 1.442695
        %v3836 = vpow.pop %v3835
        %v3837 = vmul.f32 %v3788, 1.442695
        %v3838 = vpow.pop %v3837
        %v3839 = vmul.f32 %v3789, 1.442695
        %v3840 = vpow.pop %v3839
        %v3841 = vmul.f32 %v3790, 1.442695
        %v3842 = vpow.pop %v3841
        %v3843 = vmul.f32 %v3791, 1.442695
        %v3844 = vpow.pop %v3843
        %v3845 = vmul.f32 %v3792, 1.442695
        %v3846 = vpow.pop %v3845
        %v3847 = vmul.f32 %v3793, 1.442695
        %v3848 = vpow.pop %v3847
        %v3849 = vmul.f32 %v3794, 1.442695
        %v3850 = vpow.pop %v3849
        %v3851 = vmul.f32 %v3795, 1.442695
        %v3852 = vpow.pop %v3851
        %v3853 = vmul.f32 %v3796, 1.442695
        %v3854 = vpow.pop %v3853
        %v3855 = vmul.f32 %v3797, 1.442695
        %v3856 = vpow.pop %v3855
        %v3857 = vmul.f32 %v3798, 1.442695
        %v3858 = vpow.pop %v3857
        %v3859 = vmul.f32 %v3799, 1.442695
        %v3860 = vpow.pop %v3859
        %v3861 = vmul.f32 %v3800, 1.442695
        %v3862 = vpow.pop %v3861
        %v3863 = vmul.f32 %v3801, 1.442695
        %v3864 = vpow.pop %v3863
        %v3865 = vmul.f32 %v3802, 1.442695
        %v3866 = vpow.pop %v3865
        %v3867 = vsel %vm2034, %v3804, 0.0
        %3868 = vadd.xlane.f32.xlu0 %v3867
        %v3869 = vpop.xlane.xlu0 %3868
        %v3870 = vsel %vm2034, %v3806, 0.0
        %3871 = vadd.xlane.f32.xlu0 %v3870
        %v3872 = vpop.xlane.xlu0 %3871
        %v3873 = vsel %vm2034, %v3808, 0.0
        %3874 = vadd.xlane.f32.xlu0 %v3873
        %v3875 = vpop.xlane.xlu0 %3874
        %v3876 = vsel %vm2034, %v3810, 0.0
        %3877 = vadd.xlane.f32.xlu0 %v3876
        %v3878 = vpop.xlane.xlu0 %3877
        %v3879 = vsel %vm2034, %v3812, 0.0
        %3880 = vadd.xlane.f32.xlu0 %v3879
        %v3881 = vpop.xlane.xlu0 %3880
        %v3882 = vsel %vm2034, %v3814, 0.0
        %3883 = vadd.xlane.f32.xlu0 %v3882
        %v3884 = vpop.xlane.xlu0 %3883
        %v3885 = vsel %vm2034, %v3816, 0.0
        %3886 = vadd.xlane.f32.xlu0 %v3885
        %v3887 = vpop.xlane.xlu0 %3886
        %v3888 = vsel %vm2034, %v3818, 0.0
        %3889 = vadd.xlane.f32.xlu0 %v3888
        %v3890 = vpop.xlane.xlu0 %3889
        %v3891 = vsel %vm2034, %v3820, 0.0
        %3892 = vadd.xlane.f32.xlu0 %v3891
        %v3893 = vpop.xlane.xlu0 %3892
        %v3894 = vsel %vm2034, %v3822, 0.0
        %3895 = vadd.xlane.f32.xlu0 %v3894
        %v3896 = vpop.xlane.xlu0 %3895
        %v3897 = vsel %vm2034, %v3824, 0.0
        %3898 = vadd.xlane.f32.xlu0 %v3897
        %v3899 = vpop.xlane.xlu0 %3898
        %v3900 = vsel %vm2034, %v3826, 0.0
        %3901 = vadd.xlane.f32.xlu0 %v3900
        %v3902 = vpop.xlane.xlu0 %3901
        %v3903 = vsel %vm2034, %v3828, 0.0
        %3904 = vadd.xlane.f32.xlu0 %v3903
        %v3905 = vpop.xlane.xlu0 %3904
        %v3906 = vsel %vm2034, %v3830, 0.0
        %3907 = vadd.xlane.f32.xlu0 %v3906
        %v3908 = vpop.xlane.xlu0 %3907
        %v3909 = vsel %vm2034, %v3832, 0.0
        %3910 = vadd.xlane.f32.xlu0 %v3909
        %v3911 = vpop.xlane.xlu0 %3910
        %v3912 = vsel %vm2034, %v3834, 0.0
        %3913 = vadd.xlane.f32.xlu0 %v3912
        %v3914 = vpop.xlane.xlu0 %3913
        %v3915 = vsel %vm2034, %v3836, 0.0
        %3916 = vadd.xlane.f32.xlu0 %v3915
        %v3917 = vpop.xlane.xlu0 %3916
        %v3918 = vsel %vm2034, %v3838, 0.0
        %3919 = vadd.xlane.f32.xlu0 %v3918
        %v3920 = vpop.xlane.xlu0 %3919
        %v3921 = vsel %vm2034, %v3840, 0.0
        %3922 = vadd.xlane.f32.xlu0 %v3921
        %v3923 = vpop.xlane.xlu0 %3922
        %v3924 = vsel %vm2034, %v3842, 0.0
        %3925 = vadd.xlane.f32.xlu0 %v3924
        %v3926 = vpop.xlane.xlu0 %3925
        %v3927 = vsel %vm2034, %v3844, 0.0
        %3928 = vadd.xlane.f32.xlu0 %v3927
        %v3929 = vpop.xlane.xlu0 %3928
        %v3930 = vsel %vm2034, %v3846, 0.0
        %3931 = vadd.xlane.f32.xlu0 %v3930
        %v3932 = vpop.xlane.xlu0 %3931
        %v3933 = vsel %vm2034, %v3848, 0.0
        %3934 = vadd.xlane.f32.xlu0 %v3933
        %v3935 = vpop.xlane.xlu0 %3934
        %v3936 = vsel %vm2034, %v3850, 0.0
        %3937 = vadd.xlane.f32.xlu0 %v3936
        %v3938 = vpop.xlane.xlu0 %3937
        %v3939 = vsel %vm2034, %v3852, 0.0
        %3940 = vadd.xlane.f32.xlu0 %v3939
        %v3941 = vpop.xlane.xlu0 %3940
        %v3942 = vsel %vm2034, %v3854, 0.0
        %3943 = vadd.xlane.f32.xlu0 %v3942
        %v3944 = vpop.xlane.xlu0 %3943
        %v3945 = vsel %vm2034, %v3856, 0.0
        %3946 = vadd.xlane.f32.xlu0 %v3945
        %v3947 = vpop.xlane.xlu0 %3946
        %v3948 = vsel %vm2034, %v3858, 0.0
        %3949 = vadd.xlane.f32.xlu0 %v3948
        %v3950 = vpop.xlane.xlu0 %3949
        %v3951 = vsel %vm2034, %v3860, 0.0
        %3952 = vadd.xlane.f32.xlu0 %v3951
        %v3953 = vpop.xlane.xlu0 %3952
        %v3954 = vsel %vm2034, %v3862, 0.0
        %3955 = vadd.xlane.f32.xlu0 %v3954
        %v3956 = vpop.xlane.xlu0 %3955
        %v3957 = vsel %vm2034, %v3864, 0.0
        %3958 = vadd.xlane.f32.xlu0 %v3957
        %v3959 = vpop.xlane.xlu0 %3958
        %v3960 = vsel %vm2034, %v3866, 0.0
        %3961 = vadd.xlane.f32.xlu0 %v3960
        %v3962 = vpop.xlane.xlu0 %3961
        %v3963 = vrcp.pop %v3869
        %v3964 = vrcp.pop %v3872
        %v3965 = vrcp.pop %v3875
        %v3966 = vrcp.pop %v3878
        %v3967 = vrcp.pop %v3881
        %v3968 = vrcp.pop %v3884
        %v3969 = vrcp.pop %v3887
        %v3970 = vrcp.pop %v3890
        %v3971 = vrcp.pop %v3893
        %v3972 = vrcp.pop %v3896
        %v3973 = vrcp.pop %v3899
        %v3974 = vrcp.pop %v3902
        %v3975 = vrcp.pop %v3905
        %v3976 = vrcp.pop %v3908
        %v3977 = vrcp.pop %v3911
        %v3978 = vrcp.pop %v3914
        %v3979 = vrcp.pop %v3917
        %v3980 = vrcp.pop %v3920
        %v3981 = vrcp.pop %v3923
        %v3982 = vrcp.pop %v3926
        %v3983 = vrcp.pop %v3929
        %v3984 = vrcp.pop %v3932
        %v3985 = vrcp.pop %v3935
        %v3986 = vrcp.pop %v3938
        %v3987 = vrcp.pop %v3941
        %v3988 = vrcp.pop %v3944
        %v3989 = vrcp.pop %v3947
        %v3990 = vrcp.pop %v3950
        %v3991 = vrcp.pop %v3953
        %v3992 = vrcp.pop %v3956
        %v3993 = vrcp.pop %v3959
        %v3994 = vrcp.pop %v3962
        %v3995 = vmul.f32 %v3804, %v3963
        %v3996 = vmul.f32 %v3806, %v3964
        %v3997 = vmul.f32 %v3808, %v3965
        %v3998 = vmul.f32 %v3810, %v3966
        %v3999 = vmul.f32 %v3812, %v3967
        %v4000 = vmul.f32 %v3814, %v3968
        %v4001 = vmul.f32 %v3816, %v3969
        %v4002 = vmul.f32 %v3818, %v3970
        %v4003 = vmul.f32 %v3820, %v3971
        %v4004 = vmul.f32 %v3822, %v3972
        %v4005 = vmul.f32 %v3824, %v3973
        %v4006 = vmul.f32 %v3826, %v3974
        %v4007 = vmul.f32 %v3828, %v3975
        %v4008 = vmul.f32 %v3830, %v3976
        %v4009 = vmul.f32 %v3832, %v3977
        %v4010 = vmul.f32 %v3834, %v3978
        %v4011 = vmul.f32 %v3836, %v3979
        %v4012 = vmul.f32 %v3838, %v3980
        %v4013 = vmul.f32 %v3840, %v3981
        %v4014 = vmul.f32 %v3842, %v3982
        %v4015 = vmul.f32 %v3844, %v3983
        %v4016 = vmul.f32 %v3846, %v3984
        %v4017 = vmul.f32 %v3848, %v3985
        %v4018 = vmul.f32 %v3850, %v3986
        %v4019 = vmul.f32 %v3852, %v3987
        %v4020 = vmul.f32 %v3854, %v3988
        %v4021 = vmul.f32 %v3856, %v3989
        %v4022 = vmul.f32 %v3858, %v3990
        %v4023 = vmul.f32 %v3860, %v3991
        %v4024 = vmul.f32 %v3862, %v3992
        %v4025 = vmul.f32 %v3864, %v3993
        %v4026 = vmul.f32 %v3866, %v3994
        %4027 = vrot.lane.b32.xlu0 %v1163, 56
        %v4028 = vpop.permute.xlu0 %4027
        %4029 = vrot.lane.b32.xlu0 %v1168, 56
        %v4030 = vpop.permute.xlu0 %4029
        %4031 = vrot.lane.b32.xlu0 %v1173, 56
        %v4032 = vpop.permute.xlu0 %4031
        %4033 = vrot.lane.b32.xlu0 %v1178, 56
        %v4034 = vpop.permute.xlu0 %4033
        %4035 = vrot.lane.b32.xlu0 %v1183, 56
        %v4036 = vpop.permute.xlu0 %4035
        %4037 = vrot.lane.b32.xlu0 %v1188, 56
        %v4038 = vpop.permute.xlu0 %4037
        %4039 = vrot.lane.b32.xlu0 %v1193, 56
        %v4040 = vpop.permute.xlu0 %4039
        %4041 = vrot.lane.b32.xlu0 %v1198, 56
        %v4042 = vpop.permute.xlu0 %4041
        %v4052 = vsel %vm2034, %v3995, 0
        %v4055 = vsel %vm2034, %v3996, 0
        %v4058 = vsel %vm2034, %v3997, 0
        %v4061 = vsel %vm2034, %v3998, 0
        %v4064 = vsel %vm2034, %v3999, 0
        %v4067 = vsel %vm2034, %v4000, 0
        %v4070 = vsel %vm2034, %v4001, 0
        %v4073 = vsel %vm2034, %v4002, 0
        %4075 = vmatprep.subr.mxu0 0.0
        %4076 = vmatpush1.msra.mxu0 %v4028
        %4077 = vmatprep.subr.mxu0 0.0
        %4078 = vmatpush1.msra.mxu0 %v4030
        %4079 = vmatprep.subr.mxu0 0.0
        %4080 = vmatpush1.msra.mxu0 %v4032
        %4081 = vmatprep.subr.mxu0 0.0
        %4082 = vmatpush1.msra.mxu0 %v4034
        %4083 = vmatprep.subr.mxu0 0.0
        %4084 = vmatpush1.msra.mxu0 %v4036
        %4085 = vmatprep.subr.mxu0 0.0
        %4086 = vmatpush1.msra.mxu0 %v4038
        %4087 = vmatprep.subr.mxu0 0.0
        %4088 = vmatpush1.msra.mxu0 %v4040
        %4089 = vmatprep.subr.mxu0 0.0
        %4090 = vmatpush1.msra.mxu0 %v4042
        %4091 = vmatprep.subr.mxu0 0.0
        %4092 = vmatpush1.msra.mxu0 0.0
        %4093 = vmatprep.subr.mxu0 0.0
        %4094 = vmatpush1.msra.mxu0 0.0
        %4095 = vmatprep.subr.mxu0 0.0
        %4096 = vmatpush1.msra.mxu0 0.0
        %4097 = vmatprep.subr.mxu0 0.0
        %4098 = vmatpush1.msra.mxu0 0.0
        %4099 = vmatprep.subr.mxu0 0.0
        %4100 = vmatpush1.msra.mxu0 0.0
        %4101 = vmatprep.subr.mxu0 0.0
        %4102 = vmatpush1.msra.mxu0 0.0
        %4103 = vmatprep.subr.mxu0 0.0
        %4104 = vmatpush1.msra.mxu0 0.0
        %4105 = vmatprep.subr.mxu0 0.0
        %4106 = vmatpush1.msra.mxu0 0.0
        %4107 = vmatprep.subr.mxu0 0.0
        %4108 = vmatpush1.msra.mxu0 0.0
        %4109 = vmatprep.subr.mxu0 0.0
        %4110 = vmatpush1.msra.mxu0 0.0
        %4111 = vmatprep.subr.mxu0 0.0
        %4112 = vmatpush1.msra.mxu0 0.0
        %4113 = vmatprep.subr.mxu0 0.0
        %4114 = vmatpush1.msra.mxu0 0.0
        %4115 = vmatprep.subr.mxu0 0.0
        %4116 = vmatpush1.msra.mxu0 0.0
        %4117 = vmatprep.subr.mxu0 0.0
        %4118 = vmatpush1.msra.mxu0 0.0
        %4119 = vmatprep.subr.mxu0 0.0
        %4120 = vmatpush1.msra.mxu0 0.0
        %4121 = vmatprep.subr.mxu0 0.0
        %4122 = vmatpush1.msra.mxu0 0.0
        %4123 = vmatprep.subr.mxu0 0.0
        %4124 = vmatpush1.msra.mxu0 0.0
        %4125 = vmatprep.subr.mxu0 0.0
        %4126 = vmatpush1.msra.mxu0 0.0
        %4127 = vmatprep.subr.mxu0 0.0
        %4128 = vmatpush1.msra.mxu0 0.0
        %4129 = vmatprep.subr.mxu0 0.0
        %4130 = vmatpush1.msra.mxu0 0.0
        %4131 = vmatprep.subr.mxu0 0.0
        %4132 = vmatpush1.msra.mxu0 0.0
        %4133 = vmatprep.subr.mxu0 0.0
        %4134 = vmatpush1.msra.mxu0 0.0
        %4135 = vmatprep.subr.mxu0 0.0
        %4136 = vmatpush1.msra.mxu0 0.0
        %4137 = vmatprep.subr.mxu0 0.0
        %4138 = vmatpush1.msra.mxu0 0.0
        %4139 = vmatprep.mubr.f32.mxu0 0.0
        %4140 = vmatmul.mubr.f32.gmra.mrb[0].mxu0 %v4052
        %v4141 = vpop.f32.mrb[0].mxu0
        %v4142 = vadd.f32 0.0, %v4141
        %v4143 = vpop.f32.mrb[0].mxu0
        %4144 = vmatprep.mubr.f32.mxu0 0.0
        %4145 = vmatmul.mubr.f32.gmra.mrb[0].mxu0 %v4055
        %v4146 = vpop.f32.mrb[0].mxu0
        %v4147 = vadd.f32 0.0, %v4146
        %v4148 = vpop.f32.mrb[0].mxu0
        %4149 = vmatprep.mubr.f32.mxu0 0.0
        %4150 = vmatmul.mubr.f32.gmra.mrb[0].mxu0 %v4058
        %v4151 = vpop.f32.mrb[0].mxu0
        %v4152 = vadd.f32 0.0, %v4151
        %v4153 = vpop.f32.mrb[0].mxu0
        %4154 = vmatprep.mubr.f32.mxu0 0.0
        %4155 = vmatmul.mubr.f32.gmra.mrb[0].mxu0 %v4061
        %v4156 = vpop.f32.mrb[0].mxu0
        %v4157 = vadd.f32 0.0, %v4156
        %v4158 = vpop.f32.mrb[0].mxu0
        %4159 = vmatprep.mubr.f32.mxu0 0.0
        %4160 = vmatmul.mubr.f32.gmra.mrb[0].mxu0 %v4064
        %v4161 = vpop.f32.mrb[0].mxu0
        %v4162 = vadd.f32 0.0, %v4161
        %v4163 = vpop.f32.mrb[0].mxu0
        %4164 = vmatprep.mubr.f32.mxu0 0.0
        %4165 = vmatmul.mubr.f32.gmra.mrb[0].mxu0 %v4067
        %v4166 = vpop.f32.mrb[0].mxu0
        %v4167 = vadd.f32 0.0, %v4166
        %v4168 = vpop.f32.mrb[0].mxu0
        %4169 = vmatprep.mubr.f32.mxu0 0.0
        %4170 = vmatmul.mubr.f32.gmra.mrb[0].mxu0 %v4070
        %v4171 = vpop.f32.mrb[0].mxu0
        %v4172 = vadd.f32 0.0, %v4171
        %v4173 = vpop.f32.mrb[0].mxu0
        %4174 = vmatprep.mubr.f32.mxu0 0.0
        %4175 = vmatmul.mubr.f32.gmra.mrb[0].mxu0 %v4073
        %v4176 = vpop.f32.mrb[0].mxu0
        %v4177 = vadd.f32 0.0, %v4176
        %v4178 = vpop.f32.mrb[0].mxu0
        %4179 = vdwg.mxu0
        %4180 = vrot.lane.b32.xlu0 %v1203, 56
        %v4181 = vpop.permute.xlu0 %4180
        %4182 = vrot.lane.b32.xlu0 %v1208, 56
        %v4183 = vpop.permute.xlu0 %4182
        %4184 = vrot.lane.b32.xlu0 %v1213, 56
        %v4185 = vpop.permute.xlu0 %4184
        %4186 = vrot.lane.b32.xlu0 %v1218, 56
        %v4187 = vpop.permute.xlu0 %4186
        %4188 = vrot.lane.b32.xlu0 %v1223, 56
        %v4189 = vpop.permute.xlu0 %4188
        %4190 = vrot.lane.b32.xlu0 %v1228, 56
        %v4191 = vpop.permute.xlu0 %4190
        %4192 = vrot.lane.b32.xlu0 %v1233, 56
        %v4193 = vpop.permute.xlu0 %4192
        %4194 = vrot.lane.b32.xlu0 %v1238, 56
        %v4195 = vpop.permute.xlu0 %4194
        %v4205 = vsel %vm2034, %v4003, 0
        %v4208 = vsel %vm2034, %v4004, 0
        %v4211 = vsel %vm2034, %v4005, 0
        %v4214 = vsel %vm2034, %v4006, 0
        %v4217 = vsel %vm2034, %v4007, 0
        %v4220 = vsel %vm2034, %v4008, 0
        %v4223 = vsel %vm2034, %v4009, 0
        %v4226 = vsel %vm2034, %v4010, 0
        %4228 = vmatprep.subr.mxu0 0.0
        %4229 = vmatpush1.msra.mxu0 %v4181
        %4230 = vmatprep.subr.mxu0 0.0
        %4231 = vmatpush1.msra.mxu0 %v4183
        %4232 = vmatprep.subr.mxu0 0.0
        %4233 = vmatpush1.msra.mxu0 %v4185
        %4234 = vmatprep.subr.mxu0 0.0
        %4235 = vmatpush1.msra.mxu0 %v4187
        %4236 = vmatprep.subr.mxu0 0.0
        %4237 = vmatpush1.msra.mxu0 %v4189
        %4238 = vmatprep.subr.mxu0 0.0
        %4239 = vmatpush1.msra.mxu0 %v4191
        %4240 = vmatprep.subr.mxu0 0.0
        %4241 = vmatpush1.msra.mxu0 %v4193
        %4242 = vmatprep.subr.mxu0 0.0
        %4243 = vmatpush1.msra.mxu0 %v4195
        %4244 = vmatprep.subr.mxu0 0.0
        %4245 = vmatpush1.msra.mxu0 0.0
        %4246 = vmatprep.subr.mxu0 0.0
        %4247 = vmatpush1.msra.mxu0 0.0
        %4248 = vmatprep.subr.mxu0 0.0
        %4249 = vmatpush1.msra.mxu0 0.0
        %4250 = vmatprep.subr.mxu0 0.0
        %4251 = vmatpush1.msra.mxu0 0.0
        %4252 = vmatprep.subr.mxu0 0.0
        %4253 = vmatpush1.msra.mxu0 0.0
        %4254 = vmatprep.subr.mxu0 0.0
        %4255 = vmatpush1.msra.mxu0 0.0
        %4256 = vmatprep.subr.mxu0 0.0
        %4257 = vmatpush1.msra.mxu0 0.0
        %4258 = vmatprep.subr.mxu0 0.0
        %4259 = vmatpush1.msra.mxu0 0.0
        %4260 = vmatprep.subr.mxu0 0.0
        %4261 = vmatpush1.msra.mxu0 0.0
        %4262 = vmatprep.subr.mxu0 0.0
        %4263 = vmatpush1.msra.mxu0 0.0
        %4264 = vmatprep.subr.mxu0 0.0
        %4265 = vmatpush1.msra.mxu0 0.0
        %4266 = vmatprep.subr.mxu0 0.0
        %4267 = vmatpush1.msra.mxu0 0.0
        %4268 = vmatprep.subr.mxu0 0.0
        %4269 = vmatpush1.msra.mxu0 0.0
        %4270 = vmatprep.subr.mxu0 0.0
        %4271 = vmatpush1.msra.mxu0 0.0
        %4272 = vmatprep.subr.mxu0 0.0
        %4273 = vmatpush1.msra.mxu0 0.0
        %4274 = vmatprep.subr.mxu0 0.0
        %4275 = vmatpush1.msra.mxu0 0.0
        %4276 = vmatprep.subr.mxu0 0.0
        %4277 = vmatpush1.msra.mxu0 0.0
        %4278 = vmatprep.subr.mxu0 0.0
        %4279 = vmatpush1.msra.mxu0 0.0
        %4280 = vmatprep.subr.mxu0 0.0
        %4281 = vmatpush1.msra.mxu0 0.0
        %4282 = vmatprep.subr.mxu0 0.0
        %4283 = vmatpush1.msra.mxu0 0.0
        %4284 = vmatprep.subr.mxu0 0.0
        %4285 = vmatpush1.msra.mxu0 0.0
        %4286 = vmatprep.subr.mxu0 0.0
        %4287 = vmatpush1.msra.mxu0 0.0
        %4288 = vmatprep.subr.mxu0 0.0
        %4289 = vmatpush1.msra.mxu0 0.0
        %4290 = vmatprep.subr.mxu0 0.0
        %4291 = vmatpush1.msra.mxu0 0.0
        %4292 = vmatprep.mubr.f32.mxu0 0.0
        %4293 = vmatmul.mubr.f32.gmra.mrb[0].mxu0 %v4205
        %v4294 = vpop.f32.mrb[0].mxu0
        %v4295 = vadd.f32 0.0, %v4294
        %v4296 = vpop.f32.mrb[0].mxu0
        %4297 = vmatprep.mubr.f32.mxu0 0.0
        %4298 = vmatmul.mubr.f32.gmra.mrb[0].mxu0 %v4208
        %v4299 = vpop.f32.mrb[0].mxu0
        %v4300 = vadd.f32 0.0, %v4299
        %v4301 = vpop.f32.mrb[0].mxu0
        %4302 = vmatprep.mubr.f32.mxu0 0.0
        %4303 = vmatmul.mubr.f32.gmra.mrb[0].mxu0 %v4211
        %v4304 = vpop.f32.mrb[0].mxu0
        %v4305 = vadd.f32 0.0, %v4304
        %v4306 = vpop.f32.mrb[0].mxu0
        %4307 = vmatprep.mubr.f32.mxu0 0.0
        %4308 = vmatmul.mubr.f32.gmra.mrb[0].mxu0 %v4214
        %v4309 = vpop.f32.mrb[0].mxu0
        %v4310 = vadd.f32 0.0, %v4309
        %v4311 = vpop.f32.mrb[0].mxu0
        %4312 = vmatprep.mubr.f32.mxu0 0.0
        %4313 = vmatmul.mubr.f32.gmra.mrb[0].mxu0 %v4217
        %v4314 = vpop.f32.mrb[0].mxu0
        %v4315 = vadd.f32 0.0, %v4314
        %v4316 = vpop.f32.mrb[0].mxu0
        %4317 = vmatprep.mubr.f32.mxu0 0.0
        %4318 = vmatmul.mubr.f32.gmra.mrb[0].mxu0 %v4220
        %v4319 = vpop.f32.mrb[0].mxu0
        %v4320 = vadd.f32 0.0, %v4319
        %v4321 = vpop.f32.mrb[0].mxu0
        %4322 = vmatprep.mubr.f32.mxu0 0.0
        %4323 = vmatmul.mubr.f32.gmra.mrb[0].mxu0 %v4223
        %v4324 = vpop.f32.mrb[0].mxu0
        %v4325 = vadd.f32 0.0, %v4324
        %v4326 = vpop.f32.mrb[0].mxu0
        %4327 = vmatprep.mubr.f32.mxu0 0.0
        %4328 = vmatmul.mubr.f32.gmra.mrb[0].mxu0 %v4226
        %v4329 = vpop.f32.mrb[0].mxu0
        %v4330 = vadd.f32 0.0, %v4329
        %v4331 = vpop.f32.mrb[0].mxu0
        %4332 = vdwg.mxu0
        %4333 = vrot.lane.b32.xlu0 %v1243, 56
        %v4334 = vpop.permute.xlu0 %4333
        %4335 = vrot.lane.b32.xlu0 %v1248, 56
        %v4336 = vpop.permute.xlu0 %4335
        %4337 = vrot.lane.b32.xlu0 %v1253, 56
        %v4338 = vpop.permute.xlu0 %4337
        %4339 = vrot.lane.b32.xlu0 %v1258, 56
        %v4340 = vpop.permute.xlu0 %4339
        %4341 = vrot.lane.b32.xlu0 %v1263, 56
        %v4342 = vpop.permute.xlu0 %4341
        %4343 = vrot.lane.b32.xlu0 %v1268, 56
        %v4344 = vpop.permute.xlu0 %4343
        %4345 = vrot.lane.b32.xlu0 %v1273, 56
        %v4346 = vpop.permute.xlu0 %4345
        %4347 = vrot.lane.b32.xlu0 %v1278, 56
        %v4348 = vpop.permute.xlu0 %4347
        %v4358 = vsel %vm2034, %v4011, 0
        %v4361 = vsel %vm2034, %v4012, 0
        %v4364 = vsel %vm2034, %v4013, 0
        %v4367 = vsel %vm2034, %v4014, 0
        %v4370 = vsel %vm2034, %v4015, 0
        %v4373 = vsel %vm2034, %v4016, 0
        %v4376 = vsel %vm2034, %v4017, 0
        %v4379 = vsel %vm2034, %v4018, 0
        %4381 = vmatprep.subr.mxu0 0.0
        %4382 = vmatpush1.msra.mxu0 %v4334
        %4383 = vmatprep.subr.mxu0 0.0
        %4384 = vmatpush1.msra.mxu0 %v4336
        %4385 = vmatprep.subr.mxu0 0.0
        %4386 = vmatpush1.msra.mxu0 %v4338
        %4387 = vmatprep.subr.mxu0 0.0
        %4388 = vmatpush1.msra.mxu0 %v4340
        %4389 = vmatprep.subr.mxu0 0.0
        %4390 = vmatpush1.msra.mxu0 %v4342
        %4391 = vmatprep.subr.mxu0 0.0
        %4392 = vmatpush1.msra.mxu0 %v4344
        %4393 = vmatprep.subr.mxu0 0.0
        %4394 = vmatpush1.msra.mxu0 %v4346
        %4395 = vmatprep.subr.mxu0 0.0
        %4396 = vmatpush1.msra.mxu0 %v4348
        %4397 = vmatprep.subr.mxu0 0.0
        %4398 = vmatpush1.msra.mxu0 0.0
        %4399 = vmatprep.subr.mxu0 0.0
        %4400 = vmatpush1.msra.mxu0 0.0
        %4401 = vmatprep.subr.mxu0 0.0
        %4402 = vmatpush1.msra.mxu0 0.0
        %4403 = vmatprep.subr.mxu0 0.0
        %4404 = vmatpush1.msra.mxu0 0.0
        %4405 = vmatprep.subr.mxu0 0.0
        %4406 = vmatpush1.msra.mxu0 0.0
        %4407 = vmatprep.subr.mxu0 0.0
        %4408 = vmatpush1.msra.mxu0 0.0
        %4409 = vmatprep.subr.mxu0 0.0
        %4410 = vmatpush1.msra.mxu0 0.0
        %4411 = vmatprep.subr.mxu0 0.0
        %4412 = vmatpush1.msra.mxu0 0.0
        %4413 = vmatprep.subr.mxu0 0.0
        %4414 = vmatpush1.msra.mxu0 0.0
        %4415 = vmatprep.subr.mxu0 0.0
        %4416 = vmatpush1.msra.mxu0 0.0
        %4417 = vmatprep.subr.mxu0 0.0
        %4418 = vmatpush1.msra.mxu0 0.0
        %4419 = vmatprep.subr.mxu0 0.0
        %4420 = vmatpush1.msra.mxu0 0.0
        %4421 = vmatprep.subr.mxu0 0.0
        %4422 = vmatpush1.msra.mxu0 0.0
        %4423 = vmatprep.subr.mxu0 0.0
        %4424 = vmatpush1.msra.mxu0 0.0
        %4425 = vmatprep.subr.mxu0 0.0
        %4426 = vmatpush1.msra.mxu0 0.0
        %4427 = vmatprep.subr.mxu0 0.0
        %4428 = vmatpush1.msra.mxu0 0.0
        %4429 = vmatprep.subr.mxu0 0.0
        %4430 = vmatpush1.msra.mxu0 0.0
        %4431 = vmatprep.subr.mxu0 0.0
        %4432 = vmatpush1.msra.mxu0 0.0
        %4433 = vmatprep.subr.mxu0 0.0
        %4434 = vmatpush1.msra.mxu0 0.0
        %4435 = vmatprep.subr.mxu0 0.0
        %4436 = vmatpush1.msra.mxu0 0.0
        %4437 = vmatprep.subr.mxu0 0.0
        %4438 = vmatpush1.msra.mxu0 0.0
        %4439 = vmatprep.subr.mxu0 0.0
        %4440 = vmatpush1.msra.mxu0 0.0
        %4441 = vmatprep.subr.mxu0 0.0
        %4442 = vmatpush1.msra.mxu0 0.0
        %4443 = vmatprep.subr.mxu0 0.0
        %4444 = vmatpush1.msra.mxu0 0.0
        %4445 = vmatprep.mubr.f32.mxu0 0.0
        %4446 = vmatmul.mubr.f32.gmra.mrb[0].mxu0 %v4358
        %v4447 = vpop.f32.mrb[0].mxu0
        %v4448 = vadd.f32 0.0, %v4447
        %v4449 = vpop.f32.mrb[0].mxu0
        %4450 = vmatprep.mubr.f32.mxu0 0.0
        %4451 = vmatmul.mubr.f32.gmra.mrb[0].mxu0 %v4361
        %v4452 = vpop.f32.mrb[0].mxu0
        %v4453 = vadd.f32 0.0, %v4452
        %v4454 = vpop.f32.mrb[0].mxu0
        %4455 = vmatprep.mubr.f32.mxu0 0.0
        %4456 = vmatmul.mubr.f32.gmra.mrb[0].mxu0 %v4364
        %v4457 = vpop.f32.mrb[0].mxu0
        %v4458 = vadd.f32 0.0, %v4457
        %v4459 = vpop.f32.mrb[0].mxu0
        %4460 = vmatprep.mubr.f32.mxu0 0.0
        %4461 = vmatmul.mubr.f32.gmra.mrb[0].mxu0 %v4367
        %v4462 = vpop.f32.mrb[0].mxu0
        %v4463 = vadd.f32 0.0, %v4462
        %v4464 = vpop.f32.mrb[0].mxu0
        %4465 = vmatprep.mubr.f32.mxu0 0.0
        %4466 = vmatmul.mubr.f32.gmra.mrb[0].mxu0 %v4370
        %v4467 = vpop.f32.mrb[0].mxu0
        %v4468 = vadd.f32 0.0, %v4467
        %v4469 = vpop.f32.mrb[0].mxu0
        %4470 = vmatprep.mubr.f32.mxu0 0.0
        %4471 = vmatmul.mubr.f32.gmra.mrb[0].mxu0 %v4373
        %v4472 = vpop.f32.mrb[0].mxu0
        %v4473 = vadd.f32 0.0, %v4472
        %v4474 = vpop.f32.mrb[0].mxu0
        %4475 = vmatprep.mubr.f32.mxu0 0.0
        %4476 = vmatmul.mubr.f32.gmra.mrb[0].mxu0 %v4376
        %v4477 = vpop.f32.mrb[0].mxu0
        %v4478 = vadd.f32 0.0, %v4477
        %v4479 = vpop.f32.mrb[0].mxu0
        %4480 = vmatprep.mubr.f32.mxu0 0.0
        %4481 = vmatmul.mubr.f32.gmra.mrb[0].mxu0 %v4379
        %v4482 = vpop.f32.mrb[0].mxu0
        %v4483 = vadd.f32 0.0, %v4482
        %v4484 = vpop.f32.mrb[0].mxu0
        %4485 = vdwg.mxu0
        %4486 = vrot.lane.b32.xlu0 %v1283, 56
        %v4487 = vpop.permute.xlu0 %4486
        %4488 = vrot.lane.b32.xlu0 %v1288, 56
        %v4489 = vpop.permute.xlu0 %4488
        %4490 = vrot.lane.b32.xlu0 %v1293, 56
        %v4491 = vpop.permute.xlu0 %4490
        %4492 = vrot.lane.b32.xlu0 %v1298, 56
        %v4493 = vpop.permute.xlu0 %4492
        %4494 = vrot.lane.b32.xlu0 %v1303, 56
        %v4495 = vpop.permute.xlu0 %4494
        %4496 = vrot.lane.b32.xlu0 %v1308, 56
        %v4497 = vpop.permute.xlu0 %4496
        %4498 = vrot.lane.b32.xlu0 %v1313, 56
        %v4499 = vpop.permute.xlu0 %4498
        %4500 = vrot.lane.b32.xlu0 %v1318, 56
        %v4501 = vpop.permute.xlu0 %4500
        %v4511 = vsel %vm2034, %v4019, 0
        %v4514 = vsel %vm2034, %v4020, 0
        %v4517 = vsel %vm2034, %v4021, 0
        %v4520 = vsel %vm2034, %v4022, 0
        %v4523 = vsel %vm2034, %v4023, 0
        %v4526 = vsel %vm2034, %v4024, 0
        %v4529 = vsel %vm2034, %v4025, 0
        %v4532 = vsel %vm2034, %v4026, 0
        %4534 = vmatprep.subr.mxu0 0.0
        %4535 = vmatpush1.msra.mxu0 %v4487
        %4536 = vmatprep.subr.mxu0 0.0
        %4537 = vmatpush1.msra.mxu0 %v4489
        %4538 = vmatprep.subr.mxu0 0.0
        %4539 = vmatpush1.msra.mxu0 %v4491
        %4540 = vmatprep.subr.mxu0 0.0
        %4541 = vmatpush1.msra.mxu0 %v4493
        %4542 = vmatprep.subr.mxu0 0.0
        %4543 = vmatpush1.msra.mxu0 %v4495
        %4544 = vmatprep.subr.mxu0 0.0
        %4545 = vmatpush1.msra.mxu0 %v4497
        %4546 = vmatprep.subr.mxu0 0.0
        %4547 = vmatpush1.msra.mxu0 %v4499
        %4548 = vmatprep.subr.mxu0 0.0
        %4549 = vmatpush1.msra.mxu0 %v4501
        %4550 = vmatprep.subr.mxu0 0.0
        %4551 = vmatpush1.msra.mxu0 0.0
        %4552 = vmatprep.subr.mxu0 0.0
        %4553 = vmatpush1.msra.mxu0 0.0
        %4554 = vmatprep.subr.mxu0 0.0
        %4555 = vmatpush1.msra.mxu0 0.0
        %4556 = vmatprep.subr.mxu0 0.0
        %4557 = vmatpush1.msra.mxu0 0.0
        %4558 = vmatprep.subr.mxu0 0.0
        %4559 = vmatpush1.msra.mxu0 0.0
        %4560 = vmatprep.subr.mxu0 0.0
        %4561 = vmatpush1.msra.mxu0 0.0
        %4562 = vmatprep.subr.mxu0 0.0
        %4563 = vmatpush1.msra.mxu0 0.0
        %4564 = vmatprep.subr.mxu0 0.0
        %4565 = vmatpush1.msra.mxu0 0.0
        %4566 = vmatprep.subr.mxu0 0.0
        %4567 = vmatpush1.msra.mxu0 0.0
        %4568 = vmatprep.subr.mxu0 0.0
        %4569 = vmatpush1.msra.mxu0 0.0
        %4570 = vmatprep.subr.mxu0 0.0
        %4571 = vmatpush1.msra.mxu0 0.0
        %4572 = vmatprep.subr.mxu0 0.0
        %4573 = vmatpush1.msra.mxu0 0.0
        %4574 = vmatprep.subr.mxu0 0.0
        %4575 = vmatpush1.msra.mxu0 0.0
        %4576 = vmatprep.subr.mxu0 0.0
        %4577 = vmatpush1.msra.mxu0 0.0
        %4578 = vmatprep.subr.mxu0 0.0
        %4579 = vmatpush1.msra.mxu0 0.0
        %4580 = vmatprep.subr.mxu0 0.0
        %4581 = vmatpush1.msra.mxu0 0.0
        %4582 = vmatprep.subr.mxu0 0.0
        %4583 = vmatpush1.msra.mxu0 0.0
        %4584 = vmatprep.subr.mxu0 0.0
        %4585 = vmatpush1.msra.mxu0 0.0
        %4586 = vmatprep.subr.mxu0 0.0
        %4587 = vmatpush1.msra.mxu0 0.0
        %4588 = vmatprep.subr.mxu0 0.0
        %4589 = vmatpush1.msra.mxu0 0.0
        %4590 = vmatprep.subr.mxu0 0.0
        %4591 = vmatpush1.msra.mxu0 0.0
        %4592 = vmatprep.subr.mxu0 0.0
        %4593 = vmatpush1.msra.mxu0 0.0
        %4594 = vmatprep.subr.mxu0 0.0
        %4595 = vmatpush1.msra.mxu0 0.0
        %4596 = vmatprep.subr.mxu0 0.0
        %4597 = vmatpush1.msra.mxu0 0.0
        %4598 = vmatprep.mubr.f32.mxu0 0.0
        %4599 = vmatmul.mubr.f32.gmra.mrb[0].mxu0 %v4511
        %v4600 = vpop.f32.mrb[0].mxu0
        %v4601 = vadd.f32 0.0, %v4600
        %v4602 = vpop.f32.mrb[0].mxu0
        %4603 = vmatprep.mubr.f32.mxu0 0.0
        %4604 = vmatmul.mubr.f32.gmra.mrb[0].mxu0 %v4514
        %v4605 = vpop.f32.mrb[0].mxu0
        %v4606 = vadd.f32 0.0, %v4605
        %v4607 = vpop.f32.mrb[0].mxu0
        %4608 = vmatprep.mubr.f32.mxu0 0.0
        %4609 = vmatmul.mubr.f32.gmra.mrb[0].mxu0 %v4517
        %v4610 = vpop.f32.mrb[0].mxu0
        %v4611 = vadd.f32 0.0, %v4610
        %v4612 = vpop.f32.mrb[0].mxu0
        %4613 = vmatprep.mubr.f32.mxu0 0.0
        %4614 = vmatmul.mubr.f32.gmra.mrb[0].mxu0 %v4520
        %v4615 = vpop.f32.mrb[0].mxu0
        %v4616 = vadd.f32 0.0, %v4615
        %v4617 = vpop.f32.mrb[0].mxu0
        %4618 = vmatprep.mubr.f32.mxu0 0.0
        %4619 = vmatmul.mubr.f32.gmra.mrb[0].mxu0 %v4523
        %v4620 = vpop.f32.mrb[0].mxu0
        %v4621 = vadd.f32 0.0, %v4620
        %v4622 = vpop.f32.mrb[0].mxu0
        %4623 = vmatprep.mubr.f32.mxu0 0.0
        %4624 = vmatmul.mubr.f32.gmra.mrb[0].mxu0 %v4526
        %v4625 = vpop.f32.mrb[0].mxu0
        %v4626 = vadd.f32 0.0, %v4625
        %v4627 = vpop.f32.mrb[0].mxu0
        %4628 = vmatprep.mubr.f32.mxu0 0.0
        %4629 = vmatmul.mubr.f32.gmra.mrb[0].mxu0 %v4529
        %v4630 = vpop.f32.mrb[0].mxu0
        %v4631 = vadd.f32 0.0, %v4630
        %v4632 = vpop.f32.mrb[0].mxu0
        %4633 = vmatprep.mubr.f32.mxu0 0.0
        %4634 = vmatmul.mubr.f32.gmra.mrb[0].mxu0 %v4532
        %v4635 = vpop.f32.mrb[0].mxu0
        %v4636 = vadd.f32 0.0, %v4635
        %v4637 = vpop.f32.mrb[0].mxu0
        %4638 = vdwg.mxu0
        %v4640 = vsel %vm1381, %v4142, 0
        %v4643 = vsel %vm1381, %v4147, 0
        %v4646 = vsel %vm1381, %v4152, 0
        %v4649 = vsel %vm1381, %v4157, 0
        %v4652 = vsel %vm1381, %v4162, 0
        %v4655 = vsel %vm1381, %v4167, 0
        %v4658 = vsel %vm1381, %v4172, 0
        %v4661 = vsel %vm1381, %v4177, 0
        %v4664 = vsel %vm1381, %v4295, 0
        %v4667 = vsel %vm1381, %v4300, 0
        %v4670 = vsel %vm1381, %v4305, 0
        %v4673 = vsel %vm1381, %v4310, 0
        %v4676 = vsel %vm1381, %v4315, 0
        %v4679 = vsel %vm1381, %v4320, 0
        %v4682 = vsel %vm1381, %v4325, 0
        %v4685 = vsel %vm1381, %v4330, 0
        %v4688 = vsel %vm1381, %v4448, 0
        %v4691 = vsel %vm1381, %v4453, 0
        %v4694 = vsel %vm1381, %v4458, 0
        %v4697 = vsel %vm1381, %v4463, 0
        %v4700 = vsel %vm1381, %v4468, 0
        %v4703 = vsel %vm1381, %v4473, 0
        %v4706 = vsel %vm1381, %v4478, 0
        %v4709 = vsel %vm1381, %v4483, 0
        %v4712 = vsel %vm1381, %v4601, 0
        %v4715 = vsel %vm1381, %v4606, 0
        %v4718 = vsel %vm1381, %v4611, 0
        %v4721 = vsel %vm1381, %v4616, 0
        %v4724 = vsel %vm1381, %v4621, 0
        %v4727 = vsel %vm1381, %v4626, 0
        %v4730 = vsel %vm1381, %v4631, 0
        %v4733 = vsel %vm1381, %v4636, 0
        %4735 = vmatprep.subr.mxu0 0.0
        %4736 = vmatpush1.msra.mxu0 %v1354
        %4737 = vmatprep.subr.mxu0 0.0
        %4738 = vmatpush1.msra.mxu0 0.0
        %4739 = vmatprep.subr.mxu0 0.0
        %4740 = vmatpush1.msra.mxu0 0.0
        %4741 = vmatprep.subr.mxu0 0.0
        %4742 = vmatpush1.msra.mxu0 0.0
        %4743 = vmatprep.subr.mxu0 0.0
        %4744 = vmatpush1.msra.mxu0 0.0
        %4745 = vmatprep.subr.mxu0 0.0
        %4746 = vmatpush1.msra.mxu0 0.0
        %4747 = vmatprep.subr.mxu0 0.0
        %4748 = vmatpush1.msra.mxu0 0.0
        %4749 = vmatprep.subr.mxu0 0.0
        %4750 = vmatpush1.msra.mxu0 0.0
        %4751 = vmatprep.subr.mxu0 0.0
        %4752 = vmatpush1.msra.mxu0 0.0
        %4753 = vmatprep.subr.mxu0 0.0
        %4754 = vmatpush1.msra.mxu0 0.0
        %4755 = vmatprep.subr.mxu0 0.0
        %4756 = vmatpush1.msra.mxu0 0.0
        %4757 = vmatprep.subr.mxu0 0.0
        %4758 = vmatpush1.msra.mxu0 0.0
        %4759 = vmatprep.subr.mxu0 0.0
        %4760 = vmatpush1.msra.mxu0 0.0
        %4761 = vmatprep.subr.mxu0 0.0
        %4762 = vmatpush1.msra.mxu0 0.0
        %4763 = vmatprep.subr.mxu0 0.0
        %4764 = vmatpush1.msra.mxu0 0.0
        %4765 = vmatprep.subr.mxu0 0.0
        %4766 = vmatpush1.msra.mxu0 0.0
        %4767 = vmatprep.subr.mxu0 0.0
        %4768 = vmatpush1.msra.mxu0 0.0
        %4769 = vmatprep.subr.mxu0 0.0
        %4770 = vmatpush1.msra.mxu0 0.0
        %4771 = vmatprep.subr.mxu0 0.0
        %4772 = vmatpush1.msra.mxu0 0.0
        %4773 = vmatprep.subr.mxu0 0.0
        %4774 = vmatpush1.msra.mxu0 0.0
        %4775 = vmatprep.subr.mxu0 0.0
        %4776 = vmatpush1.msra.mxu0 0.0
        %4777 = vmatprep.subr.mxu0 0.0
        %4778 = vmatpush1.msra.mxu0 0.0
        %4779 = vmatprep.subr.mxu0 0.0
        %4780 = vmatpush1.msra.mxu0 0.0
        %4781 = vmatprep.subr.mxu0 0.0
        %4782 = vmatpush1.msra.mxu0 0.0
        %4783 = vmatprep.subr.mxu0 0.0
        %4784 = vmatpush1.msra.mxu0 0.0
        %4785 = vmatprep.subr.mxu0 0.0
        %4786 = vmatpush1.msra.mxu0 0.0
        %4787 = vmatprep.subr.mxu0 0.0
        %4788 = vmatpush1.msra.mxu0 0.0
        %4789 = vmatprep.subr.mxu0 0.0
        %4790 = vmatpush1.msra.mxu0 0.0
        %4791 = vmatprep.subr.mxu0 0.0
        %4792 = vmatpush1.msra.mxu0 0.0
        %4793 = vmatprep.subr.mxu0 0.0
        %4794 = vmatpush1.msra.mxu0 0.0
        %4795 = vmatprep.subr.mxu0 0.0
        %4796 = vmatpush1.msra.mxu0 0.0
        %4797 = vmatprep.subr.mxu0 0.0
        %4798 = vmatpush1.msra.mxu0 0.0
        %4799 = vmatprep.mubr.f32.mxu0 0.0
        %4800 = vmatmul.mubr.f32.gmra.mrb[0].mxu0 %v4640
        %v4801 = vpop.f32.mrb[0].mxu0
        %v4802 = vadd.f32 0.0, %v4801
        %v4803 = vpop.f32.mrb[0].mxu0
        %4804 = vmatprep.mubr.f32.mxu0 0.0
        %4805 = vmatmul.mubr.f32.gmra.mrb[0].mxu0 %v4643
        %v4806 = vpop.f32.mrb[0].mxu0
        %v4807 = vadd.f32 0.0, %v4806
        %v4808 = vpop.f32.mrb[0].mxu0
        %4809 = vmatprep.mubr.f32.mxu0 0.0
        %4810 = vmatmul.mubr.f32.gmra.mrb[0].mxu0 %v4646
        %v4811 = vpop.f32.mrb[0].mxu0
        %v4812 = vadd.f32 0.0, %v4811
        %v4813 = vpop.f32.mrb[0].mxu0
        %4814 = vmatprep.mubr.f32.mxu0 0.0
        %4815 = vmatmul.mubr.f32.gmra.mrb[0].mxu0 %v4649
        %v4816 = vpop.f32.mrb[0].mxu0
        %v4817 = vadd.f32 0.0, %v4816
        %v4818 = vpop.f32.mrb[0].mxu0
        %4819 = vmatprep.mubr.f32.mxu0 0.0
        %4820 = vmatmul.mubr.f32.gmra.mrb[0].mxu0 %v4652
        %v4821 = vpop.f32.mrb[0].mxu0
        %v4822 = vadd.f32 0.0, %v4821
        %v4823 = vpop.f32.mrb[0].mxu0
        %4824 = vmatprep.mubr.f32.mxu0 0.0
        %4825 = vmatmul.mubr.f32.gmra.mrb[0].mxu0 %v4655
        %v4826 = vpop.f32.mrb[0].mxu0
        %v4827 = vadd.f32 0.0, %v4826
        %v4828 = vpop.f32.mrb[0].mxu0
        %4829 = vmatprep.mubr.f32.mxu0 0.0
        %4830 = vmatmul.mubr.f32.gmra.mrb[0].mxu0 %v4658
        %v4831 = vpop.f32.mrb[0].mxu0
        %v4832 = vadd.f32 0.0, %v4831
        %v4833 = vpop.f32.mrb[0].mxu0
        %4834 = vmatprep.mubr.f32.mxu0 0.0
        %4835 = vmatmul.mubr.f32.gmra.mrb[0].mxu0 %v4661
        %v4836 = vpop.f32.mrb[0].mxu0
        %v4837 = vadd.f32 0.0, %v4836
        %v4838 = vpop.f32.mrb[0].mxu0
        %4839 = vmatprep.mubr.f32.mxu0 0.0
        %4840 = vmatmul.mubr.f32.gmra.mrb[0].mxu0 %v4664
        %v4841 = vpop.f32.mrb[0].mxu0
        %v4842 = vadd.f32 0.0, %v4841
        %v4843 = vpop.f32.mrb[0].mxu0
        %4844 = vmatprep.mubr.f32.mxu0 0.0
        %4845 = vmatmul.mubr.f32.gmra.mrb[0].mxu0 %v4667
        %v4846 = vpop.f32.mrb[0].mxu0
        %v4847 = vadd.f32 0.0, %v4846
        %v4848 = vpop.f32.mrb[0].mxu0
        %4849 = vmatprep.mubr.f32.mxu0 0.0
        %4850 = vmatmul.mubr.f32.gmra.mrb[0].mxu0 %v4670
        %v4851 = vpop.f32.mrb[0].mxu0
        %v4852 = vadd.f32 0.0, %v4851
        %v4853 = vpop.f32.mrb[0].mxu0
        %4854 = vmatprep.mubr.f32.mxu0 0.0
        %4855 = vmatmul.mubr.f32.gmra.mrb[0].mxu0 %v4673
        %v4856 = vpop.f32.mrb[0].mxu0
        %v4857 = vadd.f32 0.0, %v4856
        %v4858 = vpop.f32.mrb[0].mxu0
        %4859 = vmatprep.mubr.f32.mxu0 0.0
        %4860 = vmatmul.mubr.f32.gmra.mrb[0].mxu0 %v4676
        %v4861 = vpop.f32.mrb[0].mxu0
        %v4862 = vadd.f32 0.0, %v4861
        %v4863 = vpop.f32.mrb[0].mxu0
        %4864 = vmatprep.mubr.f32.mxu0 0.0
        %4865 = vmatmul.mubr.f32.gmra.mrb[0].mxu0 %v4679
        %v4866 = vpop.f32.mrb[0].mxu0
        %v4867 = vadd.f32 0.0, %v4866
        %v4868 = vpop.f32.mrb[0].mxu0
        %4869 = vmatprep.mubr.f32.mxu0 0.0
        %4870 = vmatmul.mubr.f32.gmra.mrb[0].mxu0 %v4682
        %v4871 = vpop.f32.mrb[0].mxu0
        %v4872 = vadd.f32 0.0, %v4871
        %v4873 = vpop.f32.mrb[0].mxu0
        %4874 = vmatprep.mubr.f32.mxu0 0.0
        %4875 = vmatmul.mubr.f32.gmra.mrb[0].mxu0 %v4685
        %v4876 = vpop.f32.mrb[0].mxu0
        %v4877 = vadd.f32 0.0, %v4876
        %v4878 = vpop.f32.mrb[0].mxu0
        %4879 = vmatprep.mubr.f32.mxu0 0.0
        %4880 = vmatmul.mubr.f32.gmra.mrb[0].mxu0 %v4688
        %v4881 = vpop.f32.mrb[0].mxu0
        %v4882 = vadd.f32 0.0, %v4881
        %v4883 = vpop.f32.mrb[0].mxu0
        %4884 = vmatprep.mubr.f32.mxu0 0.0
        %4885 = vmatmul.mubr.f32.gmra.mrb[0].mxu0 %v4691
        %v4886 = vpop.f32.mrb[0].mxu0
        %v4887 = vadd.f32 0.0, %v4886
        %v4888 = vpop.f32.mrb[0].mxu0
        %4889 = vmatprep.mubr.f32.mxu0 0.0
        %4890 = vmatmul.mubr.f32.gmra.mrb[0].mxu0 %v4694
        %v4891 = vpop.f32.mrb[0].mxu0
        %v4892 = vadd.f32 0.0, %v4891
        %v4893 = vpop.f32.mrb[0].mxu0
        %4894 = vmatprep.mubr.f32.mxu0 0.0
        %4895 = vmatmul.mubr.f32.gmra.mrb[0].mxu0 %v4697
        %v4896 = vpop.f32.mrb[0].mxu0
        %v4897 = vadd.f32 0.0, %v4896
        %v4898 = vpop.f32.mrb[0].mxu0
        %4899 = vmatprep.mubr.f32.mxu0 0.0
        %4900 = vmatmul.mubr.f32.gmra.mrb[0].mxu0 %v4700
        %v4901 = vpop.f32.mrb[0].mxu0
        %v4902 = vadd.f32 0.0, %v4901
        %v4903 = vpop.f32.mrb[0].mxu0
        %4904 = vmatprep.mubr.f32.mxu0 0.0
        %4905 = vmatmul.mubr.f32.gmra.mrb[0].mxu0 %v4703
        %v4906 = vpop.f32.mrb[0].mxu0
        %v4907 = vadd.f32 0.0, %v4906
        %v4908 = vpop.f32.mrb[0].mxu0
        %4909 = vmatprep.mubr.f32.mxu0 0.0
        %4910 = vmatmul.mubr.f32.gmra.mrb[0].mxu0 %v4706
        %v4911 = vpop.f32.mrb[0].mxu0
        %v4912 = vadd.f32 0.0, %v4911
        %v4913 = vpop.f32.mrb[0].mxu0
        %4914 = vmatprep.mubr.f32.mxu0 0.0
        %4915 = vmatmul.mubr.f32.gmra.mrb[0].mxu0 %v4709
        %v4916 = vpop.f32.mrb[0].mxu0
        %v4917 = vadd.f32 0.0, %v4916
        %v4918 = vpop.f32.mrb[0].mxu0
        %4919 = vmatprep.mubr.f32.mxu0 0.0
        %4920 = vmatmul.mubr.f32.gmra.mrb[0].mxu0 %v4712
        %v4921 = vpop.f32.mrb[0].mxu0
        %v4922 = vadd.f32 0.0, %v4921
        %v4923 = vpop.f32.mrb[0].mxu0
        %4924 = vmatprep.mubr.f32.mxu0 0.0
        %4925 = vmatmul.mubr.f32.gmra.mrb[0].mxu0 %v4715
        %v4926 = vpop.f32.mrb[0].mxu0
        %v4927 = vadd.f32 0.0, %v4926
        %v4928 = vpop.f32.mrb[0].mxu0
        %4929 = vmatprep.mubr.f32.mxu0 0.0
        %4930 = vmatmul.mubr.f32.gmra.mrb[0].mxu0 %v4718
        %v4931 = vpop.f32.mrb[0].mxu0
        %v4932 = vadd.f32 0.0, %v4931
        %v4933 = vpop.f32.mrb[0].mxu0
        %4934 = vmatprep.mubr.f32.mxu0 0.0
        %4935 = vmatmul.mubr.f32.gmra.mrb[0].mxu0 %v4721
        %v4936 = vpop.f32.mrb[0].mxu0
        %v4937 = vadd.f32 0.0, %v4936
        %v4938 = vpop.f32.mrb[0].mxu0
        %4939 = vmatprep.mubr.f32.mxu0 0.0
        %4940 = vmatmul.mubr.f32.gmra.mrb[0].mxu0 %v4724
        %v4941 = vpop.f32.mrb[0].mxu0
        %v4942 = vadd.f32 0.0, %v4941
        %v4943 = vpop.f32.mrb[0].mxu0
        %4944 = vmatprep.mubr.f32.mxu0 0.0
        %4945 = vmatmul.mubr.f32.gmra.mrb[0].mxu0 %v4727
        %v4946 = vpop.f32.mrb[0].mxu0
        %v4947 = vadd.f32 0.0, %v4946
        %v4948 = vpop.f32.mrb[0].mxu0
        %4949 = vmatprep.mubr.f32.mxu0 0.0
        %4950 = vmatmul.mubr.f32.gmra.mrb[0].mxu0 %v4730
        %v4951 = vpop.f32.mrb[0].mxu0
        %v4952 = vadd.f32 0.0, %v4951
        %v4953 = vpop.f32.mrb[0].mxu0
        %4954 = vmatprep.mubr.f32.mxu0 0.0
        %4955 = vmatmul.mubr.f32.gmra.mrb[0].mxu0 %v4733
        %v4956 = vpop.f32.mrb[0].mxu0
        %v4957 = vadd.f32 0.0, %v4956
        %v4958 = vpop.f32.mrb[0].mxu0
        %4959 = vdwg.mxu0
        %v4961 = vsel %vm1381, %v2502, 0
        %v4964 = vsel %vm1381, %v2507, 0
        %v4967 = vsel %vm1381, %v2512, 0
        %v4970 = vsel %vm1381, %v2517, 0
        %v4973 = vsel %vm1381, %v2522, 0
        %v4976 = vsel %vm1381, %v2527, 0
        %v4979 = vsel %vm1381, %v2532, 0
        %v4982 = vsel %vm1381, %v2537, 0
        %v4985 = vsel %vm1381, %v2655, 0
        %v4988 = vsel %vm1381, %v2660, 0
        %v4991 = vsel %vm1381, %v2665, 0
        %v4994 = vsel %vm1381, %v2670, 0
        %v4997 = vsel %vm1381, %v2675, 0
        %v5000 = vsel %vm1381, %v2680, 0
        %v5003 = vsel %vm1381, %v2685, 0
        %v5006 = vsel %vm1381, %v2690, 0
        %v5009 = vsel %vm1381, %v2808, 0
        %v5012 = vsel %vm1381, %v2813, 0
        %v5015 = vsel %vm1381, %v2818, 0
        %v5018 = vsel %vm1381, %v2823, 0
        %v5021 = vsel %vm1381, %v2828, 0
        %v5024 = vsel %vm1381, %v2833, 0
        %v5027 = vsel %vm1381, %v2838, 0
        %v5030 = vsel %vm1381, %v2843, 0
        %v5033 = vsel %vm1381, %v2961, 0
        %v5036 = vsel %vm1381, %v2966, 0
        %v5039 = vsel %vm1381, %v2971, 0
        %v5042 = vsel %vm1381, %v2976, 0
        %v5045 = vsel %vm1381, %v2981, 0
        %v5048 = vsel %vm1381, %v2986, 0
        %v5051 = vsel %vm1381, %v2991, 0
        %v5054 = vsel %vm1381, %v2996, 0
        %5056 = vmatprep.subr.mxu0 0.0
        %5057 = vmatpush1.msra.mxu0 %v1353
        %5058 = vmatprep.subr.mxu0 0.0
        %5059 = vmatpush1.msra.mxu0 0.0
        %5060 = vmatprep.subr.mxu0 0.0
        %5061 = vmatpush1.msra.mxu0 0.0
        %5062 = vmatprep.subr.mxu0 0.0
        %5063 = vmatpush1.msra.mxu0 0.0
        %5064 = vmatprep.subr.mxu0 0.0
        %5065 = vmatpush1.msra.mxu0 0.0
        %5066 = vmatprep.subr.mxu0 0.0
        %5067 = vmatpush1.msra.mxu0 0.0
        %5068 = vmatprep.subr.mxu0 0.0
        %5069 = vmatpush1.msra.mxu0 0.0
        %5070 = vmatprep.subr.mxu0 0.0
        %5071 = vmatpush1.msra.mxu0 0.0
        %5072 = vmatprep.subr.mxu0 0.0
        %5073 = vmatpush1.msra.mxu0 0.0
        %5074 = vmatprep.subr.mxu0 0.0
        %5075 = vmatpush1.msra.mxu0 0.0
        %5076 = vmatprep.subr.mxu0 0.0
        %5077 = vmatpush1.msra.mxu0 0.0
        %5078 = vmatprep.subr.mxu0 0.0
        %5079 = vmatpush1.msra.mxu0 0.0
        %5080 = vmatprep.subr.mxu0 0.0
        %5081 = vmatpush1.msra.mxu0 0.0
        %5082 = vmatprep.subr.mxu0 0.0
        %5083 = vmatpush1.msra.mxu0 0.0
        %5084 = vmatprep.subr.mxu0 0.0
        %5085 = vmatpush1.msra.mxu0 0.0
        %5086 = vmatprep.subr.mxu0 0.0
        %5087 = vmatpush1.msra.mxu0 0.0
        %5088 = vmatprep.subr.mxu0 0.0
        %5089 = vmatpush1.msra.mxu0 0.0
        %5090 = vmatprep.subr.mxu0 0.0
        %5091 = vmatpush1.msra.mxu0 0.0
        %5092 = vmatprep.subr.mxu0 0.0
        %5093 = vmatpush1.msra.mxu0 0.0
        %5094 = vmatprep.subr.mxu0 0.0
        %5095 = vmatpush1.msra.mxu0 0.0
        %5096 = vmatprep.subr.mxu0 0.0
        %5097 = vmatpush1.msra.mxu0 0.0
        %5098 = vmatprep.subr.mxu0 0.0
        %5099 = vmatpush1.msra.mxu0 0.0
        %5100 = vmatprep.subr.mxu0 0.0
        %5101 = vmatpush1.msra.mxu0 0.0
        %5102 = vmatprep.subr.mxu0 0.0
        %5103 = vmatpush1.msra.mxu0 0.0
        %5104 = vmatprep.subr.mxu0 0.0
        %5105 = vmatpush1.msra.mxu0 0.0
        %5106 = vmatprep.subr.mxu0 0.0
        %5107 = vmatpush1.msra.mxu0 0.0
        %5108 = vmatprep.subr.mxu0 0.0
        %5109 = vmatpush1.msra.mxu0 0.0
        %5110 = vmatprep.subr.mxu0 0.0
        %5111 = vmatpush1.msra.mxu0 0.0
        %5112 = vmatprep.subr.mxu0 0.0
        %5113 = vmatpush1.msra.mxu0 0.0
        %5114 = vmatprep.subr.mxu0 0.0
        %5115 = vmatpush1.msra.mxu0 0.0
        %5116 = vmatprep.subr.mxu0 0.0
        %5117 = vmatpush1.msra.mxu0 0.0
        %5118 = vmatprep.subr.mxu0 0.0
        %5119 = vmatpush1.msra.mxu0 0.0
        %5120 = vmatprep.mubr.f32.mxu0 0.0
        %5121 = vmatmul.mubr.f32.gmra.mrb[0].mxu0 %v4961
        %v5122 = vpop.f32.mrb[0].mxu0
        %v5123 = vadd.f32 %v4802, %v5122
        %v5124 = vpop.f32.mrb[0].mxu0
        %5125 = vmatprep.mubr.f32.mxu0 0.0
        %5126 = vmatmul.mubr.f32.gmra.mrb[0].mxu0 %v4964
        %v5127 = vpop.f32.mrb[0].mxu0
        %v5128 = vadd.f32 %v4807, %v5127
        %v5129 = vpop.f32.mrb[0].mxu0
        %5130 = vmatprep.mubr.f32.mxu0 0.0
        %5131 = vmatmul.mubr.f32.gmra.mrb[0].mxu0 %v4967
        %v5132 = vpop.f32.mrb[0].mxu0
        %v5133 = vadd.f32 %v4812, %v5132
        %v5134 = vpop.f32.mrb[0].mxu0
        %5135 = vmatprep.mubr.f32.mxu0 0.0
        %5136 = vmatmul.mubr.f32.gmra.mrb[0].mxu0 %v4970
        %v5137 = vpop.f32.mrb[0].mxu0
        %v5138 = vadd.f32 %v4817, %v5137
        %v5139 = vpop.f32.mrb[0].mxu0
        %5140 = vmatprep.mubr.f32.mxu0 0.0
        %5141 = vmatmul.mubr.f32.gmra.mrb[0].mxu0 %v4973
        %v5142 = vpop.f32.mrb[0].mxu0
        %v5143 = vadd.f32 %v4822, %v5142
        %v5144 = vpop.f32.mrb[0].mxu0
        %5145 = vmatprep.mubr.f32.mxu0 0.0
        %5146 = vmatmul.mubr.f32.gmra.mrb[0].mxu0 %v4976
        %v5147 = vpop.f32.mrb[0].mxu0
        %v5148 = vadd.f32 %v4827, %v5147
        %v5149 = vpop.f32.mrb[0].mxu0
        %5150 = vmatprep.mubr.f32.mxu0 0.0
        %5151 = vmatmul.mubr.f32.gmra.mrb[0].mxu0 %v4979
        %v5152 = vpop.f32.mrb[0].mxu0
        %v5153 = vadd.f32 %v4832, %v5152
        %v5154 = vpop.f32.mrb[0].mxu0
        %5155 = vmatprep.mubr.f32.mxu0 0.0
        %5156 = vmatmul.mubr.f32.gmra.mrb[0].mxu0 %v4982
        %v5157 = vpop.f32.mrb[0].mxu0
        %v5158 = vadd.f32 %v4837, %v5157
        %v5159 = vpop.f32.mrb[0].mxu0
        %5160 = vmatprep.mubr.f32.mxu0 0.0
        %5161 = vmatmul.mubr.f32.gmra.mrb[0].mxu0 %v4985
        %v5162 = vpop.f32.mrb[0].mxu0
        %v5163 = vadd.f32 %v4842, %v5162
        %v5164 = vpop.f32.mrb[0].mxu0
        %5165 = vmatprep.mubr.f32.mxu0 0.0
        %5166 = vmatmul.mubr.f32.gmra.mrb[0].mxu0 %v4988
        %v5167 = vpop.f32.mrb[0].mxu0
        %v5168 = vadd.f32 %v4847, %v5167
        %v5169 = vpop.f32.mrb[0].mxu0
        %5170 = vmatprep.mubr.f32.mxu0 0.0
        %5171 = vmatmul.mubr.f32.gmra.mrb[0].mxu0 %v4991
        %v5172 = vpop.f32.mrb[0].mxu0
        %v5173 = vadd.f32 %v4852, %v5172
        %v5174 = vpop.f32.mrb[0].mxu0
        %5175 = vmatprep.mubr.f32.mxu0 0.0
        %5176 = vmatmul.mubr.f32.gmra.mrb[0].mxu0 %v4994
        %v5177 = vpop.f32.mrb[0].mxu0
        %v5178 = vadd.f32 %v4857, %v5177
        %v5179 = vpop.f32.mrb[0].mxu0
        %5180 = vmatprep.mubr.f32.mxu0 0.0
        %5181 = vmatmul.mubr.f32.gmra.mrb[0].mxu0 %v4997
        %v5182 = vpop.f32.mrb[0].mxu0
        %v5183 = vadd.f32 %v4862, %v5182
        %v5184 = vpop.f32.mrb[0].mxu0
        %5185 = vmatprep.mubr.f32.mxu0 0.0
        %5186 = vmatmul.mubr.f32.gmra.mrb[0].mxu0 %v5000
        %v5187 = vpop.f32.mrb[0].mxu0
        %v5188 = vadd.f32 %v4867, %v5187
        %v5189 = vpop.f32.mrb[0].mxu0
        %5190 = vmatprep.mubr.f32.mxu0 0.0
        %5191 = vmatmul.mubr.f32.gmra.mrb[0].mxu0 %v5003
        %v5192 = vpop.f32.mrb[0].mxu0
        %v5193 = vadd.f32 %v4872, %v5192
        %v5194 = vpop.f32.mrb[0].mxu0
        %5195 = vmatprep.mubr.f32.mxu0 0.0
        %5196 = vmatmul.mubr.f32.gmra.mrb[0].mxu0 %v5006
        %v5197 = vpop.f32.mrb[0].mxu0
        %v5198 = vadd.f32 %v4877, %v5197
        %v5199 = vpop.f32.mrb[0].mxu0
        %5200 = vmatprep.mubr.f32.mxu0 0.0
        %5201 = vmatmul.mubr.f32.gmra.mrb[0].mxu0 %v5009
        %v5202 = vpop.f32.mrb[0].mxu0
        %v5203 = vadd.f32 %v4882, %v5202
        %v5204 = vpop.f32.mrb[0].mxu0
        %5205 = vmatprep.mubr.f32.mxu0 0.0
        %5206 = vmatmul.mubr.f32.gmra.mrb[0].mxu0 %v5012
        %v5207 = vpop.f32.mrb[0].mxu0
        %v5208 = vadd.f32 %v4887, %v5207
        %v5209 = vpop.f32.mrb[0].mxu0
        %5210 = vmatprep.mubr.f32.mxu0 0.0
        %5211 = vmatmul.mubr.f32.gmra.mrb[0].mxu0 %v5015
        %v5212 = vpop.f32.mrb[0].mxu0
        %v5213 = vadd.f32 %v4892, %v5212
        %v5214 = vpop.f32.mrb[0].mxu0
        %5215 = vmatprep.mubr.f32.mxu0 0.0
        %5216 = vmatmul.mubr.f32.gmra.mrb[0].mxu0 %v5018
        %v5217 = vpop.f32.mrb[0].mxu0
        %v5218 = vadd.f32 %v4897, %v5217
        %v5219 = vpop.f32.mrb[0].mxu0
        %5220 = vmatprep.mubr.f32.mxu0 0.0
        %5221 = vmatmul.mubr.f32.gmra.mrb[0].mxu0 %v5021
        %v5222 = vpop.f32.mrb[0].mxu0
        %v5223 = vadd.f32 %v4902, %v5222
        %v5224 = vpop.f32.mrb[0].mxu0
        %5225 = vmatprep.mubr.f32.mxu0 0.0
        %5226 = vmatmul.mubr.f32.gmra.mrb[0].mxu0 %v5024
        %v5227 = vpop.f32.mrb[0].mxu0
        %v5228 = vadd.f32 %v4907, %v5227
        %v5229 = vpop.f32.mrb[0].mxu0
        %5230 = vmatprep.mubr.f32.mxu0 0.0
        %5231 = vmatmul.mubr.f32.gmra.mrb[0].mxu0 %v5027
        %v5232 = vpop.f32.mrb[0].mxu0
        %v5233 = vadd.f32 %v4912, %v5232
        %v5234 = vpop.f32.mrb[0].mxu0
        %5235 = vmatprep.mubr.f32.mxu0 0.0
        %5236 = vmatmul.mubr.f32.gmra.mrb[0].mxu0 %v5030
        %v5237 = vpop.f32.mrb[0].mxu0
        %v5238 = vadd.f32 %v4917, %v5237
        %v5239 = vpop.f32.mrb[0].mxu0
        %5240 = vmatprep.mubr.f32.mxu0 0.0
        %5241 = vmatmul.mubr.f32.gmra.mrb[0].mxu0 %v5033
        %v5242 = vpop.f32.mrb[0].mxu0
        %v5243 = vadd.f32 %v4922, %v5242
        %v5244 = vpop.f32.mrb[0].mxu0
        %5245 = vmatprep.mubr.f32.mxu0 0.0
        %5246 = vmatmul.mubr.f32.gmra.mrb[0].mxu0 %v5036
        %v5247 = vpop.f32.mrb[0].mxu0
        %v5248 = vadd.f32 %v4927, %v5247
        %v5249 = vpop.f32.mrb[0].mxu0
        %5250 = vmatprep.mubr.f32.mxu0 0.0
        %5251 = vmatmul.mubr.f32.gmra.mrb[0].mxu0 %v5039
        %v5252 = vpop.f32.mrb[0].mxu0
        %v5253 = vadd.f32 %v4932, %v5252
        %v5254 = vpop.f32.mrb[0].mxu0
        %5255 = vmatprep.mubr.f32.mxu0 0.0
        %5256 = vmatmul.mubr.f32.gmra.mrb[0].mxu0 %v5042
        %v5257 = vpop.f32.mrb[0].mxu0
        %v5258 = vadd.f32 %v4937, %v5257
        %v5259 = vpop.f32.mrb[0].mxu0
        %5260 = vmatprep.mubr.f32.mxu0 0.0
        %5261 = vmatmul.mubr.f32.gmra.mrb[0].mxu0 %v5045
        %v5262 = vpop.f32.mrb[0].mxu0
        %v5263 = vadd.f32 %v4942, %v5262
        %v5264 = vpop.f32.mrb[0].mxu0
        %5265 = vmatprep.mubr.f32.mxu0 0.0
        %5266 = vmatmul.mubr.f32.gmra.mrb[0].mxu0 %v5048
        %v5267 = vpop.f32.mrb[0].mxu0
        %v5268 = vadd.f32 %v4947, %v5267
        %v5269 = vpop.f32.mrb[0].mxu0
        %5270 = vmatprep.mubr.f32.mxu0 0.0
        %5271 = vmatmul.mubr.f32.gmra.mrb[0].mxu0 %v5051
        %v5272 = vpop.f32.mrb[0].mxu0
        %v5273 = vadd.f32 %v4952, %v5272
        %v5274 = vpop.f32.mrb[0].mxu0
        %5275 = vmatprep.mubr.f32.mxu0 0.0
        %5276 = vmatmul.mubr.f32.gmra.mrb[0].mxu0 %v5054
        %v5277 = vpop.f32.mrb[0].mxu0
        %v5278 = vadd.f32 %v4957, %v5277
        %v5279 = vpop.f32.mrb[0].mxu0
        %5280 = vdwg.mxu0
        %5281 = vrot.lane.b32.xlu0 %v1321, 112
        %v5282 = vpop.permute.xlu0 %5281
        %5283 = vrot.lane.b32.xlu0 %v1322, 112
        %v5284 = vpop.permute.xlu0 %5283
        %5285 = vrot.lane.b32.xlu0 %v1323, 112
        %v5286 = vpop.permute.xlu0 %5285
        %5287 = vrot.lane.b32.xlu0 %v1324, 112
        %v5288 = vpop.permute.xlu0 %5287
        %5289 = vrot.lane.b32.xlu0 %v1325, 112
        %v5290 = vpop.permute.xlu0 %5289
        %5291 = vrot.lane.b32.xlu0 %v1326, 112
        %v5292 = vpop.permute.xlu0 %5291
        %5293 = vrot.lane.b32.xlu0 %v1327, 112
        %v5294 = vpop.permute.xlu0 %5293
        %5295 = vrot.lane.b32.xlu0 %v1328, 112
        %v5296 = vpop.permute.xlu0 %5295
        %5297 = vrot.lane.b32.xlu0 %v1163, 80
        %v5298 = vpop.permute.xlu0 %5297
        %5299 = vrot.lane.b32.xlu0 %v1168, 80
        %v5300 = vpop.permute.xlu0 %5299
        %5301 = vrot.lane.b32.xlu0 %v1173, 80
        %v5302 = vpop.permute.xlu0 %5301
        %5303 = vrot.lane.b32.xlu0 %v1178, 80
        %v5304 = vpop.permute.xlu0 %5303
        %5305 = vrot.lane.b32.xlu0 %v1183, 80
        %v5306 = vpop.permute.xlu0 %5305
        %5307 = vrot.lane.b32.xlu0 %v1188, 80
        %v5308 = vpop.permute.xlu0 %5307
        %5309 = vrot.lane.b32.xlu0 %v1193, 80
        %v5310 = vpop.permute.xlu0 %5309
        %5311 = vrot.lane.b32.xlu0 %v1198, 80
        %v5312 = vpop.permute.xlu0 %5311
        %v5313 = vsel %vm1381, %v5282, 0
        %v5315 = vsel %vm1381, %v5284, 0
        %v5317 = vsel %vm1381, %v5286, 0
        %v5319 = vsel %vm1381, %v5288, 0
        %v5321 = vsel %vm1381, %v5290, 0
        %v5323 = vsel %vm1381, %v5292, 0
        %v5325 = vsel %vm1381, %v5294, 0
        %v5327 = vsel %vm1381, %v5296, 0
        %v5329 = vsel %vm1381, %v5298, 0
        %v5331 = vsel %vm1381, %v5300, 0
        %v5333 = vsel %vm1381, %v5302, 0
        %v5335 = vsel %vm1381, %v5304, 0
        %v5337 = vsel %vm1381, %v5306, 0
        %v5339 = vsel %vm1381, %v5308, 0
        %v5341 = vsel %vm1381, %v5310, 0
        %v5343 = vsel %vm1381, %v5312, 0
        %5345 = vmatprep.subr.mxu0 0.0
        %5346 = vmatpush1.xpose.msra.mxu0 %v5329
        %5347 = vmatprep.subr.mxu0 0.0
        %5348 = vmatpush1.xpose.msra.mxu0 %v5331
        %5349 = vmatprep.subr.mxu0 0.0
        %5350 = vmatpush1.xpose.msra.mxu0 %v5333
        %5351 = vmatprep.subr.mxu0 0.0
        %5352 = vmatpush1.xpose.msra.mxu0 %v5335
        %5353 = vmatprep.subr.mxu0 0.0
        %5354 = vmatpush1.xpose.msra.mxu0 %v5337
        %5355 = vmatprep.subr.mxu0 0.0
        %5356 = vmatpush1.xpose.msra.mxu0 %v5339
        %5357 = vmatprep.subr.mxu0 0.0
        %5358 = vmatpush1.xpose.msra.mxu0 %v5341
        %5359 = vmatprep.subr.mxu0 0.0
        %5360 = vmatpush1.xpose.msra.mxu0 %v5343
        %5361 = vmatprep.subr.mxu0 0.0
        %5362 = vmatpush1.xpose.msra.mxu0 0.0
        %5363 = vmatprep.subr.mxu0 0.0
        %5364 = vmatpush1.xpose.msra.mxu0 0.0
        %5365 = vmatprep.subr.mxu0 0.0
        %5366 = vmatpush1.xpose.msra.mxu0 0.0
        %5367 = vmatprep.subr.mxu0 0.0
        %5368 = vmatpush1.xpose.msra.mxu0 0.0
        %5369 = vmatprep.subr.mxu0 0.0
        %5370 = vmatpush1.xpose.msra.mxu0 0.0
        %5371 = vmatprep.subr.mxu0 0.0
        %5372 = vmatpush1.xpose.msra.mxu0 0.0
        %5373 = vmatprep.subr.mxu0 0.0
        %5374 = vmatpush1.xpose.msra.mxu0 0.0
        %5375 = vmatprep.subr.mxu0 0.0
        %5376 = vmatpush1.xpose.msra.mxu0 0.0
        %5377 = vmatprep.subr.mxu0 0.0
        %5378 = vmatpush1.xpose.msra.mxu0 0.0
        %5379 = vmatprep.subr.mxu0 0.0
        %5380 = vmatpush1.xpose.msra.mxu0 0.0
        %5381 = vmatprep.subr.mxu0 0.0
        %5382 = vmatpush1.xpose.msra.mxu0 0.0
        %5383 = vmatprep.subr.mxu0 0.0
        %5384 = vmatpush1.xpose.msra.mxu0 0.0
        %5385 = vmatprep.subr.mxu0 0.0
        %5386 = vmatpush1.xpose.msra.mxu0 0.0
        %5387 = vmatprep.subr.mxu0 0.0
        %5388 = vmatpush1.xpose.msra.mxu0 0.0
        %5389 = vmatprep.subr.mxu0 0.0
        %5390 = vmatpush1.xpose.msra.mxu0 0.0
        %5391 = vmatprep.subr.mxu0 0.0
        %5392 = vmatpush1.xpose.msra.mxu0 0.0
        %5393 = vmatprep.subr.mxu0 0.0
        %5394 = vmatpush1.xpose.msra.mxu0 0.0
        %5395 = vmatprep.subr.mxu0 0.0
        %5396 = vmatpush1.xpose.msra.mxu0 0.0
        %5397 = vmatprep.subr.mxu0 0.0
        %5398 = vmatpush1.xpose.msra.mxu0 0.0
        %5399 = vmatprep.subr.mxu0 0.0
        %5400 = vmatpush1.xpose.msra.mxu0 0.0
        %5401 = vmatprep.subr.mxu0 0.0
        %5402 = vmatpush1.xpose.msra.mxu0 0.0
        %5403 = vmatprep.subr.mxu0 0.0
        %5404 = vmatpush1.xpose.msra.mxu0 0.0
        %5405 = vmatprep.subr.mxu0 0.0
        %5406 = vmatpush1.xpose.msra.mxu0 0.0
        %5407 = vmatprep.subr.mxu0 0.0
        %5408 = vmatpush1.xpose.msra.mxu0 0.0
        %5409 = vmatprep.mubr.f32.mxu0 0.0
        %5410 = vmatmul.mubr.f32.gmra.mrb[0].mxu0 %v5313
        %v5411 = vpop.f32.mrb[0].mxu0
        %v5412 = vadd.f32 0.0, %v5411
        %v5413 = vpop.f32.mrb[0].mxu0
        %5414 = vmatprep.mubr.f32.mxu0 0.0
        %5415 = vmatmul.mubr.f32.gmra.mrb[0].mxu0 %v5315
        %v5416 = vpop.f32.mrb[0].mxu0
        %v5417 = vadd.f32 0.0, %v5416
        %v5418 = vpop.f32.mrb[0].mxu0
        %5419 = vmatprep.mubr.f32.mxu0 0.0
        %5420 = vmatmul.mubr.f32.gmra.mrb[0].mxu0 %v5317
        %v5421 = vpop.f32.mrb[0].mxu0
        %v5422 = vadd.f32 0.0, %v5421
        %v5423 = vpop.f32.mrb[0].mxu0
        %5424 = vmatprep.mubr.f32.mxu0 0.0
        %5425 = vmatmul.mubr.f32.gmra.mrb[0].mxu0 %v5319
        %v5426 = vpop.f32.mrb[0].mxu0
        %v5427 = vadd.f32 0.0, %v5426
        %v5428 = vpop.f32.mrb[0].mxu0
        %5429 = vmatprep.mubr.f32.mxu0 0.0
        %5430 = vmatmul.mubr.f32.gmra.mrb[0].mxu0 %v5321
        %v5431 = vpop.f32.mrb[0].mxu0
        %v5432 = vadd.f32 0.0, %v5431
        %v5433 = vpop.f32.mrb[0].mxu0
        %5434 = vmatprep.mubr.f32.mxu0 0.0
        %5435 = vmatmul.mubr.f32.gmra.mrb[0].mxu0 %v5323
        %v5436 = vpop.f32.mrb[0].mxu0
        %v5437 = vadd.f32 0.0, %v5436
        %v5438 = vpop.f32.mrb[0].mxu0
        %5439 = vmatprep.mubr.f32.mxu0 0.0
        %5440 = vmatmul.mubr.f32.gmra.mrb[0].mxu0 %v5325
        %v5441 = vpop.f32.mrb[0].mxu0
        %v5442 = vadd.f32 0.0, %v5441
        %v5443 = vpop.f32.mrb[0].mxu0
        %5444 = vmatprep.mubr.f32.mxu0 0.0
        %5445 = vmatmul.mubr.f32.gmra.mrb[0].mxu0 %v5327
        %v5446 = vpop.f32.mrb[0].mxu0
        %v5447 = vadd.f32 0.0, %v5446
        %v5448 = vpop.f32.mrb[0].mxu0
        %5449 = vdwg.mxu0
        %5450 = vrot.lane.b32.xlu0 %v1329, 112
        %v5451 = vpop.permute.xlu0 %5450
        %5452 = vrot.lane.b32.xlu0 %v1330, 112
        %v5453 = vpop.permute.xlu0 %5452
        %5454 = vrot.lane.b32.xlu0 %v1331, 112
        %v5455 = vpop.permute.xlu0 %5454
        %5456 = vrot.lane.b32.xlu0 %v1332, 112
        %v5457 = vpop.permute.xlu0 %5456
        %5458 = vrot.lane.b32.xlu0 %v1333, 112
        %v5459 = vpop.permute.xlu0 %5458
        %5460 = vrot.lane.b32.xlu0 %v1334, 112
        %v5461 = vpop.permute.xlu0 %5460
        %5462 = vrot.lane.b32.xlu0 %v1335, 112
        %v5463 = vpop.permute.xlu0 %5462
        %5464 = vrot.lane.b32.xlu0 %v1336, 112
        %v5465 = vpop.permute.xlu0 %5464
        %5466 = vrot.lane.b32.xlu0 %v1203, 80
        %v5467 = vpop.permute.xlu0 %5466
        %5468 = vrot.lane.b32.xlu0 %v1208, 80
        %v5469 = vpop.permute.xlu0 %5468
        %5470 = vrot.lane.b32.xlu0 %v1213, 80
        %v5471 = vpop.permute.xlu0 %5470
        %5472 = vrot.lane.b32.xlu0 %v1218, 80
        %v5473 = vpop.permute.xlu0 %5472
        %5474 = vrot.lane.b32.xlu0 %v1223, 80
        %v5475 = vpop.permute.xlu0 %5474
        %5476 = vrot.lane.b32.xlu0 %v1228, 80
        %v5477 = vpop.permute.xlu0 %5476
        %5478 = vrot.lane.b32.xlu0 %v1233, 80
        %v5479 = vpop.permute.xlu0 %5478
        %5480 = vrot.lane.b32.xlu0 %v1238, 80
        %v5481 = vpop.permute.xlu0 %5480
        %v5482 = vsel %vm1381, %v5451, 0
        %v5484 = vsel %vm1381, %v5453, 0
        %v5486 = vsel %vm1381, %v5455, 0
        %v5488 = vsel %vm1381, %v5457, 0
        %v5490 = vsel %vm1381, %v5459, 0
        %v5492 = vsel %vm1381, %v5461, 0
        %v5494 = vsel %vm1381, %v5463, 0
        %v5496 = vsel %vm1381, %v5465, 0
        %v5498 = vsel %vm1381, %v5467, 0
        %v5500 = vsel %vm1381, %v5469, 0
        %v5502 = vsel %vm1381, %v5471, 0
        %v5504 = vsel %vm1381, %v5473, 0
        %v5506 = vsel %vm1381, %v5475, 0
        %v5508 = vsel %vm1381, %v5477, 0
        %v5510 = vsel %vm1381, %v5479, 0
        %v5512 = vsel %vm1381, %v5481, 0
        %5514 = vmatprep.subr.mxu0 0.0
        %5515 = vmatpush1.xpose.msra.mxu0 %v5498
        %5516 = vmatprep.subr.mxu0 0.0
        %5517 = vmatpush1.xpose.msra.mxu0 %v5500
        %5518 = vmatprep.subr.mxu0 0.0
        %5519 = vmatpush1.xpose.msra.mxu0 %v5502
        %5520 = vmatprep.subr.mxu0 0.0
        %5521 = vmatpush1.xpose.msra.mxu0 %v5504
        %5522 = vmatprep.subr.mxu0 0.0
        %5523 = vmatpush1.xpose.msra.mxu0 %v5506
        %5524 = vmatprep.subr.mxu0 0.0
        %5525 = vmatpush1.xpose.msra.mxu0 %v5508
        %5526 = vmatprep.subr.mxu0 0.0
        %5527 = vmatpush1.xpose.msra.mxu0 %v5510
        %5528 = vmatprep.subr.mxu0 0.0
        %5529 = vmatpush1.xpose.msra.mxu0 %v5512
        %5530 = vmatprep.subr.mxu0 0.0
        %5531 = vmatpush1.xpose.msra.mxu0 0.0
        %5532 = vmatprep.subr.mxu0 0.0
        %5533 = vmatpush1.xpose.msra.mxu0 0.0
        %5534 = vmatprep.subr.mxu0 0.0
        %5535 = vmatpush1.xpose.msra.mxu0 0.0
        %5536 = vmatprep.subr.mxu0 0.0
        %5537 = vmatpush1.xpose.msra.mxu0 0.0
        %5538 = vmatprep.subr.mxu0 0.0
        %5539 = vmatpush1.xpose.msra.mxu0 0.0
        %5540 = vmatprep.subr.mxu0 0.0
        %5541 = vmatpush1.xpose.msra.mxu0 0.0
        %5542 = vmatprep.subr.mxu0 0.0
        %5543 = vmatpush1.xpose.msra.mxu0 0.0
        %5544 = vmatprep.subr.mxu0 0.0
        %5545 = vmatpush1.xpose.msra.mxu0 0.0
        %5546 = vmatprep.subr.mxu0 0.0
        %5547 = vmatpush1.xpose.msra.mxu0 0.0
        %5548 = vmatprep.subr.mxu0 0.0
        %5549 = vmatpush1.xpose.msra.mxu0 0.0
        %5550 = vmatprep.subr.mxu0 0.0
        %5551 = vmatpush1.xpose.msra.mxu0 0.0
        %5552 = vmatprep.subr.mxu0 0.0
        %5553 = vmatpush1.xpose.msra.mxu0 0.0
        %5554 = vmatprep.subr.mxu0 0.0
        %5555 = vmatpush1.xpose.msra.mxu0 0.0
        %5556 = vmatprep.subr.mxu0 0.0
        %5557 = vmatpush1.xpose.msra.mxu0 0.0
        %5558 = vmatprep.subr.mxu0 0.0
        %5559 = vmatpush1.xpose.msra.mxu0 0.0
        %5560 = vmatprep.subr.mxu0 0.0
        %5561 = vmatpush1.xpose.msra.mxu0 0.0
        %5562 = vmatprep.subr.mxu0 0.0
        %5563 = vmatpush1.xpose.msra.mxu0 0.0
        %5564 = vmatprep.subr.mxu0 0.0
        %5565 = vmatpush1.xpose.msra.mxu0 0.0
        %5566 = vmatprep.subr.mxu0 0.0
        %5567 = vmatpush1.xpose.msra.mxu0 0.0
        %5568 = vmatprep.subr.mxu0 0.0
        %5569 = vmatpush1.xpose.msra.mxu0 0.0
        %5570 = vmatprep.subr.mxu0 0.0
        %5571 = vmatpush1.xpose.msra.mxu0 0.0
        %5572 = vmatprep.subr.mxu0 0.0
        %5573 = vmatpush1.xpose.msra.mxu0 0.0
        %5574 = vmatprep.subr.mxu0 0.0
        %5575 = vmatpush1.xpose.msra.mxu0 0.0
        %5576 = vmatprep.subr.mxu0 0.0
        %5577 = vmatpush1.xpose.msra.mxu0 0.0
        %5578 = vmatprep.mubr.f32.mxu0 0.0
        %5579 = vmatmul.mubr.f32.gmra.mrb[0].mxu0 %v5482
        %v5580 = vpop.f32.mrb[0].mxu0
        %v5581 = vadd.f32 0.0, %v5580
        %v5582 = vpop.f32.mrb[0].mxu0
        %5583 = vmatprep.mubr.f32.mxu0 0.0
        %5584 = vmatmul.mubr.f32.gmra.mrb[0].mxu0 %v5484
        %v5585 = vpop.f32.mrb[0].mxu0
        %v5586 = vadd.f32 0.0, %v5585
        %v5587 = vpop.f32.mrb[0].mxu0
        %5588 = vmatprep.mubr.f32.mxu0 0.0
        %5589 = vmatmul.mubr.f32.gmra.mrb[0].mxu0 %v5486
        %v5590 = vpop.f32.mrb[0].mxu0
        %v5591 = vadd.f32 0.0, %v5590
        %v5592 = vpop.f32.mrb[0].mxu0
        %5593 = vmatprep.mubr.f32.mxu0 0.0
        %5594 = vmatmul.mubr.f32.gmra.mrb[0].mxu0 %v5488
        %v5595 = vpop.f32.mrb[0].mxu0
        %v5596 = vadd.f32 0.0, %v5595
        %v5597 = vpop.f32.mrb[0].mxu0
        %5598 = vmatprep.mubr.f32.mxu0 0.0
        %5599 = vmatmul.mubr.f32.gmra.mrb[0].mxu0 %v5490
        %v5600 = vpop.f32.mrb[0].mxu0
        %v5601 = vadd.f32 0.0, %v5600
        %v5602 = vpop.f32.mrb[0].mxu0
        %5603 = vmatprep.mubr.f32.mxu0 0.0
        %5604 = vmatmul.mubr.f32.gmra.mrb[0].mxu0 %v5492
        %v5605 = vpop.f32.mrb[0].mxu0
        %v5606 = vadd.f32 0.0, %v5605
        %v5607 = vpop.f32.mrb[0].mxu0
        %5608 = vmatprep.mubr.f32.mxu0 0.0
        %5609 = vmatmul.mubr.f32.gmra.mrb[0].mxu0 %v5494
        %v5610 = vpop.f32.mrb[0].mxu0
        %v5611 = vadd.f32 0.0, %v5610
        %v5612 = vpop.f32.mrb[0].mxu0
        %5613 = vmatprep.mubr.f32.mxu0 0.0
        %5614 = vmatmul.mubr.f32.gmra.mrb[0].mxu0 %v5496
        %v5615 = vpop.f32.mrb[0].mxu0
        %v5616 = vadd.f32 0.0, %v5615
        %v5617 = vpop.f32.mrb[0].mxu0
        %5618 = vdwg.mxu0
        %5619 = vrot.lane.b32.xlu0 %v1337, 112
        %v5620 = vpop.permute.xlu0 %5619
        %5621 = vrot.lane.b32.xlu0 %v1338, 112
        %v5622 = vpop.permute.xlu0 %5621
        %5623 = vrot.lane.b32.xlu0 %v1339, 112
        %v5624 = vpop.permute.xlu0 %5623
        %5625 = vrot.lane.b32.xlu0 %v1340, 112
        %v5626 = vpop.permute.xlu0 %5625
        %5627 = vrot.lane.b32.xlu0 %v1341, 112
        %v5628 = vpop.permute.xlu0 %5627
        %5629 = vrot.lane.b32.xlu0 %v1342, 112
        %v5630 = vpop.permute.xlu0 %5629
        %5631 = vrot.lane.b32.xlu0 %v1343, 112
        %v5632 = vpop.permute.xlu0 %5631
        %5633 = vrot.lane.b32.xlu0 %v1344, 112
        %v5634 = vpop.permute.xlu0 %5633
        %5635 = vrot.lane.b32.xlu0 %v1243, 80
        %v5636 = vpop.permute.xlu0 %5635
        %5637 = vrot.lane.b32.xlu0 %v1248, 80
        %v5638 = vpop.permute.xlu0 %5637
        %5639 = vrot.lane.b32.xlu0 %v1253, 80
        %v5640 = vpop.permute.xlu0 %5639
        %5641 = vrot.lane.b32.xlu0 %v1258, 80
        %v5642 = vpop.permute.xlu0 %5641
        %5643 = vrot.lane.b32.xlu0 %v1263, 80
        %v5644 = vpop.permute.xlu0 %5643
        %5645 = vrot.lane.b32.xlu0 %v1268, 80
        %v5646 = vpop.permute.xlu0 %5645
        %5647 = vrot.lane.b32.xlu0 %v1273, 80
        %v5648 = vpop.permute.xlu0 %5647
        %5649 = vrot.lane.b32.xlu0 %v1278, 80
        %v5650 = vpop.permute.xlu0 %5649
        %v5651 = vsel %vm1381, %v5620, 0
        %v5653 = vsel %vm1381, %v5622, 0
        %v5655 = vsel %vm1381, %v5624, 0
        %v5657 = vsel %vm1381, %v5626, 0
        %v5659 = vsel %vm1381, %v5628, 0
        %v5661 = vsel %vm1381, %v5630, 0
        %v5663 = vsel %vm1381, %v5632, 0
        %v5665 = vsel %vm1381, %v5634, 0
        %v5667 = vsel %vm1381, %v5636, 0
        %v5669 = vsel %vm1381, %v5638, 0
        %v5671 = vsel %vm1381, %v5640, 0
        %v5673 = vsel %vm1381, %v5642, 0
        %v5675 = vsel %vm1381, %v5644, 0
        %v5677 = vsel %vm1381, %v5646, 0
        %v5679 = vsel %vm1381, %v5648, 0
        %v5681 = vsel %vm1381, %v5650, 0
        %5683 = vmatprep.subr.mxu0 0.0
        %5684 = vmatpush1.xpose.msra.mxu0 %v5667
        %5685 = vmatprep.subr.mxu0 0.0
        %5686 = vmatpush1.xpose.msra.mxu0 %v5669
        %5687 = vmatprep.subr.mxu0 0.0
        %5688 = vmatpush1.xpose.msra.mxu0 %v5671
        %5689 = vmatprep.subr.mxu0 0.0
        %5690 = vmatpush1.xpose.msra.mxu0 %v5673
        %5691 = vmatprep.subr.mxu0 0.0
        %5692 = vmatpush1.xpose.msra.mxu0 %v5675
        %5693 = vmatprep.subr.mxu0 0.0
        %5694 = vmatpush1.xpose.msra.mxu0 %v5677
        %5695 = vmatprep.subr.mxu0 0.0
        %5696 = vmatpush1.xpose.msra.mxu0 %v5679
        %5697 = vmatprep.subr.mxu0 0.0
        %5698 = vmatpush1.xpose.msra.mxu0 %v5681
        %5699 = vmatprep.subr.mxu0 0.0
        %5700 = vmatpush1.xpose.msra.mxu0 0.0
        %5701 = vmatprep.subr.mxu0 0.0
        %5702 = vmatpush1.xpose.msra.mxu0 0.0
        %5703 = vmatprep.subr.mxu0 0.0
        %5704 = vmatpush1.xpose.msra.mxu0 0.0
        %5705 = vmatprep.subr.mxu0 0.0
        %5706 = vmatpush1.xpose.msra.mxu0 0.0
        %5707 = vmatprep.subr.mxu0 0.0
        %5708 = vmatpush1.xpose.msra.mxu0 0.0
        %5709 = vmatprep.subr.mxu0 0.0
        %5710 = vmatpush1.xpose.msra.mxu0 0.0
        %5711 = vmatprep.subr.mxu0 0.0
        %5712 = vmatpush1.xpose.msra.mxu0 0.0
        %5713 = vmatprep.subr.mxu0 0.0
        %5714 = vmatpush1.xpose.msra.mxu0 0.0
        %5715 = vmatprep.subr.mxu0 0.0
        %5716 = vmatpush1.xpose.msra.mxu0 0.0
        %5717 = vmatprep.subr.mxu0 0.0
        %5718 = vmatpush1.xpose.msra.mxu0 0.0
        %5719 = vmatprep.subr.mxu0 0.0
        %5720 = vmatpush1.xpose.msra.mxu0 0.0
        %5721 = vmatprep.subr.mxu0 0.0
        %5722 = vmatpush1.xpose.msra.mxu0 0.0
        %5723 = vmatprep.subr.mxu0 0.0
        %5724 = vmatpush1.xpose.msra.mxu0 0.0
        %5725 = vmatprep.subr.mxu0 0.0
        %5726 = vmatpush1.xpose.msra.mxu0 0.0
        %5727 = vmatprep.subr.mxu0 0.0
        %5728 = vmatpush1.xpose.msra.mxu0 0.0
        %5729 = vmatprep.subr.mxu0 0.0
        %5730 = vmatpush1.xpose.msra.mxu0 0.0
        %5731 = vmatprep.subr.mxu0 0.0
        %5732 = vmatpush1.xpose.msra.mxu0 0.0
        %5733 = vmatprep.subr.mxu0 0.0
        %5734 = vmatpush1.xpose.msra.mxu0 0.0
        %5735 = vmatprep.subr.mxu0 0.0
        %5736 = vmatpush1.xpose.msra.mxu0 0.0
        %5737 = vmatprep.subr.mxu0 0.0
        %5738 = vmatpush1.xpose.msra.mxu0 0.0
        %5739 = vmatprep.subr.mxu0 0.0
        %5740 = vmatpush1.xpose.msra.mxu0 0.0
        %5741 = vmatprep.subr.mxu0 0.0
        %5742 = vmatpush1.xpose.msra.mxu0 0.0
        %5743 = vmatprep.subr.mxu0 0.0
        %5744 = vmatpush1.xpose.msra.mxu0 0.0
        %5745 = vmatprep.subr.mxu0 0.0
        %5746 = vmatpush1.xpose.msra.mxu0 0.0
        %5747 = vmatprep.mubr.f32.mxu0 0.0
        %5748 = vmatmul.mubr.f32.gmra.mrb[0].mxu0 %v5651
        %v5749 = vpop.f32.mrb[0].mxu0
        %v5750 = vadd.f32 0.0, %v5749
        %v5751 = vpop.f32.mrb[0].mxu0
        %5752 = vmatprep.mubr.f32.mxu0 0.0
        %5753 = vmatmul.mubr.f32.gmra.mrb[0].mxu0 %v5653
        %v5754 = vpop.f32.mrb[0].mxu0
        %v5755 = vadd.f32 0.0, %v5754
        %v5756 = vpop.f32.mrb[0].mxu0
        %5757 = vmatprep.mubr.f32.mxu0 0.0
        %5758 = vmatmul.mubr.f32.gmra.mrb[0].mxu0 %v5655
        %v5759 = vpop.f32.mrb[0].mxu0
        %v5760 = vadd.f32 0.0, %v5759
        %v5761 = vpop.f32.mrb[0].mxu0
        %5762 = vmatprep.mubr.f32.mxu0 0.0
        %5763 = vmatmul.mubr.f32.gmra.mrb[0].mxu0 %v5657
        %v5764 = vpop.f32.mrb[0].mxu0
        %v5765 = vadd.f32 0.0, %v5764
        %v5766 = vpop.f32.mrb[0].mxu0
        %5767 = vmatprep.mubr.f32.mxu0 0.0
        %5768 = vmatmul.mubr.f32.gmra.mrb[0].mxu0 %v5659
        %v5769 = vpop.f32.mrb[0].mxu0
        %v5770 = vadd.f32 0.0, %v5769
        %v5771 = vpop.f32.mrb[0].mxu0
        %5772 = vmatprep.mubr.f32.mxu0 0.0
        %5773 = vmatmul.mubr.f32.gmra.mrb[0].mxu0 %v5661
        %v5774 = vpop.f32.mrb[0].mxu0
        %v5775 = vadd.f32 0.0, %v5774
        %v5776 = vpop.f32.mrb[0].mxu0
        %5777 = vmatprep.mubr.f32.mxu0 0.0
        %5778 = vmatmul.mubr.f32.gmra.mrb[0].mxu0 %v5663
        %v5779 = vpop.f32.mrb[0].mxu0
        %v5780 = vadd.f32 0.0, %v5779
        %v5781 = vpop.f32.mrb[0].mxu0
        %5782 = vmatprep.mubr.f32.mxu0 0.0
        %5783 = vmatmul.mubr.f32.gmra.mrb[0].mxu0 %v5665
        %v5784 = vpop.f32.mrb[0].mxu0
        %v5785 = vadd.f32 0.0, %v5784
        %v5786 = vpop.f32.mrb[0].mxu0
        %5787 = vdwg.mxu0
        %5788 = vrot.lane.b32.xlu0 %v1345, 112
        %v5789 = vpop.permute.xlu0 %5788
        %5790 = vrot.lane.b32.xlu0 %v1346, 112
        %v5791 = vpop.permute.xlu0 %5790
        %5792 = vrot.lane.b32.xlu0 %v1347, 112
        %v5793 = vpop.permute.xlu0 %5792
        %5794 = vrot.lane.b32.xlu0 %v1348, 112
        %v5795 = vpop.permute.xlu0 %5794
        %5796 = vrot.lane.b32.xlu0 %v1349, 112
        %v5797 = vpop.permute.xlu0 %5796
        %5798 = vrot.lane.b32.xlu0 %v1350, 112
        %v5799 = vpop.permute.xlu0 %5798
        %5800 = vrot.lane.b32.xlu0 %v1351, 112
        %v5801 = vpop.permute.xlu0 %5800
        %5802 = vrot.lane.b32.xlu0 %v1352, 112
        %v5803 = vpop.permute.xlu0 %5802
        %5804 = vrot.lane.b32.xlu0 %v1283, 80
        %v5805 = vpop.permute.xlu0 %5804
        %5806 = vrot.lane.b32.xlu0 %v1288, 80
        %v5807 = vpop.permute.xlu0 %5806
        %5808 = vrot.lane.b32.xlu0 %v1293, 80
        %v5809 = vpop.permute.xlu0 %5808
        %5810 = vrot.lane.b32.xlu0 %v1298, 80
        %v5811 = vpop.permute.xlu0 %5810
        %5812 = vrot.lane.b32.xlu0 %v1303, 80
        %v5813 = vpop.permute.xlu0 %5812
        %5814 = vrot.lane.b32.xlu0 %v1308, 80
        %v5815 = vpop.permute.xlu0 %5814
        %5816 = vrot.lane.b32.xlu0 %v1313, 80
        %v5817 = vpop.permute.xlu0 %5816
        %5818 = vrot.lane.b32.xlu0 %v1318, 80
        %v5819 = vpop.permute.xlu0 %5818
        %v5820 = vsel %vm1381, %v5789, 0
        %v5822 = vsel %vm1381, %v5791, 0
        %v5824 = vsel %vm1381, %v5793, 0
        %v5826 = vsel %vm1381, %v5795, 0
        %v5828 = vsel %vm1381, %v5797, 0
        %v5830 = vsel %vm1381, %v5799, 0
        %v5832 = vsel %vm1381, %v5801, 0
        %v5834 = vsel %vm1381, %v5803, 0
        %v5836 = vsel %vm1381, %v5805, 0
        %v5838 = vsel %vm1381, %v5807, 0
        %v5840 = vsel %vm1381, %v5809, 0
        %v5842 = vsel %vm1381, %v5811, 0
        %v5844 = vsel %vm1381, %v5813, 0
        %v5846 = vsel %vm1381, %v5815, 0
        %v5848 = vsel %vm1381, %v5817, 0
        %v5850 = vsel %vm1381, %v5819, 0
        %5852 = vmatprep.subr.mxu0 0.0
        %5853 = vmatpush1.xpose.msra.mxu0 %v5836
        %5854 = vmatprep.subr.mxu0 0.0
        %5855 = vmatpush1.xpose.msra.mxu0 %v5838
        %5856 = vmatprep.subr.mxu0 0.0
        %5857 = vmatpush1.xpose.msra.mxu0 %v5840
        %5858 = vmatprep.subr.mxu0 0.0
        %5859 = vmatpush1.xpose.msra.mxu0 %v5842
        %5860 = vmatprep.subr.mxu0 0.0
        %5861 = vmatpush1.xpose.msra.mxu0 %v5844
        %5862 = vmatprep.subr.mxu0 0.0
        %5863 = vmatpush1.xpose.msra.mxu0 %v5846
        %5864 = vmatprep.subr.mxu0 0.0
        %5865 = vmatpush1.xpose.msra.mxu0 %v5848
        %5866 = vmatprep.subr.mxu0 0.0
        %5867 = vmatpush1.xpose.msra.mxu0 %v5850
        %5868 = vmatprep.subr.mxu0 0.0
        %5869 = vmatpush1.xpose.msra.mxu0 0.0
        %5870 = vmatprep.subr.mxu0 0.0
        %5871 = vmatpush1.xpose.msra.mxu0 0.0
        %5872 = vmatprep.subr.mxu0 0.0
        %5873 = vmatpush1.xpose.msra.mxu0 0.0
        %5874 = vmatprep.subr.mxu0 0.0
        %5875 = vmatpush1.xpose.msra.mxu0 0.0
        %5876 = vmatprep.subr.mxu0 0.0
        %5877 = vmatpush1.xpose.msra.mxu0 0.0
        %5878 = vmatprep.subr.mxu0 0.0
        %5879 = vmatpush1.xpose.msra.mxu0 0.0
        %5880 = vmatprep.subr.mxu0 0.0
        %5881 = vmatpush1.xpose.msra.mxu0 0.0
        %5882 = vmatprep.subr.mxu0 0.0
        %5883 = vmatpush1.xpose.msra.mxu0 0.0
        %5884 = vmatprep.subr.mxu0 0.0
        %5885 = vmatpush1.xpose.msra.mxu0 0.0
        %5886 = vmatprep.subr.mxu0 0.0
        %5887 = vmatpush1.xpose.msra.mxu0 0.0
        %5888 = vmatprep.subr.mxu0 0.0
        %5889 = vmatpush1.xpose.msra.mxu0 0.0
        %5890 = vmatprep.subr.mxu0 0.0
        %5891 = vmatpush1.xpose.msra.mxu0 0.0
        %5892 = vmatprep.subr.mxu0 0.0
        %5893 = vmatpush1.xpose.msra.mxu0 0.0
        %5894 = vmatprep.subr.mxu0 0.0
        %5895 = vmatpush1.xpose.msra.mxu0 0.0
        %5896 = vmatprep.subr.mxu0 0.0
        %5897 = vmatpush1.xpose.msra.mxu0 0.0
        %5898 = vmatprep.subr.mxu0 0.0
        %5899 = vmatpush1.xpose.msra.mxu0 0.0
        %5900 = vmatprep.subr.mxu0 0.0
        %5901 = vmatpush1.xpose.msra.mxu0 0.0
        %5902 = vmatprep.subr.mxu0 0.0
        %5903 = vmatpush1.xpose.msra.mxu0 0.0
        %5904 = vmatprep.subr.mxu0 0.0
        %5905 = vmatpush1.xpose.msra.mxu0 0.0
        %5906 = vmatprep.subr.mxu0 0.0
        %5907 = vmatpush1.xpose.msra.mxu0 0.0
        %5908 = vmatprep.subr.mxu0 0.0
        %5909 = vmatpush1.xpose.msra.mxu0 0.0
        %5910 = vmatprep.subr.mxu0 0.0
        %5911 = vmatpush1.xpose.msra.mxu0 0.0
        %5912 = vmatprep.subr.mxu0 0.0
        %5913 = vmatpush1.xpose.msra.mxu0 0.0
        %5914 = vmatprep.subr.mxu0 0.0
        %5915 = vmatpush1.xpose.msra.mxu0 0.0
        %5916 = vmatprep.mubr.f32.mxu0 0.0
        %5917 = vmatmul.mubr.f32.gmra.mrb[0].mxu0 %v5820
        %v5918 = vpop.f32.mrb[0].mxu0
        %v5919 = vadd.f32 0.0, %v5918
        %v5920 = vpop.f32.mrb[0].mxu0
        %5921 = vmatprep.mubr.f32.mxu0 0.0
        %5922 = vmatmul.mubr.f32.gmra.mrb[0].mxu0 %v5822
        %v5923 = vpop.f32.mrb[0].mxu0
        %v5924 = vadd.f32 0.0, %v5923
        %v5925 = vpop.f32.mrb[0].mxu0
        %5926 = vmatprep.mubr.f32.mxu0 0.0
        %5927 = vmatmul.mubr.f32.gmra.mrb[0].mxu0 %v5824
        %v5928 = vpop.f32.mrb[0].mxu0
        %v5929 = vadd.f32 0.0, %v5928
        %v5930 = vpop.f32.mrb[0].mxu0
        %5931 = vmatprep.mubr.f32.mxu0 0.0
        %5932 = vmatmul.mubr.f32.gmra.mrb[0].mxu0 %v5826
        %v5933 = vpop.f32.mrb[0].mxu0
        %v5934 = vadd.f32 0.0, %v5933
        %v5935 = vpop.f32.mrb[0].mxu0
        %5936 = vmatprep.mubr.f32.mxu0 0.0
        %5937 = vmatmul.mubr.f32.gmra.mrb[0].mxu0 %v5828
        %v5938 = vpop.f32.mrb[0].mxu0
        %v5939 = vadd.f32 0.0, %v5938
        %v5940 = vpop.f32.mrb[0].mxu0
        %5941 = vmatprep.mubr.f32.mxu0 0.0
        %5942 = vmatmul.mubr.f32.gmra.mrb[0].mxu0 %v5830
        %v5943 = vpop.f32.mrb[0].mxu0
        %v5944 = vadd.f32 0.0, %v5943
        %v5945 = vpop.f32.mrb[0].mxu0
        %5946 = vmatprep.mubr.f32.mxu0 0.0
        %5947 = vmatmul.mubr.f32.gmra.mrb[0].mxu0 %v5832
        %v5948 = vpop.f32.mrb[0].mxu0
        %v5949 = vadd.f32 0.0, %v5948
        %v5950 = vpop.f32.mrb[0].mxu0
        %5951 = vmatprep.mubr.f32.mxu0 0.0
        %5952 = vmatmul.mubr.f32.gmra.mrb[0].mxu0 %v5834
        %v5953 = vpop.f32.mrb[0].mxu0
        %v5954 = vadd.f32 0.0, %v5953
        %v5955 = vpop.f32.mrb[0].mxu0
        %5956 = vdwg.mxu0
        %v5957 = vsel %vm2034, %v5412, -inf
        %5958 = vmax.xlane.f32.xlu0 %v5957
        %v5959 = vpop.xlane.xlu0 %5958
        %v5960 = vsel %vm2034, %v5417, -inf
        %5961 = vmax.xlane.f32.xlu0 %v5960
        %v5962 = vpop.xlane.xlu0 %5961
        %v5963 = vsel %vm2034, %v5422, -inf
        %5964 = vmax.xlane.f32.xlu0 %v5963
        %v5965 = vpop.xlane.xlu0 %5964
        %v5966 = vsel %vm2034, %v5427, -inf
        %5967 = vmax.xlane.f32.xlu0 %v5966
        %v5968 = vpop.xlane.xlu0 %5967
        %v5969 = vsel %vm2034, %v5432, -inf
        %5970 = vmax.xlane.f32.xlu0 %v5969
        %v5971 = vpop.xlane.xlu0 %5970
        %v5972 = vsel %vm2034, %v5437, -inf
        %5973 = vmax.xlane.f32.xlu0 %v5972
        %v5974 = vpop.xlane.xlu0 %5973
        %v5975 = vsel %vm2034, %v5442, -inf
        %5976 = vmax.xlane.f32.xlu0 %v5975
        %v5977 = vpop.xlane.xlu0 %5976
        %v5978 = vsel %vm2034, %v5447, -inf
        %5979 = vmax.xlane.f32.xlu0 %v5978
        %v5980 = vpop.xlane.xlu0 %5979
        %v5981 = vsel %vm2034, %v5581, -inf
        %5982 = vmax.xlane.f32.xlu0 %v5981
        %v5983 = vpop.xlane.xlu0 %5982
        %v5984 = vsel %vm2034, %v5586, -inf
        %5985 = vmax.xlane.f32.xlu0 %v5984
        %v5986 = vpop.xlane.xlu0 %5985
        %v5987 = vsel %vm2034, %v5591, -inf
        %5988 = vmax.xlane.f32.xlu0 %v5987
        %v5989 = vpop.xlane.xlu0 %5988
        %v5990 = vsel %vm2034, %v5596, -inf
        %5991 = vmax.xlane.f32.xlu0 %v5990
        %v5992 = vpop.xlane.xlu0 %5991
        %v5993 = vsel %vm2034, %v5601, -inf
        %5994 = vmax.xlane.f32.xlu0 %v5993
        %v5995 = vpop.xlane.xlu0 %5994
        %v5996 = vsel %vm2034, %v5606, -inf
        %5997 = vmax.xlane.f32.xlu0 %v5996
        %v5998 = vpop.xlane.xlu0 %5997
        %v5999 = vsel %vm2034, %v5611, -inf
        %6000 = vmax.xlane.f32.xlu0 %v5999
        %v6001 = vpop.xlane.xlu0 %6000
        %v6002 = vsel %vm2034, %v5616, -inf
        %6003 = vmax.xlane.f32.xlu0 %v6002
        %v6004 = vpop.xlane.xlu0 %6003
        %v6005 = vsel %vm2034, %v5750, -inf
        %6006 = vmax.xlane.f32.xlu0 %v6005
        %v6007 = vpop.xlane.xlu0 %6006
        %v6008 = vsel %vm2034, %v5755, -inf
        %6009 = vmax.xlane.f32.xlu0 %v6008
        %v6010 = vpop.xlane.xlu0 %6009
        %v6011 = vsel %vm2034, %v5760, -inf
        %6012 = vmax.xlane.f32.xlu0 %v6011
        %v6013 = vpop.xlane.xlu0 %6012
        %v6014 = vsel %vm2034, %v5765, -inf
        %6015 = vmax.xlane.f32.xlu0 %v6014
        %v6016 = vpop.xlane.xlu0 %6015
        %v6017 = vsel %vm2034, %v5770, -inf
        %6018 = vmax.xlane.f32.xlu0 %v6017
        %v6019 = vpop.xlane.xlu0 %6018
        %v6020 = vsel %vm2034, %v5775, -inf
        %6021 = vmax.xlane.f32.xlu0 %v6020
        %v6022 = vpop.xlane.xlu0 %6021
        %v6023 = vsel %vm2034, %v5780, -inf
        %6024 = vmax.xlane.f32.xlu0 %v6023
        %v6025 = vpop.xlane.xlu0 %6024
        %v6026 = vsel %vm2034, %v5785, -inf
        %6027 = vmax.xlane.f32.xlu0 %v6026
        %v6028 = vpop.xlane.xlu0 %6027
        %v6029 = vsel %vm2034, %v5919, -inf
        %6030 = vmax.xlane.f32.xlu0 %v6029
        %v6031 = vpop.xlane.xlu0 %6030
        %v6032 = vsel %vm2034, %v5924, -inf
        %6033 = vmax.xlane.f32.xlu0 %v6032
        %v6034 = vpop.xlane.xlu0 %6033
        %v6035 = vsel %vm2034, %v5929, -inf
        %6036 = vmax.xlane.f32.xlu0 %v6035
        %v6037 = vpop.xlane.xlu0 %6036
        %v6038 = vsel %vm2034, %v5934, -inf
        %6039 = vmax.xlane.f32.xlu0 %v6038
        %v6040 = vpop.xlane.xlu0 %6039
        %v6041 = vsel %vm2034, %v5939, -inf
        %6042 = vmax.xlane.f32.xlu0 %v6041
        %v6043 = vpop.xlane.xlu0 %6042
        %v6044 = vsel %vm2034, %v5944, -inf
        %6045 = vmax.xlane.f32.xlu0 %v6044
        %v6046 = vpop.xlane.xlu0 %6045
        %v6047 = vsel %vm2034, %v5949, -inf
        %6048 = vmax.xlane.f32.xlu0 %v6047
        %v6049 = vpop.xlane.xlu0 %6048
        %v6050 = vsel %vm2034, %v5954, -inf
        %6051 = vmax.xlane.f32.xlu0 %v6050
        %v6052 = vpop.xlane.xlu0 %6051
        %v6053 = vsub.f32 %v5412, %v5959
        %v6054 = vsub.f32 %v5417, %v5962
        %v6055 = vsub.f32 %v5422, %v5965
        %v6056 = vsub.f32 %v5427, %v5968
        %v6057 = vsub.f32 %v5432, %v5971
        %v6058 = vsub.f32 %v5437, %v5974
        %v6059 = vsub.f32 %v5442, %v5977
        %v6060 = vsub.f32 %v5447, %v5980
        %v6061 = vsub.f32 %v5581, %v5983
        %v6062 = vsub.f32 %v5586, %v5986
        %v6063 = vsub.f32 %v5591, %v5989
        %v6064 = vsub.f32 %v5596, %v5992
        %v6065 = vsub.f32 %v5601, %v5995
        %v6066 = vsub.f32 %v5606, %v5998
        %v6067 = vsub.f32 %v5611, %v6001
        %v6068 = vsub.f32 %v5616, %v6004
        %v6069 = vsub.f32 %v5750, %v6007
        %v6070 = vsub.f32 %v5755, %v6010
        %v6071 = vsub.f32 %v5760, %v6013
        %v6072 = vsub.f32 %v5765, %v6016
        %v6073 = vsub.f32 %v5770, %v6019
        %v6074 = vsub.f32 %v5775, %v6022
        %v6075 = vsub.f32 %v5780, %v6025
        %v6076 = vsub.f32 %v5785, %v6028
        %v6077 = vsub.f32 %v5919, %v6031
        %v6078 = vsub.f32 %v5924, %v6034
        %v6079 = vsub.f32 %v5929, %v6037
        %v6080 = vsub.f32 %v5934, %v6040
        %v6081 = vsub.f32 %v5939, %v6043
        %v6082 = vsub.f32 %v5944, %v6046
        %v6083 = vsub.f32 %v5949, %v6049
        %v6084 = vsub.f32 %v5954, %v6052
        %v6085 = vmul.f32 %v6053, 1.442695
        %v6086 = vpow.pop %v6085
        %v6087 = vmul.f32 %v6054, 1.442695
        %v6088 = vpow.pop %v6087
        %v6089 = vmul.f32 %v6055, 1.442695
        %v6090 = vpow.pop %v6089
        %v6091 = vmul.f32 %v6056, 1.442695
        %v6092 = vpow.pop %v6091
        %v6093 = vmul.f32 %v6057, 1.442695
        %v6094 = vpow.pop %v6093
        %v6095 = vmul.f32 %v6058, 1.442695
        %v6096 = vpow.pop %v6095
        %v6097 = vmul.f32 %v6059, 1.442695
        %v6098 = vpow.pop %v6097
        %v6099 = vmul.f32 %v6060, 1.442695
        %v6100 = vpow.pop %v6099
        %v6101 = vmul.f32 %v6061, 1.442695
        %v6102 = vpow.pop %v6101
        %v6103 = vmul.f32 %v6062, 1.442695
        %v6104 = vpow.pop %v6103
        %v6105 = vmul.f32 %v6063, 1.442695
        %v6106 = vpow.pop %v6105
        %v6107 = vmul.f32 %v6064, 1.442695
        %v6108 = vpow.pop %v6107
        %v6109 = vmul.f32 %v6065, 1.442695
        %v6110 = vpow.pop %v6109
        %v6111 = vmul.f32 %v6066, 1.442695
        %v6112 = vpow.pop %v6111
        %v6113 = vmul.f32 %v6067, 1.442695
        %v6114 = vpow.pop %v6113
        %v6115 = vmul.f32 %v6068, 1.442695
        %v6116 = vpow.pop %v6115
        %v6117 = vmul.f32 %v6069, 1.442695
        %v6118 = vpow.pop %v6117
        %v6119 = vmul.f32 %v6070, 1.442695
        %v6120 = vpow.pop %v6119
        %v6121 = vmul.f32 %v6071, 1.442695
        %v6122 = vpow.pop %v6121
        %v6123 = vmul.f32 %v6072, 1.442695
        %v6124 = vpow.pop %v6123
        %v6125 = vmul.f32 %v6073, 1.442695
        %v6126 = vpow.pop %v6125
        %v6127 = vmul.f32 %v6074, 1.442695
        %v6128 = vpow.pop %v6127
        %v6129 = vmul.f32 %v6075, 1.442695
        %v6130 = vpow.pop %v6129
        %v6131 = vmul.f32 %v6076, 1.442695
        %v6132 = vpow.pop %v6131
        %v6133 = vmul.f32 %v6077, 1.442695
        %v6134 = vpow.pop %v6133
        %v6135 = vmul.f32 %v6078, 1.442695
        %v6136 = vpow.pop %v6135
        %v6137 = vmul.f32 %v6079, 1.442695
        %v6138 = vpow.pop %v6137
        %v6139 = vmul.f32 %v6080, 1.442695
        %v6140 = vpow.pop %v6139
        %v6141 = vmul.f32 %v6081, 1.442695
        %v6142 = vpow.pop %v6141
        %v6143 = vmul.f32 %v6082, 1.442695
        %v6144 = vpow.pop %v6143
        %v6145 = vmul.f32 %v6083, 1.442695
        %v6146 = vpow.pop %v6145
        %v6147 = vmul.f32 %v6084, 1.442695
        %v6148 = vpow.pop %v6147
        %v6149 = vsel %vm2034, %v6086, 0.0
        %6150 = vadd.xlane.f32.xlu0 %v6149
        %v6151 = vpop.xlane.xlu0 %6150
        %v6152 = vsel %vm2034, %v6088, 0.0
        %6153 = vadd.xlane.f32.xlu0 %v6152
        %v6154 = vpop.xlane.xlu0 %6153
        %v6155 = vsel %vm2034, %v6090, 0.0
        %6156 = vadd.xlane.f32.xlu0 %v6155
        %v6157 = vpop.xlane.xlu0 %6156
        %v6158 = vsel %vm2034, %v6092, 0.0
        %6159 = vadd.xlane.f32.xlu0 %v6158
        %v6160 = vpop.xlane.xlu0 %6159
        %v6161 = vsel %vm2034, %v6094, 0.0
        %6162 = vadd.xlane.f32.xlu0 %v6161
        %v6163 = vpop.xlane.xlu0 %6162
        %v6164 = vsel %vm2034, %v6096, 0.0
        %6165 = vadd.xlane.f32.xlu0 %v6164
        %v6166 = vpop.xlane.xlu0 %6165
        %v6167 = vsel %vm2034, %v6098, 0.0
        %6168 = vadd.xlane.f32.xlu0 %v6167
        %v6169 = vpop.xlane.xlu0 %6168
        %v6170 = vsel %vm2034, %v6100, 0.0
        %6171 = vadd.xlane.f32.xlu0 %v6170
        %v6172 = vpop.xlane.xlu0 %6171
        %v6173 = vsel %vm2034, %v6102, 0.0
        %6174 = vadd.xlane.f32.xlu0 %v6173
        %v6175 = vpop.xlane.xlu0 %6174
        %v6176 = vsel %vm2034, %v6104, 0.0
        %6177 = vadd.xlane.f32.xlu0 %v6176
        %v6178 = vpop.xlane.xlu0 %6177
        %v6179 = vsel %vm2034, %v6106, 0.0
        %6180 = vadd.xlane.f32.xlu0 %v6179
        %v6181 = vpop.xlane.xlu0 %6180
        %v6182 = vsel %vm2034, %v6108, 0.0
        %6183 = vadd.xlane.f32.xlu0 %v6182
        %v6184 = vpop.xlane.xlu0 %6183
        %v6185 = vsel %vm2034, %v6110, 0.0
        %6186 = vadd.xlane.f32.xlu0 %v6185
        %v6187 = vpop.xlane.xlu0 %6186
        %v6188 = vsel %vm2034, %v6112, 0.0
        %6189 = vadd.xlane.f32.xlu0 %v6188
        %v6190 = vpop.xlane.xlu0 %6189
        %v6191 = vsel %vm2034, %v6114, 0.0
        %6192 = vadd.xlane.f32.xlu0 %v6191
        %v6193 = vpop.xlane.xlu0 %6192
        %v6194 = vsel %vm2034, %v6116, 0.0
        %6195 = vadd.xlane.f32.xlu0 %v6194
        %v6196 = vpop.xlane.xlu0 %6195
        %v6197 = vsel %vm2034, %v6118, 0.0
        %6198 = vadd.xlane.f32.xlu0 %v6197
        %v6199 = vpop.xlane.xlu0 %6198
        %v6200 = vsel %vm2034, %v6120, 0.0
        %6201 = vadd.xlane.f32.xlu0 %v6200
        %v6202 = vpop.xlane.xlu0 %6201
        %v6203 = vsel %vm2034, %v6122, 0.0
        %6204 = vadd.xlane.f32.xlu0 %v6203
        %v6205 = vpop.xlane.xlu0 %6204
        %v6206 = vsel %vm2034, %v6124, 0.0
        %6207 = vadd.xlane.f32.xlu0 %v6206
        %v6208 = vpop.xlane.xlu0 %6207
        %v6209 = vsel %vm2034, %v6126, 0.0
        %6210 = vadd.xlane.f32.xlu0 %v6209
        %v6211 = vpop.xlane.xlu0 %6210
        %v6212 = vsel %vm2034, %v6128, 0.0
        %6213 = vadd.xlane.f32.xlu0 %v6212
        %v6214 = vpop.xlane.xlu0 %6213
        %v6215 = vsel %vm2034, %v6130, 0.0
        %6216 = vadd.xlane.f32.xlu0 %v6215
        %v6217 = vpop.xlane.xlu0 %6216
        %v6218 = vsel %vm2034, %v6132, 0.0
        %6219 = vadd.xlane.f32.xlu0 %v6218
        %v6220 = vpop.xlane.xlu0 %6219
        %v6221 = vsel %vm2034, %v6134, 0.0
        %6222 = vadd.xlane.f32.xlu0 %v6221
        %v6223 = vpop.xlane.xlu0 %6222
        %v6224 = vsel %vm2034, %v6136, 0.0
        %6225 = vadd.xlane.f32.xlu0 %v6224
        %v6226 = vpop.xlane.xlu0 %6225
        %v6227 = vsel %vm2034, %v6138, 0.0
        %6228 = vadd.xlane.f32.xlu0 %v6227
        %v6229 = vpop.xlane.xlu0 %6228
        %v6230 = vsel %vm2034, %v6140, 0.0
        %6231 = vadd.xlane.f32.xlu0 %v6230
        %v6232 = vpop.xlane.xlu0 %6231
        %v6233 = vsel %vm2034, %v6142, 0.0
        %6234 = vadd.xlane.f32.xlu0 %v6233
        %v6235 = vpop.xlane.xlu0 %6234
        %v6236 = vsel %vm2034, %v6144, 0.0
        %6237 = vadd.xlane.f32.xlu0 %v6236
        %v6238 = vpop.xlane.xlu0 %6237
        %v6239 = vsel %vm2034, %v6146, 0.0
        %6240 = vadd.xlane.f32.xlu0 %v6239
        %v6241 = vpop.xlane.xlu0 %6240
        %v6242 = vsel %vm2034, %v6148, 0.0
        %6243 = vadd.xlane.f32.xlu0 %v6242
        %v6244 = vpop.xlane.xlu0 %6243
        %v6245 = vrcp.pop %v6151
        %v6246 = vrcp.pop %v6154
        %v6247 = vrcp.pop %v6157
        %v6248 = vrcp.pop %v6160
        %v6249 = vrcp.pop %v6163
        %v6250 = vrcp.pop %v6166
        %v6251 = vrcp.pop %v6169
        %v6252 = vrcp.pop %v6172
        %v6253 = vrcp.pop %v6175
        %v6254 = vrcp.pop %v6178
        %v6255 = vrcp.pop %v6181
        %v6256 = vrcp.pop %v6184
        %v6257 = vrcp.pop %v6187
        %v6258 = vrcp.pop %v6190
        %v6259 = vrcp.pop %v6193
        %v6260 = vrcp.pop %v6196
        %v6261 = vrcp.pop %v6199
        %v6262 = vrcp.pop %v6202
        %v6263 = vrcp.pop %v6205
        %v6264 = vrcp.pop %v6208
        %v6265 = vrcp.pop %v6211
        %v6266 = vrcp.pop %v6214
        %v6267 = vrcp.pop %v6217
        %v6268 = vrcp.pop %v6220
        %v6269 = vrcp.pop %v6223
        %v6270 = vrcp.pop %v6226
        %v6271 = vrcp.pop %v6229
        %v6272 = vrcp.pop %v6232
        %v6273 = vrcp.pop %v6235
        %v6274 = vrcp.pop %v6238
        %v6275 = vrcp.pop %v6241
        %v6276 = vrcp.pop %v6244
        %v6277 = vmul.f32 %v6086, %v6245
        %v6278 = vmul.f32 %v6088, %v6246
        %v6279 = vmul.f32 %v6090, %v6247
        %v6280 = vmul.f32 %v6092, %v6248
        %v6281 = vmul.f32 %v6094, %v6249
        %v6282 = vmul.f32 %v6096, %v6250
        %v6283 = vmul.f32 %v6098, %v6251
        %v6284 = vmul.f32 %v6100, %v6252
        %v6285 = vmul.f32 %v6102, %v6253
        %v6286 = vmul.f32 %v6104, %v6254
        %v6287 = vmul.f32 %v6106, %v6255
        %v6288 = vmul.f32 %v6108, %v6256
        %v6289 = vmul.f32 %v6110, %v6257
        %v6290 = vmul.f32 %v6112, %v6258
        %v6291 = vmul.f32 %v6114, %v6259
        %v6292 = vmul.f32 %v6116, %v6260
        %v6293 = vmul.f32 %v6118, %v6261
        %v6294 = vmul.f32 %v6120, %v6262
        %v6295 = vmul.f32 %v6122, %v6263
        %v6296 = vmul.f32 %v6124, %v6264
        %v6297 = vmul.f32 %v6126, %v6265
        %v6298 = vmul.f32 %v6128, %v6266
        %v6299 = vmul.f32 %v6130, %v6267
        %v6300 = vmul.f32 %v6132, %v6268
        %v6301 = vmul.f32 %v6134, %v6269
        %v6302 = vmul.f32 %v6136, %v6270
        %v6303 = vmul.f32 %v6138, %v6271
        %v6304 = vmul.f32 %v6140, %v6272
        %v6305 = vmul.f32 %v6142, %v6273
        %v6306 = vmul.f32 %v6144, %v6274
        %v6307 = vmul.f32 %v6146, %v6275
        %v6308 = vmul.f32 %v6148, %v6276
        %6309 = vrot.lane.b32.xlu0 %v1163, 48
        %v6310 = vpop.permute.xlu0 %6309
        %6311 = vrot.lane.b32.xlu0 %v1168, 48
        %v6312 = vpop.permute.xlu0 %6311
        %6313 = vrot.lane.b32.xlu0 %v1173, 48
        %v6314 = vpop.permute.xlu0 %6313
        %6315 = vrot.lane.b32.xlu0 %v1178, 48
        %v6316 = vpop.permute.xlu0 %6315
        %6317 = vrot.lane.b32.xlu0 %v1183, 48
        %v6318 = vpop.permute.xlu0 %6317
        %6319 = vrot.lane.b32.xlu0 %v1188, 48
        %v6320 = vpop.permute.xlu0 %6319
        %6321 = vrot.lane.b32.xlu0 %v1193, 48
        %v6322 = vpop.permute.xlu0 %6321
        %6323 = vrot.lane.b32.xlu0 %v1198, 48
        %v6324 = vpop.permute.xlu0 %6323
        %v6334 = vsel %vm2034, %v6277, 0
        %v6337 = vsel %vm2034, %v6278, 0
        %v6340 = vsel %vm2034, %v6279, 0
        %v6343 = vsel %vm2034, %v6280, 0
        %v6346 = vsel %vm2034, %v6281, 0
        %v6349 = vsel %vm2034, %v6282, 0
        %v6352 = vsel %vm2034, %v6283, 0
        %v6355 = vsel %vm2034, %v6284, 0
        %6357 = vmatprep.subr.mxu0 0.0
        %6358 = vmatpush1.msra.mxu0 %v6310
        %6359 = vmatprep.subr.mxu0 0.0
        %6360 = vmatpush1.msra.mxu0 %v6312
        %6361 = vmatprep.subr.mxu0 0.0
        %6362 = vmatpush1.msra.mxu0 %v6314
        %6363 = vmatprep.subr.mxu0 0.0
        %6364 = vmatpush1.msra.mxu0 %v6316
        %6365 = vmatprep.subr.mxu0 0.0
        %6366 = vmatpush1.msra.mxu0 %v6318
        %6367 = vmatprep.subr.mxu0 0.0
        %6368 = vmatpush1.msra.mxu0 %v6320
        %6369 = vmatprep.subr.mxu0 0.0
        %6370 = vmatpush1.msra.mxu0 %v6322
        %6371 = vmatprep.subr.mxu0 0.0
        %6372 = vmatpush1.msra.mxu0 %v6324
        %6373 = vmatprep.subr.mxu0 0.0
        %6374 = vmatpush1.msra.mxu0 0.0
        %6375 = vmatprep.subr.mxu0 0.0
        %6376 = vmatpush1.msra.mxu0 0.0
        %6377 = vmatprep.subr.mxu0 0.0
        %6378 = vmatpush1.msra.mxu0 0.0
        %6379 = vmatprep.subr.mxu0 0.0
        %6380 = vmatpush1.msra.mxu0 0.0
        %6381 = vmatprep.subr.mxu0 0.0
        %6382 = vmatpush1.msra.mxu0 0.0
        %6383 = vmatprep.subr.mxu0 0.0
        %6384 = vmatpush1.msra.mxu0 0.0
        %6385 = vmatprep.subr.mxu0 0.0
        %6386 = vmatpush1.msra.mxu0 0.0
        %6387 = vmatprep.subr.mxu0 0.0
        %6388 = vmatpush1.msra.mxu0 0.0
        %6389 = vmatprep.subr.mxu0 0.0
        %6390 = vmatpush1.msra.mxu0 0.0
        %6391 = vmatprep.subr.mxu0 0.0
        %6392 = vmatpush1.msra.mxu0 0.0
        %6393 = vmatprep.subr.mxu0 0.0
        %6394 = vmatpush1.msra.mxu0 0.0
        %6395 = vmatprep.subr.mxu0 0.0
        %6396 = vmatpush1.msra.mxu0 0.0
        %6397 = vmatprep.subr.mxu0 0.0
        %6398 = vmatpush1.msra.mxu0 0.0
        %6399 = vmatprep.subr.mxu0 0.0
        %6400 = vmatpush1.msra.mxu0 0.0
        %6401 = vmatprep.subr.mxu0 0.0
        %6402 = vmatpush1.msra.mxu0 0.0
        %6403 = vmatprep.subr.mxu0 0.0
        %6404 = vmatpush1.msra.mxu0 0.0
        %6405 = vmatprep.subr.mxu0 0.0
        %6406 = vmatpush1.msra.mxu0 0.0
        %6407 = vmatprep.subr.mxu0 0.0
        %6408 = vmatpush1.msra.mxu0 0.0
        %6409 = vmatprep.subr.mxu0 0.0
        %6410 = vmatpush1.msra.mxu0 0.0
        %6411 = vmatprep.subr.mxu0 0.0
        %6412 = vmatpush1.msra.mxu0 0.0
        %6413 = vmatprep.subr.mxu0 0.0
        %6414 = vmatpush1.msra.mxu0 0.0
        %6415 = vmatprep.subr.mxu0 0.0
        %6416 = vmatpush1.msra.mxu0 0.0
        %6417 = vmatprep.subr.mxu0 0.0
        %6418 = vmatpush1.msra.mxu0 0.0
        %6419 = vmatprep.subr.mxu0 0.0
        %6420 = vmatpush1.msra.mxu0 0.0
        %6421 = vmatprep.mubr.f32.mxu0 0.0
        %6422 = vmatmul.mubr.f32.gmra.mrb[0].mxu0 %v6334
        %v6423 = vpop.f32.mrb[0].mxu0
        %v6424 = vadd.f32 0.0, %v6423
        %v6425 = vpop.f32.mrb[0].mxu0
        %6426 = vmatprep.mubr.f32.mxu0 0.0
        %6427 = vmatmul.mubr.f32.gmra.mrb[0].mxu0 %v6337
        %v6428 = vpop.f32.mrb[0].mxu0
        %v6429 = vadd.f32 0.0, %v6428
        %v6430 = vpop.f32.mrb[0].mxu0
        %6431 = vmatprep.mubr.f32.mxu0 0.0
        %6432 = vmatmul.mubr.f32.gmra.mrb[0].mxu0 %v6340
        %v6433 = vpop.f32.mrb[0].mxu0
        %v6434 = vadd.f32 0.0, %v6433
        %v6435 = vpop.f32.mrb[0].mxu0
        %6436 = vmatprep.mubr.f32.mxu0 0.0
        %6437 = vmatmul.mubr.f32.gmra.mrb[0].mxu0 %v6343
        %v6438 = vpop.f32.mrb[0].mxu0
        %v6439 = vadd.f32 0.0, %v6438
        %v6440 = vpop.f32.mrb[0].mxu0
        %6441 = vmatprep.mubr.f32.mxu0 0.0
        %6442 = vmatmul.mubr.f32.gmra.mrb[0].mxu0 %v6346
        %v6443 = vpop.f32.mrb[0].mxu0
        %v6444 = vadd.f32 0.0, %v6443
        %v6445 = vpop.f32.mrb[0].mxu0
        %6446 = vmatprep.mubr.f32.mxu0 0.0
        %6447 = vmatmul.mubr.f32.gmra.mrb[0].mxu0 %v6349
        %v6448 = vpop.f32.mrb[0].mxu0
        %v6449 = vadd.f32 0.0, %v6448
        %v6450 = vpop.f32.mrb[0].mxu0
        %6451 = vmatprep.mubr.f32.mxu0 0.0
        %6452 = vmatmul.mubr.f32.gmra.mrb[0].mxu0 %v6352
        %v6453 = vpop.f32.mrb[0].mxu0
        %v6454 = vadd.f32 0.0, %v6453
        %v6455 = vpop.f32.mrb[0].mxu0
        %6456 = vmatprep.mubr.f32.mxu0 0.0
        %6457 = vmatmul.mubr.f32.gmra.mrb[0].mxu0 %v6355
        %v6458 = vpop.f32.mrb[0].mxu0
        %v6459 = vadd.f32 0.0, %v6458
        %v6460 = vpop.f32.mrb[0].mxu0
        %6461 = vdwg.mxu0
        %6462 = vrot.lane.b32.xlu0 %v1203, 48
        %v6463 = vpop.permute.xlu0 %6462
        %6464 = vrot.lane.b32.xlu0 %v1208, 48
        %v6465 = vpop.permute.xlu0 %6464
        %6466 = vrot.lane.b32.xlu0 %v1213, 48
        %v6467 = vpop.permute.xlu0 %6466
        %6468 = vrot.lane.b32.xlu0 %v1218, 48
        %v6469 = vpop.permute.xlu0 %6468
        %6470 = vrot.lane.b32.xlu0 %v1223, 48
        %v6471 = vpop.permute.xlu0 %6470
        %6472 = vrot.lane.b32.xlu0 %v1228, 48
        %v6473 = vpop.permute.xlu0 %6472
        %6474 = vrot.lane.b32.xlu0 %v1233, 48
        %v6475 = vpop.permute.xlu0 %6474
        %6476 = vrot.lane.b32.xlu0 %v1238, 48
        %v6477 = vpop.permute.xlu0 %6476
        %v6487 = vsel %vm2034, %v6285, 0
        %v6490 = vsel %vm2034, %v6286, 0
        %v6493 = vsel %vm2034, %v6287, 0
        %v6496 = vsel %vm2034, %v6288, 0
        %v6499 = vsel %vm2034, %v6289, 0
        %v6502 = vsel %vm2034, %v6290, 0
        %v6505 = vsel %vm2034, %v6291, 0
        %v6508 = vsel %vm2034, %v6292, 0
        %6510 = vmatprep.subr.mxu0 0.0
        %6511 = vmatpush1.msra.mxu0 %v6463
        %6512 = vmatprep.subr.mxu0 0.0
        %6513 = vmatpush1.msra.mxu0 %v6465
        %6514 = vmatprep.subr.mxu0 0.0
        %6515 = vmatpush1.msra.mxu0 %v6467
        %6516 = vmatprep.subr.mxu0 0.0
        %6517 = vmatpush1.msra.mxu0 %v6469
        %6518 = vmatprep.subr.mxu0 0.0
        %6519 = vmatpush1.msra.mxu0 %v6471
        %6520 = vmatprep.subr.mxu0 0.0
        %6521 = vmatpush1.msra.mxu0 %v6473
        %6522 = vmatprep.subr.mxu0 0.0
        %6523 = vmatpush1.msra.mxu0 %v6475
        %6524 = vmatprep.subr.mxu0 0.0
        %6525 = vmatpush1.msra.mxu0 %v6477
        %6526 = vmatprep.subr.mxu0 0.0
        %6527 = vmatpush1.msra.mxu0 0.0
        %6528 = vmatprep.subr.mxu0 0.0
        %6529 = vmatpush1.msra.mxu0 0.0
        %6530 = vmatprep.subr.mxu0 0.0
        %6531 = vmatpush1.msra.mxu0 0.0
        %6532 = vmatprep.subr.mxu0 0.0
        %6533 = vmatpush1.msra.mxu0 0.0
        %6534 = vmatprep.subr.mxu0 0.0
        %6535 = vmatpush1.msra.mxu0 0.0
        %6536 = vmatprep.subr.mxu0 0.0
        %6537 = vmatpush1.msra.mxu0 0.0
        %6538 = vmatprep.subr.mxu0 0.0
        %6539 = vmatpush1.msra.mxu0 0.0
        %6540 = vmatprep.subr.mxu0 0.0
        %6541 = vmatpush1.msra.mxu0 0.0
        %6542 = vmatprep.subr.mxu0 0.0
        %6543 = vmatpush1.msra.mxu0 0.0
        %6544 = vmatprep.subr.mxu0 0.0
        %6545 = vmatpush1.msra.mxu0 0.0
        %6546 = vmatprep.subr.mxu0 0.0
        %6547 = vmatpush1.msra.mxu0 0.0
        %6548 = vmatprep.subr.mxu0 0.0
        %6549 = vmatpush1.msra.mxu0 0.0
        %6550 = vmatprep.subr.mxu0 0.0
        %6551 = vmatpush1.msra.mxu0 0.0
        %6552 = vmatprep.subr.mxu0 0.0
        %6553 = vmatpush1.msra.mxu0 0.0
        %6554 = vmatprep.subr.mxu0 0.0
        %6555 = vmatpush1.msra.mxu0 0.0
        %6556 = vmatprep.subr.mxu0 0.0
        %6557 = vmatpush1.msra.mxu0 0.0
        %6558 = vmatprep.subr.mxu0 0.0
        %6559 = vmatpush1.msra.mxu0 0.0
        %6560 = vmatprep.subr.mxu0 0.0
        %6561 = vmatpush1.msra.mxu0 0.0
        %6562 = vmatprep.subr.mxu0 0.0
        %6563 = vmatpush1.msra.mxu0 0.0
        %6564 = vmatprep.subr.mxu0 0.0
        %6565 = vmatpush1.msra.mxu0 0.0
        %6566 = vmatprep.subr.mxu0 0.0
        %6567 = vmatpush1.msra.mxu0 0.0
        %6568 = vmatprep.subr.mxu0 0.0
        %6569 = vmatpush1.msra.mxu0 0.0
        %6570 = vmatprep.subr.mxu0 0.0
        %6571 = vmatpush1.msra.mxu0 0.0
        %6572 = vmatprep.subr.mxu0 0.0
        %6573 = vmatpush1.msra.mxu0 0.0
        %6574 = vmatprep.mubr.f32.mxu0 0.0
        %6575 = vmatmul.mubr.f32.gmra.mrb[0].mxu0 %v6487
        %v6576 = vpop.f32.mrb[0].mxu0
        %v6577 = vadd.f32 0.0, %v6576
        %v6578 = vpop.f32.mrb[0].mxu0
        %6579 = vmatprep.mubr.f32.mxu0 0.0
        %6580 = vmatmul.mubr.f32.gmra.mrb[0].mxu0 %v6490
        %v6581 = vpop.f32.mrb[0].mxu0
        %v6582 = vadd.f32 0.0, %v6581
        %v6583 = vpop.f32.mrb[0].mxu0
        %6584 = vmatprep.mubr.f32.mxu0 0.0
        %6585 = vmatmul.mubr.f32.gmra.mrb[0].mxu0 %v6493
        %v6586 = vpop.f32.mrb[0].mxu0
        %v6587 = vadd.f32 0.0, %v6586
        %v6588 = vpop.f32.mrb[0].mxu0
        %6589 = vmatprep.mubr.f32.mxu0 0.0
        %6590 = vmatmul.mubr.f32.gmra.mrb[0].mxu0 %v6496
        %v6591 = vpop.f32.mrb[0].mxu0
        %v6592 = vadd.f32 0.0, %v6591
        %v6593 = vpop.f32.mrb[0].mxu0
        %6594 = vmatprep.mubr.f32.mxu0 0.0
        %6595 = vmatmul.mubr.f32.gmra.mrb[0].mxu0 %v6499
        %v6596 = vpop.f32.mrb[0].mxu0
        %v6597 = vadd.f32 0.0, %v6596
        %v6598 = vpop.f32.mrb[0].mxu0
        %6599 = vmatprep.mubr.f32.mxu0 0.0
        %6600 = vmatmul.mubr.f32.gmra.mrb[0].mxu0 %v6502
        %v6601 = vpop.f32.mrb[0].mxu0
        %v6602 = vadd.f32 0.0, %v6601
        %v6603 = vpop.f32.mrb[0].mxu0
        %6604 = vmatprep.mubr.f32.mxu0 0.0
        %6605 = vmatmul.mubr.f32.gmra.mrb[0].mxu0 %v6505
        %v6606 = vpop.f32.mrb[0].mxu0
        %v6607 = vadd.f32 0.0, %v6606
        %v6608 = vpop.f32.mrb[0].mxu0
        %6609 = vmatprep.mubr.f32.mxu0 0.0
        %6610 = vmatmul.mubr.f32.gmra.mrb[0].mxu0 %v6508
        %v6611 = vpop.f32.mrb[0].mxu0
        %v6612 = vadd.f32 0.0, %v6611
        %v6613 = vpop.f32.mrb[0].mxu0
        %6614 = vdwg.mxu0
        %6615 = vrot.lane.b32.xlu0 %v1243, 48
        %v6616 = vpop.permute.xlu0 %6615
        %6617 = vrot.lane.b32.xlu0 %v1248, 48
        %v6618 = vpop.permute.xlu0 %6617
        %6619 = vrot.lane.b32.xlu0 %v1253, 48
        %v6620 = vpop.permute.xlu0 %6619
        %6621 = vrot.lane.b32.xlu0 %v1258, 48
        %v6622 = vpop.permute.xlu0 %6621
        %6623 = vrot.lane.b32.xlu0 %v1263, 48
        %v6624 = vpop.permute.xlu0 %6623
        %6625 = vrot.lane.b32.xlu0 %v1268, 48
        %v6626 = vpop.permute.xlu0 %6625
        %6627 = vrot.lane.b32.xlu0 %v1273, 48
        %v6628 = vpop.permute.xlu0 %6627
        %6629 = vrot.lane.b32.xlu0 %v1278, 48
        %v6630 = vpop.permute.xlu0 %6629
        %v6640 = vsel %vm2034, %v6293, 0
        %v6643 = vsel %vm2034, %v6294, 0
        %v6646 = vsel %vm2034, %v6295, 0
        %v6649 = vsel %vm2034, %v6296, 0
        %v6652 = vsel %vm2034, %v6297, 0
        %v6655 = vsel %vm2034, %v6298, 0
        %v6658 = vsel %vm2034, %v6299, 0
        %v6661 = vsel %vm2034, %v6300, 0
        %6663 = vmatprep.subr.mxu0 0.0
        %6664 = vmatpush1.msra.mxu0 %v6616
        %6665 = vmatprep.subr.mxu0 0.0
        %6666 = vmatpush1.msra.mxu0 %v6618
        %6667 = vmatprep.subr.mxu0 0.0
        %6668 = vmatpush1.msra.mxu0 %v6620
        %6669 = vmatprep.subr.mxu0 0.0
        %6670 = vmatpush1.msra.mxu0 %v6622
        %6671 = vmatprep.subr.mxu0 0.0
        %6672 = vmatpush1.msra.mxu0 %v6624
        %6673 = vmatprep.subr.mxu0 0.0
        %6674 = vmatpush1.msra.mxu0 %v6626
        %6675 = vmatprep.subr.mxu0 0.0
        %6676 = vmatpush1.msra.mxu0 %v6628
        %6677 = vmatprep.subr.mxu0 0.0
        %6678 = vmatpush1.msra.mxu0 %v6630
        %6679 = vmatprep.subr.mxu0 0.0
        %6680 = vmatpush1.msra.mxu0 0.0
        %6681 = vmatprep.subr.mxu0 0.0
        %6682 = vmatpush1.msra.mxu0 0.0
        %6683 = vmatprep.subr.mxu0 0.0
        %6684 = vmatpush1.msra.mxu0 0.0
        %6685 = vmatprep.subr.mxu0 0.0
        %6686 = vmatpush1.msra.mxu0 0.0
        %6687 = vmatprep.subr.mxu0 0.0
        %6688 = vmatpush1.msra.mxu0 0.0
        %6689 = vmatprep.subr.mxu0 0.0
        %6690 = vmatpush1.msra.mxu0 0.0
        %6691 = vmatprep.subr.mxu0 0.0
        %6692 = vmatpush1.msra.mxu0 0.0
        %6693 = vmatprep.subr.mxu0 0.0
        %6694 = vmatpush1.msra.mxu0 0.0
        %6695 = vmatprep.subr.mxu0 0.0
        %6696 = vmatpush1.msra.mxu0 0.0
        %6697 = vmatprep.subr.mxu0 0.0
        %6698 = vmatpush1.msra.mxu0 0.0
        %6699 = vmatprep.subr.mxu0 0.0
        %6700 = vmatpush1.msra.mxu0 0.0
        %6701 = vmatprep.subr.mxu0 0.0
        %6702 = vmatpush1.msra.mxu0 0.0
        %6703 = vmatprep.subr.mxu0 0.0
        %6704 = vmatpush1.msra.mxu0 0.0
        %6705 = vmatprep.subr.mxu0 0.0
        %6706 = vmatpush1.msra.mxu0 0.0
        %6707 = vmatprep.subr.mxu0 0.0
        %6708 = vmatpush1.msra.mxu0 0.0
        %6709 = vmatprep.subr.mxu0 0.0
        %6710 = vmatpush1.msra.mxu0 0.0
        %6711 = vmatprep.subr.mxu0 0.0
        %6712 = vmatpush1.msra.mxu0 0.0
        %6713 = vmatprep.subr.mxu0 0.0
        %6714 = vmatpush1.msra.mxu0 0.0
        %6715 = vmatprep.subr.mxu0 0.0
        %6716 = vmatpush1.msra.mxu0 0.0
        %6717 = vmatprep.subr.mxu0 0.0
        %6718 = vmatpush1.msra.mxu0 0.0
        %6719 = vmatprep.subr.mxu0 0.0
        %6720 = vmatpush1.msra.mxu0 0.0
        %6721 = vmatprep.subr.mxu0 0.0
        %6722 = vmatpush1.msra.mxu0 0.0
        %6723 = vmatprep.subr.mxu0 0.0
        %6724 = vmatpush1.msra.mxu0 0.0
        %6725 = vmatprep.subr.mxu0 0.0
        %6726 = vmatpush1.msra.mxu0 0.0
        %6727 = vmatprep.mubr.f32.mxu0 0.0
        %6728 = vmatmul.mubr.f32.gmra.mrb[0].mxu0 %v6640
        %v6729 = vpop.f32.mrb[0].mxu0
        %v6730 = vadd.f32 0.0, %v6729
        %v6731 = vpop.f32.mrb[0].mxu0
        %6732 = vmatprep.mubr.f32.mxu0 0.0
        %6733 = vmatmul.mubr.f32.gmra.mrb[0].mxu0 %v6643
        %v6734 = vpop.f32.mrb[0].mxu0
        %v6735 = vadd.f32 0.0, %v6734
        %v6736 = vpop.f32.mrb[0].mxu0
        %6737 = vmatprep.mubr.f32.mxu0 0.0
        %6738 = vmatmul.mubr.f32.gmra.mrb[0].mxu0 %v6646
        %v6739 = vpop.f32.mrb[0].mxu0
        %v6740 = vadd.f32 0.0, %v6739
        %v6741 = vpop.f32.mrb[0].mxu0
        %6742 = vmatprep.mubr.f32.mxu0 0.0
        %6743 = vmatmul.mubr.f32.gmra.mrb[0].mxu0 %v6649
        %v6744 = vpop.f32.mrb[0].mxu0
        %v6745 = vadd.f32 0.0, %v6744
        %v6746 = vpop.f32.mrb[0].mxu0
        %6747 = vmatprep.mubr.f32.mxu0 0.0
        %6748 = vmatmul.mubr.f32.gmra.mrb[0].mxu0 %v6652
        %v6749 = vpop.f32.mrb[0].mxu0
        %v6750 = vadd.f32 0.0, %v6749
        %v6751 = vpop.f32.mrb[0].mxu0
        %6752 = vmatprep.mubr.f32.mxu0 0.0
        %6753 = vmatmul.mubr.f32.gmra.mrb[0].mxu0 %v6655
        %v6754 = vpop.f32.mrb[0].mxu0
        %v6755 = vadd.f32 0.0, %v6754
        %v6756 = vpop.f32.mrb[0].mxu0
        %6757 = vmatprep.mubr.f32.mxu0 0.0
        %6758 = vmatmul.mubr.f32.gmra.mrb[0].mxu0 %v6658
        %v6759 = vpop.f32.mrb[0].mxu0
        %v6760 = vadd.f32 0.0, %v6759
        %v6761 = vpop.f32.mrb[0].mxu0
        %6762 = vmatprep.mubr.f32.mxu0 0.0
        %6763 = vmatmul.mubr.f32.gmra.mrb[0].mxu0 %v6661
        %v6764 = vpop.f32.mrb[0].mxu0
        %v6765 = vadd.f32 0.0, %v6764
        %v6766 = vpop.f32.mrb[0].mxu0
        %6767 = vdwg.mxu0
        %6768 = vrot.lane.b32.xlu0 %v1283, 48
        %v6769 = vpop.permute.xlu0 %6768
        %6770 = vrot.lane.b32.xlu0 %v1288, 48
        %v6771 = vpop.permute.xlu0 %6770
        %6772 = vrot.lane.b32.xlu0 %v1293, 48
        %v6773 = vpop.permute.xlu0 %6772
        %6774 = vrot.lane.b32.xlu0 %v1298, 48
        %v6775 = vpop.permute.xlu0 %6774
        %6776 = vrot.lane.b32.xlu0 %v1303, 48
        %v6777 = vpop.permute.xlu0 %6776
        %6778 = vrot.lane.b32.xlu0 %v1308, 48
        %v6779 = vpop.permute.xlu0 %6778
        %6780 = vrot.lane.b32.xlu0 %v1313, 48
        %v6781 = vpop.permute.xlu0 %6780
        %6782 = vrot.lane.b32.xlu0 %v1318, 48
        %v6783 = vpop.permute.xlu0 %6782
        %v6793 = vsel %vm2034, %v6301, 0
        %v6796 = vsel %vm2034, %v6302, 0
        %v6799 = vsel %vm2034, %v6303, 0
        %v6802 = vsel %vm2034, %v6304, 0
        %v6805 = vsel %vm2034, %v6305, 0
        %v6808 = vsel %vm2034, %v6306, 0
        %v6811 = vsel %vm2034, %v6307, 0
        %v6814 = vsel %vm2034, %v6308, 0
        %6816 = vmatprep.subr.mxu0 0.0
        %6817 = vmatpush1.msra.mxu0 %v6769
        %6818 = vmatprep.subr.mxu0 0.0
        %6819 = vmatpush1.msra.mxu0 %v6771
        %6820 = vmatprep.subr.mxu0 0.0
        %6821 = vmatpush1.msra.mxu0 %v6773
        %6822 = vmatprep.subr.mxu0 0.0
        %6823 = vmatpush1.msra.mxu0 %v6775
        %6824 = vmatprep.subr.mxu0 0.0
        %6825 = vmatpush1.msra.mxu0 %v6777
        %6826 = vmatprep.subr.mxu0 0.0
        %6827 = vmatpush1.msra.mxu0 %v6779
        %6828 = vmatprep.subr.mxu0 0.0
        %6829 = vmatpush1.msra.mxu0 %v6781
        %6830 = vmatprep.subr.mxu0 0.0
        %6831 = vmatpush1.msra.mxu0 %v6783
        %6832 = vmatprep.subr.mxu0 0.0
        %6833 = vmatpush1.msra.mxu0 0.0
        %6834 = vmatprep.subr.mxu0 0.0
        %6835 = vmatpush1.msra.mxu0 0.0
        %6836 = vmatprep.subr.mxu0 0.0
        %6837 = vmatpush1.msra.mxu0 0.0
        %6838 = vmatprep.subr.mxu0 0.0
        %6839 = vmatpush1.msra.mxu0 0.0
        %6840 = vmatprep.subr.mxu0 0.0
        %6841 = vmatpush1.msra.mxu0 0.0
        %6842 = vmatprep.subr.mxu0 0.0
        %6843 = vmatpush1.msra.mxu0 0.0
        %6844 = vmatprep.subr.mxu0 0.0
        %6845 = vmatpush1.msra.mxu0 0.0
        %6846 = vmatprep.subr.mxu0 0.0
        %6847 = vmatpush1.msra.mxu0 0.0
        %6848 = vmatprep.subr.mxu0 0.0
        %6849 = vmatpush1.msra.mxu0 0.0
        %6850 = vmatprep.subr.mxu0 0.0
        %6851 = vmatpush1.msra.mxu0 0.0
        %6852 = vmatprep.subr.mxu0 0.0
        %6853 = vmatpush1.msra.mxu0 0.0
        %6854 = vmatprep.subr.mxu0 0.0
        %6855 = vmatpush1.msra.mxu0 0.0
        %6856 = vmatprep.subr.mxu0 0.0
        %6857 = vmatpush1.msra.mxu0 0.0
        %6858 = vmatprep.subr.mxu0 0.0
        %6859 = vmatpush1.msra.mxu0 0.0
        %6860 = vmatprep.subr.mxu0 0.0
        %6861 = vmatpush1.msra.mxu0 0.0
        %6862 = vmatprep.subr.mxu0 0.0
        %6863 = vmatpush1.msra.mxu0 0.0
        %6864 = vmatprep.subr.mxu0 0.0
        %6865 = vmatpush1.msra.mxu0 0.0
        %6866 = vmatprep.subr.mxu0 0.0
        %6867 = vmatpush1.msra.mxu0 0.0
        %6868 = vmatprep.subr.mxu0 0.0
        %6869 = vmatpush1.msra.mxu0 0.0
        %6870 = vmatprep.subr.mxu0 0.0
        %6871 = vmatpush1.msra.mxu0 0.0
        %6872 = vmatprep.subr.mxu0 0.0
        %6873 = vmatpush1.msra.mxu0 0.0
        %6874 = vmatprep.subr.mxu0 0.0
        %6875 = vmatpush1.msra.mxu0 0.0
        %6876 = vmatprep.subr.mxu0 0.0
        %6877 = vmatpush1.msra.mxu0 0.0
        %6878 = vmatprep.subr.mxu0 0.0
        %6879 = vmatpush1.msra.mxu0 0.0
        %6880 = vmatprep.mubr.f32.mxu0 0.0
        %6881 = vmatmul.mubr.f32.gmra.mrb[0].mxu0 %v6793
        %v6882 = vpop.f32.mrb[0].mxu0
        %v6883 = vadd.f32 0.0, %v6882
        %v6884 = vpop.f32.mrb[0].mxu0
        %6885 = vmatprep.mubr.f32.mxu0 0.0
        %6886 = vmatmul.mubr.f32.gmra.mrb[0].mxu0 %v6796
        %v6887 = vpop.f32.mrb[0].mxu0
        %v6888 = vadd.f32 0.0, %v6887
        %v6889 = vpop.f32.mrb[0].mxu0
        %6890 = vmatprep.mubr.f32.mxu0 0.0
        %6891 = vmatmul.mubr.f32.gmra.mrb[0].mxu0 %v6799
        %v6892 = vpop.f32.mrb[0].mxu0
        %v6893 = vadd.f32 0.0, %v6892
        %v6894 = vpop.f32.mrb[0].mxu0
        %6895 = vmatprep.mubr.f32.mxu0 0.0
        %6896 = vmatmul.mubr.f32.gmra.mrb[0].mxu0 %v6802
        %v6897 = vpop.f32.mrb[0].mxu0
        %v6898 = vadd.f32 0.0, %v6897
        %v6899 = vpop.f32.mrb[0].mxu0
        %6900 = vmatprep.mubr.f32.mxu0 0.0
        %6901 = vmatmul.mubr.f32.gmra.mrb[0].mxu0 %v6805
        %v6902 = vpop.f32.mrb[0].mxu0
        %v6903 = vadd.f32 0.0, %v6902
        %v6904 = vpop.f32.mrb[0].mxu0
        %6905 = vmatprep.mubr.f32.mxu0 0.0
        %6906 = vmatmul.mubr.f32.gmra.mrb[0].mxu0 %v6808
        %v6907 = vpop.f32.mrb[0].mxu0
        %v6908 = vadd.f32 0.0, %v6907
        %v6909 = vpop.f32.mrb[0].mxu0
        %6910 = vmatprep.mubr.f32.mxu0 0.0
        %6911 = vmatmul.mubr.f32.gmra.mrb[0].mxu0 %v6811
        %v6912 = vpop.f32.mrb[0].mxu0
        %v6913 = vadd.f32 0.0, %v6912
        %v6914 = vpop.f32.mrb[0].mxu0
        %6915 = vmatprep.mubr.f32.mxu0 0.0
        %6916 = vmatmul.mubr.f32.gmra.mrb[0].mxu0 %v6814
        %v6917 = vpop.f32.mrb[0].mxu0
        %v6918 = vadd.f32 0.0, %v6917
        %v6919 = vpop.f32.mrb[0].mxu0
        %6920 = vdwg.mxu0
        %v6922 = vsel %vm1381, %v6424, 0
        %v6925 = vsel %vm1381, %v6429, 0
        %v6928 = vsel %vm1381, %v6434, 0
        %v6931 = vsel %vm1381, %v6439, 0
        %v6934 = vsel %vm1381, %v6444, 0
        %v6937 = vsel %vm1381, %v6449, 0
        %v6940 = vsel %vm1381, %v6454, 0
        %v6943 = vsel %vm1381, %v6459, 0
        %v6946 = vsel %vm1381, %v6577, 0
        %v6949 = vsel %vm1381, %v6582, 0
        %v6952 = vsel %vm1381, %v6587, 0
        %v6955 = vsel %vm1381, %v6592, 0
        %v6958 = vsel %vm1381, %v6597, 0
        %v6961 = vsel %vm1381, %v6602, 0
        %v6964 = vsel %vm1381, %v6607, 0
        %v6967 = vsel %vm1381, %v6612, 0
        %v6970 = vsel %vm1381, %v6730, 0
        %v6973 = vsel %vm1381, %v6735, 0
        %v6976 = vsel %vm1381, %v6740, 0
        %v6979 = vsel %vm1381, %v6745, 0
        %v6982 = vsel %vm1381, %v6750, 0
        %v6985 = vsel %vm1381, %v6755, 0
        %v6988 = vsel %vm1381, %v6760, 0
        %v6991 = vsel %vm1381, %v6765, 0
        %v6994 = vsel %vm1381, %v6883, 0
        %v6997 = vsel %vm1381, %v6888, 0
        %v7000 = vsel %vm1381, %v6893, 0
        %v7003 = vsel %vm1381, %v6898, 0
        %v7006 = vsel %vm1381, %v6903, 0
        %v7009 = vsel %vm1381, %v6908, 0
        %v7012 = vsel %vm1381, %v6913, 0
        %v7015 = vsel %vm1381, %v6918, 0
        %7017 = vmatprep.subr.mxu0 0.0
        %7018 = vmatpush1.msra.mxu0 %v1355
        %7019 = vmatprep.subr.mxu0 0.0
        %7020 = vmatpush1.msra.mxu0 0.0
        %7021 = vmatprep.subr.mxu0 0.0
        %7022 = vmatpush1.msra.mxu0 0.0
        %7023 = vmatprep.subr.mxu0 0.0
        %7024 = vmatpush1.msra.mxu0 0.0
        %7025 = vmatprep.subr.mxu0 0.0
        %7026 = vmatpush1.msra.mxu0 0.0
        %7027 = vmatprep.subr.mxu0 0.0
        %7028 = vmatpush1.msra.mxu0 0.0
        %7029 = vmatprep.subr.mxu0 0.0
        %7030 = vmatpush1.msra.mxu0 0.0
        %7031 = vmatprep.subr.mxu0 0.0
        %7032 = vmatpush1.msra.mxu0 0.0
        %7033 = vmatprep.subr.mxu0 0.0
        %7034 = vmatpush1.msra.mxu0 0.0
        %7035 = vmatprep.subr.mxu0 0.0
        %7036 = vmatpush1.msra.mxu0 0.0
        %7037 = vmatprep.subr.mxu0 0.0
        %7038 = vmatpush1.msra.mxu0 0.0
        %7039 = vmatprep.subr.mxu0 0.0
        %7040 = vmatpush1.msra.mxu0 0.0
        %7041 = vmatprep.subr.mxu0 0.0
        %7042 = vmatpush1.msra.mxu0 0.0
        %7043 = vmatprep.subr.mxu0 0.0
        %7044 = vmatpush1.msra.mxu0 0.0
        %7045 = vmatprep.subr.mxu0 0.0
        %7046 = vmatpush1.msra.mxu0 0.0
        %7047 = vmatprep.subr.mxu0 0.0
        %7048 = vmatpush1.msra.mxu0 0.0
        %7049 = vmatprep.subr.mxu0 0.0
        %7050 = vmatpush1.msra.mxu0 0.0
        %7051 = vmatprep.subr.mxu0 0.0
        %7052 = vmatpush1.msra.mxu0 0.0
        %7053 = vmatprep.subr.mxu0 0.0
        %7054 = vmatpush1.msra.mxu0 0.0
        %7055 = vmatprep.subr.mxu0 0.0
        %7056 = vmatpush1.msra.mxu0 0.0
        %7057 = vmatprep.subr.mxu0 0.0
        %7058 = vmatpush1.msra.mxu0 0.0
        %7059 = vmatprep.subr.mxu0 0.0
        %7060 = vmatpush1.msra.mxu0 0.0
        %7061 = vmatprep.subr.mxu0 0.0
        %7062 = vmatpush1.msra.mxu0 0.0
        %7063 = vmatprep.subr.mxu0 0.0
        %7064 = vmatpush1.msra.mxu0 0.0
        %7065 = vmatprep.subr.mxu0 0.0
        %7066 = vmatpush1.msra.mxu0 0.0
        %7067 = vmatprep.subr.mxu0 0.0
        %7068 = vmatpush1.msra.mxu0 0.0
        %7069 = vmatprep.subr.mxu0 0.0
        %7070 = vmatpush1.msra.mxu0 0.0
        %7071 = vmatprep.subr.mxu0 0.0
        %7072 = vmatpush1.msra.mxu0 0.0
        %7073 = vmatprep.subr.mxu0 0.0
        %7074 = vmatpush1.msra.mxu0 0.0
        %7075 = vmatprep.subr.mxu0 0.0
        %7076 = vmatpush1.msra.mxu0 0.0
        %7077 = vmatprep.subr.mxu0 0.0
        %7078 = vmatpush1.msra.mxu0 0.0
        %7079 = vmatprep.subr.mxu0 0.0
        %7080 = vmatpush1.msra.mxu0 0.0
        %7081 = vmatprep.mubr.f32.mxu0 0.0
        %7082 = vmatmul.mubr.f32.gmra.mrb[0].mxu0 %v6922
        %v7083 = vpop.f32.mrb[0].mxu0
        %v7084 = vadd.f32 0.0, %v7083
        %v7085 = vpop.f32.mrb[0].mxu0
        %7086 = vmatprep.mubr.f32.mxu0 0.0
        %7087 = vmatmul.mubr.f32.gmra.mrb[0].mxu0 %v6925
        %v7088 = vpop.f32.mrb[0].mxu0
        %v7089 = vadd.f32 0.0, %v7088
        %v7090 = vpop.f32.mrb[0].mxu0
        %7091 = vmatprep.mubr.f32.mxu0 0.0
        %7092 = vmatmul.mubr.f32.gmra.mrb[0].mxu0 %v6928
        %v7093 = vpop.f32.mrb[0].mxu0
        %v7094 = vadd.f32 0.0, %v7093
        %v7095 = vpop.f32.mrb[0].mxu0
        %7096 = vmatprep.mubr.f32.mxu0 0.0
        %7097 = vmatmul.mubr.f32.gmra.mrb[0].mxu0 %v6931
        %v7098 = vpop.f32.mrb[0].mxu0
        %v7099 = vadd.f32 0.0, %v7098
        %v7100 = vpop.f32.mrb[0].mxu0
        %7101 = vmatprep.mubr.f32.mxu0 0.0
        %7102 = vmatmul.mubr.f32.gmra.mrb[0].mxu0 %v6934
        %v7103 = vpop.f32.mrb[0].mxu0
        %v7104 = vadd.f32 0.0, %v7103
        %v7105 = vpop.f32.mrb[0].mxu0
        %7106 = vmatprep.mubr.f32.mxu0 0.0
        %7107 = vmatmul.mubr.f32.gmra.mrb[0].mxu0 %v6937
        %v7108 = vpop.f32.mrb[0].mxu0
        %v7109 = vadd.f32 0.0, %v7108
        %v7110 = vpop.f32.mrb[0].mxu0
        %7111 = vmatprep.mubr.f32.mxu0 0.0
        %7112 = vmatmul.mubr.f32.gmra.mrb[0].mxu0 %v6940
        %v7113 = vpop.f32.mrb[0].mxu0
        %v7114 = vadd.f32 0.0, %v7113
        %v7115 = vpop.f32.mrb[0].mxu0
        %7116 = vmatprep.mubr.f32.mxu0 0.0
        %7117 = vmatmul.mubr.f32.gmra.mrb[0].mxu0 %v6943
        %v7118 = vpop.f32.mrb[0].mxu0
        %v7119 = vadd.f32 0.0, %v7118
        %v7120 = vpop.f32.mrb[0].mxu0
        %7121 = vmatprep.mubr.f32.mxu0 0.0
        %7122 = vmatmul.mubr.f32.gmra.mrb[0].mxu0 %v6946
        %v7123 = vpop.f32.mrb[0].mxu0
        %v7124 = vadd.f32 0.0, %v7123
        %v7125 = vpop.f32.mrb[0].mxu0
        %7126 = vmatprep.mubr.f32.mxu0 0.0
        %7127 = vmatmul.mubr.f32.gmra.mrb[0].mxu0 %v6949
        %v7128 = vpop.f32.mrb[0].mxu0
        %v7129 = vadd.f32 0.0, %v7128
        %v7130 = vpop.f32.mrb[0].mxu0
        %7131 = vmatprep.mubr.f32.mxu0 0.0
        %7132 = vmatmul.mubr.f32.gmra.mrb[0].mxu0 %v6952
        %v7133 = vpop.f32.mrb[0].mxu0
        %v7134 = vadd.f32 0.0, %v7133
        %v7135 = vpop.f32.mrb[0].mxu0
        %7136 = vmatprep.mubr.f32.mxu0 0.0
        %7137 = vmatmul.mubr.f32.gmra.mrb[0].mxu0 %v6955
        %v7138 = vpop.f32.mrb[0].mxu0
        %v7139 = vadd.f32 0.0, %v7138
        %v7140 = vpop.f32.mrb[0].mxu0
        %7141 = vmatprep.mubr.f32.mxu0 0.0
        %7142 = vmatmul.mubr.f32.gmra.mrb[0].mxu0 %v6958
        %v7143 = vpop.f32.mrb[0].mxu0
        %v7144 = vadd.f32 0.0, %v7143
        %v7145 = vpop.f32.mrb[0].mxu0
        %7146 = vmatprep.mubr.f32.mxu0 0.0
        %7147 = vmatmul.mubr.f32.gmra.mrb[0].mxu0 %v6961
        %v7148 = vpop.f32.mrb[0].mxu0
        %v7149 = vadd.f32 0.0, %v7148
        %v7150 = vpop.f32.mrb[0].mxu0
        %7151 = vmatprep.mubr.f32.mxu0 0.0
        %7152 = vmatmul.mubr.f32.gmra.mrb[0].mxu0 %v6964
        %v7153 = vpop.f32.mrb[0].mxu0
        %v7154 = vadd.f32 0.0, %v7153
        %v7155 = vpop.f32.mrb[0].mxu0
        %7156 = vmatprep.mubr.f32.mxu0 0.0
        %7157 = vmatmul.mubr.f32.gmra.mrb[0].mxu0 %v6967
        %v7158 = vpop.f32.mrb[0].mxu0
        %v7159 = vadd.f32 0.0, %v7158
        %v7160 = vpop.f32.mrb[0].mxu0
        %7161 = vmatprep.mubr.f32.mxu0 0.0
        %7162 = vmatmul.mubr.f32.gmra.mrb[0].mxu0 %v6970
        %v7163 = vpop.f32.mrb[0].mxu0
        %v7164 = vadd.f32 0.0, %v7163
        %v7165 = vpop.f32.mrb[0].mxu0
        %7166 = vmatprep.mubr.f32.mxu0 0.0
        %7167 = vmatmul.mubr.f32.gmra.mrb[0].mxu0 %v6973
        %v7168 = vpop.f32.mrb[0].mxu0
        %v7169 = vadd.f32 0.0, %v7168
        %v7170 = vpop.f32.mrb[0].mxu0
        %7171 = vmatprep.mubr.f32.mxu0 0.0
        %7172 = vmatmul.mubr.f32.gmra.mrb[0].mxu0 %v6976
        %v7173 = vpop.f32.mrb[0].mxu0
        %v7174 = vadd.f32 0.0, %v7173
        %v7175 = vpop.f32.mrb[0].mxu0
        %7176 = vmatprep.mubr.f32.mxu0 0.0
        %7177 = vmatmul.mubr.f32.gmra.mrb[0].mxu0 %v6979
        %v7178 = vpop.f32.mrb[0].mxu0
        %v7179 = vadd.f32 0.0, %v7178
        %v7180 = vpop.f32.mrb[0].mxu0
        %7181 = vmatprep.mubr.f32.mxu0 0.0
        %7182 = vmatmul.mubr.f32.gmra.mrb[0].mxu0 %v6982
        %v7183 = vpop.f32.mrb[0].mxu0
        %v7184 = vadd.f32 0.0, %v7183
        %v7185 = vpop.f32.mrb[0].mxu0
        %7186 = vmatprep.mubr.f32.mxu0 0.0
        %7187 = vmatmul.mubr.f32.gmra.mrb[0].mxu0 %v6985
        %v7188 = vpop.f32.mrb[0].mxu0
        %v7189 = vadd.f32 0.0, %v7188
        %v7190 = vpop.f32.mrb[0].mxu0
        %7191 = vmatprep.mubr.f32.mxu0 0.0
        %7192 = vmatmul.mubr.f32.gmra.mrb[0].mxu0 %v6988
        %v7193 = vpop.f32.mrb[0].mxu0
        %v7194 = vadd.f32 0.0, %v7193
        %v7195 = vpop.f32.mrb[0].mxu0
        %7196 = vmatprep.mubr.f32.mxu0 0.0
        %7197 = vmatmul.mubr.f32.gmra.mrb[0].mxu0 %v6991
        %v7198 = vpop.f32.mrb[0].mxu0
        %v7199 = vadd.f32 0.0, %v7198
        %v7200 = vpop.f32.mrb[0].mxu0
        %7201 = vmatprep.mubr.f32.mxu0 0.0
        %7202 = vmatmul.mubr.f32.gmra.mrb[0].mxu0 %v6994
        %v7203 = vpop.f32.mrb[0].mxu0
        %v7204 = vadd.f32 0.0, %v7203
        %v7205 = vpop.f32.mrb[0].mxu0
        %7206 = vmatprep.mubr.f32.mxu0 0.0
        %7207 = vmatmul.mubr.f32.gmra.mrb[0].mxu0 %v6997
        %v7208 = vpop.f32.mrb[0].mxu0
        %v7209 = vadd.f32 0.0, %v7208
        %v7210 = vpop.f32.mrb[0].mxu0
        %7211 = vmatprep.mubr.f32.mxu0 0.0
        %7212 = vmatmul.mubr.f32.gmra.mrb[0].mxu0 %v7000
        %v7213 = vpop.f32.mrb[0].mxu0
        %v7214 = vadd.f32 0.0, %v7213
        %v7215 = vpop.f32.mrb[0].mxu0
        %7216 = vmatprep.mubr.f32.mxu0 0.0
        %7217 = vmatmul.mubr.f32.gmra.mrb[0].mxu0 %v7003
        %v7218 = vpop.f32.mrb[0].mxu0
        %v7219 = vadd.f32 0.0, %v7218
        %v7220 = vpop.f32.mrb[0].mxu0
        %7221 = vmatprep.mubr.f32.mxu0 0.0
        %7222 = vmatmul.mubr.f32.gmra.mrb[0].mxu0 %v7006
        %v7223 = vpop.f32.mrb[0].mxu0
        %v7224 = vadd.f32 0.0, %v7223
        %v7225 = vpop.f32.mrb[0].mxu0
        %7226 = vmatprep.mubr.f32.mxu0 0.0
        %7227 = vmatmul.mubr.f32.gmra.mrb[0].mxu0 %v7009
        %v7228 = vpop.f32.mrb[0].mxu0
        %v7229 = vadd.f32 0.0, %v7228
        %v7230 = vpop.f32.mrb[0].mxu0
        %7231 = vmatprep.mubr.f32.mxu0 0.0
        %7232 = vmatmul.mubr.f32.gmra.mrb[0].mxu0 %v7012
        %v7233 = vpop.f32.mrb[0].mxu0
        %v7234 = vadd.f32 0.0, %v7233
        %v7235 = vpop.f32.mrb[0].mxu0
        %7236 = vmatprep.mubr.f32.mxu0 0.0
        %7237 = vmatmul.mubr.f32.gmra.mrb[0].mxu0 %v7015
        %v7238 = vpop.f32.mrb[0].mxu0
        %v7239 = vadd.f32 0.0, %v7238
        %v7240 = vpop.f32.mrb[0].mxu0
        %7241 = vdwg.mxu0
        %v7242 = vadd.f32 %v5123, %v7084
        %v7243 = vadd.f32 %v5128, %v7089
        %v7244 = vadd.f32 %v5133, %v7094
        %v7245 = vadd.f32 %v5138, %v7099
        %v7246 = vadd.f32 %v5143, %v7104
        %v7247 = vadd.f32 %v5148, %v7109
        %v7248 = vadd.f32 %v5153, %v7114
        %v7249 = vadd.f32 %v5158, %v7119
        %v7250 = vadd.f32 %v5163, %v7124
        %v7251 = vadd.f32 %v5168, %v7129
        %v7252 = vadd.f32 %v5173, %v7134
        %v7253 = vadd.f32 %v5178, %v7139
        %v7254 = vadd.f32 %v5183, %v7144
        %v7255 = vadd.f32 %v5188, %v7149
        %v7256 = vadd.f32 %v5193, %v7154
        %v7257 = vadd.f32 %v5198, %v7159
        %v7258 = vadd.f32 %v5203, %v7164
        %v7259 = vadd.f32 %v5208, %v7169
        %v7260 = vadd.f32 %v5213, %v7174
        %v7261 = vadd.f32 %v5218, %v7179
        %v7262 = vadd.f32 %v5223, %v7184
        %v7263 = vadd.f32 %v5228, %v7189
        %v7264 = vadd.f32 %v5233, %v7194
        %v7265 = vadd.f32 %v5238, %v7199
        %v7266 = vadd.f32 %v5243, %v7204
        %v7267 = vadd.f32 %v5248, %v7209
        %v7268 = vadd.f32 %v5253, %v7214
        %v7269 = vadd.f32 %v5258, %v7219
        %v7270 = vadd.f32 %v5263, %v7224
        %v7271 = vadd.f32 %v5268, %v7229
        %v7272 = vadd.f32 %v5273, %v7234
        %v7273 = vadd.f32 %v5278, %v7239
        %7274 = vrot.lane.b32.xlu0 %v1321, 104
        %v7275 = vpop.permute.xlu0 %7274
        %7276 = vrot.lane.b32.xlu0 %v1322, 104
        %v7277 = vpop.permute.xlu0 %7276
        %7278 = vrot.lane.b32.xlu0 %v1323, 104
        %v7279 = vpop.permute.xlu0 %7278
        %7280 = vrot.lane.b32.xlu0 %v1324, 104
        %v7281 = vpop.permute.xlu0 %7280
        %7282 = vrot.lane.b32.xlu0 %v1325, 104
        %v7283 = vpop.permute.xlu0 %7282
        %7284 = vrot.lane.b32.xlu0 %v1326, 104
        %v7285 = vpop.permute.xlu0 %7284
        %7286 = vrot.lane.b32.xlu0 %v1327, 104
        %v7287 = vpop.permute.xlu0 %7286
        %7288 = vrot.lane.b32.xlu0 %v1328, 104
        %v7289 = vpop.permute.xlu0 %7288
        %7290 = vrot.lane.b32.xlu0 %v1163, 72
        %v7291 = vpop.permute.xlu0 %7290
        %7292 = vrot.lane.b32.xlu0 %v1168, 72
        %v7293 = vpop.permute.xlu0 %7292
        %7294 = vrot.lane.b32.xlu0 %v1173, 72
        %v7295 = vpop.permute.xlu0 %7294
        %7296 = vrot.lane.b32.xlu0 %v1178, 72
        %v7297 = vpop.permute.xlu0 %7296
        %7298 = vrot.lane.b32.xlu0 %v1183, 72
        %v7299 = vpop.permute.xlu0 %7298
        %7300 = vrot.lane.b32.xlu0 %v1188, 72
        %v7301 = vpop.permute.xlu0 %7300
        %7302 = vrot.lane.b32.xlu0 %v1193, 72
        %v7303 = vpop.permute.xlu0 %7302
        %7304 = vrot.lane.b32.xlu0 %v1198, 72
        %v7305 = vpop.permute.xlu0 %7304
        %v7306 = vsel %vm1381, %v7275, 0
        %v7308 = vsel %vm1381, %v7277, 0
        %v7310 = vsel %vm1381, %v7279, 0
        %v7312 = vsel %vm1381, %v7281, 0
        %v7314 = vsel %vm1381, %v7283, 0
        %v7316 = vsel %vm1381, %v7285, 0
        %v7318 = vsel %vm1381, %v7287, 0
        %v7320 = vsel %vm1381, %v7289, 0
        %v7322 = vsel %vm1381, %v7291, 0
        %v7324 = vsel %vm1381, %v7293, 0
        %v7326 = vsel %vm1381, %v7295, 0
        %v7328 = vsel %vm1381, %v7297, 0
        %v7330 = vsel %vm1381, %v7299, 0
        %v7332 = vsel %vm1381, %v7301, 0
        %v7334 = vsel %vm1381, %v7303, 0
        %v7336 = vsel %vm1381, %v7305, 0
        %7338 = vmatprep.subr.mxu0 0.0
        %7339 = vmatpush1.xpose.msra.mxu0 %v7322
        %7340 = vmatprep.subr.mxu0 0.0
        %7341 = vmatpush1.xpose.msra.mxu0 %v7324
        %7342 = vmatprep.subr.mxu0 0.0
        %7343 = vmatpush1.xpose.msra.mxu0 %v7326
        %7344 = vmatprep.subr.mxu0 0.0
        %7345 = vmatpush1.xpose.msra.mxu0 %v7328
        %7346 = vmatprep.subr.mxu0 0.0
        %7347 = vmatpush1.xpose.msra.mxu0 %v7330
        %7348 = vmatprep.subr.mxu0 0.0
        %7349 = vmatpush1.xpose.msra.mxu0 %v7332
        %7350 = vmatprep.subr.mxu0 0.0
        %7351 = vmatpush1.xpose.msra.mxu0 %v7334
        %7352 = vmatprep.subr.mxu0 0.0
        %7353 = vmatpush1.xpose.msra.mxu0 %v7336
        %7354 = vmatprep.subr.mxu0 0.0
        %7355 = vmatpush1.xpose.msra.mxu0 0.0
        %7356 = vmatprep.subr.mxu0 0.0
        %7357 = vmatpush1.xpose.msra.mxu0 0.0
        %7358 = vmatprep.subr.mxu0 0.0
        %7359 = vmatpush1.xpose.msra.mxu0 0.0
        %7360 = vmatprep.subr.mxu0 0.0
        %7361 = vmatpush1.xpose.msra.mxu0 0.0
        %7362 = vmatprep.subr.mxu0 0.0
        %7363 = vmatpush1.xpose.msra.mxu0 0.0
        %7364 = vmatprep.subr.mxu0 0.0
        %7365 = vmatpush1.xpose.msra.mxu0 0.0
        %7366 = vmatprep.subr.mxu0 0.0
        %7367 = vmatpush1.xpose.msra.mxu0 0.0
        %7368 = vmatprep.subr.mxu0 0.0
        %7369 = vmatpush1.xpose.msra.mxu0 0.0
        %7370 = vmatprep.subr.mxu0 0.0
        %7371 = vmatpush1.xpose.msra.mxu0 0.0
        %7372 = vmatprep.subr.mxu0 0.0
        %7373 = vmatpush1.xpose.msra.mxu0 0.0
        %7374 = vmatprep.subr.mxu0 0.0
        %7375 = vmatpush1.xpose.msra.mxu0 0.0
        %7376 = vmatprep.subr.mxu0 0.0
        %7377 = vmatpush1.xpose.msra.mxu0 0.0
        %7378 = vmatprep.subr.mxu0 0.0
        %7379 = vmatpush1.xpose.msra.mxu0 0.0
        %7380 = vmatprep.subr.mxu0 0.0
        %7381 = vmatpush1.xpose.msra.mxu0 0.0
        %7382 = vmatprep.subr.mxu0 0.0
        %7383 = vmatpush1.xpose.msra.mxu0 0.0
        %7384 = vmatprep.subr.mxu0 0.0
        %7385 = vmatpush1.xpose.msra.mxu0 0.0
        %7386 = vmatprep.subr.mxu0 0.0
        %7387 = vmatpush1.xpose.msra.mxu0 0.0
        %7388 = vmatprep.subr.mxu0 0.0
        %7389 = vmatpush1.xpose.msra.mxu0 0.0
        %7390 = vmatprep.subr.mxu0 0.0
        %7391 = vmatpush1.xpose.msra.mxu0 0.0
        %7392 = vmatprep.subr.mxu0 0.0
        %7393 = vmatpush1.xpose.msra.mxu0 0.0
        %7394 = vmatprep.subr.mxu0 0.0
        %7395 = vmatpush1.xpose.msra.mxu0 0.0
        %7396 = vmatprep.subr.mxu0 0.0
        %7397 = vmatpush1.xpose.msra.mxu0 0.0
        %7398 = vmatprep.subr.mxu0 0.0
        %7399 = vmatpush1.xpose.msra.mxu0 0.0
        %7400 = vmatprep.subr.mxu0 0.0
        %7401 = vmatpush1.xpose.msra.mxu0 0.0
        %7402 = vmatprep.mubr.f32.mxu0 0.0
        %7403 = vmatmul.mubr.f32.gmra.mrb[0].mxu0 %v7306
        %v7404 = vpop.f32.mrb[0].mxu0
        %v7405 = vadd.f32 0.0, %v7404
        %v7406 = vpop.f32.mrb[0].mxu0
        %7407 = vmatprep.mubr.f32.mxu0 0.0
        %7408 = vmatmul.mubr.f32.gmra.mrb[0].mxu0 %v7308
        %v7409 = vpop.f32.mrb[0].mxu0
        %v7410 = vadd.f32 0.0, %v7409
        %v7411 = vpop.f32.mrb[0].mxu0
        %7412 = vmatprep.mubr.f32.mxu0 0.0
        %7413 = vmatmul.mubr.f32.gmra.mrb[0].mxu0 %v7310
        %v7414 = vpop.f32.mrb[0].mxu0
        %v7415 = vadd.f32 0.0, %v7414
        %v7416 = vpop.f32.mrb[0].mxu0
        %7417 = vmatprep.mubr.f32.mxu0 0.0
        %7418 = vmatmul.mubr.f32.gmra.mrb[0].mxu0 %v7312
        %v7419 = vpop.f32.mrb[0].mxu0
        %v7420 = vadd.f32 0.0, %v7419
        %v7421 = vpop.f32.mrb[0].mxu0
        %7422 = vmatprep.mubr.f32.mxu0 0.0
        %7423 = vmatmul.mubr.f32.gmra.mrb[0].mxu0 %v7314
        %v7424 = vpop.f32.mrb[0].mxu0
        %v7425 = vadd.f32 0.0, %v7424
        %v7426 = vpop.f32.mrb[0].mxu0
        %7427 = vmatprep.mubr.f32.mxu0 0.0
        %7428 = vmatmul.mubr.f32.gmra.mrb[0].mxu0 %v7316
        %v7429 = vpop.f32.mrb[0].mxu0
        %v7430 = vadd.f32 0.0, %v7429
        %v7431 = vpop.f32.mrb[0].mxu0
        %7432 = vmatprep.mubr.f32.mxu0 0.0
        %7433 = vmatmul.mubr.f32.gmra.mrb[0].mxu0 %v7318
        %v7434 = vpop.f32.mrb[0].mxu0
        %v7435 = vadd.f32 0.0, %v7434
        %v7436 = vpop.f32.mrb[0].mxu0
        %7437 = vmatprep.mubr.f32.mxu0 0.0
        %7438 = vmatmul.mubr.f32.gmra.mrb[0].mxu0 %v7320
        %v7439 = vpop.f32.mrb[0].mxu0
        %v7440 = vadd.f32 0.0, %v7439
        %v7441 = vpop.f32.mrb[0].mxu0
        %7442 = vdwg.mxu0
        %7443 = vrot.lane.b32.xlu0 %v1329, 104
        %v7444 = vpop.permute.xlu0 %7443
        %7445 = vrot.lane.b32.xlu0 %v1330, 104
        %v7446 = vpop.permute.xlu0 %7445
        %7447 = vrot.lane.b32.xlu0 %v1331, 104
        %v7448 = vpop.permute.xlu0 %7447
        %7449 = vrot.lane.b32.xlu0 %v1332, 104
        %v7450 = vpop.permute.xlu0 %7449
        %7451 = vrot.lane.b32.xlu0 %v1333, 104
        %v7452 = vpop.permute.xlu0 %7451
        %7453 = vrot.lane.b32.xlu0 %v1334, 104
        %v7454 = vpop.permute.xlu0 %7453
        %7455 = vrot.lane.b32.xlu0 %v1335, 104
        %v7456 = vpop.permute.xlu0 %7455
        %7457 = vrot.lane.b32.xlu0 %v1336, 104
        %v7458 = vpop.permute.xlu0 %7457
        %7459 = vrot.lane.b32.xlu0 %v1203, 72
        %v7460 = vpop.permute.xlu0 %7459
        %7461 = vrot.lane.b32.xlu0 %v1208, 72
        %v7462 = vpop.permute.xlu0 %7461
        %7463 = vrot.lane.b32.xlu0 %v1213, 72
        %v7464 = vpop.permute.xlu0 %7463
        %7465 = vrot.lane.b32.xlu0 %v1218, 72
        %v7466 = vpop.permute.xlu0 %7465
        %7467 = vrot.lane.b32.xlu0 %v1223, 72
        %v7468 = vpop.permute.xlu0 %7467
        %7469 = vrot.lane.b32.xlu0 %v1228, 72
        %v7470 = vpop.permute.xlu0 %7469
        %7471 = vrot.lane.b32.xlu0 %v1233, 72
        %v7472 = vpop.permute.xlu0 %7471
        %7473 = vrot.lane.b32.xlu0 %v1238, 72
        %v7474 = vpop.permute.xlu0 %7473
        %v7475 = vsel %vm1381, %v7444, 0
        %v7477 = vsel %vm1381, %v7446, 0
        %v7479 = vsel %vm1381, %v7448, 0
        %v7481 = vsel %vm1381, %v7450, 0
        %v7483 = vsel %vm1381, %v7452, 0
        %v7485 = vsel %vm1381, %v7454, 0
        %v7487 = vsel %vm1381, %v7456, 0
        %v7489 = vsel %vm1381, %v7458, 0
        %v7491 = vsel %vm1381, %v7460, 0
        %v7493 = vsel %vm1381, %v7462, 0
        %v7495 = vsel %vm1381, %v7464, 0
        %v7497 = vsel %vm1381, %v7466, 0
        %v7499 = vsel %vm1381, %v7468, 0
        %v7501 = vsel %vm1381, %v7470, 0
        %v7503 = vsel %vm1381, %v7472, 0
        %v7505 = vsel %vm1381, %v7474, 0
        %7507 = vmatprep.subr.mxu0 0.0
        %7508 = vmatpush1.xpose.msra.mxu0 %v7491
        %7509 = vmatprep.subr.mxu0 0.0
        %7510 = vmatpush1.xpose.msra.mxu0 %v7493
        %7511 = vmatprep.subr.mxu0 0.0
        %7512 = vmatpush1.xpose.msra.mxu0 %v7495
        %7513 = vmatprep.subr.mxu0 0.0
        %7514 = vmatpush1.xpose.msra.mxu0 %v7497
        %7515 = vmatprep.subr.mxu0 0.0
        %7516 = vmatpush1.xpose.msra.mxu0 %v7499
        %7517 = vmatprep.subr.mxu0 0.0
        %7518 = vmatpush1.xpose.msra.mxu0 %v7501
        %7519 = vmatprep.subr.mxu0 0.0
        %7520 = vmatpush1.xpose.msra.mxu0 %v7503
        %7521 = vmatprep.subr.mxu0 0.0
        %7522 = vmatpush1.xpose.msra.mxu0 %v7505
        %7523 = vmatprep.subr.mxu0 0.0
        %7524 = vmatpush1.xpose.msra.mxu0 0.0
        %7525 = vmatprep.subr.mxu0 0.0
        %7526 = vmatpush1.xpose.msra.mxu0 0.0
        %7527 = vmatprep.subr.mxu0 0.0
        %7528 = vmatpush1.xpose.msra.mxu0 0.0
        %7529 = vmatprep.subr.mxu0 0.0
        %7530 = vmatpush1.xpose.msra.mxu0 0.0
        %7531 = vmatprep.subr.mxu0 0.0
        %7532 = vmatpush1.xpose.msra.mxu0 0.0
        %7533 = vmatprep.subr.mxu0 0.0
        %7534 = vmatpush1.xpose.msra.mxu0 0.0
        %7535 = vmatprep.subr.mxu0 0.0
        %7536 = vmatpush1.xpose.msra.mxu0 0.0
        %7537 = vmatprep.subr.mxu0 0.0
        %7538 = vmatpush1.xpose.msra.mxu0 0.0
        %7539 = vmatprep.subr.mxu0 0.0
        %7540 = vmatpush1.xpose.msra.mxu0 0.0
        %7541 = vmatprep.subr.mxu0 0.0
        %7542 = vmatpush1.xpose.msra.mxu0 0.0
        %7543 = vmatprep.subr.mxu0 0.0
        %7544 = vmatpush1.xpose.msra.mxu0 0.0
        %7545 = vmatprep.subr.mxu0 0.0
        %7546 = vmatpush1.xpose.msra.mxu0 0.0
        %7547 = vmatprep.subr.mxu0 0.0
        %7548 = vmatpush1.xpose.msra.mxu0 0.0
        %7549 = vmatprep.subr.mxu0 0.0
        %7550 = vmatpush1.xpose.msra.mxu0 0.0
        %7551 = vmatprep.subr.mxu0 0.0
        %7552 = vmatpush1.xpose.msra.mxu0 0.0
        %7553 = vmatprep.subr.mxu0 0.0
        %7554 = vmatpush1.xpose.msra.mxu0 0.0
        %7555 = vmatprep.subr.mxu0 0.0
        %7556 = vmatpush1.xpose.msra.mxu0 0.0
        %7557 = vmatprep.subr.mxu0 0.0
        %7558 = vmatpush1.xpose.msra.mxu0 0.0
        %7559 = vmatprep.subr.mxu0 0.0
        %7560 = vmatpush1.xpose.msra.mxu0 0.0
        %7561 = vmatprep.subr.mxu0 0.0
        %7562 = vmatpush1.xpose.msra.mxu0 0.0
        %7563 = vmatprep.subr.mxu0 0.0
        %7564 = vmatpush1.xpose.msra.mxu0 0.0
        %7565 = vmatprep.subr.mxu0 0.0
        %7566 = vmatpush1.xpose.msra.mxu0 0.0
        %7567 = vmatprep.subr.mxu0 0.0
        %7568 = vmatpush1.xpose.msra.mxu0 0.0
        %7569 = vmatprep.subr.mxu0 0.0
        %7570 = vmatpush1.xpose.msra.mxu0 0.0
        %7571 = vmatprep.mubr.f32.mxu0 0.0
        %7572 = vmatmul.mubr.f32.gmra.mrb[0].mxu0 %v7475
        %v7573 = vpop.f32.mrb[0].mxu0
        %v7574 = vadd.f32 0.0, %v7573
        %v7575 = vpop.f32.mrb[0].mxu0
        %7576 = vmatprep.mubr.f32.mxu0 0.0
        %7577 = vmatmul.mubr.f32.gmra.mrb[0].mxu0 %v7477
        %v7578 = vpop.f32.mrb[0].mxu0
        %v7579 = vadd.f32 0.0, %v7578
        %v7580 = vpop.f32.mrb[0].mxu0
        %7581 = vmatprep.mubr.f32.mxu0 0.0
        %7582 = vmatmul.mubr.f32.gmra.mrb[0].mxu0 %v7479
        %v7583 = vpop.f32.mrb[0].mxu0
        %v7584 = vadd.f32 0.0, %v7583
        %v7585 = vpop.f32.mrb[0].mxu0
        %7586 = vmatprep.mubr.f32.mxu0 0.0
        %7587 = vmatmul.mubr.f32.gmra.mrb[0].mxu0 %v7481
        %v7588 = vpop.f32.mrb[0].mxu0
        %v7589 = vadd.f32 0.0, %v7588
        %v7590 = vpop.f32.mrb[0].mxu0
        %7591 = vmatprep.mubr.f32.mxu0 0.0
        %7592 = vmatmul.mubr.f32.gmra.mrb[0].mxu0 %v7483
        %v7593 = vpop.f32.mrb[0].mxu0
        %v7594 = vadd.f32 0.0, %v7593
        %v7595 = vpop.f32.mrb[0].mxu0
        %7596 = vmatprep.mubr.f32.mxu0 0.0
        %7597 = vmatmul.mubr.f32.gmra.mrb[0].mxu0 %v7485
        %v7598 = vpop.f32.mrb[0].mxu0
        %v7599 = vadd.f32 0.0, %v7598
        %v7600 = vpop.f32.mrb[0].mxu0
        %7601 = vmatprep.mubr.f32.mxu0 0.0
        %7602 = vmatmul.mubr.f32.gmra.mrb[0].mxu0 %v7487
        %v7603 = vpop.f32.mrb[0].mxu0
        %v7604 = vadd.f32 0.0, %v7603
        %v7605 = vpop.f32.mrb[0].mxu0
        %7606 = vmatprep.mubr.f32.mxu0 0.0
        %7607 = vmatmul.mubr.f32.gmra.mrb[0].mxu0 %v7489
        %v7608 = vpop.f32.mrb[0].mxu0
        %v7609 = vadd.f32 0.0, %v7608
        %v7610 = vpop.f32.mrb[0].mxu0
        %7611 = vdwg.mxu0
        %7612 = vrot.lane.b32.xlu0 %v1337, 104
        %v7613 = vpop.permute.xlu0 %7612
        %7614 = vrot.lane.b32.xlu0 %v1338, 104
        %v7615 = vpop.permute.xlu0 %7614
        %7616 = vrot.lane.b32.xlu0 %v1339, 104
        %v7617 = vpop.permute.xlu0 %7616
        %7618 = vrot.lane.b32.xlu0 %v1340, 104
        %v7619 = vpop.permute.xlu0 %7618
        %7620 = vrot.lane.b32.xlu0 %v1341, 104
        %v7621 = vpop.permute.xlu0 %7620
        %7622 = vrot.lane.b32.xlu0 %v1342, 104
        %v7623 = vpop.permute.xlu0 %7622
        %7624 = vrot.lane.b32.xlu0 %v1343, 104
        %v7625 = vpop.permute.xlu0 %7624
        %7626 = vrot.lane.b32.xlu0 %v1344, 104
        %v7627 = vpop.permute.xlu0 %7626
        %7628 = vrot.lane.b32.xlu0 %v1243, 72
        %v7629 = vpop.permute.xlu0 %7628
        %7630 = vrot.lane.b32.xlu0 %v1248, 72
        %v7631 = vpop.permute.xlu0 %7630
        %7632 = vrot.lane.b32.xlu0 %v1253, 72
        %v7633 = vpop.permute.xlu0 %7632
        %7634 = vrot.lane.b32.xlu0 %v1258, 72
        %v7635 = vpop.permute.xlu0 %7634
        %7636 = vrot.lane.b32.xlu0 %v1263, 72
        %v7637 = vpop.permute.xlu0 %7636
        %7638 = vrot.lane.b32.xlu0 %v1268, 72
        %v7639 = vpop.permute.xlu0 %7638
        %7640 = vrot.lane.b32.xlu0 %v1273, 72
        %v7641 = vpop.permute.xlu0 %7640
        %7642 = vrot.lane.b32.xlu0 %v1278, 72
        %v7643 = vpop.permute.xlu0 %7642
        %v7644 = vsel %vm1381, %v7613, 0
        %v7646 = vsel %vm1381, %v7615, 0
        %v7648 = vsel %vm1381, %v7617, 0
        %v7650 = vsel %vm1381, %v7619, 0
        %v7652 = vsel %vm1381, %v7621, 0
        %v7654 = vsel %vm1381, %v7623, 0
        %v7656 = vsel %vm1381, %v7625, 0
        %v7658 = vsel %vm1381, %v7627, 0
        %v7660 = vsel %vm1381, %v7629, 0
        %v7662 = vsel %vm1381, %v7631, 0
        %v7664 = vsel %vm1381, %v7633, 0
        %v7666 = vsel %vm1381, %v7635, 0
        %v7668 = vsel %vm1381, %v7637, 0
        %v7670 = vsel %vm1381, %v7639, 0
        %v7672 = vsel %vm1381, %v7641, 0
        %v7674 = vsel %vm1381, %v7643, 0
        %7676 = vmatprep.subr.mxu0 0.0
        %7677 = vmatpush1.xpose.msra.mxu0 %v7660
        %7678 = vmatprep.subr.mxu0 0.0
        %7679 = vmatpush1.xpose.msra.mxu0 %v7662
        %7680 = vmatprep.subr.mxu0 0.0
        %7681 = vmatpush1.xpose.msra.mxu0 %v7664
        %7682 = vmatprep.subr.mxu0 0.0
        %7683 = vmatpush1.xpose.msra.mxu0 %v7666
        %7684 = vmatprep.subr.mxu0 0.0
        %7685 = vmatpush1.xpose.msra.mxu0 %v7668
        %7686 = vmatprep.subr.mxu0 0.0
        %7687 = vmatpush1.xpose.msra.mxu0 %v7670
        %7688 = vmatprep.subr.mxu0 0.0
        %7689 = vmatpush1.xpose.msra.mxu0 %v7672
        %7690 = vmatprep.subr.mxu0 0.0
        %7691 = vmatpush1.xpose.msra.mxu0 %v7674
        %7692 = vmatprep.subr.mxu0 0.0
        %7693 = vmatpush1.xpose.msra.mxu0 0.0
        %7694 = vmatprep.subr.mxu0 0.0
        %7695 = vmatpush1.xpose.msra.mxu0 0.0
        %7696 = vmatprep.subr.mxu0 0.0
        %7697 = vmatpush1.xpose.msra.mxu0 0.0
        %7698 = vmatprep.subr.mxu0 0.0
        %7699 = vmatpush1.xpose.msra.mxu0 0.0
        %7700 = vmatprep.subr.mxu0 0.0
        %7701 = vmatpush1.xpose.msra.mxu0 0.0
        %7702 = vmatprep.subr.mxu0 0.0
        %7703 = vmatpush1.xpose.msra.mxu0 0.0
        %7704 = vmatprep.subr.mxu0 0.0
        %7705 = vmatpush1.xpose.msra.mxu0 0.0
        %7706 = vmatprep.subr.mxu0 0.0
        %7707 = vmatpush1.xpose.msra.mxu0 0.0
        %7708 = vmatprep.subr.mxu0 0.0
        %7709 = vmatpush1.xpose.msra.mxu0 0.0
        %7710 = vmatprep.subr.mxu0 0.0
        %7711 = vmatpush1.xpose.msra.mxu0 0.0
        %7712 = vmatprep.subr.mxu0 0.0
        %7713 = vmatpush1.xpose.msra.mxu0 0.0
        %7714 = vmatprep.subr.mxu0 0.0
        %7715 = vmatpush1.xpose.msra.mxu0 0.0
        %7716 = vmatprep.subr.mxu0 0.0
        %7717 = vmatpush1.xpose.msra.mxu0 0.0
        %7718 = vmatprep.subr.mxu0 0.0
        %7719 = vmatpush1.xpose.msra.mxu0 0.0
        %7720 = vmatprep.subr.mxu0 0.0
        %7721 = vmatpush1.xpose.msra.mxu0 0.0
        %7722 = vmatprep.subr.mxu0 0.0
        %7723 = vmatpush1.xpose.msra.mxu0 0.0
        %7724 = vmatprep.subr.mxu0 0.0
        %7725 = vmatpush1.xpose.msra.mxu0 0.0
        %7726 = vmatprep.subr.mxu0 0.0
        %7727 = vmatpush1.xpose.msra.mxu0 0.0
        %7728 = vmatprep.subr.mxu0 0.0
        %7729 = vmatpush1.xpose.msra.mxu0 0.0
        %7730 = vmatprep.subr.mxu0 0.0
        %7731 = vmatpush1.xpose.msra.mxu0 0.0
        %7732 = vmatprep.subr.mxu0 0.0
        %7733 = vmatpush1.xpose.msra.mxu0 0.0
        %7734 = vmatprep.subr.mxu0 0.0
        %7735 = vmatpush1.xpose.msra.mxu0 0.0
        %7736 = vmatprep.subr.mxu0 0.0
        %7737 = vmatpush1.xpose.msra.mxu0 0.0
        %7738 = vmatprep.subr.mxu0 0.0
        %7739 = vmatpush1.xpose.msra.mxu0 0.0
        %7740 = vmatprep.mubr.f32.mxu0 0.0
        %7741 = vmatmul.mubr.f32.gmra.mrb[0].mxu0 %v7644
        %v7742 = vpop.f32.mrb[0].mxu0
        %v7743 = vadd.f32 0.0, %v7742
        %v7744 = vpop.f32.mrb[0].mxu0
        %7745 = vmatprep.mubr.f32.mxu0 0.0
        %7746 = vmatmul.mubr.f32.gmra.mrb[0].mxu0 %v7646
        %v7747 = vpop.f32.mrb[0].mxu0
        %v7748 = vadd.f32 0.0, %v7747
        %v7749 = vpop.f32.mrb[0].mxu0
        %7750 = vmatprep.mubr.f32.mxu0 0.0
        %7751 = vmatmul.mubr.f32.gmra.mrb[0].mxu0 %v7648
        %v7752 = vpop.f32.mrb[0].mxu0
        %v7753 = vadd.f32 0.0, %v7752
        %v7754 = vpop.f32.mrb[0].mxu0
        %7755 = vmatprep.mubr.f32.mxu0 0.0
        %7756 = vmatmul.mubr.f32.gmra.mrb[0].mxu0 %v7650
        %v7757 = vpop.f32.mrb[0].mxu0
        %v7758 = vadd.f32 0.0, %v7757
        %v7759 = vpop.f32.mrb[0].mxu0
        %7760 = vmatprep.mubr.f32.mxu0 0.0
        %7761 = vmatmul.mubr.f32.gmra.mrb[0].mxu0 %v7652
        %v7762 = vpop.f32.mrb[0].mxu0
        %v7763 = vadd.f32 0.0, %v7762
        %v7764 = vpop.f32.mrb[0].mxu0
        %7765 = vmatprep.mubr.f32.mxu0 0.0
        %7766 = vmatmul.mubr.f32.gmra.mrb[0].mxu0 %v7654
        %v7767 = vpop.f32.mrb[0].mxu0
        %v7768 = vadd.f32 0.0, %v7767
        %v7769 = vpop.f32.mrb[0].mxu0
        %7770 = vmatprep.mubr.f32.mxu0 0.0
        %7771 = vmatmul.mubr.f32.gmra.mrb[0].mxu0 %v7656
        %v7772 = vpop.f32.mrb[0].mxu0
        %v7773 = vadd.f32 0.0, %v7772
        %v7774 = vpop.f32.mrb[0].mxu0
        %7775 = vmatprep.mubr.f32.mxu0 0.0
        %7776 = vmatmul.mubr.f32.gmra.mrb[0].mxu0 %v7658
        %v7777 = vpop.f32.mrb[0].mxu0
        %v7778 = vadd.f32 0.0, %v7777
        %v7779 = vpop.f32.mrb[0].mxu0
        %7780 = vdwg.mxu0
        %7781 = vrot.lane.b32.xlu0 %v1345, 104
        %v7782 = vpop.permute.xlu0 %7781
        %7783 = vrot.lane.b32.xlu0 %v1346, 104
        %v7784 = vpop.permute.xlu0 %7783
        %7785 = vrot.lane.b32.xlu0 %v1347, 104
        %v7786 = vpop.permute.xlu0 %7785
        %7787 = vrot.lane.b32.xlu0 %v1348, 104
        %v7788 = vpop.permute.xlu0 %7787
        %7789 = vrot.lane.b32.xlu0 %v1349, 104
        %v7790 = vpop.permute.xlu0 %7789
        %7791 = vrot.lane.b32.xlu0 %v1350, 104
        %v7792 = vpop.permute.xlu0 %7791
        %7793 = vrot.lane.b32.xlu0 %v1351, 104
        %v7794 = vpop.permute.xlu0 %7793
        %7795 = vrot.lane.b32.xlu0 %v1352, 104
        %v7796 = vpop.permute.xlu0 %7795
        %7797 = vrot.lane.b32.xlu0 %v1283, 72
        %v7798 = vpop.permute.xlu0 %7797
        %7799 = vrot.lane.b32.xlu0 %v1288, 72
        %v7800 = vpop.permute.xlu0 %7799
        %7801 = vrot.lane.b32.xlu0 %v1293, 72
        %v7802 = vpop.permute.xlu0 %7801
        %7803 = vrot.lane.b32.xlu0 %v1298, 72
        %v7804 = vpop.permute.xlu0 %7803
        %7805 = vrot.lane.b32.xlu0 %v1303, 72
        %v7806 = vpop.permute.xlu0 %7805
        %7807 = vrot.lane.b32.xlu0 %v1308, 72
        %v7808 = vpop.permute.xlu0 %7807
        %7809 = vrot.lane.b32.xlu0 %v1313, 72
        %v7810 = vpop.permute.xlu0 %7809
        %7811 = vrot.lane.b32.xlu0 %v1318, 72
        %v7812 = vpop.permute.xlu0 %7811
        %v7813 = vsel %vm1381, %v7782, 0
        %v7815 = vsel %vm1381, %v7784, 0
        %v7817 = vsel %vm1381, %v7786, 0
        %v7819 = vsel %vm1381, %v7788, 0
        %v7821 = vsel %vm1381, %v7790, 0
        %v7823 = vsel %vm1381, %v7792, 0
        %v7825 = vsel %vm1381, %v7794, 0
        %v7827 = vsel %vm1381, %v7796, 0
        %v7829 = vsel %vm1381, %v7798, 0
        %v7831 = vsel %vm1381, %v7800, 0
        %v7833 = vsel %vm1381, %v7802, 0
        %v7835 = vsel %vm1381, %v7804, 0
        %v7837 = vsel %vm1381, %v7806, 0
        %v7839 = vsel %vm1381, %v7808, 0
        %v7841 = vsel %vm1381, %v7810, 0
        %v7843 = vsel %vm1381, %v7812, 0
        %7845 = vmatprep.subr.mxu0 0.0
        %7846 = vmatpush1.xpose.msra.mxu0 %v7829
        %7847 = vmatprep.subr.mxu0 0.0
        %7848 = vmatpush1.xpose.msra.mxu0 %v7831
        %7849 = vmatprep.subr.mxu0 0.0
        %7850 = vmatpush1.xpose.msra.mxu0 %v7833
        %7851 = vmatprep.subr.mxu0 0.0
        %7852 = vmatpush1.xpose.msra.mxu0 %v7835
        %7853 = vmatprep.subr.mxu0 0.0
        %7854 = vmatpush1.xpose.msra.mxu0 %v7837
        %7855 = vmatprep.subr.mxu0 0.0
        %7856 = vmatpush1.xpose.msra.mxu0 %v7839
        %7857 = vmatprep.subr.mxu0 0.0
        %7858 = vmatpush1.xpose.msra.mxu0 %v7841
        %7859 = vmatprep.subr.mxu0 0.0
        %7860 = vmatpush1.xpose.msra.mxu0 %v7843
        %7861 = vmatprep.subr.mxu0 0.0
        %7862 = vmatpush1.xpose.msra.mxu0 0.0
        %7863 = vmatprep.subr.mxu0 0.0
        %7864 = vmatpush1.xpose.msra.mxu0 0.0
        %7865 = vmatprep.subr.mxu0 0.0
        %7866 = vmatpush1.xpose.msra.mxu0 0.0
        %7867 = vmatprep.subr.mxu0 0.0
        %7868 = vmatpush1.xpose.msra.mxu0 0.0
        %7869 = vmatprep.subr.mxu0 0.0
        %7870 = vmatpush1.xpose.msra.mxu0 0.0
        %7871 = vmatprep.subr.mxu0 0.0
        %7872 = vmatpush1.xpose.msra.mxu0 0.0
        %7873 = vmatprep.subr.mxu0 0.0
        %7874 = vmatpush1.xpose.msra.mxu0 0.0
        %7875 = vmatprep.subr.mxu0 0.0
        %7876 = vmatpush1.xpose.msra.mxu0 0.0
        %7877 = vmatprep.subr.mxu0 0.0
        %7878 = vmatpush1.xpose.msra.mxu0 0.0
        %7879 = vmatprep.subr.mxu0 0.0
        %7880 = vmatpush1.xpose.msra.mxu0 0.0
        %7881 = vmatprep.subr.mxu0 0.0
        %7882 = vmatpush1.xpose.msra.mxu0 0.0
        %7883 = vmatprep.subr.mxu0 0.0
        %7884 = vmatpush1.xpose.msra.mxu0 0.0
        %7885 = vmatprep.subr.mxu0 0.0
        %7886 = vmatpush1.xpose.msra.mxu0 0.0
        %7887 = vmatprep.subr.mxu0 0.0
        %7888 = vmatpush1.xpose.msra.mxu0 0.0
        %7889 = vmatprep.subr.mxu0 0.0
        %7890 = vmatpush1.xpose.msra.mxu0 0.0
        %7891 = vmatprep.subr.mxu0 0.0
        %7892 = vmatpush1.xpose.msra.mxu0 0.0
        %7893 = vmatprep.subr.mxu0 0.0
        %7894 = vmatpush1.xpose.msra.mxu0 0.0
        %7895 = vmatprep.subr.mxu0 0.0
        %7896 = vmatpush1.xpose.msra.mxu0 0.0
        %7897 = vmatprep.subr.mxu0 0.0
        %7898 = vmatpush1.xpose.msra.mxu0 0.0
        %7899 = vmatprep.subr.mxu0 0.0
        %7900 = vmatpush1.xpose.msra.mxu0 0.0
        %7901 = vmatprep.subr.mxu0 0.0
        %7902 = vmatpush1.xpose.msra.mxu0 0.0
        %7903 = vmatprep.subr.mxu0 0.0
        %7904 = vmatpush1.xpose.msra.mxu0 0.0
        %7905 = vmatprep.subr.mxu0 0.0
        %7906 = vmatpush1.xpose.msra.mxu0 0.0
        %7907 = vmatprep.subr.mxu0 0.0
        %7908 = vmatpush1.xpose.msra.mxu0 0.0
        %7909 = vmatprep.mubr.f32.mxu0 0.0
        %7910 = vmatmul.mubr.f32.gmra.mrb[0].mxu0 %v7813
        %v7911 = vpop.f32.mrb[0].mxu0
        %v7912 = vadd.f32 0.0, %v7911
        %v7913 = vpop.f32.mrb[0].mxu0
        %7914 = vmatprep.mubr.f32.mxu0 0.0
        %7915 = vmatmul.mubr.f32.gmra.mrb[0].mxu0 %v7815
        %v7916 = vpop.f32.mrb[0].mxu0
        %v7917 = vadd.f32 0.0, %v7916
        %v7918 = vpop.f32.mrb[0].mxu0
        %7919 = vmatprep.mubr.f32.mxu0 0.0
        %7920 = vmatmul.mubr.f32.gmra.mrb[0].mxu0 %v7817
        %v7921 = vpop.f32.mrb[0].mxu0
        %v7922 = vadd.f32 0.0, %v7921
        %v7923 = vpop.f32.mrb[0].mxu0
        %7924 = vmatprep.mubr.f32.mxu0 0.0
        %7925 = vmatmul.mubr.f32.gmra.mrb[0].mxu0 %v7819
        %v7926 = vpop.f32.mrb[0].mxu0
        %v7927 = vadd.f32 0.0, %v7926
        %v7928 = vpop.f32.mrb[0].mxu0
        %7929 = vmatprep.mubr.f32.mxu0 0.0
        %7930 = vmatmul.mubr.f32.gmra.mrb[0].mxu0 %v7821
        %v7931 = vpop.f32.mrb[0].mxu0
        %v7932 = vadd.f32 0.0, %v7931
        %v7933 = vpop.f32.mrb[0].mxu0
        %7934 = vmatprep.mubr.f32.mxu0 0.0
        %7935 = vmatmul.mubr.f32.gmra.mrb[0].mxu0 %v7823
        %v7936 = vpop.f32.mrb[0].mxu0
        %v7937 = vadd.f32 0.0, %v7936
        %v7938 = vpop.f32.mrb[0].mxu0
        %7939 = vmatprep.mubr.f32.mxu0 0.0
        %7940 = vmatmul.mubr.f32.gmra.mrb[0].mxu0 %v7825
        %v7941 = vpop.f32.mrb[0].mxu0
        %v7942 = vadd.f32 0.0, %v7941
        %v7943 = vpop.f32.mrb[0].mxu0
        %7944 = vmatprep.mubr.f32.mxu0 0.0
        %7945 = vmatmul.mubr.f32.gmra.mrb[0].mxu0 %v7827
        %v7946 = vpop.f32.mrb[0].mxu0
        %v7947 = vadd.f32 0.0, %v7946
        %v7948 = vpop.f32.mrb[0].mxu0
        %7949 = vdwg.mxu0
        %v7950 = vsel %vm2034, %v7405, -inf
        %7951 = vmax.xlane.f32.xlu0 %v7950
        %v7952 = vpop.xlane.xlu0 %7951
        %v7953 = vsel %vm2034, %v7410, -inf
        %7954 = vmax.xlane.f32.xlu0 %v7953
        %v7955 = vpop.xlane.xlu0 %7954
        %v7956 = vsel %vm2034, %v7415, -inf
        %7957 = vmax.xlane.f32.xlu0 %v7956
        %v7958 = vpop.xlane.xlu0 %7957
        %v7959 = vsel %vm2034, %v7420, -inf
        %7960 = vmax.xlane.f32.xlu0 %v7959
        %v7961 = vpop.xlane.xlu0 %7960
        %v7962 = vsel %vm2034, %v7425, -inf
        %7963 = vmax.xlane.f32.xlu0 %v7962
        %v7964 = vpop.xlane.xlu0 %7963
        %v7965 = vsel %vm2034, %v7430, -inf
        %7966 = vmax.xlane.f32.xlu0 %v7965
        %v7967 = vpop.xlane.xlu0 %7966
        %v7968 = vsel %vm2034, %v7435, -inf
        %7969 = vmax.xlane.f32.xlu0 %v7968
        %v7970 = vpop.xlane.xlu0 %7969
        %v7971 = vsel %vm2034, %v7440, -inf
        %7972 = vmax.xlane.f32.xlu0 %v7971
        %v7973 = vpop.xlane.xlu0 %7972
        %v7974 = vsel %vm2034, %v7574, -inf
        %7975 = vmax.xlane.f32.xlu0 %v7974
        %v7976 = vpop.xlane.xlu0 %7975
        %v7977 = vsel %vm2034, %v7579, -inf
        %7978 = vmax.xlane.f32.xlu0 %v7977
        %v7979 = vpop.xlane.xlu0 %7978
        %v7980 = vsel %vm2034, %v7584, -inf
        %7981 = vmax.xlane.f32.xlu0 %v7980
        %v7982 = vpop.xlane.xlu0 %7981
        %v7983 = vsel %vm2034, %v7589, -inf
        %7984 = vmax.xlane.f32.xlu0 %v7983
        %v7985 = vpop.xlane.xlu0 %7984
        %v7986 = vsel %vm2034, %v7594, -inf
        %7987 = vmax.xlane.f32.xlu0 %v7986
        %v7988 = vpop.xlane.xlu0 %7987
        %v7989 = vsel %vm2034, %v7599, -inf
        %7990 = vmax.xlane.f32.xlu0 %v7989
        %v7991 = vpop.xlane.xlu0 %7990
        %v7992 = vsel %vm2034, %v7604, -inf
        %7993 = vmax.xlane.f32.xlu0 %v7992
        %v7994 = vpop.xlane.xlu0 %7993
        %v7995 = vsel %vm2034, %v7609, -inf
        %7996 = vmax.xlane.f32.xlu0 %v7995
        %v7997 = vpop.xlane.xlu0 %7996
        %v7998 = vsel %vm2034, %v7743, -inf
        %7999 = vmax.xlane.f32.xlu0 %v7998
        %v8000 = vpop.xlane.xlu0 %7999
        %v8001 = vsel %vm2034, %v7748, -inf
        %8002 = vmax.xlane.f32.xlu0 %v8001
        %v8003 = vpop.xlane.xlu0 %8002
        %v8004 = vsel %vm2034, %v7753, -inf
        %8005 = vmax.xlane.f32.xlu0 %v8004
        %v8006 = vpop.xlane.xlu0 %8005
        %v8007 = vsel %vm2034, %v7758, -inf
        %8008 = vmax.xlane.f32.xlu0 %v8007
        %v8009 = vpop.xlane.xlu0 %8008
        %v8010 = vsel %vm2034, %v7763, -inf
        %8011 = vmax.xlane.f32.xlu0 %v8010
        %v8012 = vpop.xlane.xlu0 %8011
        %v8013 = vsel %vm2034, %v7768, -inf
        %8014 = vmax.xlane.f32.xlu0 %v8013
        %v8015 = vpop.xlane.xlu0 %8014
        %v8016 = vsel %vm2034, %v7773, -inf
        %8017 = vmax.xlane.f32.xlu0 %v8016
        %v8018 = vpop.xlane.xlu0 %8017
        %v8019 = vsel %vm2034, %v7778, -inf
        %8020 = vmax.xlane.f32.xlu0 %v8019
        %v8021 = vpop.xlane.xlu0 %8020
        %v8022 = vsel %vm2034, %v7912, -inf
        %8023 = vmax.xlane.f32.xlu0 %v8022
        %v8024 = vpop.xlane.xlu0 %8023
        %v8025 = vsel %vm2034, %v7917, -inf
        %8026 = vmax.xlane.f32.xlu0 %v8025
        %v8027 = vpop.xlane.xlu0 %8026
        %v8028 = vsel %vm2034, %v7922, -inf
        %8029 = vmax.xlane.f32.xlu0 %v8028
        %v8030 = vpop.xlane.xlu0 %8029
        %v8031 = vsel %vm2034, %v7927, -inf
        %8032 = vmax.xlane.f32.xlu0 %v8031
        %v8033 = vpop.xlane.xlu0 %8032
        %v8034 = vsel %vm2034, %v7932, -inf
        %8035 = vmax.xlane.f32.xlu0 %v8034
        %v8036 = vpop.xlane.xlu0 %8035
        %v8037 = vsel %vm2034, %v7937, -inf
        %8038 = vmax.xlane.f32.xlu0 %v8037
        %v8039 = vpop.xlane.xlu0 %8038
        %v8040 = vsel %vm2034, %v7942, -inf
        %8041 = vmax.xlane.f32.xlu0 %v8040
        %v8042 = vpop.xlane.xlu0 %8041
        %v8043 = vsel %vm2034, %v7947, -inf
        %8044 = vmax.xlane.f32.xlu0 %v8043
        %v8045 = vpop.xlane.xlu0 %8044
        %v8046 = vsub.f32 %v7405, %v7952
        %v8047 = vsub.f32 %v7410, %v7955
        %v8048 = vsub.f32 %v7415, %v7958
        %v8049 = vsub.f32 %v7420, %v7961
        %v8050 = vsub.f32 %v7425, %v7964
        %v8051 = vsub.f32 %v7430, %v7967
        %v8052 = vsub.f32 %v7435, %v7970
        %v8053 = vsub.f32 %v7440, %v7973
        %v8054 = vsub.f32 %v7574, %v7976
        %v8055 = vsub.f32 %v7579, %v7979
        %v8056 = vsub.f32 %v7584, %v7982
        %v8057 = vsub.f32 %v7589, %v7985
        %v8058 = vsub.f32 %v7594, %v7988
        %v8059 = vsub.f32 %v7599, %v7991
        %v8060 = vsub.f32 %v7604, %v7994
        %v8061 = vsub.f32 %v7609, %v7997
        %v8062 = vsub.f32 %v7743, %v8000
        %v8063 = vsub.f32 %v7748, %v8003
        %v8064 = vsub.f32 %v7753, %v8006
        %v8065 = vsub.f32 %v7758, %v8009
        %v8066 = vsub.f32 %v7763, %v8012
        %v8067 = vsub.f32 %v7768, %v8015
        %v8068 = vsub.f32 %v7773, %v8018
        %v8069 = vsub.f32 %v7778, %v8021
        %v8070 = vsub.f32 %v7912, %v8024
        %v8071 = vsub.f32 %v7917, %v8027
        %v8072 = vsub.f32 %v7922, %v8030
        %v8073 = vsub.f32 %v7927, %v8033
        %v8074 = vsub.f32 %v7932, %v8036
        %v8075 = vsub.f32 %v7937, %v8039
        %v8076 = vsub.f32 %v7942, %v8042
        %v8077 = vsub.f32 %v7947, %v8045
        %v8078 = vmul.f32 %v8046, 1.442695
        %v8079 = vpow.pop %v8078
        %v8080 = vmul.f32 %v8047, 1.442695
        %v8081 = vpow.pop %v8080
        %v8082 = vmul.f32 %v8048, 1.442695
        %v8083 = vpow.pop %v8082
        %v8084 = vmul.f32 %v8049, 1.442695
        %v8085 = vpow.pop %v8084
        %v8086 = vmul.f32 %v8050, 1.442695
        %v8087 = vpow.pop %v8086
        %v8088 = vmul.f32 %v8051, 1.442695
        %v8089 = vpow.pop %v8088
        %v8090 = vmul.f32 %v8052, 1.442695
        %v8091 = vpow.pop %v8090
        %v8092 = vmul.f32 %v8053, 1.442695
        %v8093 = vpow.pop %v8092
        %v8094 = vmul.f32 %v8054, 1.442695
        %v8095 = vpow.pop %v8094
        %v8096 = vmul.f32 %v8055, 1.442695
        %v8097 = vpow.pop %v8096
        %v8098 = vmul.f32 %v8056, 1.442695
        %v8099 = vpow.pop %v8098
        %v8100 = vmul.f32 %v8057, 1.442695
        %v8101 = vpow.pop %v8100
        %v8102 = vmul.f32 %v8058, 1.442695
        %v8103 = vpow.pop %v8102
        %v8104 = vmul.f32 %v8059, 1.442695
        %v8105 = vpow.pop %v8104
        %v8106 = vmul.f32 %v8060, 1.442695
        %v8107 = vpow.pop %v8106
        %v8108 = vmul.f32 %v8061, 1.442695
        %v8109 = vpow.pop %v8108
        %v8110 = vmul.f32 %v8062, 1.442695
        %v8111 = vpow.pop %v8110
        %v8112 = vmul.f32 %v8063, 1.442695
        %v8113 = vpow.pop %v8112
        %v8114 = vmul.f32 %v8064, 1.442695
        %v8115 = vpow.pop %v8114
        %v8116 = vmul.f32 %v8065, 1.442695
        %v8117 = vpow.pop %v8116
        %v8118 = vmul.f32 %v8066, 1.442695
        %v8119 = vpow.pop %v8118
        %v8120 = vmul.f32 %v8067, 1.442695
        %v8121 = vpow.pop %v8120
        %v8122 = vmul.f32 %v8068, 1.442695
        %v8123 = vpow.pop %v8122
        %v8124 = vmul.f32 %v8069, 1.442695
        %v8125 = vpow.pop %v8124
        %v8126 = vmul.f32 %v8070, 1.442695
        %v8127 = vpow.pop %v8126
        %v8128 = vmul.f32 %v8071, 1.442695
        %v8129 = vpow.pop %v8128
        %v8130 = vmul.f32 %v8072, 1.442695
        %v8131 = vpow.pop %v8130
        %v8132 = vmul.f32 %v8073, 1.442695
        %v8133 = vpow.pop %v8132
        %v8134 = vmul.f32 %v8074, 1.442695
        %v8135 = vpow.pop %v8134
        %v8136 = vmul.f32 %v8075, 1.442695
        %v8137 = vpow.pop %v8136
        %v8138 = vmul.f32 %v8076, 1.442695
        %v8139 = vpow.pop %v8138
        %v8140 = vmul.f32 %v8077, 1.442695
        %v8141 = vpow.pop %v8140
        %v8142 = vsel %vm2034, %v8079, 0.0
        %8143 = vadd.xlane.f32.xlu0 %v8142
        %v8144 = vpop.xlane.xlu0 %8143
        %v8145 = vsel %vm2034, %v8081, 0.0
        %8146 = vadd.xlane.f32.xlu0 %v8145
        %v8147 = vpop.xlane.xlu0 %8146
        %v8148 = vsel %vm2034, %v8083, 0.0
        %8149 = vadd.xlane.f32.xlu0 %v8148
        %v8150 = vpop.xlane.xlu0 %8149
        %v8151 = vsel %vm2034, %v8085, 0.0
        %8152 = vadd.xlane.f32.xlu0 %v8151
        %v8153 = vpop.xlane.xlu0 %8152
        %v8154 = vsel %vm2034, %v8087, 0.0
        %8155 = vadd.xlane.f32.xlu0 %v8154
        %v8156 = vpop.xlane.xlu0 %8155
        %v8157 = vsel %vm2034, %v8089, 0.0
        %8158 = vadd.xlane.f32.xlu0 %v8157
        %v8159 = vpop.xlane.xlu0 %8158
        %v8160 = vsel %vm2034, %v8091, 0.0
        %8161 = vadd.xlane.f32.xlu0 %v8160
        %v8162 = vpop.xlane.xlu0 %8161
        %v8163 = vsel %vm2034, %v8093, 0.0
        %8164 = vadd.xlane.f32.xlu0 %v8163
        %v8165 = vpop.xlane.xlu0 %8164
        %v8166 = vsel %vm2034, %v8095, 0.0
        %8167 = vadd.xlane.f32.xlu0 %v8166
        %v8168 = vpop.xlane.xlu0 %8167
        %v8169 = vsel %vm2034, %v8097, 0.0
        %8170 = vadd.xlane.f32.xlu0 %v8169
        %v8171 = vpop.xlane.xlu0 %8170
        %v8172 = vsel %vm2034, %v8099, 0.0
        %8173 = vadd.xlane.f32.xlu0 %v8172
        %v8174 = vpop.xlane.xlu0 %8173
        %v8175 = vsel %vm2034, %v8101, 0.0
        %8176 = vadd.xlane.f32.xlu0 %v8175
        %v8177 = vpop.xlane.xlu0 %8176
        %v8178 = vsel %vm2034, %v8103, 0.0
        %8179 = vadd.xlane.f32.xlu0 %v8178
        %v8180 = vpop.xlane.xlu0 %8179
        %v8181 = vsel %vm2034, %v8105, 0.0
        %8182 = vadd.xlane.f32.xlu0 %v8181
        %v8183 = vpop.xlane.xlu0 %8182
        %v8184 = vsel %vm2034, %v8107, 0.0
        %8185 = vadd.xlane.f32.xlu0 %v8184
        %v8186 = vpop.xlane.xlu0 %8185
        %v8187 = vsel %vm2034, %v8109, 0.0
        %8188 = vadd.xlane.f32.xlu0 %v8187
        %v8189 = vpop.xlane.xlu0 %8188
        %v8190 = vsel %vm2034, %v8111, 0.0
        %8191 = vadd.xlane.f32.xlu0 %v8190
        %v8192 = vpop.xlane.xlu0 %8191
        %v8193 = vsel %vm2034, %v8113, 0.0
        %8194 = vadd.xlane.f32.xlu0 %v8193
        %v8195 = vpop.xlane.xlu0 %8194
        %v8196 = vsel %vm2034, %v8115, 0.0
        %8197 = vadd.xlane.f32.xlu0 %v8196
        %v8198 = vpop.xlane.xlu0 %8197
        %v8199 = vsel %vm2034, %v8117, 0.0
        %8200 = vadd.xlane.f32.xlu0 %v8199
        %v8201 = vpop.xlane.xlu0 %8200
        %v8202 = vsel %vm2034, %v8119, 0.0
        %8203 = vadd.xlane.f32.xlu0 %v8202
        %v8204 = vpop.xlane.xlu0 %8203
        %v8205 = vsel %vm2034, %v8121, 0.0
        %8206 = vadd.xlane.f32.xlu0 %v8205
        %v8207 = vpop.xlane.xlu0 %8206
        %v8208 = vsel %vm2034, %v8123, 0.0
        %8209 = vadd.xlane.f32.xlu0 %v8208
        %v8210 = vpop.xlane.xlu0 %8209
        %v8211 = vsel %vm2034, %v8125, 0.0
        %8212 = vadd.xlane.f32.xlu0 %v8211
        %v8213 = vpop.xlane.xlu0 %8212
        %v8214 = vsel %vm2034, %v8127, 0.0
        %8215 = vadd.xlane.f32.xlu0 %v8214
        %v8216 = vpop.xlane.xlu0 %8215
        %v8217 = vsel %vm2034, %v8129, 0.0
        %8218 = vadd.xlane.f32.xlu0 %v8217
        %v8219 = vpop.xlane.xlu0 %8218
        %v8220 = vsel %vm2034, %v8131, 0.0
        %8221 = vadd.xlane.f32.xlu0 %v8220
        %v8222 = vpop.xlane.xlu0 %8221
        %v8223 = vsel %vm2034, %v8133, 0.0
        %8224 = vadd.xlane.f32.xlu0 %v8223
        %v8225 = vpop.xlane.xlu0 %8224
        %v8226 = vsel %vm2034, %v8135, 0.0
        %8227 = vadd.xlane.f32.xlu0 %v8226
        %v8228 = vpop.xlane.xlu0 %8227
        %v8229 = vsel %vm2034, %v8137, 0.0
        %8230 = vadd.xlane.f32.xlu0 %v8229
        %v8231 = vpop.xlane.xlu0 %8230
        %v8232 = vsel %vm2034, %v8139, 0.0
        %8233 = vadd.xlane.f32.xlu0 %v8232
        %v8234 = vpop.xlane.xlu0 %8233
        %v8235 = vsel %vm2034, %v8141, 0.0
        %8236 = vadd.xlane.f32.xlu0 %v8235
        %v8237 = vpop.xlane.xlu0 %8236
        %v8238 = vrcp.pop %v8144
        %v8239 = vrcp.pop %v8147
        %v8240 = vrcp.pop %v8150
        %v8241 = vrcp.pop %v8153
        %v8242 = vrcp.pop %v8156
        %v8243 = vrcp.pop %v8159
        %v8244 = vrcp.pop %v8162
        %v8245 = vrcp.pop %v8165
        %v8246 = vrcp.pop %v8168
        %v8247 = vrcp.pop %v8171
        %v8248 = vrcp.pop %v8174
        %v8249 = vrcp.pop %v8177
        %v8250 = vrcp.pop %v8180
        %v8251 = vrcp.pop %v8183
        %v8252 = vrcp.pop %v8186
        %v8253 = vrcp.pop %v8189
        %v8254 = vrcp.pop %v8192
        %v8255 = vrcp.pop %v8195
        %v8256 = vrcp.pop %v8198
        %v8257 = vrcp.pop %v8201
        %v8258 = vrcp.pop %v8204
        %v8259 = vrcp.pop %v8207
        %v8260 = vrcp.pop %v8210
        %v8261 = vrcp.pop %v8213
        %v8262 = vrcp.pop %v8216
        %v8263 = vrcp.pop %v8219
        %v8264 = vrcp.pop %v8222
        %v8265 = vrcp.pop %v8225
        %v8266 = vrcp.pop %v8228
        %v8267 = vrcp.pop %v8231
        %v8268 = vrcp.pop %v8234
        %v8269 = vrcp.pop %v8237
        %v8270 = vmul.f32 %v8079, %v8238
        %v8271 = vmul.f32 %v8081, %v8239
        %v8272 = vmul.f32 %v8083, %v8240
        %v8273 = vmul.f32 %v8085, %v8241
        %v8274 = vmul.f32 %v8087, %v8242
        %v8275 = vmul.f32 %v8089, %v8243
        %v8276 = vmul.f32 %v8091, %v8244
        %v8277 = vmul.f32 %v8093, %v8245
        %v8278 = vmul.f32 %v8095, %v8246
        %v8279 = vmul.f32 %v8097, %v8247
        %v8280 = vmul.f32 %v8099, %v8248
        %v8281 = vmul.f32 %v8101, %v8249
        %v8282 = vmul.f32 %v8103, %v8250
        %v8283 = vmul.f32 %v8105, %v8251
        %v8284 = vmul.f32 %v8107, %v8252
        %v8285 = vmul.f32 %v8109, %v8253
        %v8286 = vmul.f32 %v8111, %v8254
        %v8287 = vmul.f32 %v8113, %v8255
        %v8288 = vmul.f32 %v8115, %v8256
        %v8289 = vmul.f32 %v8117, %v8257
        %v8290 = vmul.f32 %v8119, %v8258
        %v8291 = vmul.f32 %v8121, %v8259
        %v8292 = vmul.f32 %v8123, %v8260
        %v8293 = vmul.f32 %v8125, %v8261
        %v8294 = vmul.f32 %v8127, %v8262
        %v8295 = vmul.f32 %v8129, %v8263
        %v8296 = vmul.f32 %v8131, %v8264
        %v8297 = vmul.f32 %v8133, %v8265
        %v8298 = vmul.f32 %v8135, %v8266
        %v8299 = vmul.f32 %v8137, %v8267
        %v8300 = vmul.f32 %v8139, %v8268
        %v8301 = vmul.f32 %v8141, %v8269
        %8302 = vrot.lane.b32.xlu0 %v1163, 40
        %v8303 = vpop.permute.xlu0 %8302
        %8304 = vrot.lane.b32.xlu0 %v1168, 40
        %v8305 = vpop.permute.xlu0 %8304
        %8306 = vrot.lane.b32.xlu0 %v1173, 40
        %v8307 = vpop.permute.xlu0 %8306
        %8308 = vrot.lane.b32.xlu0 %v1178, 40
        %v8309 = vpop.permute.xlu0 %8308
        %8310 = vrot.lane.b32.xlu0 %v1183, 40
        %v8311 = vpop.permute.xlu0 %8310
        %8312 = vrot.lane.b32.xlu0 %v1188, 40
        %v8313 = vpop.permute.xlu0 %8312
        %8314 = vrot.lane.b32.xlu0 %v1193, 40
        %v8315 = vpop.permute.xlu0 %8314
        %8316 = vrot.lane.b32.xlu0 %v1198, 40
        %v8317 = vpop.permute.xlu0 %8316
        %v8327 = vsel %vm2034, %v8270, 0
        %v8330 = vsel %vm2034, %v8271, 0
        %v8333 = vsel %vm2034, %v8272, 0
        %v8336 = vsel %vm2034, %v8273, 0
        %v8339 = vsel %vm2034, %v8274, 0
        %v8342 = vsel %vm2034, %v8275, 0
        %v8345 = vsel %vm2034, %v8276, 0
        %v8348 = vsel %vm2034, %v8277, 0
        %8350 = vmatprep.subr.mxu0 0.0
        %8351 = vmatpush1.msra.mxu0 %v8303
        %8352 = vmatprep.subr.mxu0 0.0
        %8353 = vmatpush1.msra.mxu0 %v8305
        %8354 = vmatprep.subr.mxu0 0.0
        %8355 = vmatpush1.msra.mxu0 %v8307
        %8356 = vmatprep.subr.mxu0 0.0
        %8357 = vmatpush1.msra.mxu0 %v8309
        %8358 = vmatprep.subr.mxu0 0.0
        %8359 = vmatpush1.msra.mxu0 %v8311
        %8360 = vmatprep.subr.mxu0 0.0
        %8361 = vmatpush1.msra.mxu0 %v8313
        %8362 = vmatprep.subr.mxu0 0.0
        %8363 = vmatpush1.msra.mxu0 %v8315
        %8364 = vmatprep.subr.mxu0 0.0
        %8365 = vmatpush1.msra.mxu0 %v8317
        %8366 = vmatprep.subr.mxu0 0.0
        %8367 = vmatpush1.msra.mxu0 0.0
        %8368 = vmatprep.subr.mxu0 0.0
        %8369 = vmatpush1.msra.mxu0 0.0
        %8370 = vmatprep.subr.mxu0 0.0
        %8371 = vmatpush1.msra.mxu0 0.0
        %8372 = vmatprep.subr.mxu0 0.0
        %8373 = vmatpush1.msra.mxu0 0.0
        %8374 = vmatprep.subr.mxu0 0.0
        %8375 = vmatpush1.msra.mxu0 0.0
        %8376 = vmatprep.subr.mxu0 0.0
        %8377 = vmatpush1.msra.mxu0 0.0
        %8378 = vmatprep.subr.mxu0 0.0
        %8379 = vmatpush1.msra.mxu0 0.0
        %8380 = vmatprep.subr.mxu0 0.0
        %8381 = vmatpush1.msra.mxu0 0.0
        %8382 = vmatprep.subr.mxu0 0.0
        %8383 = vmatpush1.msra.mxu0 0.0
        %8384 = vmatprep.subr.mxu0 0.0
        %8385 = vmatpush1.msra.mxu0 0.0
        %8386 = vmatprep.subr.mxu0 0.0
        %8387 = vmatpush1.msra.mxu0 0.0
        %8388 = vmatprep.subr.mxu0 0.0
        %8389 = vmatpush1.msra.mxu0 0.0
        %8390 = vmatprep.subr.mxu0 0.0
        %8391 = vmatpush1.msra.mxu0 0.0
        %8392 = vmatprep.subr.mxu0 0.0
        %8393 = vmatpush1.msra.mxu0 0.0
        %8394 = vmatprep.subr.mxu0 0.0
        %8395 = vmatpush1.msra.mxu0 0.0
        %8396 = vmatprep.subr.mxu0 0.0
        %8397 = vmatpush1.msra.mxu0 0.0
        %8398 = vmatprep.subr.mxu0 0.0
        %8399 = vmatpush1.msra.mxu0 0.0
        %8400 = vmatprep.subr.mxu0 0.0
        %8401 = vmatpush1.msra.mxu0 0.0
        %8402 = vmatprep.subr.mxu0 0.0
        %8403 = vmatpush1.msra.mxu0 0.0
        %8404 = vmatprep.subr.mxu0 0.0
        %8405 = vmatpush1.msra.mxu0 0.0
        %8406 = vmatprep.subr.mxu0 0.0
        %8407 = vmatpush1.msra.mxu0 0.0
        %8408 = vmatprep.subr.mxu0 0.0
        %8409 = vmatpush1.msra.mxu0 0.0
        %8410 = vmatprep.subr.mxu0 0.0
        %8411 = vmatpush1.msra.mxu0 0.0
        %8412 = vmatprep.subr.mxu0 0.0
        %8413 = vmatpush1.msra.mxu0 0.0
        %8414 = vmatprep.mubr.f32.mxu0 0.0
        %8415 = vmatmul.mubr.f32.gmra.mrb[0].mxu0 %v8327
        %v8416 = vpop.f32.mrb[0].mxu0
        %v8417 = vadd.f32 0.0, %v8416
        %v8418 = vpop.f32.mrb[0].mxu0
        %8419 = vmatprep.mubr.f32.mxu0 0.0
        %8420 = vmatmul.mubr.f32.gmra.mrb[0].mxu0 %v8330
        %v8421 = vpop.f32.mrb[0].mxu0
        %v8422 = vadd.f32 0.0, %v8421
        %v8423 = vpop.f32.mrb[0].mxu0
        %8424 = vmatprep.mubr.f32.mxu0 0.0
        %8425 = vmatmul.mubr.f32.gmra.mrb[0].mxu0 %v8333
        %v8426 = vpop.f32.mrb[0].mxu0
        %v8427 = vadd.f32 0.0, %v8426
        %v8428 = vpop.f32.mrb[0].mxu0
        %8429 = vmatprep.mubr.f32.mxu0 0.0
        %8430 = vmatmul.mubr.f32.gmra.mrb[0].mxu0 %v8336
        %v8431 = vpop.f32.mrb[0].mxu0
        %v8432 = vadd.f32 0.0, %v8431
        %v8433 = vpop.f32.mrb[0].mxu0
        %8434 = vmatprep.mubr.f32.mxu0 0.0
        %8435 = vmatmul.mubr.f32.gmra.mrb[0].mxu0 %v8339
        %v8436 = vpop.f32.mrb[0].mxu0
        %v8437 = vadd.f32 0.0, %v8436
        %v8438 = vpop.f32.mrb[0].mxu0
        %8439 = vmatprep.mubr.f32.mxu0 0.0
        %8440 = vmatmul.mubr.f32.gmra.mrb[0].mxu0 %v8342
        %v8441 = vpop.f32.mrb[0].mxu0
        %v8442 = vadd.f32 0.0, %v8441
        %v8443 = vpop.f32.mrb[0].mxu0
        %8444 = vmatprep.mubr.f32.mxu0 0.0
        %8445 = vmatmul.mubr.f32.gmra.mrb[0].mxu0 %v8345
        %v8446 = vpop.f32.mrb[0].mxu0
        %v8447 = vadd.f32 0.0, %v8446
        %v8448 = vpop.f32.mrb[0].mxu0
        %8449 = vmatprep.mubr.f32.mxu0 0.0
        %8450 = vmatmul.mubr.f32.gmra.mrb[0].mxu0 %v8348
        %v8451 = vpop.f32.mrb[0].mxu0
        %v8452 = vadd.f32 0.0, %v8451
        %v8453 = vpop.f32.mrb[0].mxu0
        %8454 = vdwg.mxu0
        %8455 = vrot.lane.b32.xlu0 %v1203, 40
        %v8456 = vpop.permute.xlu0 %8455
        %8457 = vrot.lane.b32.xlu0 %v1208, 40
        %v8458 = vpop.permute.xlu0 %8457
        %8459 = vrot.lane.b32.xlu0 %v1213, 40
        %v8460 = vpop.permute.xlu0 %8459
        %8461 = vrot.lane.b32.xlu0 %v1218, 40
        %v8462 = vpop.permute.xlu0 %8461
        %8463 = vrot.lane.b32.xlu0 %v1223, 40
        %v8464 = vpop.permute.xlu0 %8463
        %8465 = vrot.lane.b32.xlu0 %v1228, 40
        %v8466 = vpop.permute.xlu0 %8465
        %8467 = vrot.lane.b32.xlu0 %v1233, 40
        %v8468 = vpop.permute.xlu0 %8467
        %8469 = vrot.lane.b32.xlu0 %v1238, 40
        %v8470 = vpop.permute.xlu0 %8469
        %v8480 = vsel %vm2034, %v8278, 0
        %v8483 = vsel %vm2034, %v8279, 0
        %v8486 = vsel %vm2034, %v8280, 0
        %v8489 = vsel %vm2034, %v8281, 0
        %v8492 = vsel %vm2034, %v8282, 0
        %v8495 = vsel %vm2034, %v8283, 0
        %v8498 = vsel %vm2034, %v8284, 0
        %v8501 = vsel %vm2034, %v8285, 0
        %8503 = vmatprep.subr.mxu0 0.0
        %8504 = vmatpush1.msra.mxu0 %v8456
        %8505 = vmatprep.subr.mxu0 0.0
        %8506 = vmatpush1.msra.mxu0 %v8458
        %8507 = vmatprep.subr.mxu0 0.0
        %8508 = vmatpush1.msra.mxu0 %v8460
        %8509 = vmatprep.subr.mxu0 0.0
        %8510 = vmatpush1.msra.mxu0 %v8462
        %8511 = vmatprep.subr.mxu0 0.0
        %8512 = vmatpush1.msra.mxu0 %v8464
        %8513 = vmatprep.subr.mxu0 0.0
        %8514 = vmatpush1.msra.mxu0 %v8466
        %8515 = vmatprep.subr.mxu0 0.0
        %8516 = vmatpush1.msra.mxu0 %v8468
        %8517 = vmatprep.subr.mxu0 0.0
        %8518 = vmatpush1.msra.mxu0 %v8470
        %8519 = vmatprep.subr.mxu0 0.0
        %8520 = vmatpush1.msra.mxu0 0.0
        %8521 = vmatprep.subr.mxu0 0.0
        %8522 = vmatpush1.msra.mxu0 0.0
        %8523 = vmatprep.subr.mxu0 0.0
        %8524 = vmatpush1.msra.mxu0 0.0
        %8525 = vmatprep.subr.mxu0 0.0
        %8526 = vmatpush1.msra.mxu0 0.0
        %8527 = vmatprep.subr.mxu0 0.0
        %8528 = vmatpush1.msra.mxu0 0.0
        %8529 = vmatprep.subr.mxu0 0.0
        %8530 = vmatpush1.msra.mxu0 0.0
        %8531 = vmatprep.subr.mxu0 0.0
        %8532 = vmatpush1.msra.mxu0 0.0
        %8533 = vmatprep.subr.mxu0 0.0
        %8534 = vmatpush1.msra.mxu0 0.0
        %8535 = vmatprep.subr.mxu0 0.0
        %8536 = vmatpush1.msra.mxu0 0.0
        %8537 = vmatprep.subr.mxu0 0.0
        %8538 = vmatpush1.msra.mxu0 0.0
        %8539 = vmatprep.subr.mxu0 0.0
        %8540 = vmatpush1.msra.mxu0 0.0
        %8541 = vmatprep.subr.mxu0 0.0
        %8542 = vmatpush1.msra.mxu0 0.0
        %8543 = vmatprep.subr.mxu0 0.0
        %8544 = vmatpush1.msra.mxu0 0.0
        %8545 = vmatprep.subr.mxu0 0.0
        %8546 = vmatpush1.msra.mxu0 0.0
        %8547 = vmatprep.subr.mxu0 0.0
        %8548 = vmatpush1.msra.mxu0 0.0
        %8549 = vmatprep.subr.mxu0 0.0
        %8550 = vmatpush1.msra.mxu0 0.0
        %8551 = vmatprep.subr.mxu0 0.0
        %8552 = vmatpush1.msra.mxu0 0.0
        %8553 = vmatprep.subr.mxu0 0.0
        %8554 = vmatpush1.msra.mxu0 0.0
        %8555 = vmatprep.subr.mxu0 0.0
        %8556 = vmatpush1.msra.mxu0 0.0
        %8557 = vmatprep.subr.mxu0 0.0
        %8558 = vmatpush1.msra.mxu0 0.0
        %8559 = vmatprep.subr.mxu0 0.0
        %8560 = vmatpush1.msra.mxu0 0.0
        %8561 = vmatprep.subr.mxu0 0.0
        %8562 = vmatpush1.msra.mxu0 0.0
        %8563 = vmatprep.subr.mxu0 0.0
        %8564 = vmatpush1.msra.mxu0 0.0
        %8565 = vmatprep.subr.mxu0 0.0
        %8566 = vmatpush1.msra.mxu0 0.0
        %8567 = vmatprep.mubr.f32.mxu0 0.0
        %8568 = vmatmul.mubr.f32.gmra.mrb[0].mxu0 %v8480
        %v8569 = vpop.f32.mrb[0].mxu0
        %v8570 = vadd.f32 0.0, %v8569
        %v8571 = vpop.f32.mrb[0].mxu0
        %8572 = vmatprep.mubr.f32.mxu0 0.0
        %8573 = vmatmul.mubr.f32.gmra.mrb[0].mxu0 %v8483
        %v8574 = vpop.f32.mrb[0].mxu0
        %v8575 = vadd.f32 0.0, %v8574
        %v8576 = vpop.f32.mrb[0].mxu0
        %8577 = vmatprep.mubr.f32.mxu0 0.0
        %8578 = vmatmul.mubr.f32.gmra.mrb[0].mxu0 %v8486
        %v8579 = vpop.f32.mrb[0].mxu0
        %v8580 = vadd.f32 0.0, %v8579
        %v8581 = vpop.f32.mrb[0].mxu0
        %8582 = vmatprep.mubr.f32.mxu0 0.0
        %8583 = vmatmul.mubr.f32.gmra.mrb[0].mxu0 %v8489
        %v8584 = vpop.f32.mrb[0].mxu0
        %v8585 = vadd.f32 0.0, %v8584
        %v8586 = vpop.f32.mrb[0].mxu0
        %8587 = vmatprep.mubr.f32.mxu0 0.0
        %8588 = vmatmul.mubr.f32.gmra.mrb[0].mxu0 %v8492
        %v8589 = vpop.f32.mrb[0].mxu0
        %v8590 = vadd.f32 0.0, %v8589
        %v8591 = vpop.f32.mrb[0].mxu0
        %8592 = vmatprep.mubr.f32.mxu0 0.0
        %8593 = vmatmul.mubr.f32.gmra.mrb[0].mxu0 %v8495
        %v8594 = vpop.f32.mrb[0].mxu0
        %v8595 = vadd.f32 0.0, %v8594
        %v8596 = vpop.f32.mrb[0].mxu0
        %8597 = vmatprep.mubr.f32.mxu0 0.0
        %8598 = vmatmul.mubr.f32.gmra.mrb[0].mxu0 %v8498
        %v8599 = vpop.f32.mrb[0].mxu0
        %v8600 = vadd.f32 0.0, %v8599
        %v8601 = vpop.f32.mrb[0].mxu0
        %8602 = vmatprep.mubr.f32.mxu0 0.0
        %8603 = vmatmul.mubr.f32.gmra.mrb[0].mxu0 %v8501
        %v8604 = vpop.f32.mrb[0].mxu0
        %v8605 = vadd.f32 0.0, %v8604
        %v8606 = vpop.f32.mrb[0].mxu0
        %8607 = vdwg.mxu0
        %8608 = vrot.lane.b32.xlu0 %v1243, 40
        %v8609 = vpop.permute.xlu0 %8608
        %8610 = vrot.lane.b32.xlu0 %v1248, 40
        %v8611 = vpop.permute.xlu0 %8610
        %8612 = vrot.lane.b32.xlu0 %v1253, 40
        %v8613 = vpop.permute.xlu0 %8612
        %8614 = vrot.lane.b32.xlu0 %v1258, 40
        %v8615 = vpop.permute.xlu0 %8614
        %8616 = vrot.lane.b32.xlu0 %v1263, 40
        %v8617 = vpop.permute.xlu0 %8616
        %8618 = vrot.lane.b32.xlu0 %v1268, 40
        %v8619 = vpop.permute.xlu0 %8618
        %8620 = vrot.lane.b32.xlu0 %v1273, 40
        %v8621 = vpop.permute.xlu0 %8620
        %8622 = vrot.lane.b32.xlu0 %v1278, 40
        %v8623 = vpop.permute.xlu0 %8622
        %v8633 = vsel %vm2034, %v8286, 0
        %v8636 = vsel %vm2034, %v8287, 0
        %v8639 = vsel %vm2034, %v8288, 0
        %v8642 = vsel %vm2034, %v8289, 0
        %v8645 = vsel %vm2034, %v8290, 0
        %v8648 = vsel %vm2034, %v8291, 0
        %v8651 = vsel %vm2034, %v8292, 0
        %v8654 = vsel %vm2034, %v8293, 0
        %8656 = vmatprep.subr.mxu0 0.0
        %8657 = vmatpush1.msra.mxu0 %v8609
        %8658 = vmatprep.subr.mxu0 0.0
        %8659 = vmatpush1.msra.mxu0 %v8611
        %8660 = vmatprep.subr.mxu0 0.0
        %8661 = vmatpush1.msra.mxu0 %v8613
        %8662 = vmatprep.subr.mxu0 0.0
        %8663 = vmatpush1.msra.mxu0 %v8615
        %8664 = vmatprep.subr.mxu0 0.0
        %8665 = vmatpush1.msra.mxu0 %v8617
        %8666 = vmatprep.subr.mxu0 0.0
        %8667 = vmatpush1.msra.mxu0 %v8619
        %8668 = vmatprep.subr.mxu0 0.0
        %8669 = vmatpush1.msra.mxu0 %v8621
        %8670 = vmatprep.subr.mxu0 0.0
        %8671 = vmatpush1.msra.mxu0 %v8623
        %8672 = vmatprep.subr.mxu0 0.0
        %8673 = vmatpush1.msra.mxu0 0.0
        %8674 = vmatprep.subr.mxu0 0.0
        %8675 = vmatpush1.msra.mxu0 0.0
        %8676 = vmatprep.subr.mxu0 0.0
        %8677 = vmatpush1.msra.mxu0 0.0
        %8678 = vmatprep.subr.mxu0 0.0
        %8679 = vmatpush1.msra.mxu0 0.0
        %8680 = vmatprep.subr.mxu0 0.0
        %8681 = vmatpush1.msra.mxu0 0.0
        %8682 = vmatprep.subr.mxu0 0.0
        %8683 = vmatpush1.msra.mxu0 0.0
        %8684 = vmatprep.subr.mxu0 0.0
        %8685 = vmatpush1.msra.mxu0 0.0
        %8686 = vmatprep.subr.mxu0 0.0
        %8687 = vmatpush1.msra.mxu0 0.0
        %8688 = vmatprep.subr.mxu0 0.0
        %8689 = vmatpush1.msra.mxu0 0.0
        %8690 = vmatprep.subr.mxu0 0.0
        %8691 = vmatpush1.msra.mxu0 0.0
        %8692 = vmatprep.subr.mxu0 0.0
        %8693 = vmatpush1.msra.mxu0 0.0
        %8694 = vmatprep.subr.mxu0 0.0
        %8695 = vmatpush1.msra.mxu0 0.0
        %8696 = vmatprep.subr.mxu0 0.0
        %8697 = vmatpush1.msra.mxu0 0.0
        %8698 = vmatprep.subr.mxu0 0.0
        %8699 = vmatpush1.msra.mxu0 0.0
        %8700 = vmatprep.subr.mxu0 0.0
        %8701 = vmatpush1.msra.mxu0 0.0
        %8702 = vmatprep.subr.mxu0 0.0
        %8703 = vmatpush1.msra.mxu0 0.0
        %8704 = vmatprep.subr.mxu0 0.0
        %8705 = vmatpush1.msra.mxu0 0.0
        %8706 = vmatprep.subr.mxu0 0.0
        %8707 = vmatpush1.msra.mxu0 0.0
        %8708 = vmatprep.subr.mxu0 0.0
        %8709 = vmatpush1.msra.mxu0 0.0
        %8710 = vmatprep.subr.mxu0 0.0
        %8711 = vmatpush1.msra.mxu0 0.0
        %8712 = vmatprep.subr.mxu0 0.0
        %8713 = vmatpush1.msra.mxu0 0.0
        %8714 = vmatprep.subr.mxu0 0.0
        %8715 = vmatpush1.msra.mxu0 0.0
        %8716 = vmatprep.subr.mxu0 0.0
        %8717 = vmatpush1.msra.mxu0 0.0
        %8718 = vmatprep.subr.mxu0 0.0
        %8719 = vmatpush1.msra.mxu0 0.0
        %8720 = vmatprep.mubr.f32.mxu0 0.0
        %8721 = vmatmul.mubr.f32.gmra.mrb[0].mxu0 %v8633
        %v8722 = vpop.f32.mrb[0].mxu0
        %v8723 = vadd.f32 0.0, %v8722
        %v8724 = vpop.f32.mrb[0].mxu0
        %8725 = vmatprep.mubr.f32.mxu0 0.0
        %8726 = vmatmul.mubr.f32.gmra.mrb[0].mxu0 %v8636
        %v8727 = vpop.f32.mrb[0].mxu0
        %v8728 = vadd.f32 0.0, %v8727
        %v8729 = vpop.f32.mrb[0].mxu0
        %8730 = vmatprep.mubr.f32.mxu0 0.0
        %8731 = vmatmul.mubr.f32.gmra.mrb[0].mxu0 %v8639
        %v8732 = vpop.f32.mrb[0].mxu0
        %v8733 = vadd.f32 0.0, %v8732
        %v8734 = vpop.f32.mrb[0].mxu0
        %8735 = vmatprep.mubr.f32.mxu0 0.0
        %8736 = vmatmul.mubr.f32.gmra.mrb[0].mxu0 %v8642
        %v8737 = vpop.f32.mrb[0].mxu0
        %v8738 = vadd.f32 0.0, %v8737
        %v8739 = vpop.f32.mrb[0].mxu0
        %8740 = vmatprep.mubr.f32.mxu0 0.0
        %8741 = vmatmul.mubr.f32.gmra.mrb[0].mxu0 %v8645
        %v8742 = vpop.f32.mrb[0].mxu0
        %v8743 = vadd.f32 0.0, %v8742
        %v8744 = vpop.f32.mrb[0].mxu0
        %8745 = vmatprep.mubr.f32.mxu0 0.0
        %8746 = vmatmul.mubr.f32.gmra.mrb[0].mxu0 %v8648
        %v8747 = vpop.f32.mrb[0].mxu0
        %v8748 = vadd.f32 0.0, %v8747
        %v8749 = vpop.f32.mrb[0].mxu0
        %8750 = vmatprep.mubr.f32.mxu0 0.0
        %8751 = vmatmul.mubr.f32.gmra.mrb[0].mxu0 %v8651
        %v8752 = vpop.f32.mrb[0].mxu0
        %v8753 = vadd.f32 0.0, %v8752
        %v8754 = vpop.f32.mrb[0].mxu0
        %8755 = vmatprep.mubr.f32.mxu0 0.0
        %8756 = vmatmul.mubr.f32.gmra.mrb[0].mxu0 %v8654
        %v8757 = vpop.f32.mrb[0].mxu0
        %v8758 = vadd.f32 0.0, %v8757
        %v8759 = vpop.f32.mrb[0].mxu0
        %8760 = vdwg.mxu0
        %8761 = vrot.lane.b32.xlu0 %v1283, 40
        %v8762 = vpop.permute.xlu0 %8761
        %8763 = vrot.lane.b32.xlu0 %v1288, 40
        %v8764 = vpop.permute.xlu0 %8763
        %8765 = vrot.lane.b32.xlu0 %v1293, 40
        %v8766 = vpop.permute.xlu0 %8765
        %8767 = vrot.lane.b32.xlu0 %v1298, 40
        %v8768 = vpop.permute.xlu0 %8767
        %8769 = vrot.lane.b32.xlu0 %v1303, 40
        %v8770 = vpop.permute.xlu0 %8769
        %8771 = vrot.lane.b32.xlu0 %v1308, 40
        %v8772 = vpop.permute.xlu0 %8771
        %8773 = vrot.lane.b32.xlu0 %v1313, 40
        %v8774 = vpop.permute.xlu0 %8773
        %8775 = vrot.lane.b32.xlu0 %v1318, 40
        %v8776 = vpop.permute.xlu0 %8775
        %v8786 = vsel %vm2034, %v8294, 0
        %v8789 = vsel %vm2034, %v8295, 0
        %v8792 = vsel %vm2034, %v8296, 0
        %v8795 = vsel %vm2034, %v8297, 0
        %v8798 = vsel %vm2034, %v8298, 0
        %v8801 = vsel %vm2034, %v8299, 0
        %v8804 = vsel %vm2034, %v8300, 0
        %v8807 = vsel %vm2034, %v8301, 0
        %8809 = vmatprep.subr.mxu0 0.0
        %8810 = vmatpush1.msra.mxu0 %v8762
        %8811 = vmatprep.subr.mxu0 0.0
        %8812 = vmatpush1.msra.mxu0 %v8764
        %8813 = vmatprep.subr.mxu0 0.0
        %8814 = vmatpush1.msra.mxu0 %v8766
        %8815 = vmatprep.subr.mxu0 0.0
        %8816 = vmatpush1.msra.mxu0 %v8768
        %8817 = vmatprep.subr.mxu0 0.0
        %8818 = vmatpush1.msra.mxu0 %v8770
        %8819 = vmatprep.subr.mxu0 0.0
        %8820 = vmatpush1.msra.mxu0 %v8772
        %8821 = vmatprep.subr.mxu0 0.0
        %8822 = vmatpush1.msra.mxu0 %v8774
        %8823 = vmatprep.subr.mxu0 0.0
        %8824 = vmatpush1.msra.mxu0 %v8776
        %8825 = vmatprep.subr.mxu0 0.0
        %8826 = vmatpush1.msra.mxu0 0.0
        %8827 = vmatprep.subr.mxu0 0.0
        %8828 = vmatpush1.msra.mxu0 0.0
        %8829 = vmatprep.subr.mxu0 0.0
        %8830 = vmatpush1.msra.mxu0 0.0
        %8831 = vmatprep.subr.mxu0 0.0
        %8832 = vmatpush1.msra.mxu0 0.0
        %8833 = vmatprep.subr.mxu0 0.0
        %8834 = vmatpush1.msra.mxu0 0.0
        %8835 = vmatprep.subr.mxu0 0.0
        %8836 = vmatpush1.msra.mxu0 0.0
        %8837 = vmatprep.subr.mxu0 0.0
        %8838 = vmatpush1.msra.mxu0 0.0
        %8839 = vmatprep.subr.mxu0 0.0
        %8840 = vmatpush1.msra.mxu0 0.0
        %8841 = vmatprep.subr.mxu0 0.0
        %8842 = vmatpush1.msra.mxu0 0.0
        %8843 = vmatprep.subr.mxu0 0.0
        %8844 = vmatpush1.msra.mxu0 0.0
        %8845 = vmatprep.subr.mxu0 0.0
        %8846 = vmatpush1.msra.mxu0 0.0
        %8847 = vmatprep.subr.mxu0 0.0
        %8848 = vmatpush1.msra.mxu0 0.0
        %8849 = vmatprep.subr.mxu0 0.0
        %8850 = vmatpush1.msra.mxu0 0.0
        %8851 = vmatprep.subr.mxu0 0.0
        %8852 = vmatpush1.msra.mxu0 0.0
        %8853 = vmatprep.subr.mxu0 0.0
        %8854 = vmatpush1.msra.mxu0 0.0
        %8855 = vmatprep.subr.mxu0 0.0
        %8856 = vmatpush1.msra.mxu0 0.0
        %8857 = vmatprep.subr.mxu0 0.0
        %8858 = vmatpush1.msra.mxu0 0.0
        %8859 = vmatprep.subr.mxu0 0.0
        %8860 = vmatpush1.msra.mxu0 0.0
        %8861 = vmatprep.subr.mxu0 0.0
        %8862 = vmatpush1.msra.mxu0 0.0
        %8863 = vmatprep.subr.mxu0 0.0
        %8864 = vmatpush1.msra.mxu0 0.0
        %8865 = vmatprep.subr.mxu0 0.0
        %8866 = vmatpush1.msra.mxu0 0.0
        %8867 = vmatprep.subr.mxu0 0.0
        %8868 = vmatpush1.msra.mxu0 0.0
        %8869 = vmatprep.subr.mxu0 0.0
        %8870 = vmatpush1.msra.mxu0 0.0
        %8871 = vmatprep.subr.mxu0 0.0
        %8872 = vmatpush1.msra.mxu0 0.0
        %8873 = vmatprep.mubr.f32.mxu0 0.0
        %8874 = vmatmul.mubr.f32.gmra.mrb[0].mxu0 %v8786
        %v8875 = vpop.f32.mrb[0].mxu0
        %v8876 = vadd.f32 0.0, %v8875
        %v8877 = vpop.f32.mrb[0].mxu0
        %8878 = vmatprep.mubr.f32.mxu0 0.0
        %8879 = vmatmul.mubr.f32.gmra.mrb[0].mxu0 %v8789
        %v8880 = vpop.f32.mrb[0].mxu0
        %v8881 = vadd.f32 0.0, %v8880
        %v8882 = vpop.f32.mrb[0].mxu0
        %8883 = vmatprep.mubr.f32.mxu0 0.0
        %8884 = vmatmul.mubr.f32.gmra.mrb[0].mxu0 %v8792
        %v8885 = vpop.f32.mrb[0].mxu0
        %v8886 = vadd.f32 0.0, %v8885
        %v8887 = vpop.f32.mrb[0].mxu0
        %8888 = vmatprep.mubr.f32.mxu0 0.0
        %8889 = vmatmul.mubr.f32.gmra.mrb[0].mxu0 %v8795
        %v8890 = vpop.f32.mrb[0].mxu0
        %v8891 = vadd.f32 0.0, %v8890
        %v8892 = vpop.f32.mrb[0].mxu0
        %8893 = vmatprep.mubr.f32.mxu0 0.0
        %8894 = vmatmul.mubr.f32.gmra.mrb[0].mxu0 %v8798
        %v8895 = vpop.f32.mrb[0].mxu0
        %v8896 = vadd.f32 0.0, %v8895
        %v8897 = vpop.f32.mrb[0].mxu0
        %8898 = vmatprep.mubr.f32.mxu0 0.0
        %8899 = vmatmul.mubr.f32.gmra.mrb[0].mxu0 %v8801
        %v8900 = vpop.f32.mrb[0].mxu0
        %v8901 = vadd.f32 0.0, %v8900
        %v8902 = vpop.f32.mrb[0].mxu0
        %8903 = vmatprep.mubr.f32.mxu0 0.0
        %8904 = vmatmul.mubr.f32.gmra.mrb[0].mxu0 %v8804
        %v8905 = vpop.f32.mrb[0].mxu0
        %v8906 = vadd.f32 0.0, %v8905
        %v8907 = vpop.f32.mrb[0].mxu0
        %8908 = vmatprep.mubr.f32.mxu0 0.0
        %8909 = vmatmul.mubr.f32.gmra.mrb[0].mxu0 %v8807
        %v8910 = vpop.f32.mrb[0].mxu0
        %v8911 = vadd.f32 0.0, %v8910
        %v8912 = vpop.f32.mrb[0].mxu0
        %8913 = vdwg.mxu0
        %v8915 = vsel %vm1381, %v8417, 0
        %v8918 = vsel %vm1381, %v8422, 0
        %v8921 = vsel %vm1381, %v8427, 0
        %v8924 = vsel %vm1381, %v8432, 0
        %v8927 = vsel %vm1381, %v8437, 0
        %v8930 = vsel %vm1381, %v8442, 0
        %v8933 = vsel %vm1381, %v8447, 0
        %v8936 = vsel %vm1381, %v8452, 0
        %v8939 = vsel %vm1381, %v8570, 0
        %v8942 = vsel %vm1381, %v8575, 0
        %v8945 = vsel %vm1381, %v8580, 0
        %v8948 = vsel %vm1381, %v8585, 0
        %v8951 = vsel %vm1381, %v8590, 0
        %v8954 = vsel %vm1381, %v8595, 0
        %v8957 = vsel %vm1381, %v8600, 0
        %v8960 = vsel %vm1381, %v8605, 0
        %v8963 = vsel %vm1381, %v8723, 0
        %v8966 = vsel %vm1381, %v8728, 0
        %v8969 = vsel %vm1381, %v8733, 0
        %v8972 = vsel %vm1381, %v8738, 0
        %v8975 = vsel %vm1381, %v8743, 0
        %v8978 = vsel %vm1381, %v8748, 0
        %v8981 = vsel %vm1381, %v8753, 0
        %v8984 = vsel %vm1381, %v8758, 0
        %v8987 = vsel %vm1381, %v8876, 0
        %v8990 = vsel %vm1381, %v8881, 0
        %v8993 = vsel %vm1381, %v8886, 0
        %v8996 = vsel %vm1381, %v8891, 0
        %v8999 = vsel %vm1381, %v8896, 0
        %v9002 = vsel %vm1381, %v8901, 0
        %v9005 = vsel %vm1381, %v8906, 0
        %v9008 = vsel %vm1381, %v8911, 0
        %9010 = vmatprep.subr.mxu0 0.0
        %9011 = vmatpush1.msra.mxu0 %v1356
        %9012 = vmatprep.subr.mxu0 0.0
        %9013 = vmatpush1.msra.mxu0 0.0
        %9014 = vmatprep.subr.mxu0 0.0
        %9015 = vmatpush1.msra.mxu0 0.0
        %9016 = vmatprep.subr.mxu0 0.0
        %9017 = vmatpush1.msra.mxu0 0.0
        %9018 = vmatprep.subr.mxu0 0.0
        %9019 = vmatpush1.msra.mxu0 0.0
        %9020 = vmatprep.subr.mxu0 0.0
        %9021 = vmatpush1.msra.mxu0 0.0
        %9022 = vmatprep.subr.mxu0 0.0
        %9023 = vmatpush1.msra.mxu0 0.0
        %9024 = vmatprep.subr.mxu0 0.0
        %9025 = vmatpush1.msra.mxu0 0.0
        %9026 = vmatprep.subr.mxu0 0.0
        %9027 = vmatpush1.msra.mxu0 0.0
        %9028 = vmatprep.subr.mxu0 0.0
        %9029 = vmatpush1.msra.mxu0 0.0
        %9030 = vmatprep.subr.mxu0 0.0
        %9031 = vmatpush1.msra.mxu0 0.0
        %9032 = vmatprep.subr.mxu0 0.0
        %9033 = vmatpush1.msra.mxu0 0.0
        %9034 = vmatprep.subr.mxu0 0.0
        %9035 = vmatpush1.msra.mxu0 0.0
        %9036 = vmatprep.subr.mxu0 0.0
        %9037 = vmatpush1.msra.mxu0 0.0
        %9038 = vmatprep.subr.mxu0 0.0
        %9039 = vmatpush1.msra.mxu0 0.0
        %9040 = vmatprep.subr.mxu0 0.0
        %9041 = vmatpush1.msra.mxu0 0.0
        %9042 = vmatprep.subr.mxu0 0.0
        %9043 = vmatpush1.msra.mxu0 0.0
        %9044 = vmatprep.subr.mxu0 0.0
        %9045 = vmatpush1.msra.mxu0 0.0
        %9046 = vmatprep.subr.mxu0 0.0
        %9047 = vmatpush1.msra.mxu0 0.0
        %9048 = vmatprep.subr.mxu0 0.0
        %9049 = vmatpush1.msra.mxu0 0.0
        %9050 = vmatprep.subr.mxu0 0.0
        %9051 = vmatpush1.msra.mxu0 0.0
        %9052 = vmatprep.subr.mxu0 0.0
        %9053 = vmatpush1.msra.mxu0 0.0
        %9054 = vmatprep.subr.mxu0 0.0
        %9055 = vmatpush1.msra.mxu0 0.0
        %9056 = vmatprep.subr.mxu0 0.0
        %9057 = vmatpush1.msra.mxu0 0.0
        %9058 = vmatprep.subr.mxu0 0.0
        %9059 = vmatpush1.msra.mxu0 0.0
        %9060 = vmatprep.subr.mxu0 0.0
        %9061 = vmatpush1.msra.mxu0 0.0
        %9062 = vmatprep.subr.mxu0 0.0
        %9063 = vmatpush1.msra.mxu0 0.0
        %9064 = vmatprep.subr.mxu0 0.0
        %9065 = vmatpush1.msra.mxu0 0.0
        %9066 = vmatprep.subr.mxu0 0.0
        %9067 = vmatpush1.msra.mxu0 0.0
        %9068 = vmatprep.subr.mxu0 0.0
        %9069 = vmatpush1.msra.mxu0 0.0
        %9070 = vmatprep.subr.mxu0 0.0
        %9071 = vmatpush1.msra.mxu0 0.0
        %9072 = vmatprep.subr.mxu0 0.0
        %9073 = vmatpush1.msra.mxu0 0.0
        %9074 = vmatprep.mubr.f32.mxu0 0.0
        %9075 = vmatmul.mubr.f32.gmra.mrb[0].mxu0 %v8915
        %v9076 = vpop.f32.mrb[0].mxu0
        %v9077 = vadd.f32 0.0, %v9076
        %v9078 = vpop.f32.mrb[0].mxu0
        %9079 = vmatprep.mubr.f32.mxu0 0.0
        %9080 = vmatmul.mubr.f32.gmra.mrb[0].mxu0 %v8918
        %v9081 = vpop.f32.mrb[0].mxu0
        %v9082 = vadd.f32 0.0, %v9081
        %v9083 = vpop.f32.mrb[0].mxu0
        %9084 = vmatprep.mubr.f32.mxu0 0.0
        %9085 = vmatmul.mubr.f32.gmra.mrb[0].mxu0 %v8921
        %v9086 = vpop.f32.mrb[0].mxu0
        %v9087 = vadd.f32 0.0, %v9086
        %v9088 = vpop.f32.mrb[0].mxu0
        %9089 = vmatprep.mubr.f32.mxu0 0.0
        %9090 = vmatmul.mubr.f32.gmra.mrb[0].mxu0 %v8924
        %v9091 = vpop.f32.mrb[0].mxu0
        %v9092 = vadd.f32 0.0, %v9091
        %v9093 = vpop.f32.mrb[0].mxu0
        %9094 = vmatprep.mubr.f32.mxu0 0.0
        %9095 = vmatmul.mubr.f32.gmra.mrb[0].mxu0 %v8927
        %v9096 = vpop.f32.mrb[0].mxu0
        %v9097 = vadd.f32 0.0, %v9096
        %v9098 = vpop.f32.mrb[0].mxu0
        %9099 = vmatprep.mubr.f32.mxu0 0.0
        %9100 = vmatmul.mubr.f32.gmra.mrb[0].mxu0 %v8930
        %v9101 = vpop.f32.mrb[0].mxu0
        %v9102 = vadd.f32 0.0, %v9101
        %v9103 = vpop.f32.mrb[0].mxu0
        %9104 = vmatprep.mubr.f32.mxu0 0.0
        %9105 = vmatmul.mubr.f32.gmra.mrb[0].mxu0 %v8933
        %v9106 = vpop.f32.mrb[0].mxu0
        %v9107 = vadd.f32 0.0, %v9106
        %v9108 = vpop.f32.mrb[0].mxu0
        %9109 = vmatprep.mubr.f32.mxu0 0.0
        %9110 = vmatmul.mubr.f32.gmra.mrb[0].mxu0 %v8936
        %v9111 = vpop.f32.mrb[0].mxu0
        %v9112 = vadd.f32 0.0, %v9111
        %v9113 = vpop.f32.mrb[0].mxu0
        %9114 = vmatprep.mubr.f32.mxu0 0.0
        %9115 = vmatmul.mubr.f32.gmra.mrb[0].mxu0 %v8939
        %v9116 = vpop.f32.mrb[0].mxu0
        %v9117 = vadd.f32 0.0, %v9116
        %v9118 = vpop.f32.mrb[0].mxu0
        %9119 = vmatprep.mubr.f32.mxu0 0.0
        %9120 = vmatmul.mubr.f32.gmra.mrb[0].mxu0 %v8942
        %v9121 = vpop.f32.mrb[0].mxu0
        %v9122 = vadd.f32 0.0, %v9121
        %v9123 = vpop.f32.mrb[0].mxu0
        %9124 = vmatprep.mubr.f32.mxu0 0.0
        %9125 = vmatmul.mubr.f32.gmra.mrb[0].mxu0 %v8945
        %v9126 = vpop.f32.mrb[0].mxu0
        %v9127 = vadd.f32 0.0, %v9126
        %v9128 = vpop.f32.mrb[0].mxu0
        %9129 = vmatprep.mubr.f32.mxu0 0.0
        %9130 = vmatmul.mubr.f32.gmra.mrb[0].mxu0 %v8948
        %v9131 = vpop.f32.mrb[0].mxu0
        %v9132 = vadd.f32 0.0, %v9131
        %v9133 = vpop.f32.mrb[0].mxu0
        %9134 = vmatprep.mubr.f32.mxu0 0.0
        %9135 = vmatmul.mubr.f32.gmra.mrb[0].mxu0 %v8951
        %v9136 = vpop.f32.mrb[0].mxu0
        %v9137 = vadd.f32 0.0, %v9136
        %v9138 = vpop.f32.mrb[0].mxu0
        %9139 = vmatprep.mubr.f32.mxu0 0.0
        %9140 = vmatmul.mubr.f32.gmra.mrb[0].mxu0 %v8954
        %v9141 = vpop.f32.mrb[0].mxu0
        %v9142 = vadd.f32 0.0, %v9141
        %v9143 = vpop.f32.mrb[0].mxu0
        %9144 = vmatprep.mubr.f32.mxu0 0.0
        %9145 = vmatmul.mubr.f32.gmra.mrb[0].mxu0 %v8957
        %v9146 = vpop.f32.mrb[0].mxu0
        %v9147 = vadd.f32 0.0, %v9146
        %v9148 = vpop.f32.mrb[0].mxu0
        %9149 = vmatprep.mubr.f32.mxu0 0.0
        %9150 = vmatmul.mubr.f32.gmra.mrb[0].mxu0 %v8960
        %v9151 = vpop.f32.mrb[0].mxu0
        %v9152 = vadd.f32 0.0, %v9151
        %v9153 = vpop.f32.mrb[0].mxu0
        %9154 = vmatprep.mubr.f32.mxu0 0.0
        %9155 = vmatmul.mubr.f32.gmra.mrb[0].mxu0 %v8963
        %v9156 = vpop.f32.mrb[0].mxu0
        %v9157 = vadd.f32 0.0, %v9156
        %v9158 = vpop.f32.mrb[0].mxu0
        %9159 = vmatprep.mubr.f32.mxu0 0.0
        %9160 = vmatmul.mubr.f32.gmra.mrb[0].mxu0 %v8966
        %v9161 = vpop.f32.mrb[0].mxu0
        %v9162 = vadd.f32 0.0, %v9161
        %v9163 = vpop.f32.mrb[0].mxu0
        %9164 = vmatprep.mubr.f32.mxu0 0.0
        %9165 = vmatmul.mubr.f32.gmra.mrb[0].mxu0 %v8969
        %v9166 = vpop.f32.mrb[0].mxu0
        %v9167 = vadd.f32 0.0, %v9166
        %v9168 = vpop.f32.mrb[0].mxu0
        %9169 = vmatprep.mubr.f32.mxu0 0.0
        %9170 = vmatmul.mubr.f32.gmra.mrb[0].mxu0 %v8972
        %v9171 = vpop.f32.mrb[0].mxu0
        %v9172 = vadd.f32 0.0, %v9171
        %v9173 = vpop.f32.mrb[0].mxu0
        %9174 = vmatprep.mubr.f32.mxu0 0.0
        %9175 = vmatmul.mubr.f32.gmra.mrb[0].mxu0 %v8975
        %v9176 = vpop.f32.mrb[0].mxu0
        %v9177 = vadd.f32 0.0, %v9176
        %v9178 = vpop.f32.mrb[0].mxu0
        %9179 = vmatprep.mubr.f32.mxu0 0.0
        %9180 = vmatmul.mubr.f32.gmra.mrb[0].mxu0 %v8978
        %v9181 = vpop.f32.mrb[0].mxu0
        %v9182 = vadd.f32 0.0, %v9181
        %v9183 = vpop.f32.mrb[0].mxu0
        %9184 = vmatprep.mubr.f32.mxu0 0.0
        %9185 = vmatmul.mubr.f32.gmra.mrb[0].mxu0 %v8981
        %v9186 = vpop.f32.mrb[0].mxu0
        %v9187 = vadd.f32 0.0, %v9186
        %v9188 = vpop.f32.mrb[0].mxu0
        %9189 = vmatprep.mubr.f32.mxu0 0.0
        %9190 = vmatmul.mubr.f32.gmra.mrb[0].mxu0 %v8984
        %v9191 = vpop.f32.mrb[0].mxu0
        %v9192 = vadd.f32 0.0, %v9191
        %v9193 = vpop.f32.mrb[0].mxu0
        %9194 = vmatprep.mubr.f32.mxu0 0.0
        %9195 = vmatmul.mubr.f32.gmra.mrb[0].mxu0 %v8987
        %v9196 = vpop.f32.mrb[0].mxu0
        %v9197 = vadd.f32 0.0, %v9196
        %v9198 = vpop.f32.mrb[0].mxu0
        %9199 = vmatprep.mubr.f32.mxu0 0.0
        %9200 = vmatmul.mubr.f32.gmra.mrb[0].mxu0 %v8990
        %v9201 = vpop.f32.mrb[0].mxu0
        %v9202 = vadd.f32 0.0, %v9201
        %v9203 = vpop.f32.mrb[0].mxu0
        %9204 = vmatprep.mubr.f32.mxu0 0.0
        %9205 = vmatmul.mubr.f32.gmra.mrb[0].mxu0 %v8993
        %v9206 = vpop.f32.mrb[0].mxu0
        %v9207 = vadd.f32 0.0, %v9206
        %v9208 = vpop.f32.mrb[0].mxu0
        %9209 = vmatprep.mubr.f32.mxu0 0.0
        %9210 = vmatmul.mubr.f32.gmra.mrb[0].mxu0 %v8996
        %v9211 = vpop.f32.mrb[0].mxu0
        %v9212 = vadd.f32 0.0, %v9211
        %v9213 = vpop.f32.mrb[0].mxu0
        %9214 = vmatprep.mubr.f32.mxu0 0.0
        %9215 = vmatmul.mubr.f32.gmra.mrb[0].mxu0 %v8999
        %v9216 = vpop.f32.mrb[0].mxu0
        %v9217 = vadd.f32 0.0, %v9216
        %v9218 = vpop.f32.mrb[0].mxu0
        %9219 = vmatprep.mubr.f32.mxu0 0.0
        %9220 = vmatmul.mubr.f32.gmra.mrb[0].mxu0 %v9002
        %v9221 = vpop.f32.mrb[0].mxu0
        %v9222 = vadd.f32 0.0, %v9221
        %v9223 = vpop.f32.mrb[0].mxu0
        %9224 = vmatprep.mubr.f32.mxu0 0.0
        %9225 = vmatmul.mubr.f32.gmra.mrb[0].mxu0 %v9005
        %v9226 = vpop.f32.mrb[0].mxu0
        %v9227 = vadd.f32 0.0, %v9226
        %v9228 = vpop.f32.mrb[0].mxu0
        %9229 = vmatprep.mubr.f32.mxu0 0.0
        %9230 = vmatmul.mubr.f32.gmra.mrb[0].mxu0 %v9008
        %v9231 = vpop.f32.mrb[0].mxu0
        %v9232 = vadd.f32 0.0, %v9231
        %v9233 = vpop.f32.mrb[0].mxu0
        %9234 = vdwg.mxu0
        %v9235 = vadd.f32 %v7242, %v9077
        %v9236 = vadd.f32 %v7243, %v9082
        %v9237 = vadd.f32 %v7244, %v9087
        %v9238 = vadd.f32 %v7245, %v9092
        %v9239 = vadd.f32 %v7246, %v9097
        %v9240 = vadd.f32 %v7247, %v9102
        %v9241 = vadd.f32 %v7248, %v9107
        %v9242 = vadd.f32 %v7249, %v9112
        %v9243 = vadd.f32 %v7250, %v9117
        %v9244 = vadd.f32 %v7251, %v9122
        %v9245 = vadd.f32 %v7252, %v9127
        %v9246 = vadd.f32 %v7253, %v9132
        %v9247 = vadd.f32 %v7254, %v9137
        %v9248 = vadd.f32 %v7255, %v9142
        %v9249 = vadd.f32 %v7256, %v9147
        %v9250 = vadd.f32 %v7257, %v9152
        %v9251 = vadd.f32 %v7258, %v9157
        %v9252 = vadd.f32 %v7259, %v9162
        %v9253 = vadd.f32 %v7260, %v9167
        %v9254 = vadd.f32 %v7261, %v9172
        %v9255 = vadd.f32 %v7262, %v9177
        %v9256 = vadd.f32 %v7263, %v9182
        %v9257 = vadd.f32 %v7264, %v9187
        %v9258 = vadd.f32 %v7265, %v9192
        %v9259 = vadd.f32 %v7266, %v9197
        %v9260 = vadd.f32 %v7267, %v9202
        %v9261 = vadd.f32 %v7268, %v9207
        %v9262 = vadd.f32 %v7269, %v9212
        %v9263 = vadd.f32 %v7270, %v9217
        %v9264 = vadd.f32 %v7271, %v9222
        %v9265 = vadd.f32 %v7272, %v9227
        %v9266 = vadd.f32 %v7273, %v9232
        %v9267 = vld [vmem:[#allocation14] sm:$0x1]
        %v9269 = vlaneseq
        %v9270 = vshrl.u32 %v9269, 7
        %v9271 = vsub.s32 0, %v9270
        %v9272 = vrot.slane %v9267, %v9271
        %v9274 = vadd.f32 %v9235, %v9272
        %v9275 = vadd.f32 %v9236, %v9272
        %v9276 = vadd.f32 %v9237, %v9272
        %v9277 = vadd.f32 %v9238, %v9272
        %v9278 = vadd.f32 %v9239, %v9272
        %v9279 = vadd.f32 %v9240, %v9272
        %v9280 = vadd.f32 %v9241, %v9272
        %v9281 = vadd.f32 %v9242, %v9272
        %v9282 = vadd.f32 %v9243, %v9272
        %v9283 = vadd.f32 %v9244, %v9272
        %v9284 = vadd.f32 %v9245, %v9272
        %v9285 = vadd.f32 %v9246, %v9272
        %v9286 = vadd.f32 %v9247, %v9272
        %v9287 = vadd.f32 %v9248, %v9272
        %v9288 = vadd.f32 %v9249, %v9272
        %v9289 = vadd.f32 %v9250, %v9272
        %v9290 = vadd.f32 %v9251, %v9272
        %v9291 = vadd.f32 %v9252, %v9272
        %v9292 = vadd.f32 %v9253, %v9272
        %v9293 = vadd.f32 %v9254, %v9272
        %v9294 = vadd.f32 %v9255, %v9272
        %v9295 = vadd.f32 %v9256, %v9272
        %v9296 = vadd.f32 %v9257, %v9272
        %v9297 = vadd.f32 %v9258, %v9272
        %v9298 = vadd.f32 %v9259, %v9272
        %v9299 = vadd.f32 %v9260, %v9272
        %v9300 = vadd.f32 %v9261, %v9272
        %v9301 = vadd.f32 %v9262, %v9272
        %v9302 = vadd.f32 %v9263, %v9272
        %v9303 = vadd.f32 %v9264, %v9272
        %v9304 = vadd.f32 %v9265, %v9272
        %v9305 = vadd.f32 %v9266, %v9272
        %v9306 = vadd.f32 %v9274, %v421
        %v9307 = vadd.f32 %v9275, %v422
        %v9308 = vadd.f32 %v9276, %v423
        %v9309 = vadd.f32 %v9277, %v424
        %v9310 = vadd.f32 %v9278, %v425
        %v9311 = vadd.f32 %v9279, %v426
        %v9312 = vadd.f32 %v9280, %v427
        %v9313 = vadd.f32 %v9281, %v428
        %v9314 = vadd.f32 %v9282, %v429
        %v9315 = vadd.f32 %v9283, %v430
        %v9316 = vadd.f32 %v9284, %v431
        %v9317 = vadd.f32 %v9285, %v432
        %v9318 = vadd.f32 %v9286, %v433
        %v9319 = vadd.f32 %v9287, %v434
        %v9320 = vadd.f32 %v9288, %v435
        %v9321 = vadd.f32 %v9289, %v436
        %v9322 = vadd.f32 %v9290, %v437
        %v9323 = vadd.f32 %v9291, %v438
        %v9324 = vadd.f32 %v9292, %v439
        %v9325 = vadd.f32 %v9293, %v440
        %v9326 = vadd.f32 %v9294, %v441
        %v9327 = vadd.f32 %v9295, %v442
        %v9328 = vadd.f32 %v9296, %v443
        %v9329 = vadd.f32 %v9297, %v444
        %v9330 = vadd.f32 %v9298, %v445
        %v9331 = vadd.f32 %v9299, %v446
        %v9332 = vadd.f32 %v9300, %v447
        %v9333 = vadd.f32 %v9301, %v448
        %v9334 = vadd.f32 %v9302, %v449
        %v9335 = vadd.f32 %v9303, %v450
        %v9336 = vadd.f32 %v9304, %v451
        %v9337 = vadd.f32 %v9305, %v452
        %9338 = vst.msk [vmem:[%s418] sm:$0xff] %vm453, %v9306
        %9339 = vst.msk [vmem:[%s418 + $0x8] sm:$0xff] %vm453, %v9307
        %9340 = vst.msk [vmem:[%s418 + $0x10] sm:$0xff] %vm453, %v9308
        %9341 = vst.msk [vmem:[%s418 + $0x18] sm:$0xff] %vm453, %v9309
        %9342 = vst.msk [vmem:[%s418 + $0x20] sm:$0xff] %vm453, %v9310
        %9343 = vst.msk [vmem:[%s418 + $0x28] sm:$0xff] %vm453, %v9311
        %9344 = vst.msk [vmem:[%s418 + $0x30] sm:$0xff] %vm453, %v9312
        %9345 = vst.msk [vmem:[%s418 + $0x38] sm:$0xff] %vm453, %v9313
        %9346 = vst.msk [vmem:[%s418 + $0x40] sm:$0xff] %vm453, %v9314
        %9347 = vst.msk [vmem:[%s418 + $0x48] sm:$0xff] %vm453, %v9315
        %9348 = vst.msk [vmem:[%s418 + $0x50] sm:$0xff] %vm453, %v9316
        %9349 = vst.msk [vmem:[%s418 + $0x58] sm:$0xff] %vm453, %v9317
        %9350 = vst.msk [vmem:[%s418 + $0x60] sm:$0xff] %vm453, %v9318
        %9351 = vst.msk [vmem:[%s418 + $0x68] sm:$0xff] %vm453, %v9319
        %9352 = vst.msk [vmem:[%s418 + $0x70] sm:$0xff] %vm453, %v9320
        %9353 = vst.msk [vmem:[%s418 + $0x78] sm:$0xff] %vm453, %v9321
        %9354 = vst.msk [vmem:[%s418 + $0x80] sm:$0xff] %vm453, %v9322
        %9355 = vst.msk [vmem:[%s418 + $0x88] sm:$0xff] %vm453, %v9323
        %9356 = vst.msk [vmem:[%s418 + $0x90] sm:$0xff] %vm453, %v9324
        %9357 = vst.msk [vmem:[%s418 + $0x98] sm:$0xff] %vm453, %v9325
        %9358 = vst.msk [vmem:[%s418 + $0xa0] sm:$0xff] %vm453, %v9326
        %9359 = vst.msk [vmem:[%s418 + $0xa8] sm:$0xff] %vm453, %v9327
        %9360 = vst.msk [vmem:[%s418 + $0xb0] sm:$0xff] %vm453, %v9328
        %9361 = vst.msk [vmem:[%s418 + $0xb8] sm:$0xff] %vm453, %v9329
        %9362 = vst.msk [vmem:[%s418 + $0xc0] sm:$0xff] %vm453, %v9330
        %9363 = vst.msk [vmem:[%s418 + $0xc8] sm:$0xff] %vm453, %v9331
        %9364 = vst.msk [vmem:[%s418 + $0xd0] sm:$0xff] %vm453, %v9332
        %9365 = vst.msk [vmem:[%s418 + $0xd8] sm:$0xff] %vm453, %v9333
        %9366 = vst.msk [vmem:[%s418 + $0xe0] sm:$0xff] %vm453, %v9334
        %9367 = vst.msk [vmem:[%s418 + $0xe8] sm:$0xff] %vm453, %v9335
        %9368 = vst.msk [vmem:[%s418 + $0xf0] sm:$0xff] %vm453, %v9336
        %9369 = vst.msk [vmem:[%s418 + $0xf8] sm:$0xff] %vm453, %v9337
        %s9370 = sand.u32 %s210, 1
        %s9371 = scalar_lea.sflag [#allocation4], %s9370
        %s9372 = sand.u32 %s210, 1
        %s9373 = smul.addr %s9372, 256
        %s9374 = scalar_lea.vmem [#allocation16], %s9373
        // Predicated region
        $region85: #{tpu_custom_call.1} parent=51 // pred_check
          %p9375 = pneg %p220
        $region86: #{tpu_custom_call.1} parent=51 // pred_check_branch
          %9377 = sbr.rel (%p9375) target = $region88
        $region87: #{tpu_custom_call.1} parent=51 // pred_region
          %s9378 = smul.u32 4, %s29
          %s9380 = ssub.s32 4096, 4096
          %9381 = vsyncadd %s9371, %s9380
          %s9382 = smul.addr %s9378, 8
          %s9383 = smul.addr %s9382, 128
          %s9384 = scalar_lea.hbm %s8, %s9383
          %s9385 = sshll.u32 %s9374, 4
          %s9386 = int_to_ptr.vmem [resolvable:$true] %s9385
          %9391 = dma.vmem_to_hbm [thread:$0]  %s9386, 4096, %s9384, %s9371, 128, 128, 8
        $region88: #{tpu_custom_call.1} parent=51 // pred_fallthru
          _
      $region52: #{tpu_custom_call.1} parent=5 // pred_fallthru
        _
      %p9392 = scmp.le.s32.totalorder 2, %s24
      // Predicated region
      $region89: #{tpu_custom_call.1} parent=5 // pred_check
        %p9393 = pneg %p9392
      $region90: #{tpu_custom_call.1} parent=5 // pred_check_branch
        %9395 = sbr.rel (%p9393) target = $region92
      $region91: #{tpu_custom_call.1} parent=5 // pred_region
        %s9396 = ssub.s32 %s24, 2
        // Predicated region
        $region93: #{tpu_custom_call.1} parent=91 // pred_check
          %p9397 = pneg %p226
        $region94: #{tpu_custom_call.1} parent=91 // pred_check_branch
          %9399 = sbr.rel (%p9397) target = $region96
        $region95: #{tpu_custom_call.1} parent=91 // pred_region
          %s9400 = sand.u32 %s211, 1
          %s9401 = scalar_lea.sflag [#allocation4], %s9400
          %s9402 = sand.u32 %s211, 1
          %s9403 = smul.addr %s9402, 256
          %s9404 = scalar_lea.vmem [#allocation16], %s9403
          %9405 = dma.done %s9401, 4096
        $region96: #{tpu_custom_call.1} parent=91 // pred_fallthru
          _
      $region92: #{tpu_custom_call.1} parent=5 // pred_fallthru
        _
    $region6: #{tpu_custom_call.1} parent=1 // loop_footer
      %s28 = sadd.s32 1, %s24
    $region7: #{tpu_custom_call.1} parent=1 // loop_footer_branch
      %23 = sbr.rel target = $region3
    $region8: #{tpu_custom_call.1} parent=1 // loop_exit
      _
    %9406 = vsyncpa [#allocation3], 1
    %s9407 = scalar_lea.sflag [#allocation3], 1
    %9408 = vsyncpa %s9407, 1
    %9409 = vsyncpa [#allocation6], 1
    %9410 = vsyncpa [#allocation9], 1
    %9411 = vsyncpa [#allocation12], 1
    %9412 = vsyncpa [#allocation15], 1
    %9413 = vsyncpa [#allocation4], 1
    %s9414 = scalar_lea.sflag [#allocation4], 1
    %9415 = vsyncpa %s9414, 1

</llo_original>
